<compile_context>
chip_gen: v7x
topology: tpu7x:2x2x1
jax: 0.10.0
libtpu: 0.0.40
codegen_flags: <defaults>
</compile_context>

<pallas_src>
import functools

import jax
import jax.numpy as jnp
from jax.experimental import pallas as pl
from jax.experimental.pallas import tpu as pltpu

LANES = 128
_VMEM_LIMIT = 32 * 1024 * 1024   # safe scoped-VMEM request on v5e/v6e/v7x


def _round_up(x, m):
    return (x + m - 1) // m * m


# ---------------------------------------------------------------------------
# Fused 3x3 conv kernel:  out = act( sum_{ky,kx} shift_{ky,kx}(x) @ W[ky,kx] + b )
# One grid step = one batch image.
# ---------------------------------------------------------------------------
def _conv3x3_kernel(*refs, stride, h_out, w_out, apply_relu):
    n_ph = stride * stride
    x_refs = refs[:n_ph]                       # phase views of the padded input
    w_ref, b_ref, o_ref = refs[n_ph], refs[n_ph + 1], refs[n_ph + 2]
    c_out = o_ref.shape[-1]

    acc = jnp.zeros((h_out * w_out, c_out), jnp.float32)
    for ky in range(3):
        for kx in range(3):
            ph = (ky % stride) * stride + (kx % stride)
            oy, ox = ky // stride, kx // stride
            sl = x_refs[ph][oy:oy + h_out, ox:ox + w_out, :]   # contiguous load
            tap = sl.reshape(h_out * w_out, sl.shape[-1])
            acc = acc + jnp.dot(tap, w_ref[ky * 3 + kx],
                                preferred_element_type=jnp.float32)
    acc = acc + b_ref[...]                     # f32 epilogue (v5e-safe)
    if apply_relu:
        acc = jnp.maximum(acc, 0.0)
    o_ref[...] = acc.astype(o_ref.dtype)


def conv2d_3x3(x_nhwc, w_packed, b_row, *, stride, apply_relu):
    """3x3 conv, padding=1.  x_nhwc (N,H,W,Cin) bf16; w_packed (9,Cin,Cout) bf16."""
    N, H, W, C_in = x_nhwc.shape
    assert C_in == w_packed.shape[1]
    assert H % stride == 0 and W % stride == 0
    C_out = w_packed.shape[-1]
    H_out = (H + 2 - 3) // stride + 1
    W_out = (W + 2 - 3) // stride + 1
    M = H_out * W_out

    xp = jnp.pad(x_nhwc, ((0, 0), (1, 1), (1, 1), (0, 0)))
    # Space-to-phase split (identity for stride=1): every in-kernel access
    # becomes a contiguous slice; total bytes equal the padded activation.
    phases = [xp[:, py::stride, px::stride, :]
              for py in range(stride) for px in range(stride)]
    n_ph = len(phases)
    ph_h, ph_w = phases[0].shape[1], phases[0].shape[2]

    kern = functools.partial(_conv3x3_kernel, stride=stride, h_out=H_out,
                             w_out=W_out, apply_relu=apply_relu)

    in_specs = (
        [pl.BlockSpec((None, ph_h, ph_w, C_in), lambda n: (n, 0, 0, 0))
         for _ in range(n_ph)]
        + [pl.BlockSpec((9, C_in, C_out), lambda n: (0, 0, 0)),
           pl.BlockSpec((1, C_out), lambda n: (0, 0))]
    )
    flops = 2 * N * M * 9 * C_in * C_out
    bytes_accessed = (n_ph * N * ph_h * ph_w * C_in * 2
                      + 9 * C_in * C_out * 2 + C_out * 4
                      + N * M * C_out * 2)

    out = pl.pallas_call(
        kern,
        out_shape=jax.ShapeDtypeStruct((N, M, C_out), jnp.bfloat16),
        grid=(N,),
        in_specs=in_specs,
        out_specs=pl.BlockSpec((None, M, C_out), lambda n: (n, 0, 0)),
        compiler_params=pltpu.CompilerParams(
            dimension_semantics=("parallel",),
            vmem_limit_bytes=_VMEM_LIMIT),
        cost_estimate=pl.CostEstimate(flops=flops, transcendentals=0,
                                      bytes_accessed=bytes_accessed),
    )(*phases, w_packed, b_row)
    # TODO(synk): for very large spatial inputs (per-image block > ~8 MiB) add
    # output-row tiling with manual overlapping-window DMA (pl.ANY +
    # pltpu.make_async_copy); whole-image blocks are fine at VAE-encoder sizes.
    return out.reshape(N, H_out, W_out, C_out)


# ---------------------------------------------------------------------------
# Final Linear: y = x @ W + b, K-tiled with an f32 VMEM accumulator.
# ---------------------------------------------------------------------------
def _fc_kernel(x_ref, w_ref, b_ref, o_ref, acc_ref):
    k = pl.program_id(0)

    @pl.when(k == 0)
    def _():
        acc_ref[...] = jnp.zeros_like(acc_ref)

    acc_ref[...] += jnp.dot(x_ref[...], w_ref[...],
                            preferred_element_type=jnp.float32)

    @pl.when(k == pl.num_programs(0) - 1)
    def _():
        o_ref[...] = (acc_ref[...] + b_ref[...]).astype(o_ref.dtype)


def linear(x, w_kn, b_row):
    M, K = x.shape
    K2, N_out = w_kn.shape
    assert K == K2
    tile_k = 512 if K % 512 == 0 else K
    grid_k = K // tile_k

    return pl.pallas_call(
        _fc_kernel,
        out_shape=jax.ShapeDtypeStruct((M, N_out), jnp.float32),
        grid=(grid_k,),
        in_specs=[pl.BlockSpec((M, tile_k), lambda k: (0, k)),
                  pl.BlockSpec((tile_k, N_out), lambda k: (k, 0)),
                  pl.BlockSpec((1, N_out), lambda k: (0, 0))],
        out_specs=pl.BlockSpec((M, N_out), lambda k: (0, 0)),
        scratch_shapes=[pltpu.VMEM((M, N_out), jnp.float32)],
        compiler_params=pltpu.CompilerParams(
            dimension_semantics=("arbitrary",),
            vmem_limit_bytes=_VMEM_LIMIT),
        cost_estimate=pl.CostEstimate(
            flops=2 * M * K * N_out, transcendentals=0,
            bytes_accessed=M * K * 2 + K * N_out * 2 + N_out * 4 + M * N_out * 4),
    )(x, w_kn, b_row)


# ---------------------------------------------------------------------------
# One-time parameter repacking (layout + lane padding + bf16 cast).
# ---------------------------------------------------------------------------
def _pack_conv(w_oihw, b, c_in_pad, c_out_pad):
    c_out, c_in, kh, kw = w_oihw.shape
    w = jnp.transpose(w_oihw, (2, 3, 1, 0)).reshape(kh * kw, c_in, c_out)
    w = jnp.pad(w, ((0, 0), (0, c_in_pad - c_in), (0, c_out_pad - c_out)))
    b = jnp.pad(b, (0, c_out_pad - c_out)).reshape(1, c_out_pad)
    return w.astype(jnp.bfloat16), b.astype(jnp.float32)


def prepare_params(params, input_shape):
    channels, height, width = input_shape
    h8, w8 = height // 8, width // 8
    ci1 = _round_up(channels, 8)          # pad input channels to >= 1 sublane
    co1 = _round_up(32, LANES)            # 128: lane-dense conv1 output
    co2 = _round_up(64, LANES)            # 128: lane-dense conv2 output
    prep = {}
    prep["w1"], prep["b1"] = _pack_conv(params["w1"], params["b1"], ci1, co1)
    prep["w2"], prep["b2"] = _pack_conv(params["w2"], params["b2"], co1, co2)
    prep["w3"], prep["b3"] = _pack_conv(params["w3"], params["b3"], co2, 128)
    prep["w4"], prep["b4"] = _pack_conv(params["w4"], params["b4"], 128, 256)
    # nn.Linear weight (latent, 256*h8*w8) with columns in NCHW (c,h,w) order
    # -> permute columns to NHWC (h,w,c) order and transpose once to (K, latent).
    latent = params["w_fc"].shape[0]
    w_fc = (params["w_fc"].reshape(latent, 256, h8, w8)
            .transpose(0, 2, 3, 1).reshape(latent, 256 * h8 * w8).T)
    prep["w_fc"] = w_fc.astype(jnp.bfloat16)
    prep["b_fc"] = params["b_fc"].reshape(1, latent).astype(jnp.float32)
    return prep


# ---------------------------------------------------------------------------
# Forward pass
# ---------------------------------------------------------------------------
def base_encoder_forward(x_nchw, prep):
    x = jnp.transpose(x_nchw, (0, 2, 3, 1)).astype(jnp.bfloat16)   # NCHW -> NHWC once
    ci1 = prep["w1"].shape[1]
    if x.shape[-1] != ci1:
        x = jnp.pad(x, ((0, 0), (0, 0), (0, 0), (0, ci1 - x.shape[-1])))
    x = conv2d_3x3(x, prep["w1"], prep["b1"], stride=1, apply_relu=True)
    x = conv2d_3x3(x, prep["w2"], prep["b2"], stride=2, apply_relu=True)
    x = conv2d_3x3(x, prep["w3"], prep["b3"], stride=2, apply_relu=True)
    x = conv2d_3x3(x, prep["w4"], prep["b4"], stride=2, apply_relu=False)
    x = x.reshape(x.shape[0], -1)     # NHWC flatten; w_fc columns pre-permuted to match
    return linear(x, prep["w_fc"], prep["b_fc"])


# ---------------------------------------------------------------------------
# Deterministic synthetic parameters (PyTorch shapes) + pure-JAX reference.
# ---------------------------------------------------------------------------
def init_params(key, input_shape, latent_dim):
    channels, height, width = input_shape
    flatten_size = 256 * (height // 8) * (width // 8)
    keys = jax.random.split(key, 10)

    def cw(k, cout, cin):
        return jax.random.normal(k, (cout, cin, 3, 3), jnp.float32) * 0.05

    return {
        "w1": cw(keys[0], 32, channels),
        "b1": jax.random.normal(keys[1], (32,), jnp.float32) * 0.01,
        "w2": cw(keys[2], 64, 32),
        "b2": jax.random.normal(keys[3], (64,), jnp.float32) * 0.01,
        "w3": cw(keys[4], 128, 64),
        "b3": jax.random.normal(keys[5], (128,), jnp.float32) * 0.01,
        "w4": cw(keys[6], 256, 128),
        "b4": jax.random.normal(keys[7], (256,), jnp.float32) * 0.01,
        "w_fc": jax.random.normal(keys[8], (latent_dim, flatten_size), jnp.float32) * 0.02,
        "b_fc": jax.random.normal(keys[9], (latent_dim,), jnp.float32) * 0.01,
    }


def reference_forward(x_nchw, params):
    def conv(x, w, b, stride):
        y = jax.lax.conv_general_dilated(
            x, w, window_strides=(stride, stride), padding=((1, 1), (1, 1)),
            dimension_numbers=("NCHW", "OIHW", "NCHW"))
        return y + b.reshape(1, -1, 1, 1)

    x = jax.nn.relu(conv(x_nchw, params["w1"], params["b1"], 1))
    x = jax.nn.relu(conv(x, params["w2"], params["b2"], 2))
    x = jax.nn.relu(conv(x, params["w3"], params["b3"], 2))
    x = conv(x, params["w4"], params["b4"], 2)
    x = x.reshape(x.shape[0], -1)
    return x @ params["w_fc"].T + params["b_fc"]


if __name__ == "__main__":
    input_shape = (4, 16, 16)      # (C, H, W)
    latent_dim = 32
    batch = 2

    key = jax.random.PRNGKey(0)
    k_x, k_p = jax.random.split(key)
    x = jax.random.normal(k_x, (batch,) + input_shape, jnp.float32)   # NCHW, like PyTorch
    params = init_params(k_p, input_shape, latent_dim)
    prep = prepare_params(params, input_shape)

    fwd = jax.jit(base_encoder_forward)
    out = jax.block_until_ready(fwd(x, prep))
    assert out.shape == (batch, latent_dim), out.shape

    # bf16-tolerance correctness check against a pure-JAX f32 reference.
    ref = jax.block_until_ready(reference_forward(x, params))
    err = float(jnp.max(jnp.abs(out.astype(jnp.float32) - ref)))
    assert err < 5e-2, f"max abs err {err}"
    print("KERNEL_OK")
</pallas_src>

<mosaic_0001>
module attributes {stable_mosaic.version = 11 : i64} {
  func.func @_conv3x3_kernel(%arg0: i32, %arg1: memref<1x18x18x8xbf16, #tpu.memory_space<vmem>>, %arg2: memref<9x8x128xbf16, #tpu.memory_space<vmem>>, %arg3: memref<1x128xf32, #tpu.memory_space<vmem>>, %arg4: memref<1x256x128xbf16, #tpu.memory_space<vmem>>) attributes {dimension_semantics = [#tpu.dimension_semantics<parallel>], iteration_bounds = array<i64: 2>, scalar_prefetch = 0 : i64, scratch_operands = 0 : i64, tpu.core_type = #tpu.core_type<tc>, window_params = [{transform_indices = @transform_0, window_bounds = array<i64: 1, 18, 18, 8>}, {pipeline_mode = #tpu.pipeline_mode<synchronous>, transform_indices = @transform_1, window_bounds = array<i64: 9, 8, 128>}, {pipeline_mode = #tpu.pipeline_mode<synchronous>, transform_indices = @transform_2, window_bounds = array<i64: 1, 128>}, {transform_indices = @transform_3, window_bounds = array<i64: 1, 256, 128>}]} {
    %cst = arith.constant 0.000000e+00 : f32
    %0 = vector.broadcast %cst : f32 to vector<256x128xf32>
    %c0 = arith.constant 0 : index
    %c0_0 = arith.constant 0 : index
    %c0_1 = arith.constant 0 : index
    %c0_2 = arith.constant 0 : index
    %1 = vector.load %arg1[%c0, %c0_0, %c0_1, %c0_2] : memref<1x18x18x8xbf16, #tpu.memory_space<vmem>>, vector<1x16x16x8xbf16>
    %2 = vector.shape_cast %1 : vector<1x16x16x8xbf16> to vector<16x16x8xbf16>
    %3 = vector.shape_cast %2 : vector<16x16x8xbf16> to vector<256x8xbf16>
    %c0_3 = arith.constant 0 : index
    %c0_4 = arith.constant 0 : index
    %c0_5 = arith.constant 0 : index
    %4 = vector.load %arg2[%c0_3, %c0_4, %c0_5] : memref<9x8x128xbf16, #tpu.memory_space<vmem>>, vector<1x8x128xbf16>
    %5 = vector.shape_cast %4 : vector<1x8x128xbf16> to vector<8x128xbf16>
    %cst_6 = arith.constant dense<0.000000e+00> : vector<256x128xf32>
    %6 = tpu.matmul %3, %5, %cst_6 {dimension_numbers = #tpu.dot_dimension_numbers<[1], [0], [0], [1], [0, 0, 1, 1], [], []>} : vector<256x8xbf16>, vector<8x128xbf16>, vector<256x128xf32> -> vector<256x128xf32>
    %7 = arith.addf %0, %6 : vector<256x128xf32>
    %c0_7 = arith.constant 0 : index
    %c0_8 = arith.constant 0 : index
    %c1 = arith.constant 1 : index
    %c0_9 = arith.constant 0 : index
    %8 = vector.load %arg1[%c0_7, %c0_8, %c1, %c0_9] : memref<1x18x18x8xbf16, #tpu.memory_space<vmem>>, vector<1x16x16x8xbf16>
    %9 = vector.shape_cast %8 : vector<1x16x16x8xbf16> to vector<16x16x8xbf16>
    %10 = vector.shape_cast %9 : vector<16x16x8xbf16> to vector<256x8xbf16>
    %c1_10 = arith.constant 1 : index
    %c0_11 = arith.constant 0 : index
    %c0_12 = arith.constant 0 : index
    %11 = vector.load %arg2[%c1_10, %c0_11, %c0_12] : memref<9x8x128xbf16, #tpu.memory_space<vmem>>, vector<1x8x128xbf16>
    %12 = vector.shape_cast %11 : vector<1x8x128xbf16> to vector<8x128xbf16>
    %cst_13 = arith.constant dense<0.000000e+00> : vector<256x128xf32>
    %13 = tpu.matmul %10, %12, %cst_13 {dimension_numbers = #tpu.dot_dimension_numbers<[1], [0], [0], [1], [0, 0, 1, 1], [], []>} : vector<256x8xbf16>, vector<8x128xbf16>, vector<256x128xf32> -> vector<256x128xf32>
    %14 = arith.addf %7, %13 : vector<256x128xf32>
    %c0_14 = arith.constant 0 : index
    %c0_15 = arith.constant 0 : index
    %c2 = arith.constant 2 : index
    %c0_16 = arith.constant 0 : index
    %15 = vector.load %arg1[%c0_14, %c0_15, %c2, %c0_16] : memref<1x18x18x8xbf16, #tpu.memory_space<vmem>>, vector<1x16x16x8xbf16>
    %16 = vector.shape_cast %15 : vector<1x16x16x8xbf16> to vector<16x16x8xbf16>
    %17 = vector.shape_cast %16 : vector<16x16x8xbf16> to vector<256x8xbf16>
    %c2_17 = arith.constant 2 : index
    %c0_18 = arith.constant 0 : index
    %c0_19 = arith.constant 0 : index
    %18 = vector.load %arg2[%c2_17, %c0_18, %c0_19] : memref<9x8x128xbf16, #tpu.memory_space<vmem>>, vector<1x8x128xbf16>
    %19 = vector.shape_cast %18 : vector<1x8x128xbf16> to vector<8x128xbf16>
    %cst_20 = arith.constant dense<0.000000e+00> : vector<256x128xf32>
    %20 = tpu.matmul %17, %19, %cst_20 {dimension_numbers = #tpu.dot_dimension_numbers<[1], [0], [0], [1], [0, 0, 1, 1], [], []>} : vector<256x8xbf16>, vector<8x128xbf16>, vector<256x128xf32> -> vector<256x128xf32>
    %21 = arith.addf %14, %20 : vector<256x128xf32>
    %c0_21 = arith.constant 0 : index
    %c1_22 = arith.constant 1 : index
    %c0_23 = arith.constant 0 : index
    %c0_24 = arith.constant 0 : index
    %22 = vector.load %arg1[%c0_21, %c1_22, %c0_23, %c0_24] : memref<1x18x18x8xbf16, #tpu.memory_space<vmem>>, vector<1x16x16x8xbf16>
    %23 = vector.shape_cast %22 : vector<1x16x16x8xbf16> to vector<16x16x8xbf16>
    %24 = vector.shape_cast %23 : vector<16x16x8xbf16> to vector<256x8xbf16>
    %c3 = arith.constant 3 : index
    %c0_25 = arith.constant 0 : index
    %c0_26 = arith.constant 0 : index
    %25 = vector.load %arg2[%c3, %c0_25, %c0_26] : memref<9x8x128xbf16, #tpu.memory_space<vmem>>, vector<1x8x128xbf16>
    %26 = vector.shape_cast %25 : vector<1x8x128xbf16> to vector<8x128xbf16>
    %cst_27 = arith.constant dense<0.000000e+00> : vector<256x128xf32>
    %27 = tpu.matmul %24, %26, %cst_27 {dimension_numbers = #tpu.dot_dimension_numbers<[1], [0], [0], [1], [0, 0, 1, 1], [], []>} : vector<256x8xbf16>, vector<8x128xbf16>, vector<256x128xf32> -> vector<256x128xf32>
    %28 = arith.addf %21, %27 : vector<256x128xf32>
    %c0_28 = arith.constant 0 : index
    %c1_29 = arith.constant 1 : index
    %c1_30 = arith.constant 1 : index
    %c0_31 = arith.constant 0 : index
    %29 = vector.load %arg1[%c0_28, %c1_29, %c1_30, %c0_31] : memref<1x18x18x8xbf16, #tpu.memory_space<vmem>>, vector<1x16x16x8xbf16>
    %30 = vector.shape_cast %29 : vector<1x16x16x8xbf16> to vector<16x16x8xbf16>
    %31 = vector.shape_cast %30 : vector<16x16x8xbf16> to vector<256x8xbf16>
    %c4 = arith.constant 4 : index
    %c0_32 = arith.constant 0 : index
    %c0_33 = arith.constant 0 : index
    %32 = vector.load %arg2[%c4, %c0_32, %c0_33] : memref<9x8x128xbf16, #tpu.memory_space<vmem>>, vector<1x8x128xbf16>
    %33 = vector.shape_cast %32 : vector<1x8x128xbf16> to vector<8x128xbf16>
    %cst_34 = arith.constant dense<0.000000e+00> : vector<256x128xf32>
    %34 = tpu.matmul %31, %33, %cst_34 {dimension_numbers = #tpu.dot_dimension_numbers<[1], [0], [0], [1], [0, 0, 1, 1], [], []>} : vector<256x8xbf16>, vector<8x128xbf16>, vector<256x128xf32> -> vector<256x128xf32>
    %35 = arith.addf %28, %34 : vector<256x128xf32>
    %c0_35 = arith.constant 0 : index
    %c1_36 = arith.constant 1 : index
    %c2_37 = arith.constant 2 : index
    %c0_38 = arith.constant 0 : index
    %36 = vector.load %arg1[%c0_35, %c1_36, %c2_37, %c0_38] : memref<1x18x18x8xbf16, #tpu.memory_space<vmem>>, vector<1x16x16x8xbf16>
    %37 = vector.shape_cast %36 : vector<1x16x16x8xbf16> to vector<16x16x8xbf16>
    %38 = vector.shape_cast %37 : vector<16x16x8xbf16> to vector<256x8xbf16>
    %c5 = arith.constant 5 : index
    %c0_39 = arith.constant 0 : index
    %c0_40 = arith.constant 0 : index
    %39 = vector.load %arg2[%c5, %c0_39, %c0_40] : memref<9x8x128xbf16, #tpu.memory_space<vmem>>, vector<1x8x128xbf16>
    %40 = vector.shape_cast %39 : vector<1x8x128xbf16> to vector<8x128xbf16>
    %cst_41 = arith.constant dense<0.000000e+00> : vector<256x128xf32>
    %41 = tpu.matmul %38, %40, %cst_41 {dimension_numbers = #tpu.dot_dimension_numbers<[1], [0], [0], [1], [0, 0, 1, 1], [], []>} : vector<256x8xbf16>, vector<8x128xbf16>, vector<256x128xf32> -> vector<256x128xf32>
    %42 = arith.addf %35, %41 : vector<256x128xf32>
    %c0_42 = arith.constant 0 : index
    %c2_43 = arith.constant 2 : index
    %c0_44 = arith.constant 0 : index
    %c0_45 = arith.constant 0 : index
    %43 = vector.load %arg1[%c0_42, %c2_43, %c0_44, %c0_45] : memref<1x18x18x8xbf16, #tpu.memory_space<vmem>>, vector<1x16x16x8xbf16>
    %44 = vector.shape_cast %43 : vector<1x16x16x8xbf16> to vector<16x16x8xbf16>
    %45 = vector.shape_cast %44 : vector<16x16x8xbf16> to vector<256x8xbf16>
    %c6 = arith.constant 6 : index
    %c0_46 = arith.constant 0 : index
    %c0_47 = arith.constant 0 : index
    %46 = vector.load %arg2[%c6, %c0_46, %c0_47] : memref<9x8x128xbf16, #tpu.memory_space<vmem>>, vector<1x8x128xbf16>
    %47 = vector.shape_cast %46 : vector<1x8x128xbf16> to vector<8x128xbf16>
    %cst_48 = arith.constant dense<0.000000e+00> : vector<256x128xf32>
    %48 = tpu.matmul %45, %47, %cst_48 {dimension_numbers = #tpu.dot_dimension_numbers<[1], [0], [0], [1], [0, 0, 1, 1], [], []>} : vector<256x8xbf16>, vector<8x128xbf16>, vector<256x128xf32> -> vector<256x128xf32>
    %49 = arith.addf %42, %48 : vector<256x128xf32>
    %c0_49 = arith.constant 0 : index
    %c2_50 = arith.constant 2 : index
    %c1_51 = arith.constant 1 : index
    %c0_52 = arith.constant 0 : index
    %50 = vector.load %arg1[%c0_49, %c2_50, %c1_51, %c0_52] : memref<1x18x18x8xbf16, #tpu.memory_space<vmem>>, vector<1x16x16x8xbf16>
    %51 = vector.shape_cast %50 : vector<1x16x16x8xbf16> to vector<16x16x8xbf16>
    %52 = vector.shape_cast %51 : vector<16x16x8xbf16> to vector<256x8xbf16>
    %c7 = arith.constant 7 : index
    %c0_53 = arith.constant 0 : index
    %c0_54 = arith.constant 0 : index
    %53 = vector.load %arg2[%c7, %c0_53, %c0_54] : memref<9x8x128xbf16, #tpu.memory_space<vmem>>, vector<1x8x128xbf16>
    %54 = vector.shape_cast %53 : vector<1x8x128xbf16> to vector<8x128xbf16>
    %cst_55 = arith.constant dense<0.000000e+00> : vector<256x128xf32>
    %55 = tpu.matmul %52, %54, %cst_55 {dimension_numbers = #tpu.dot_dimension_numbers<[1], [0], [0], [1], [0, 0, 1, 1], [], []>} : vector<256x8xbf16>, vector<8x128xbf16>, vector<256x128xf32> -> vector<256x128xf32>
    %56 = arith.addf %49, %55 : vector<256x128xf32>
    %c0_56 = arith.constant 0 : index
    %c2_57 = arith.constant 2 : index
    %c2_58 = arith.constant 2 : index
    %c0_59 = arith.constant 0 : index
    %57 = vector.load %arg1[%c0_56, %c2_57, %c2_58, %c0_59] : memref<1x18x18x8xbf16, #tpu.memory_space<vmem>>, vector<1x16x16x8xbf16>
    %58 = vector.shape_cast %57 : vector<1x16x16x8xbf16> to vector<16x16x8xbf16>
    %59 = vector.shape_cast %58 : vector<16x16x8xbf16> to vector<256x8xbf16>
    %c8 = arith.constant 8 : index
    %c0_60 = arith.constant 0 : index
    %c0_61 = arith.constant 0 : index
    %60 = vector.load %arg2[%c8, %c0_60, %c0_61] : memref<9x8x128xbf16, #tpu.memory_space<vmem>>, vector<1x8x128xbf16>
    %61 = vector.shape_cast %60 : vector<1x8x128xbf16> to vector<8x128xbf16>
    %cst_62 = arith.constant dense<0.000000e+00> : vector<256x128xf32>
    %62 = tpu.matmul %59, %61, %cst_62 {dimension_numbers = #tpu.dot_dimension_numbers<[1], [0], [0], [1], [0, 0, 1, 1], [], []>} : vector<256x8xbf16>, vector<8x128xbf16>, vector<256x128xf32> -> vector<256x128xf32>
    %63 = arith.addf %56, %62 : vector<256x128xf32>
    %c0_63 = arith.constant 0 : index
    %c0_64 = arith.constant 0 : index
    %64 = vector.load %arg3[%c0_63, %c0_64] : memref<1x128xf32, #tpu.memory_space<vmem>>, vector<1x128xf32>
    %65 = vector.broadcast %64 : vector<1x128xf32> to vector<256x128xf32>
    %66 = arith.addf %63, %65 : vector<256x128xf32>
    %cst_65 = arith.constant 0.000000e+00 : f32
    %67 = vector.broadcast %cst_65 : f32 to vector<256x128xf32>
    %68 = arith.maximumf %66, %67 : vector<256x128xf32>
    %69 = arith.truncf %68 : vector<256x128xf32> to vector<256x128xbf16>
    %c0_66 = arith.constant 0 : index
    %c0_67 = arith.constant 0 : index
    %c0_68 = arith.constant 0 : index
    %70 = vector.load %arg4[%c0_66, %c0_67, %c0_68] : memref<1x256x128xbf16, #tpu.memory_space<vmem>>, vector<1x256x128xbf16>
    %71 = vector.shape_cast %70 : vector<1x256x128xbf16> to vector<256x128xbf16>
    %72 = vector.shape_cast %69 : vector<256x128xbf16> to vector<1x256x128xbf16>
    tpu.vector_store %arg4[%c0_66, %c0_67, %c0_68], %72 {strides = array<i32>} : memref<1x256x128xbf16, #tpu.memory_space<vmem>>, vector<1x256x128xbf16>,
    return
  }
  func.func @transform_0(%arg0: i32) -> (i32, i32, i32, i32) {
    %c0_i32 = arith.constant 0 : i32
    %c0_i32_0 = arith.constant 0 : i32
    %c0_i32_1 = arith.constant 0 : i32
    %c0_i32_2 = arith.constant 0 : i32
    return %arg0, %c0_i32, %c0_i32_0, %c0_i32_1 : i32, i32, i32, i32
  }
  func.func @transform_1(%arg0: i32) -> (i32, i32, i32) {
    %c0_i32 = arith.constant 0 : i32
    %c0_i32_0 = arith.constant 0 : i32
    %c0_i32_1 = arith.constant 0 : i32
    %c0_i32_2 = arith.constant 0 : i32
    return %c0_i32, %c0_i32_0, %c0_i32_1 : i32, i32, i32
  }
  func.func @transform_2(%arg0: i32) -> (i32, i32) {
    %c0_i32 = arith.constant 0 : i32
    %c0_i32_0 = arith.constant 0 : i32
    %c0_i32_1 = arith.constant 0 : i32
    return %c0_i32, %c0_i32_0 : i32, i32
  }
  func.func @transform_3(%arg0: i32) -> (i32, i32, i32) {
    %c0_i32 = arith.constant 0 : i32
    %c0_i32_0 = arith.constant 0 : i32
    %c0_i32_1 = arith.constant 0 : i32
    return %arg0, %c0_i32, %c0_i32_0 : i32, i32, i32
  }
}

module attributes {stable_mosaic.version = 11 : i64} {
  func.func @_conv3x3_kernel(%arg0: i32, %arg1: memref<1x9x9x128xbf16, #tpu.memory_space<vmem>>, %arg2: memref<1x9x9x128xbf16, #tpu.memory_space<vmem>>, %arg3: memref<1x9x9x128xbf16, #tpu.memory_space<vmem>>, %arg4: memref<1x9x9x128xbf16, #tpu.memory_space<vmem>>, %arg5: memref<9x128x128xbf16, #tpu.memory_space<vmem>>, %arg6: memref<1x128xf32, #tpu.memory_space<vmem>>, %arg7: memref<1x64x128xbf16, #tpu.memory_space<vmem>>) attributes {dimension_semantics = [#tpu.dimension_semantics<parallel>], iteration_bounds = array<i64: 2>, scalar_prefetch = 0 : i64, scratch_operands = 0 : i64, tpu.core_type = #tpu.core_type<tc>, window_params = [{transform_indices = @transform_0, window_bounds = array<i64: 1, 9, 9, 128>}, {transform_indices = @transform_1, window_bounds = array<i64: 1, 9, 9, 128>}, {transform_indices = @transform_2, window_bounds = array<i64: 1, 9, 9, 128>}, {transform_indices = @transform_3, window_bounds = array<i64: 1, 9, 9, 128>}, {pipeline_mode = #tpu.pipeline_mode<synchronous>, transform_indices = @transform_4, window_bounds = array<i64: 9, 128, 128>}, {pipeline_mode = #tpu.pipeline_mode<synchronous>, transform_indices = @transform_5, window_bounds = array<i64: 1, 128>}, {transform_indices = @transform_6, window_bounds = array<i64: 1, 64, 128>}]} {
    %cst = arith.constant 0.000000e+00 : f32
    %0 = vector.broadcast %cst : f32 to vector<64x128xf32>
    %c0 = arith.constant 0 : index
    %c0_0 = arith.constant 0 : index
    %c0_1 = arith.constant 0 : index
    %c0_2 = arith.constant 0 : index
    %1 = vector.load %arg1[%c0, %c0_0, %c0_1, %c0_2] : memref<1x9x9x128xbf16, #tpu.memory_space<vmem>>, vector<1x8x8x128xbf16>
    %2 = vector.shape_cast %1 : vector<1x8x8x128xbf16> to vector<8x8x128xbf16>
    %3 = vector.shape_cast %2 : vector<8x8x128xbf16> to vector<64x128xbf16>
    %c0_3 = arith.constant 0 : index
    %c0_4 = arith.constant 0 : index
    %c0_5 = arith.constant 0 : index
    %4 = vector.load %arg5[%c0_3, %c0_4, %c0_5] : memref<9x128x128xbf16, #tpu.memory_space<vmem>>, vector<1x128x128xbf16>
    %5 = vector.shape_cast %4 : vector<1x128x128xbf16> to vector<128x128xbf16>
    %cst_6 = arith.constant dense<0.000000e+00> : vector<64x128xf32>
    %6 = tpu.matmul %3, %5, %cst_6 {dimension_numbers = #tpu.dot_dimension_numbers<[1], [0], [0], [1], [0, 0, 1, 1], [], []>} : vector<64x128xbf16>, vector<128x128xbf16>, vector<64x128xf32> -> vector<64x128xf32>
    %7 = arith.addf %0, %6 : vector<64x128xf32>
    %c0_7 = arith.constant 0 : index
    %c0_8 = arith.constant 0 : index
    %c0_9 = arith.constant 0 : index
    %c0_10 = arith.constant 0 : index
    %8 = vector.load %arg2[%c0_7, %c0_8, %c0_9, %c0_10] : memref<1x9x9x128xbf16, #tpu.memory_space<vmem>>, vector<1x8x8x128xbf16>
    %9 = vector.shape_cast %8 : vector<1x8x8x128xbf16> to vector<8x8x128xbf16>
    %10 = vector.shape_cast %9 : vector<8x8x128xbf16> to vector<64x128xbf16>
    %c1 = arith.constant 1 : index
    %c0_11 = arith.constant 0 : index
    %c0_12 = arith.constant 0 : index
    %11 = vector.load %arg5[%c1, %c0_11, %c0_12] : memref<9x128x128xbf16, #tpu.memory_space<vmem>>, vector<1x128x128xbf16>
    %12 = vector.shape_cast %11 : vector<1x128x128xbf16> to vector<128x128xbf16>
    %cst_13 = arith.constant dense<0.000000e+00> : vector<64x128xf32>
    %13 = tpu.matmul %10, %12, %cst_13 {dimension_numbers = #tpu.dot_dimension_numbers<[1], [0], [0], [1], [0, 0, 1, 1], [], []>} : vector<64x128xbf16>, vector<128x128xbf16>, vector<64x128xf32> -> vector<64x128xf32>
    %14 = arith.addf %7, %13 : vector<64x128xf32>
    %c0_14 = arith.constant 0 : index
    %c0_15 = arith.constant 0 : index
    %c1_16 = arith.constant 1 : index
    %c0_17 = arith.constant 0 : index
    %15 = vector.load %arg1[%c0_14, %c0_15, %c1_16, %c0_17] : memref<1x9x9x128xbf16, #tpu.memory_space<vmem>>, vector<1x8x8x128xbf16>
    %16 = vector.shape_cast %15 : vector<1x8x8x128xbf16> to vector<8x8x128xbf16>
    %17 = vector.shape_cast %16 : vector<8x8x128xbf16> to vector<64x128xbf16>
    %c2 = arith.constant 2 : index
    %c0_18 = arith.constant 0 : index
    %c0_19 = arith.constant 0 : index
    %18 = vector.load %arg5[%c2, %c0_18, %c0_19] : memref<9x128x128xbf16, #tpu.memory_space<vmem>>, vector<1x128x128xbf16>
    %19 = vector.shape_cast %18 : vector<1x128x128xbf16> to vector<128x128xbf16>
    %cst_20 = arith.constant dense<0.000000e+00> : vector<64x128xf32>
    %20 = tpu.matmul %17, %19, %cst_20 {dimension_numbers = #tpu.dot_dimension_numbers<[1], [0], [0], [1], [0, 0, 1, 1], [], []>} : vector<64x128xbf16>, vector<128x128xbf16>, vector<64x128xf32> -> vector<64x128xf32>
    %21 = arith.addf %14, %20 : vector<64x128xf32>
    %c0_21 = arith.constant 0 : index
    %c0_22 = arith.constant 0 : index
    %c0_23 = arith.constant 0 : index
    %c0_24 = arith.constant 0 : index
    %22 = vector.load %arg3[%c0_21, %c0_22, %c0_23, %c0_24] : memref<1x9x9x128xbf16, #tpu.memory_space<vmem>>, vector<1x8x8x128xbf16>
    %23 = vector.shape_cast %22 : vector<1x8x8x128xbf16> to vector<8x8x128xbf16>
    %24 = vector.shape_cast %23 : vector<8x8x128xbf16> to vector<64x128xbf16>
    %c3 = arith.constant 3 : index
    %c0_25 = arith.constant 0 : index
    %c0_26 = arith.constant 0 : index
    %25 = vector.load %arg5[%c3, %c0_25, %c0_26] : memref<9x128x128xbf16, #tpu.memory_space<vmem>>, vector<1x128x128xbf16>
    %26 = vector.shape_cast %25 : vector<1x128x128xbf16> to vector<128x128xbf16>
    %cst_27 = arith.constant dense<0.000000e+00> : vector<64x128xf32>
    %27 = tpu.matmul %24, %26, %cst_27 {dimension_numbers = #tpu.dot_dimension_numbers<[1], [0], [0], [1], [0, 0, 1, 1], [], []>} : vector<64x128xbf16>, vector<128x128xbf16>, vector<64x128xf32> -> vector<64x128xf32>
    %28 = arith.addf %21, %27 : vector<64x128xf32>
    %c0_28 = arith.constant 0 : index
    %c0_29 = arith.constant 0 : index
    %c0_30 = arith.constant 0 : index
    %c0_31 = arith.constant 0 : index
    %29 = vector.load %arg4[%c0_28, %c0_29, %c0_30, %c0_31] : memref<1x9x9x128xbf16, #tpu.memory_space<vmem>>, vector<1x8x8x128xbf16>
    %30 = vector.shape_cast %29 : vector<1x8x8x128xbf16> to vector<8x8x128xbf16>
    %31 = vector.shape_cast %30 : vector<8x8x128xbf16> to vector<64x128xbf16>
    %c4 = arith.constant 4 : index
    %c0_32 = arith.constant 0 : index
    %c0_33 = arith.constant 0 : index
    %32 = vector.load %arg5[%c4, %c0_32, %c0_33] : memref<9x128x128xbf16, #tpu.memory_space<vmem>>, vector<1x128x128xbf16>
    %33 = vector.shape_cast %32 : vector<1x128x128xbf16> to vector<128x128xbf16>
    %cst_34 = arith.constant dense<0.000000e+00> : vector<64x128xf32>
    %34 = tpu.matmul %31, %33, %cst_34 {dimension_numbers = #tpu.dot_dimension_numbers<[1], [0], [0], [1], [0, 0, 1, 1], [], []>} : vector<64x128xbf16>, vector<128x128xbf16>, vector<64x128xf32> -> vector<64x128xf32>
    %35 = arith.addf %28, %34 : vector<64x128xf32>
    %c0_35 = arith.constant 0 : index
    %c0_36 = arith.constant 0 : index
    %c1_37 = arith.constant 1 : index
    %c0_38 = arith.constant 0 : index
    %36 = vector.load %arg3[%c0_35, %c0_36, %c1_37, %c0_38] : memref<1x9x9x128xbf16, #tpu.memory_space<vmem>>, vector<1x8x8x128xbf16>
    %37 = vector.shape_cast %36 : vector<1x8x8x128xbf16> to vector<8x8x128xbf16>
    %38 = vector.shape_cast %37 : vector<8x8x128xbf16> to vector<64x128xbf16>
    %c5 = arith.constant 5 : index
    %c0_39 = arith.constant 0 : index
    %c0_40 = arith.constant 0 : index
    %39 = vector.load %arg5[%c5, %c0_39, %c0_40] : memref<9x128x128xbf16, #tpu.memory_space<vmem>>, vector<1x128x128xbf16>
    %40 = vector.shape_cast %39 : vector<1x128x128xbf16> to vector<128x128xbf16>
    %cst_41 = arith.constant dense<0.000000e+00> : vector<64x128xf32>
    %41 = tpu.matmul %38, %40, %cst_41 {dimension_numbers = #tpu.dot_dimension_numbers<[1], [0], [0], [1], [0, 0, 1, 1], [], []>} : vector<64x128xbf16>, vector<128x128xbf16>, vector<64x128xf32> -> vector<64x128xf32>
    %42 = arith.addf %35, %41 : vector<64x128xf32>
    %c0_42 = arith.constant 0 : index
    %c1_43 = arith.constant 1 : index
    %c0_44 = arith.constant 0 : index
    %c0_45 = arith.constant 0 : index
    %43 = vector.load %arg1[%c0_42, %c1_43, %c0_44, %c0_45] : memref<1x9x9x128xbf16, #tpu.memory_space<vmem>>, vector<1x8x8x128xbf16>
    %44 = vector.shape_cast %43 : vector<1x8x8x128xbf16> to vector<8x8x128xbf16>
    %45 = vector.shape_cast %44 : vector<8x8x128xbf16> to vector<64x128xbf16>
    %c6 = arith.constant 6 : index
    %c0_46 = arith.constant 0 : index
    %c0_47 = arith.constant 0 : index
    %46 = vector.load %arg5[%c6, %c0_46, %c0_47] : memref<9x128x128xbf16, #tpu.memory_space<vmem>>, vector<1x128x128xbf16>
    %47 = vector.shape_cast %46 : vector<1x128x128xbf16> to vector<128x128xbf16>
    %cst_48 = arith.constant dense<0.000000e+00> : vector<64x128xf32>
    %48 = tpu.matmul %45, %47, %cst_48 {dimension_numbers = #tpu.dot_dimension_numbers<[1], [0], [0], [1], [0, 0, 1, 1], [], []>} : vector<64x128xbf16>, vector<128x128xbf16>, vector<64x128xf32> -> vector<64x128xf32>
    %49 = arith.addf %42, %48 : vector<64x128xf32>
    %c0_49 = arith.constant 0 : index
    %c1_50 = arith.constant 1 : index
    %c0_51 = arith.constant 0 : index
    %c0_52 = arith.constant 0 : index
    %50 = vector.load %arg2[%c0_49, %c1_50, %c0_51, %c0_52] : memref<1x9x9x128xbf16, #tpu.memory_space<vmem>>, vector<1x8x8x128xbf16>
    %51 = vector.shape_cast %50 : vector<1x8x8x128xbf16> to vector<8x8x128xbf16>
    %52 = vector.shape_cast %51 : vector<8x8x128xbf16> to vector<64x128xbf16>
    %c7 = arith.constant 7 : index
    %c0_53 = arith.constant 0 : index
    %c0_54 = arith.constant 0 : index
    %53 = vector.load %arg5[%c7, %c0_53, %c0_54] : memref<9x128x128xbf16, #tpu.memory_space<vmem>>, vector<1x128x128xbf16>
    %54 = vector.shape_cast %53 : vector<1x128x128xbf16> to vector<128x128xbf16>
    %cst_55 = arith.constant dense<0.000000e+00> : vector<64x128xf32>
    %55 = tpu.matmul %52, %54, %cst_55 {dimension_numbers = #tpu.dot_dimension_numbers<[1], [0], [0], [1], [0, 0, 1, 1], [], []>} : vector<64x128xbf16>, vector<128x128xbf16>, vector<64x128xf32> -> vector<64x128xf32>
    %56 = arith.addf %49, %55 : vector<64x128xf32>
    %c0_56 = arith.constant 0 : index
    %c1_57 = arith.constant 1 : index
    %c1_58 = arith.constant 1 : index
    %c0_59 = arith.constant 0 : index
    %57 = vector.load %arg1[%c0_56, %c1_57, %c1_58, %c0_59] : memref<1x9x9x128xbf16, #tpu.memory_space<vmem>>, vector<1x8x8x128xbf16>
    %58 = vector.shape_cast %57 : vector<1x8x8x128xbf16> to vector<8x8x128xbf16>
    %59 = vector.shape_cast %58 : vector<8x8x128xbf16> to vector<64x128xbf16>
    %c8 = arith.constant 8 : index
    %c0_60 = arith.constant 0 : index
    %c0_61 = arith.constant 0 : index
    %60 = vector.load %arg5[%c8, %c0_60, %c0_61] : memref<9x128x128xbf16, #tpu.memory_space<vmem>>, vector<1x128x128xbf16>
    %61 = vector.shape_cast %60 : vector<1x128x128xbf16> to vector<128x128xbf16>
    %cst_62 = arith.constant dense<0.000000e+00> : vector<64x128xf32>
    %62 = tpu.matmul %59, %61, %cst_62 {dimension_numbers = #tpu.dot_dimension_numbers<[1], [0], [0], [1], [0, 0, 1, 1], [], []>} : vector<64x128xbf16>, vector<128x128xbf16>, vector<64x128xf32> -> vector<64x128xf32>
    %63 = arith.addf %56, %62 : vector<64x128xf32>
    %c0_63 = arith.constant 0 : index
    %c0_64 = arith.constant 0 : index
    %64 = vector.load %arg6[%c0_63, %c0_64] : memref<1x128xf32, #tpu.memory_space<vmem>>, vector<1x128xf32>
    %65 = vector.broadcast %64 : vector<1x128xf32> to vector<64x128xf32>
    %66 = arith.addf %63, %65 : vector<64x128xf32>
    %cst_65 = arith.constant 0.000000e+00 : f32
    %67 = vector.broadcast %cst_65 : f32 to vector<64x128xf32>
    %68 = arith.maximumf %66, %67 : vector<64x128xf32>
    %69 = arith.truncf %68 : vector<64x128xf32> to vector<64x128xbf16>
    %c0_66 = arith.constant 0 : index
    %c0_67 = arith.constant 0 : index
    %c0_68 = arith.constant 0 : index
    %70 = vector.load %arg7[%c0_66, %c0_67, %c0_68] : memref<1x64x128xbf16, #tpu.memory_space<vmem>>, vector<1x64x128xbf16>
    %71 = vector.shape_cast %70 : vector<1x64x128xbf16> to vector<64x128xbf16>
    %72 = vector.shape_cast %69 : vector<64x128xbf16> to vector<1x64x128xbf16>
    tpu.vector_store %arg7[%c0_66, %c0_67, %c0_68], %72 {strides = array<i32>} : memref<1x64x128xbf16, #tpu.memory_space<vmem>>, vector<1x64x128xbf16>,
    return
  }
  func.func @transform_0(%arg0: i32) -> (i32, i32, i32, i32) {
    %c0_i32 = arith.constant 0 : i32
    %c0_i32_0 = arith.constant 0 : i32
    %c0_i32_1 = arith.constant 0 : i32
    %c0_i32_2 = arith.constant 0 : i32
    return %arg0, %c0_i32, %c0_i32_0, %c0_i32_1 : i32, i32, i32, i32
  }
  func.func @transform_1(%arg0: i32) -> (i32, i32, i32, i32) {
    %c0_i32 = arith.constant 0 : i32
    %c0_i32_0 = arith.constant 0 : i32
    %c0_i32_1 = arith.constant 0 : i32
    %c0_i32_2 = arith.constant 0 : i32
    return %arg0, %c0_i32, %c0_i32_0, %c0_i32_1 : i32, i32, i32, i32
  }
  func.func @transform_2(%arg0: i32) -> (i32, i32, i32, i32) {
    %c0_i32 = arith.constant 0 : i32
    %c0_i32_0 = arith.constant 0 : i32
    %c0_i32_1 = arith.constant 0 : i32
    %c0_i32_2 = arith.constant 0 : i32
    return %arg0, %c0_i32, %c0_i32_0, %c0_i32_1 : i32, i32, i32, i32
  }
  func.func @transform_3(%arg0: i32) -> (i32, i32, i32, i32) {
    %c0_i32 = arith.constant 0 : i32
    %c0_i32_0 = arith.constant 0 : i32
    %c0_i32_1 = arith.constant 0 : i32
    %c0_i32_2 = arith.constant 0 : i32
    return %arg0, %c0_i32, %c0_i32_0, %c0_i32_1 : i32, i32, i32, i32
  }
  func.func @transform_4(%arg0: i32) -> (i32, i32, i32) {
    %c0_i32 = arith.constant 0 : i32
    %c0_i32_0 = arith.constant 0 : i32
    %c0_i32_1 = arith.constant 0 : i32
    %c0_i32_2 = arith.constant 0 : i32
    return %c0_i32, %c0_i32_0, %c0_i32_1 : i32, i32, i32
  }
  func.func @transform_5(%arg0: i32) -> (i32, i32) {
    %c0_i32 = arith.constant 0 : i32
    %c0_i32_0 = arith.constant 0 : i32
    %c0_i32_1 = arith.constant 0 : i32
    return %c0_i32, %c0_i32_0 : i32, i32
  }
  func.func @transform_6(%arg0: i32) -> (i32, i32, i32) {
    %c0_i32 = arith.constant 0 : i32
    %c0_i32_0 = arith.constant 0 : i32
    %c0_i32_1 = arith.constant 0 : i32
    return %arg0, %c0_i32, %c0_i32_0 : i32, i32, i32
  }
}

module attributes {stable_mosaic.version = 11 : i64} {
  func.func @_conv3x3_kernel(%arg0: i32, %arg1: memref<1x5x5x128xbf16, #tpu.memory_space<vmem>>, %arg2: memref<1x5x5x128xbf16, #tpu.memory_space<vmem>>, %arg3: memref<1x5x5x128xbf16, #tpu.memory_space<vmem>>, %arg4: memref<1x5x5x128xbf16, #tpu.memory_space<vmem>>, %arg5: memref<9x128x128xbf16, #tpu.memory_space<vmem>>, %arg6: memref<1x128xf32, #tpu.memory_space<vmem>>, %arg7: memref<1x16x128xbf16, #tpu.memory_space<vmem>>) attributes {dimension_semantics = [#tpu.dimension_semantics<parallel>], iteration_bounds = array<i64: 2>, scalar_prefetch = 0 : i64, scratch_operands = 0 : i64, tpu.core_type = #tpu.core_type<tc>, window_params = [{transform_indices = @transform_0, window_bounds = array<i64: 1, 5, 5, 128>}, {transform_indices = @transform_1, window_bounds = array<i64: 1, 5, 5, 128>}, {transform_indices = @transform_2, window_bounds = array<i64: 1, 5, 5, 128>}, {transform_indices = @transform_3, window_bounds = array<i64: 1, 5, 5, 128>}, {pipeline_mode = #tpu.pipeline_mode<synchronous>, transform_indices = @transform_4, window_bounds = array<i64: 9, 128, 128>}, {pipeline_mode = #tpu.pipeline_mode<synchronous>, transform_indices = @transform_5, window_bounds = array<i64: 1, 128>}, {transform_indices = @transform_6, window_bounds = array<i64: 1, 16, 128>}]} {
    %cst = arith.constant 0.000000e+00 : f32
    %0 = vector.broadcast %cst : f32 to vector<16x128xf32>
    %c0 = arith.constant 0 : index
    %c0_0 = arith.constant 0 : index
    %c0_1 = arith.constant 0 : index
    %c0_2 = arith.constant 0 : index
    %1 = vector.load %arg1[%c0, %c0_0, %c0_1, %c0_2] : memref<1x5x5x128xbf16, #tpu.memory_space<vmem>>, vector<1x4x4x128xbf16>
    %2 = vector.shape_cast %1 : vector<1x4x4x128xbf16> to vector<4x4x128xbf16>
    %3 = vector.shape_cast %2 : vector<4x4x128xbf16> to vector<16x128xbf16>
    %c0_3 = arith.constant 0 : index
    %c0_4 = arith.constant 0 : index
    %c0_5 = arith.constant 0 : index
    %4 = vector.load %arg5[%c0_3, %c0_4, %c0_5] : memref<9x128x128xbf16, #tpu.memory_space<vmem>>, vector<1x128x128xbf16>
    %5 = vector.shape_cast %4 : vector<1x128x128xbf16> to vector<128x128xbf16>
    %cst_6 = arith.constant dense<0.000000e+00> : vector<16x128xf32>
    %6 = tpu.matmul %3, %5, %cst_6 {dimension_numbers = #tpu.dot_dimension_numbers<[1], [0], [0], [1], [0, 0, 1, 1], [], []>} : vector<16x128xbf16>, vector<128x128xbf16>, vector<16x128xf32> -> vector<16x128xf32>
    %7 = arith.addf %0, %6 : vector<16x128xf32>
    %c0_7 = arith.constant 0 : index
    %c0_8 = arith.constant 0 : index
    %c0_9 = arith.constant 0 : index
    %c0_10 = arith.constant 0 : index
    %8 = vector.load %arg2[%c0_7, %c0_8, %c0_9, %c0_10] : memref<1x5x5x128xbf16, #tpu.memory_space<vmem>>, vector<1x4x4x128xbf16>
    %9 = vector.shape_cast %8 : vector<1x4x4x128xbf16> to vector<4x4x128xbf16>
    %10 = vector.shape_cast %9 : vector<4x4x128xbf16> to vector<16x128xbf16>
    %c1 = arith.constant 1 : index
    %c0_11 = arith.constant 0 : index
    %c0_12 = arith.constant 0 : index
    %11 = vector.load %arg5[%c1, %c0_11, %c0_12] : memref<9x128x128xbf16, #tpu.memory_space<vmem>>, vector<1x128x128xbf16>
    %12 = vector.shape_cast %11 : vector<1x128x128xbf16> to vector<128x128xbf16>
    %cst_13 = arith.constant dense<0.000000e+00> : vector<16x128xf32>
    %13 = tpu.matmul %10, %12, %cst_13 {dimension_numbers = #tpu.dot_dimension_numbers<[1], [0], [0], [1], [0, 0, 1, 1], [], []>} : vector<16x128xbf16>, vector<128x128xbf16>, vector<16x128xf32> -> vector<16x128xf32>
    %14 = arith.addf %7, %13 : vector<16x128xf32>
    %c0_14 = arith.constant 0 : index
    %c0_15 = arith.constant 0 : index
    %c1_16 = arith.constant 1 : index
    %c0_17 = arith.constant 0 : index
    %15 = vector.load %arg1[%c0_14, %c0_15, %c1_16, %c0_17] : memref<1x5x5x128xbf16, #tpu.memory_space<vmem>>, vector<1x4x4x128xbf16>
    %16 = vector.shape_cast %15 : vector<1x4x4x128xbf16> to vector<4x4x128xbf16>
    %17 = vector.shape_cast %16 : vector<4x4x128xbf16> to vector<16x128xbf16>
    %c2 = arith.constant 2 : index
    %c0_18 = arith.constant 0 : index
    %c0_19 = arith.constant 0 : index
    %18 = vector.load %arg5[%c2, %c0_18, %c0_19] : memref<9x128x128xbf16, #tpu.memory_space<vmem>>, vector<1x128x128xbf16>
    %19 = vector.shape_cast %18 : vector<1x128x128xbf16> to vector<128x128xbf16>
    %cst_20 = arith.constant dense<0.000000e+00> : vector<16x128xf32>
    %20 = tpu.matmul %17, %19, %cst_20 {dimension_numbers = #tpu.dot_dimension_numbers<[1], [0], [0], [1], [0, 0, 1, 1], [], []>} : vector<16x128xbf16>, vector<128x128xbf16>, vector<16x128xf32> -> vector<16x128xf32>
    %21 = arith.addf %14, %20 : vector<16x128xf32>
    %c0_21 = arith.constant 0 : index
    %c0_22 = arith.constant 0 : index
    %c0_23 = arith.constant 0 : index
    %c0_24 = arith.constant 0 : index
    %22 = vector.load %arg3[%c0_21, %c0_22, %c0_23, %c0_24] : memref<1x5x5x128xbf16, #tpu.memory_space<vmem>>, vector<1x4x4x128xbf16>
    %23 = vector.shape_cast %22 : vector<1x4x4x128xbf16> to vector<4x4x128xbf16>
    %24 = vector.shape_cast %23 : vector<4x4x128xbf16> to vector<16x128xbf16>
    %c3 = arith.constant 3 : index
    %c0_25 = arith.constant 0 : index
    %c0_26 = arith.constant 0 : index
    %25 = vector.load %arg5[%c3, %c0_25, %c0_26] : memref<9x128x128xbf16, #tpu.memory_space<vmem>>, vector<1x128x128xbf16>
    %26 = vector.shape_cast %25 : vector<1x128x128xbf16> to vector<128x128xbf16>
    %cst_27 = arith.constant dense<0.000000e+00> : vector<16x128xf32>
    %27 = tpu.matmul %24, %26, %cst_27 {dimension_numbers = #tpu.dot_dimension_numbers<[1], [0], [0], [1], [0, 0, 1, 1], [], []>} : vector<16x128xbf16>, vector<128x128xbf16>, vector<16x128xf32> -> vector<16x128xf32>
    %28 = arith.addf %21, %27 : vector<16x128xf32>
    %c0_28 = arith.constant 0 : index
    %c0_29 = arith.constant 0 : index
    %c0_30 = arith.constant 0 : index
    %c0_31 = arith.constant 0 : index
    %29 = vector.load %arg4[%c0_28, %c0_29, %c0_30, %c0_31] : memref<1x5x5x128xbf16, #tpu.memory_space<vmem>>, vector<1x4x4x128xbf16>
    %30 = vector.shape_cast %29 : vector<1x4x4x128xbf16> to vector<4x4x128xbf16>
    %31 = vector.shape_cast %30 : vector<4x4x128xbf16> to vector<16x128xbf16>
    %c4 = arith.constant 4 : index
    %c0_32 = arith.constant 0 : index
    %c0_33 = arith.constant 0 : index
    %32 = vector.load %arg5[%c4, %c0_32, %c0_33] : memref<9x128x128xbf16, #tpu.memory_space<vmem>>, vector<1x128x128xbf16>
    %33 = vector.shape_cast %32 : vector<1x128x128xbf16> to vector<128x128xbf16>
    %cst_34 = arith.constant dense<0.000000e+00> : vector<16x128xf32>
    %34 = tpu.matmul %31, %33, %cst_34 {dimension_numbers = #tpu.dot_dimension_numbers<[1], [0], [0], [1], [0, 0, 1, 1], [], []>} : vector<16x128xbf16>, vector<128x128xbf16>, vector<16x128xf32> -> vector<16x128xf32>
    %35 = arith.addf %28, %34 : vector<16x128xf32>
    %c0_35 = arith.constant 0 : index
    %c0_36 = arith.constant 0 : index
    %c1_37 = arith.constant 1 : index
    %c0_38 = arith.constant 0 : index
    %36 = vector.load %arg3[%c0_35, %c0_36, %c1_37, %c0_38] : memref<1x5x5x128xbf16, #tpu.memory_space<vmem>>, vector<1x4x4x128xbf16>
    %37 = vector.shape_cast %36 : vector<1x4x4x128xbf16> to vector<4x4x128xbf16>
    %38 = vector.shape_cast %37 : vector<4x4x128xbf16> to vector<16x128xbf16>
    %c5 = arith.constant 5 : index
    %c0_39 = arith.constant 0 : index
    %c0_40 = arith.constant 0 : index
    %39 = vector.load %arg5[%c5, %c0_39, %c0_40] : memref<9x128x128xbf16, #tpu.memory_space<vmem>>, vector<1x128x128xbf16>
    %40 = vector.shape_cast %39 : vector<1x128x128xbf16> to vector<128x128xbf16>
    %cst_41 = arith.constant dense<0.000000e+00> : vector<16x128xf32>
    %41 = tpu.matmul %38, %40, %cst_41 {dimension_numbers = #tpu.dot_dimension_numbers<[1], [0], [0], [1], [0, 0, 1, 1], [], []>} : vector<16x128xbf16>, vector<128x128xbf16>, vector<16x128xf32> -> vector<16x128xf32>
    %42 = arith.addf %35, %41 : vector<16x128xf32>
    %c0_42 = arith.constant 0 : index
    %c1_43 = arith.constant 1 : index
    %c0_44 = arith.constant 0 : index
    %c0_45 = arith.constant 0 : index
    %43 = vector.load %arg1[%c0_42, %c1_43, %c0_44, %c0_45] : memref<1x5x5x128xbf16, #tpu.memory_space<vmem>>, vector<1x4x4x128xbf16>
    %44 = vector.shape_cast %43 : vector<1x4x4x128xbf16> to vector<4x4x128xbf16>
    %45 = vector.shape_cast %44 : vector<4x4x128xbf16> to vector<16x128xbf16>
    %c6 = arith.constant 6 : index
    %c0_46 = arith.constant 0 : index
    %c0_47 = arith.constant 0 : index
    %46 = vector.load %arg5[%c6, %c0_46, %c0_47] : memref<9x128x128xbf16, #tpu.memory_space<vmem>>, vector<1x128x128xbf16>
    %47 = vector.shape_cast %46 : vector<1x128x128xbf16> to vector<128x128xbf16>
    %cst_48 = arith.constant dense<0.000000e+00> : vector<16x128xf32>
    %48 = tpu.matmul %45, %47, %cst_48 {dimension_numbers = #tpu.dot_dimension_numbers<[1], [0], [0], [1], [0, 0, 1, 1], [], []>} : vector<16x128xbf16>, vector<128x128xbf16>, vector<16x128xf32> -> vector<16x128xf32>
    %49 = arith.addf %42, %48 : vector<16x128xf32>
    %c0_49 = arith.constant 0 : index
    %c1_50 = arith.constant 1 : index
    %c0_51 = arith.constant 0 : index
    %c0_52 = arith.constant 0 : index
    %50 = vector.load %arg2[%c0_49, %c1_50, %c0_51, %c0_52] : memref<1x5x5x128xbf16, #tpu.memory_space<vmem>>, vector<1x4x4x128xbf16>
    %51 = vector.shape_cast %50 : vector<1x4x4x128xbf16> to vector<4x4x128xbf16>
    %52 = vector.shape_cast %51 : vector<4x4x128xbf16> to vector<16x128xbf16>
    %c7 = arith.constant 7 : index
    %c0_53 = arith.constant 0 : index
    %c0_54 = arith.constant 0 : index
    %53 = vector.load %arg5[%c7, %c0_53, %c0_54] : memref<9x128x128xbf16, #tpu.memory_space<vmem>>, vector<1x128x128xbf16>
    %54 = vector.shape_cast %53 : vector<1x128x128xbf16> to vector<128x128xbf16>
    %cst_55 = arith.constant dense<0.000000e+00> : vector<16x128xf32>
    %55 = tpu.matmul %52, %54, %cst_55 {dimension_numbers = #tpu.dot_dimension_numbers<[1], [0], [0], [1], [0, 0, 1, 1], [], []>} : vector<16x128xbf16>, vector<128x128xbf16>, vector<16x128xf32> -> vector<16x128xf32>
    %56 = arith.addf %49, %55 : vector<16x128xf32>
    %c0_56 = arith.constant 0 : index
    %c1_57 = arith.constant 1 : index
    %c1_58 = arith.constant 1 : index
    %c0_59 = arith.constant 0 : index
    %57 = vector.load %arg1[%c0_56, %c1_57, %c1_58, %c0_59] : memref<1x5x5x128xbf16, #tpu.memory_space<vmem>>, vector<1x4x4x128xbf16>
    %58 = vector.shape_cast %57 : vector<1x4x4x128xbf16> to vector<4x4x128xbf16>
    %59 = vector.shape_cast %58 : vector<4x4x128xbf16> to vector<16x128xbf16>
    %c8 = arith.constant 8 : index
    %c0_60 = arith.constant 0 : index
    %c0_61 = arith.constant 0 : index
    %60 = vector.load %arg5[%c8, %c0_60, %c0_61] : memref<9x128x128xbf16, #tpu.memory_space<vmem>>, vector<1x128x128xbf16>
    %61 = vector.shape_cast %60 : vector<1x128x128xbf16> to vector<128x128xbf16>
    %cst_62 = arith.constant dense<0.000000e+00> : vector<16x128xf32>
    %62 = tpu.matmul %59, %61, %cst_62 {dimension_numbers = #tpu.dot_dimension_numbers<[1], [0], [0], [1], [0, 0, 1, 1], [], []>} : vector<16x128xbf16>, vector<128x128xbf16>, vector<16x128xf32> -> vector<16x128xf32>
    %63 = arith.addf %56, %62 : vector<16x128xf32>
    %c0_63 = arith.constant 0 : index
    %c0_64 = arith.constant 0 : index
    %64 = vector.load %arg6[%c0_63, %c0_64] : memref<1x128xf32, #tpu.memory_space<vmem>>, vector<1x128xf32>
    %65 = vector.broadcast %64 : vector<1x128xf32> to vector<16x128xf32>
    %66 = arith.addf %63, %65 : vector<16x128xf32>
    %cst_65 = arith.constant 0.000000e+00 : f32
    %67 = vector.broadcast %cst_65 : f32 to vector<16x128xf32>
    %68 = arith.maximumf %66, %67 : vector<16x128xf32>
    %69 = arith.truncf %68 : vector<16x128xf32> to vector<16x128xbf16>
    %c0_66 = arith.constant 0 : index
    %c0_67 = arith.constant 0 : index
    %c0_68 = arith.constant 0 : index
    %70 = vector.load %arg7[%c0_66, %c0_67, %c0_68] : memref<1x16x128xbf16, #tpu.memory_space<vmem>>, vector<1x16x128xbf16>
    %71 = vector.shape_cast %70 : vector<1x16x128xbf16> to vector<16x128xbf16>
    %72 = vector.shape_cast %69 : vector<16x128xbf16> to vector<1x16x128xbf16>
    tpu.vector_store %arg7[%c0_66, %c0_67, %c0_68], %72 {strides = array<i32>} : memref<1x16x128xbf16, #tpu.memory_space<vmem>>, vector<1x16x128xbf16>,
    return
  }
  func.func @transform_0(%arg0: i32) -> (i32, i32, i32, i32) {
    %c0_i32 = arith.constant 0 : i32
    %c0_i32_0 = arith.constant 0 : i32
    %c0_i32_1 = arith.constant 0 : i32
    %c0_i32_2 = arith.constant 0 : i32
    return %arg0, %c0_i32, %c0_i32_0, %c0_i32_1 : i32, i32, i32, i32
  }
  func.func @transform_1(%arg0: i32) -> (i32, i32, i32, i32) {
    %c0_i32 = arith.constant 0 : i32
    %c0_i32_0 = arith.constant 0 : i32
    %c0_i32_1 = arith.constant 0 : i32
    %c0_i32_2 = arith.constant 0 : i32
    return %arg0, %c0_i32, %c0_i32_0, %c0_i32_1 : i32, i32, i32, i32
  }
  func.func @transform_2(%arg0: i32) -> (i32, i32, i32, i32) {
    %c0_i32 = arith.constant 0 : i32
    %c0_i32_0 = arith.constant 0 : i32
    %c0_i32_1 = arith.constant 0 : i32
    %c0_i32_2 = arith.constant 0 : i32
    return %arg0, %c0_i32, %c0_i32_0, %c0_i32_1 : i32, i32, i32, i32
  }
  func.func @transform_3(%arg0: i32) -> (i32, i32, i32, i32) {
    %c0_i32 = arith.constant 0 : i32
    %c0_i32_0 = arith.constant 0 : i32
    %c0_i32_1 = arith.constant 0 : i32
    %c0_i32_2 = arith.constant 0 : i32
    return %arg0, %c0_i32, %c0_i32_0, %c0_i32_1 : i32, i32, i32, i32
  }
  func.func @transform_4(%arg0: i32) -> (i32, i32, i32) {
    %c0_i32 = arith.constant 0 : i32
    %c0_i32_0 = arith.constant 0 : i32
    %c0_i32_1 = arith.constant 0 : i32
    %c0_i32_2 = arith.constant 0 : i32
    return %c0_i32, %c0_i32_0, %c0_i32_1 : i32, i32, i32
  }
  func.func @transform_5(%arg0: i32) -> (i32, i32) {
    %c0_i32 = arith.constant 0 : i32
    %c0_i32_0 = arith.constant 0 : i32
    %c0_i32_1 = arith.constant 0 : i32
    return %c0_i32, %c0_i32_0 : i32, i32
  }
  func.func @transform_6(%arg0: i32) -> (i32, i32, i32) {
    %c0_i32 = arith.constant 0 : i32
    %c0_i32_0 = arith.constant 0 : i32
    %c0_i32_1 = arith.constant 0 : i32
    return %arg0, %c0_i32, %c0_i32_0 : i32, i32, i32
  }
}

module attributes {stable_mosaic.version = 11 : i64} {
  func.func @_conv3x3_kernel(%arg0: i32, %arg1: memref<1x3x3x128xbf16, #tpu.memory_space<vmem>>, %arg2: memref<1x3x3x128xbf16, #tpu.memory_space<vmem>>, %arg3: memref<1x3x3x128xbf16, #tpu.memory_space<vmem>>, %arg4: memref<1x3x3x128xbf16, #tpu.memory_space<vmem>>, %arg5: memref<9x128x256xbf16, #tpu.memory_space<vmem>>, %arg6: memref<1x256xf32, #tpu.memory_space<vmem>>, %arg7: memref<1x4x256xbf16, #tpu.memory_space<vmem>>) attributes {dimension_semantics = [#tpu.dimension_semantics<parallel>], iteration_bounds = array<i64: 2>, scalar_prefetch = 0 : i64, scratch_operands = 0 : i64, tpu.core_type = #tpu.core_type<tc>, window_params = [{transform_indices = @transform_0, window_bounds = array<i64: 1, 3, 3, 128>}, {transform_indices = @transform_1, window_bounds = array<i64: 1, 3, 3, 128>}, {transform_indices = @transform_2, window_bounds = array<i64: 1, 3, 3, 128>}, {transform_indices = @transform_3, window_bounds = array<i64: 1, 3, 3, 128>}, {pipeline_mode = #tpu.pipeline_mode<synchronous>, transform_indices = @transform_4, window_bounds = array<i64: 9, 128, 256>}, {pipeline_mode = #tpu.pipeline_mode<synchronous>, transform_indices = @transform_5, window_bounds = array<i64: 1, 256>}, {transform_indices = @transform_6, window_bounds = array<i64: 1, 4, 256>}]} {
    %cst = arith.constant 0.000000e+00 : f32
    %0 = vector.broadcast %cst : f32 to vector<4x256xf32>
    %c0 = arith.constant 0 : index
    %c0_0 = arith.constant 0 : index
    %c0_1 = arith.constant 0 : index
    %c0_2 = arith.constant 0 : index
    %1 = vector.load %arg1[%c0, %c0_0, %c0_1, %c0_2] : memref<1x3x3x128xbf16, #tpu.memory_space<vmem>>, vector<1x2x2x128xbf16>
    %2 = vector.shape_cast %1 : vector<1x2x2x128xbf16> to vector<2x2x128xbf16>
    %3 = vector.shape_cast %2 : vector<2x2x128xbf16> to vector<4x128xbf16>
    %c0_3 = arith.constant 0 : index
    %c0_4 = arith.constant 0 : index
    %c0_5 = arith.constant 0 : index
    %4 = vector.load %arg5[%c0_3, %c0_4, %c0_5] : memref<9x128x256xbf16, #tpu.memory_space<vmem>>, vector<1x128x256xbf16>
    %5 = vector.shape_cast %4 : vector<1x128x256xbf16> to vector<128x256xbf16>
    %cst_6 = arith.constant dense<0.000000e+00> : vector<4x256xf32>
    %6 = tpu.matmul %3, %5, %cst_6 {dimension_numbers = #tpu.dot_dimension_numbers<[1], [0], [0], [1], [0, 0, 1, 1], [], []>} : vector<4x128xbf16>, vector<128x256xbf16>, vector<4x256xf32> -> vector<4x256xf32>
    %7 = arith.addf %0, %6 : vector<4x256xf32>
    %c0_7 = arith.constant 0 : index
    %c0_8 = arith.constant 0 : index
    %c0_9 = arith.constant 0 : index
    %c0_10 = arith.constant 0 : index
    %8 = vector.load %arg2[%c0_7, %c0_8, %c0_9, %c0_10] : memref<1x3x3x128xbf16, #tpu.memory_space<vmem>>, vector<1x2x2x128xbf16>
    %9 = vector.shape_cast %8 : vector<1x2x2x128xbf16> to vector<2x2x128xbf16>
    %10 = vector.shape_cast %9 : vector<2x2x128xbf16> to vector<4x128xbf16>
    %c1 = arith.constant 1 : index
    %c0_11 = arith.constant 0 : index
    %c0_12 = arith.constant 0 : index
    %11 = vector.load %arg5[%c1, %c0_11, %c0_12] : memref<9x128x256xbf16, #tpu.memory_space<vmem>>, vector<1x128x256xbf16>
    %12 = vector.shape_cast %11 : vector<1x128x256xbf16> to vector<128x256xbf16>
    %cst_13 = arith.constant dense<0.000000e+00> : vector<4x256xf32>
    %13 = tpu.matmul %10, %12, %cst_13 {dimension_numbers = #tpu.dot_dimension_numbers<[1], [0], [0], [1], [0, 0, 1, 1], [], []>} : vector<4x128xbf16>, vector<128x256xbf16>, vector<4x256xf32> -> vector<4x256xf32>
    %14 = arith.addf %7, %13 : vector<4x256xf32>
    %c0_14 = arith.constant 0 : index
    %c0_15 = arith.constant 0 : index
    %c1_16 = arith.constant 1 : index
    %c0_17 = arith.constant 0 : index
    %15 = vector.load %arg1[%c0_14, %c0_15, %c1_16, %c0_17] : memref<1x3x3x128xbf16, #tpu.memory_space<vmem>>, vector<1x2x2x128xbf16>
    %16 = vector.shape_cast %15 : vector<1x2x2x128xbf16> to vector<2x2x128xbf16>
    %17 = vector.shape_cast %16 : vector<2x2x128xbf16> to vector<4x128xbf16>
    %c2 = arith.constant 2 : index
    %c0_18 = arith.constant 0 : index
    %c0_19 = arith.constant 0 : index
    %18 = vector.load %arg5[%c2, %c0_18, %c0_19] : memref<9x128x256xbf16, #tpu.memory_space<vmem>>, vector<1x128x256xbf16>
    %19 = vector.shape_cast %18 : vector<1x128x256xbf16> to vector<128x256xbf16>
    %cst_20 = arith.constant dense<0.000000e+00> : vector<4x256xf32>
    %20 = tpu.matmul %17, %19, %cst_20 {dimension_numbers = #tpu.dot_dimension_numbers<[1], [0], [0], [1], [0, 0, 1, 1], [], []>} : vector<4x128xbf16>, vector<128x256xbf16>, vector<4x256xf32> -> vector<4x256xf32>
    %21 = arith.addf %14, %20 : vector<4x256xf32>
    %c0_21 = arith.constant 0 : index
    %c0_22 = arith.constant 0 : index
    %c0_23 = arith.constant 0 : index
    %c0_24 = arith.constant 0 : index
    %22 = vector.load %arg3[%c0_21, %c0_22, %c0_23, %c0_24] : memref<1x3x3x128xbf16, #tpu.memory_space<vmem>>, vector<1x2x2x128xbf16>
    %23 = vector.shape_cast %22 : vector<1x2x2x128xbf16> to vector<2x2x128xbf16>
    %24 = vector.shape_cast %23 : vector<2x2x128xbf16> to vector<4x128xbf16>
    %c3 = arith.constant 3 : index
    %c0_25 = arith.constant 0 : index
    %c0_26 = arith.constant 0 : index
    %25 = vector.load %arg5[%c3, %c0_25, %c0_26] : memref<9x128x256xbf16, #tpu.memory_space<vmem>>, vector<1x128x256xbf16>
    %26 = vector.shape_cast %25 : vector<1x128x256xbf16> to vector<128x256xbf16>
    %cst_27 = arith.constant dense<0.000000e+00> : vector<4x256xf32>
    %27 = tpu.matmul %24, %26, %cst_27 {dimension_numbers = #tpu.dot_dimension_numbers<[1], [0], [0], [1], [0, 0, 1, 1], [], []>} : vector<4x128xbf16>, vector<128x256xbf16>, vector<4x256xf32> -> vector<4x256xf32>
    %28 = arith.addf %21, %27 : vector<4x256xf32>
    %c0_28 = arith.constant 0 : index
    %c0_29 = arith.constant 0 : index
    %c0_30 = arith.constant 0 : index
    %c0_31 = arith.constant 0 : index
    %29 = vector.load %arg4[%c0_28, %c0_29, %c0_30, %c0_31] : memref<1x3x3x128xbf16, #tpu.memory_space<vmem>>, vector<1x2x2x128xbf16>
    %30 = vector.shape_cast %29 : vector<1x2x2x128xbf16> to vector<2x2x128xbf16>
    %31 = vector.shape_cast %30 : vector<2x2x128xbf16> to vector<4x128xbf16>
    %c4 = arith.constant 4 : index
    %c0_32 = arith.constant 0 : index
    %c0_33 = arith.constant 0 : index
    %32 = vector.load %arg5[%c4, %c0_32, %c0_33] : memref<9x128x256xbf16, #tpu.memory_space<vmem>>, vector<1x128x256xbf16>
    %33 = vector.shape_cast %32 : vector<1x128x256xbf16> to vector<128x256xbf16>
    %cst_34 = arith.constant dense<0.000000e+00> : vector<4x256xf32>
    %34 = tpu.matmul %31, %33, %cst_34 {dimension_numbers = #tpu.dot_dimension_numbers<[1], [0], [0], [1], [0, 0, 1, 1], [], []>} : vector<4x128xbf16>, vector<128x256xbf16>, vector<4x256xf32> -> vector<4x256xf32>
    %35 = arith.addf %28, %34 : vector<4x256xf32>
    %c0_35 = arith.constant 0 : index
    %c0_36 = arith.constant 0 : index
    %c1_37 = arith.constant 1 : index
    %c0_38 = arith.constant 0 : index
    %36 = vector.load %arg3[%c0_35, %c0_36, %c1_37, %c0_38] : memref<1x3x3x128xbf16, #tpu.memory_space<vmem>>, vector<1x2x2x128xbf16>
    %37 = vector.shape_cast %36 : vector<1x2x2x128xbf16> to vector<2x2x128xbf16>
    %38 = vector.shape_cast %37 : vector<2x2x128xbf16> to vector<4x128xbf16>
    %c5 = arith.constant 5 : index
    %c0_39 = arith.constant 0 : index
    %c0_40 = arith.constant 0 : index
    %39 = vector.load %arg5[%c5, %c0_39, %c0_40] : memref<9x128x256xbf16, #tpu.memory_space<vmem>>, vector<1x128x256xbf16>
    %40 = vector.shape_cast %39 : vector<1x128x256xbf16> to vector<128x256xbf16>
    %cst_41 = arith.constant dense<0.000000e+00> : vector<4x256xf32>
    %41 = tpu.matmul %38, %40, %cst_41 {dimension_numbers = #tpu.dot_dimension_numbers<[1], [0], [0], [1], [0, 0, 1, 1], [], []>} : vector<4x128xbf16>, vector<128x256xbf16>, vector<4x256xf32> -> vector<4x256xf32>
    %42 = arith.addf %35, %41 : vector<4x256xf32>
    %c0_42 = arith.constant 0 : index
    %c1_43 = arith.constant 1 : index
    %c0_44 = arith.constant 0 : index
    %c0_45 = arith.constant 0 : index
    %43 = vector.load %arg1[%c0_42, %c1_43, %c0_44, %c0_45] : memref<1x3x3x128xbf16, #tpu.memory_space<vmem>>, vector<1x2x2x128xbf16>
    %44 = vector.shape_cast %43 : vector<1x2x2x128xbf16> to vector<2x2x128xbf16>
    %45 = vector.shape_cast %44 : vector<2x2x128xbf16> to vector<4x128xbf16>
    %c6 = arith.constant 6 : index
    %c0_46 = arith.constant 0 : index
    %c0_47 = arith.constant 0 : index
    %46 = vector.load %arg5[%c6, %c0_46, %c0_47] : memref<9x128x256xbf16, #tpu.memory_space<vmem>>, vector<1x128x256xbf16>
    %47 = vector.shape_cast %46 : vector<1x128x256xbf16> to vector<128x256xbf16>
    %cst_48 = arith.constant dense<0.000000e+00> : vector<4x256xf32>
    %48 = tpu.matmul %45, %47, %cst_48 {dimension_numbers = #tpu.dot_dimension_numbers<[1], [0], [0], [1], [0, 0, 1, 1], [], []>} : vector<4x128xbf16>, vector<128x256xbf16>, vector<4x256xf32> -> vector<4x256xf32>
    %49 = arith.addf %42, %48 : vector<4x256xf32>
    %c0_49 = arith.constant 0 : index
    %c1_50 = arith.constant 1 : index
    %c0_51 = arith.constant 0 : index
    %c0_52 = arith.constant 0 : index
    %50 = vector.load %arg2[%c0_49, %c1_50, %c0_51, %c0_52] : memref<1x3x3x128xbf16, #tpu.memory_space<vmem>>, vector<1x2x2x128xbf16>
    %51 = vector.shape_cast %50 : vector<1x2x2x128xbf16> to vector<2x2x128xbf16>
    %52 = vector.shape_cast %51 : vector<2x2x128xbf16> to vector<4x128xbf16>
    %c7 = arith.constant 7 : index
    %c0_53 = arith.constant 0 : index
    %c0_54 = arith.constant 0 : index
    %53 = vector.load %arg5[%c7, %c0_53, %c0_54] : memref<9x128x256xbf16, #tpu.memory_space<vmem>>, vector<1x128x256xbf16>
    %54 = vector.shape_cast %53 : vector<1x128x256xbf16> to vector<128x256xbf16>
    %cst_55 = arith.constant dense<0.000000e+00> : vector<4x256xf32>
    %55 = tpu.matmul %52, %54, %cst_55 {dimension_numbers = #tpu.dot_dimension_numbers<[1], [0], [0], [1], [0, 0, 1, 1], [], []>} : vector<4x128xbf16>, vector<128x256xbf16>, vector<4x256xf32> -> vector<4x256xf32>
    %56 = arith.addf %49, %55 : vector<4x256xf32>
    %c0_56 = arith.constant 0 : index
    %c1_57 = arith.constant 1 : index
    %c1_58 = arith.constant 1 : index
    %c0_59 = arith.constant 0 : index
    %57 = vector.load %arg1[%c0_56, %c1_57, %c1_58, %c0_59] : memref<1x3x3x128xbf16, #tpu.memory_space<vmem>>, vector<1x2x2x128xbf16>
    %58 = vector.shape_cast %57 : vector<1x2x2x128xbf16> to vector<2x2x128xbf16>
    %59 = vector.shape_cast %58 : vector<2x2x128xbf16> to vector<4x128xbf16>
    %c8 = arith.constant 8 : index
    %c0_60 = arith.constant 0 : index
    %c0_61 = arith.constant 0 : index
    %60 = vector.load %arg5[%c8, %c0_60, %c0_61] : memref<9x128x256xbf16, #tpu.memory_space<vmem>>, vector<1x128x256xbf16>
    %61 = vector.shape_cast %60 : vector<1x128x256xbf16> to vector<128x256xbf16>
    %cst_62 = arith.constant dense<0.000000e+00> : vector<4x256xf32>
    %62 = tpu.matmul %59, %61, %cst_62 {dimension_numbers = #tpu.dot_dimension_numbers<[1], [0], [0], [1], [0, 0, 1, 1], [], []>} : vector<4x128xbf16>, vector<128x256xbf16>, vector<4x256xf32> -> vector<4x256xf32>
    %63 = arith.addf %56, %62 : vector<4x256xf32>
    %c0_63 = arith.constant 0 : index
    %c0_64 = arith.constant 0 : index
    %64 = vector.load %arg6[%c0_63, %c0_64] : memref<1x256xf32, #tpu.memory_space<vmem>>, vector<1x256xf32>
    %65 = vector.broadcast %64 : vector<1x256xf32> to vector<4x256xf32>
    %66 = arith.addf %63, %65 : vector<4x256xf32>
    %67 = arith.truncf %66 : vector<4x256xf32> to vector<4x256xbf16>
    %c0_65 = arith.constant 0 : index
    %c0_66 = arith.constant 0 : index
    %c0_67 = arith.constant 0 : index
    %68 = vector.load %arg7[%c0_65, %c0_66, %c0_67] : memref<1x4x256xbf16, #tpu.memory_space<vmem>>, vector<1x4x256xbf16>
    %69 = vector.shape_cast %68 : vector<1x4x256xbf16> to vector<4x256xbf16>
    %70 = vector.shape_cast %67 : vector<4x256xbf16> to vector<1x4x256xbf16>
    tpu.vector_store %arg7[%c0_65, %c0_66, %c0_67], %70 {strides = array<i32>} : memref<1x4x256xbf16, #tpu.memory_space<vmem>>, vector<1x4x256xbf16>,
    return
  }
  func.func @transform_0(%arg0: i32) -> (i32, i32, i32, i32) {
    %c0_i32 = arith.constant 0 : i32
    %c0_i32_0 = arith.constant 0 : i32
    %c0_i32_1 = arith.constant 0 : i32
    %c0_i32_2 = arith.constant 0 : i32
    return %arg0, %c0_i32, %c0_i32_0, %c0_i32_1 : i32, i32, i32, i32
  }
  func.func @transform_1(%arg0: i32) -> (i32, i32, i32, i32) {
    %c0_i32 = arith.constant 0 : i32
    %c0_i32_0 = arith.constant 0 : i32
    %c0_i32_1 = arith.constant 0 : i32
    %c0_i32_2 = arith.constant 0 : i32
    return %arg0, %c0_i32, %c0_i32_0, %c0_i32_1 : i32, i32, i32, i32
  }
  func.func @transform_2(%arg0: i32) -> (i32, i32, i32, i32) {
    %c0_i32 = arith.constant 0 : i32
    %c0_i32_0 = arith.constant 0 : i32
    %c0_i32_1 = arith.constant 0 : i32
    %c0_i32_2 = arith.constant 0 : i32
    return %arg0, %c0_i32, %c0_i32_0, %c0_i32_1 : i32, i32, i32, i32
  }
  func.func @transform_3(%arg0: i32) -> (i32, i32, i32, i32) {
    %c0_i32 = arith.constant 0 : i32
    %c0_i32_0 = arith.constant 0 : i32
    %c0_i32_1 = arith.constant 0 : i32
    %c0_i32_2 = arith.constant 0 : i32
    return %arg0, %c0_i32, %c0_i32_0, %c0_i32_1 : i32, i32, i32, i32
  }
  func.func @transform_4(%arg0: i32) -> (i32, i32, i32) {
    %c0_i32 = arith.constant 0 : i32
    %c0_i32_0 = arith.constant 0 : i32
    %c0_i32_1 = arith.constant 0 : i32
    %c0_i32_2 = arith.constant 0 : i32
    return %c0_i32, %c0_i32_0, %c0_i32_1 : i32, i32, i32
  }
  func.func @transform_5(%arg0: i32) -> (i32, i32) {
    %c0_i32 = arith.constant 0 : i32
    %c0_i32_0 = arith.constant 0 : i32
    %c0_i32_1 = arith.constant 0 : i32
    return %c0_i32, %c0_i32_0 : i32, i32
  }
  func.func @transform_6(%arg0: i32) -> (i32, i32, i32) {
    %c0_i32 = arith.constant 0 : i32
    %c0_i32_0 = arith.constant 0 : i32
    %c0_i32_1 = arith.constant 0 : i32
    return %arg0, %c0_i32, %c0_i32_0 : i32, i32, i32
  }
}

module attributes {stable_mosaic.version = 11 : i64} {
  func.func @_fc_kernel(%arg0: i32, %arg1: memref<2x512xbf16, #tpu.memory_space<vmem>>, %arg2: memref<512x32xbf16, #tpu.memory_space<vmem>>, %arg3: memref<1x32xf32, #tpu.memory_space<vmem>>, %arg4: memref<2x32xf32, #tpu.memory_space<vmem>>, %arg5: memref<2x32xf32, #tpu.memory_space<vmem>>) attributes {dimension_semantics = [#tpu.dimension_semantics<arbitrary>], iteration_bounds = array<i64: 2>, scalar_prefetch = 0 : i64, scratch_operands = 1 : i64, tpu.core_type = #tpu.core_type<tc>, window_params = [{transform_indices = @transform_0, window_bounds = array<i64: 2, 512>}, {transform_indices = @transform_1, window_bounds = array<i64: 512, 32>}, {pipeline_mode = #tpu.pipeline_mode<synchronous>, transform_indices = @transform_2, window_bounds = array<i64: 1, 32>}, {pipeline_mode = #tpu.pipeline_mode<synchronous>, transform_indices = @transform_3, window_bounds = array<i64: 2, 32>}]} {
    %c0_i32 = arith.constant 0 : i32
    %0 = arith.cmpi eq, %arg0, %c0_i32 : i32
    %1 = arith.extui %0 : i1 to i32
    %c0_i32_0 = arith.constant 0 : i32
    %2 = arith.cmpi ne, %1, %c0_i32_0 : i32
    scf.if %2 {
      %cst_9 = arith.constant 0.000000e+00 : f32
      %12 = vector.broadcast %cst_9 : f32 to vector<2x32xf32>
      %c0_10 = arith.constant 0 : index
      %c0_11 = arith.constant 0 : index
      %13 = vector.load %arg5[%c0_10, %c0_11] : memref<2x32xf32, #tpu.memory_space<vmem>>, vector<2x32xf32>
      tpu.vector_store %arg5[%c0_10, %c0_11], %12 {strides = array<i32>} : memref<2x32xf32, #tpu.memory_space<vmem>>, vector<2x32xf32>,
    } else {
    }
    %c0 = arith.constant 0 : index
    %c0_1 = arith.constant 0 : index
    %3 = vector.load %arg5[%c0, %c0_1] : memref<2x32xf32, #tpu.memory_space<vmem>>, vector<2x32xf32>
    %c0_2 = arith.constant 0 : index
    %c0_3 = arith.constant 0 : index
    %4 = vector.load %arg1[%c0_2, %c0_3] : memref<2x512xbf16, #tpu.memory_space<vmem>>, vector<2x512xbf16>
    %c0_4 = arith.constant 0 : index
    %c0_5 = arith.constant 0 : index
    %5 = vector.load %arg2[%c0_4, %c0_5] : memref<512x32xbf16, #tpu.memory_space<vmem>>, vector<512x32xbf16>
    %cst = arith.constant dense<0.000000e+00> : vector<2x32xf32>
    %6 = tpu.matmul %4, %5, %cst {dimension_numbers = #tpu.dot_dimension_numbers<[1], [0], [0], [1], [0, 0, 1, 1], [], []>} : vector<2x512xbf16>, vector<512x32xbf16>, vector<2x32xf32> -> vector<2x32xf32>
    %7 = arith.addf %3, %6 : vector<2x32xf32>
    %c0_6 = arith.constant 0 : index
    %c0_7 = arith.constant 0 : index
    %8 = vector.load %arg5[%c0_6, %c0_7] : memref<2x32xf32, #tpu.memory_space<vmem>>, vector<2x32xf32>
    tpu.vector_store %arg5[%c0_6, %c0_7], %7 {strides = array<i32>} : memref<2x32xf32, #tpu.memory_space<vmem>>, vector<2x32xf32>,
    %c1_i32 = arith.constant 1 : i32
    %9 = arith.cmpi eq, %arg0, %c1_i32 : i32
    %10 = arith.extui %9 : i1 to i32
    %c0_i32_8 = arith.constant 0 : i32
    %11 = arith.cmpi ne, %10, %c0_i32_8 : i32
    scf.if %11 {
      %c0_9 = arith.constant 0 : index
      %c0_10 = arith.constant 0 : index
      %12 = vector.load %arg5[%c0_9, %c0_10] : memref<2x32xf32, #tpu.memory_space<vmem>>, vector<2x32xf32>
      %c0_11 = arith.constant 0 : index
      %c0_12 = arith.constant 0 : index
      %13 = vector.load %arg3[%c0_11, %c0_12] : memref<1x32xf32, #tpu.memory_space<vmem>>, vector<1x32xf32>
      %14 = vector.broadcast %13 : vector<1x32xf32> to vector<2x32xf32>
      %15 = arith.addf %12, %14 : vector<2x32xf32>
      %c0_13 = arith.constant 0 : index
      %c0_14 = arith.constant 0 : index
      %16 = vector.load %arg4[%c0_13, %c0_14] : memref<2x32xf32, #tpu.memory_space<vmem>>, vector<2x32xf32>
      tpu.vector_store %arg4[%c0_13, %c0_14], %15 {strides = array<i32>} : memref<2x32xf32, #tpu.memory_space<vmem>>, vector<2x32xf32>,
    } else {
    }
    return
  }
  func.func @transform_0(%arg0: i32) -> (i32, i32) {
    %c0_i32 = arith.constant 0 : i32
    %c0_i32_0 = arith.constant 0 : i32
    return %c0_i32, %arg0 : i32, i32
  }
  func.func @transform_1(%arg0: i32) -> (i32, i32) {
    %c0_i32 = arith.constant 0 : i32
    %c0_i32_0 = arith.constant 0 : i32
    return %arg0, %c0_i32 : i32, i32
  }
  func.func @transform_2(%arg0: i32) -> (i32, i32) {
    %c0_i32 = arith.constant 0 : i32
    %c0_i32_0 = arith.constant 0 : i32
    %c0_i32_1 = arith.constant 0 : i32
    return %c0_i32, %c0_i32_0 : i32, i32
  }
  func.func @transform_3(%arg0: i32) -> (i32, i32) {
    %c0_i32 = arith.constant 0 : i32
    %c0_i32_0 = arith.constant 0 : i32
    %c0_i32_1 = arith.constant 0 : i32
    return %c0_i32, %c0_i32_0 : i32, i32
  }
}

</mosaic_0001>

<llo_original>
// kernel: base_encoder_forward.6
$region0: #{base_encoder_forward.6}
  #allocation0 [shape = 'u32[]', space=smem, size = 0x4, offset = 0x4, fixed_abs, tag = 'smem constant byte address 0x4 - core index']
  #allocation1 [shape = 'u32[144,128]{1,0:T(1,128)}', space=vmem, size = 0x12000, scoped, tag = 'internal scratch']
  %s0 = inlined_call_operand.vmem [shape: bf16[2,9,9,128], index: 0, kind: input, shape index: {}]
  %s1 = inlined_call_operand.vmem [shape: bf16[2,9,9,128], index: 1, kind: input, shape index: {}]
  %s2 = inlined_call_operand.vmem [shape: bf16[2,9,9,128], index: 2, kind: input, shape index: {}]
  %s3 = inlined_call_operand.vmem [shape: bf16[2,9,9,128], index: 3, kind: input, shape index: {}]
  %s4 = inlined_call_operand.vmem [shape: bf16[9,128,128], index: 4, kind: input, shape index: {}]
  %s5 = inlined_call_operand.vmem [shape: f32[1,128], index: 5, kind: input, shape index: {}]
  %s6 = inlined_call_operand.vmem [shape: bf16[2,64,128], index: 6, kind: output, shape index: {}]
  %s7 = sld [smem:[#allocation0]]
  $region57: #{base_encoder_forward.6} parent=0
    _
  %s9 = ssub.s32 1, %s7
  %s10 = scalar_select 0, %s9, %s7
  loop: start=0, step=1, limit=4
  $region2: #{base_encoder_forward.6} parent=0 // loop_pre_header
    _
  $region3: #{base_encoder_forward.6} parent=0 // loop_header
    %s12 = sphi 0, %s16
    %p13 = scmp.ge.s32.totalorder %s12, 4
    %s22 = sphi 0, %s24
    %s25 = sphi 0, %s22
    %s26 = sphi 0, %s25
    %s42 = sphi 0, %s26
    %s48 = sphi 0, %s50
    %s51 = sphi 0, %s48
    %s52 = sphi 0, %s51
    %s68 = sphi 0, %s52
    %s74 = sphi 0, %s76
    %s77 = sphi 0, %s74
    %s78 = sphi 0, %s77
    %s94 = sphi 0, %s78
    %s100 = sphi 0, %s102
    %s103 = sphi 0, %s100
    %s104 = sphi 0, %s103
    %s120 = sphi 0, %s104
    %s124 = sphi 0, %s124
    %s126 = sphi 0, %s124
    %s127 = sphi 0, %s126
    %s141 = sphi 0, %s127
    %s145 = sphi 0, %s145
    %s147 = sphi 0, %s145
    %s148 = sphi 0, %s147
    %s162 = sphi 0, %s148
    %s168 = sphi 0, %s170
    %s171 = sphi 0, %s168
    %s172 = sphi 0, %s171
    %s188 = sphi 0, %s172
  $region4: #{base_encoder_forward.6} parent=0 // loop_header_branch
    %15 = sbr.rel (%p13) target = $region8
  $region5: #{base_encoder_forward.6} parent=0 // loop_body
    %s17 = ssub.s32 %s12, 1
    %s18 = ssub.s32 %s12, 2
    %s19 = sadd.s32 %s12, 1
    %s20 = ssub.s32 %s12, %s19
    %p21 = scmp.eq.s32.totalorder %s20, 0
    %s23 = sadd.s32 %s22, 1
    %s24 = scalar_select %p21, %s22, %s23
    %p27 = pneg %p21
    %p28 = scmp.eq.s32.totalorder %s12, 1
    %p29 = por %p27, %p28
    %p30 = scmp.ne.s32.totalorder %s22, %s25
    %p31 = scmp.eq.s32.totalorder %s12, 0
    %p32 = por %p30, %p31
    %p33 = scmp.ne.s32.totalorder %s22, %s25
    %p34 = scmp.eq.s32.totalorder %s17, 1
    %p35 = por %p33, %p34
    %p36 = scmp.ne.s32.totalorder %s25, %s26
    %p37 = scmp.eq.s32.totalorder %s17, 0
    %p38 = por %p36, %p37
    %p39 = scmp.ne.s32.totalorder %s25, %s26
    %p40 = scmp.eq.s32.totalorder %s18, 1
    %p41 = por %p39, %p40
    %p43 = scmp.ne.s32.totalorder %s26, %s42
    %p44 = scmp.eq.s32.totalorder %s18, 0
    %p45 = por %p43, %p44
    %s46 = ssub.s32 %s12, %s19
    %p47 = scmp.eq.s32.totalorder %s46, 0
    %s49 = sadd.s32 %s48, 1
    %s50 = scalar_select %p47, %s48, %s49
    %p53 = pneg %p47
    %p54 = scmp.eq.s32.totalorder %s12, 1
    %p55 = por %p53, %p54
    %p56 = scmp.ne.s32.totalorder %s48, %s51
    %p57 = scmp.eq.s32.totalorder %s12, 0
    %p58 = por %p56, %p57
    %p59 = scmp.ne.s32.totalorder %s48, %s51
    %p60 = scmp.eq.s32.totalorder %s17, 1
    %p61 = por %p59, %p60
    %p62 = scmp.ne.s32.totalorder %s51, %s52
    %p63 = scmp.eq.s32.totalorder %s17, 0
    %p64 = por %p62, %p63
    %p65 = scmp.ne.s32.totalorder %s51, %s52
    %p66 = scmp.eq.s32.totalorder %s18, 1
    %p67 = por %p65, %p66
    %p69 = scmp.ne.s32.totalorder %s52, %s68
    %p70 = scmp.eq.s32.totalorder %s18, 0
    %p71 = por %p69, %p70
    %s72 = ssub.s32 %s12, %s19
    %p73 = scmp.eq.s32.totalorder %s72, 0
    %s75 = sadd.s32 %s74, 1
    %s76 = scalar_select %p73, %s74, %s75
    %p79 = pneg %p73
    %p80 = scmp.eq.s32.totalorder %s12, 1
    %p81 = por %p79, %p80
    %p82 = scmp.ne.s32.totalorder %s74, %s77
    %p83 = scmp.eq.s32.totalorder %s12, 0
    %p84 = por %p82, %p83
    %p85 = scmp.ne.s32.totalorder %s74, %s77
    %p86 = scmp.eq.s32.totalorder %s17, 1
    %p87 = por %p85, %p86
    %p88 = scmp.ne.s32.totalorder %s77, %s78
    %p89 = scmp.eq.s32.totalorder %s17, 0
    %p90 = por %p88, %p89
    %p91 = scmp.ne.s32.totalorder %s77, %s78
    %p92 = scmp.eq.s32.totalorder %s18, 1
    %p93 = por %p91, %p92
    %p95 = scmp.ne.s32.totalorder %s78, %s94
    %p96 = scmp.eq.s32.totalorder %s18, 0
    %p97 = por %p95, %p96
    %s98 = ssub.s32 %s12, %s19
    %p99 = scmp.eq.s32.totalorder %s98, 0
    %s101 = sadd.s32 %s100, 1
    %s102 = scalar_select %p99, %s100, %s101
    %p105 = pneg %p99
    %p106 = scmp.eq.s32.totalorder %s12, 1
    %p107 = por %p105, %p106
    %p108 = scmp.ne.s32.totalorder %s100, %s103
    %p109 = scmp.eq.s32.totalorder %s12, 0
    %p110 = por %p108, %p109
    %p111 = scmp.ne.s32.totalorder %s100, %s103
    %p112 = scmp.eq.s32.totalorder %s17, 1
    %p113 = por %p111, %p112
    %p114 = scmp.ne.s32.totalorder %s103, %s104
    %p115 = scmp.eq.s32.totalorder %s17, 0
    %p116 = por %p114, %p115
    %p117 = scmp.ne.s32.totalorder %s103, %s104
    %p118 = scmp.eq.s32.totalorder %s18, 1
    %p119 = por %p117, %p118
    %p121 = scmp.ne.s32.totalorder %s104, %s120
    %p122 = scmp.eq.s32.totalorder %s18, 0
    %p123 = por %p121, %p122
    %s125 = sadd.s32 %s124, 1
    %p128 = scmp.eq.s32.totalorder %s12, 1
    %p129 = scmp.ne.s32.totalorder %s124, %s126
    %p130 = scmp.eq.s32.totalorder %s12, 0
    %p131 = por %p129, %p130
    %p132 = scmp.ne.s32.totalorder %s124, %s126
    %p133 = scmp.eq.s32.totalorder %s17, 1
    %p134 = por %p132, %p133
    %p135 = scmp.ne.s32.totalorder %s126, %s127
    %p136 = scmp.eq.s32.totalorder %s17, 0
    %p137 = por %p135, %p136
    %p138 = scmp.ne.s32.totalorder %s126, %s127
    %p139 = scmp.eq.s32.totalorder %s18, 1
    %p140 = por %p138, %p139
    %p142 = scmp.ne.s32.totalorder %s127, %s141
    %p143 = scmp.eq.s32.totalorder %s18, 0
    %p144 = por %p142, %p143
    %s146 = sadd.s32 %s145, 1
    %p149 = scmp.eq.s32.totalorder %s12, 1
    %p150 = scmp.ne.s32.totalorder %s145, %s147
    %p151 = scmp.eq.s32.totalorder %s12, 0
    %p152 = por %p150, %p151
    %p153 = scmp.ne.s32.totalorder %s145, %s147
    %p154 = scmp.eq.s32.totalorder %s17, 1
    %p155 = por %p153, %p154
    %p156 = scmp.ne.s32.totalorder %s147, %s148
    %p157 = scmp.eq.s32.totalorder %s17, 0
    %p158 = por %p156, %p157
    %p159 = scmp.ne.s32.totalorder %s147, %s148
    %p160 = scmp.eq.s32.totalorder %s18, 1
    %p161 = por %p159, %p160
    %p163 = scmp.ne.s32.totalorder %s148, %s162
    %p164 = scmp.eq.s32.totalorder %s18, 0
    %p165 = por %p163, %p164
    %s166 = ssub.s32 %s12, %s19
    %p167 = scmp.eq.s32.totalorder %s166, 0
    %s169 = sadd.s32 %s168, 1
    %s170 = scalar_select %p167, %s168, %s169
    %p173 = pneg %p167
    %p174 = scmp.eq.s32.totalorder %s12, 1
    %p175 = por %p173, %p174
    %p176 = scmp.ne.s32.totalorder %s168, %s171
    %p177 = scmp.eq.s32.totalorder %s12, 0
    %p178 = por %p176, %p177
    %p179 = scmp.ne.s32.totalorder %s168, %s171
    %p180 = scmp.eq.s32.totalorder %s17, 1
    %p181 = por %p179, %p180
    %p182 = scmp.ne.s32.totalorder %s171, %s172
    %p183 = scmp.eq.s32.totalorder %s17, 0
    %p184 = por %p182, %p183
    %p185 = scmp.ne.s32.totalorder %s171, %s172
    %p186 = scmp.eq.s32.totalorder %s18, 1
    %p187 = por %p185, %p186
    %p189 = scmp.ne.s32.totalorder %s172, %s188
    %p190 = scmp.eq.s32.totalorder %s18, 0
    %p191 = por %p189, %p190
    %p192 = scmp.le.s32.totalorder 1, %s12
    %p193 = scmp.lt.s32.totalorder %s12, 3
    %p194 = pnand %p192, %p193
    %p195 = pneg %p194
    // Predicated region
    $region9: #{base_encoder_forward.6} parent=5 // pred_check
      _
    $region10: #{base_encoder_forward.6} parent=5 // pred_check_branch
      %197 = sbr.rel (%p194) target = $region12
    $region11: #{base_encoder_forward.6} parent=5 // pred_region
      %s198 = ssub.s32 %s12, 1
      // Predicated region
      $region13: #{base_encoder_forward.6} parent=11 // pred_check
        %p199 = pneg %p137
      $region14: #{base_encoder_forward.6} parent=11 // pred_check_branch
        %201 = sbr.rel (%p199) target = $region16
      $region15: #{base_encoder_forward.6} parent=11 // pred_region
        _
      $region16: #{base_encoder_forward.6} parent=11 // pred_fallthru
        _
      // Predicated region
      $region17: #{base_encoder_forward.6} parent=11 // pred_check
        %p202 = pneg %p158
      $region18: #{base_encoder_forward.6} parent=11 // pred_check_branch
        %204 = sbr.rel (%p202) target = $region20
      $region19: #{base_encoder_forward.6} parent=11 // pred_region
        _
      $region20: #{base_encoder_forward.6} parent=11 // pred_fallthru
        _
    $region12: #{base_encoder_forward.6} parent=5 // pred_fallthru
      _
    %p205 = scmp.lt.s32.totalorder %s12, 2
    // Predicated region
    $region21: #{base_encoder_forward.6} parent=5 // pred_check
      %p206 = pneg %p205
    $region22: #{base_encoder_forward.6} parent=5 // pred_check_branch
      %208 = sbr.rel (%p206) target = $region24
    $region23: #{base_encoder_forward.6} parent=5 // pred_region
      // Predicated region
      $region25: #{base_encoder_forward.6} parent=23 // pred_check
        %p209 = pneg %p32
      $region26: #{base_encoder_forward.6} parent=23 // pred_check_branch
        %211 = sbr.rel (%p209) target = $region28
      $region27: #{base_encoder_forward.6} parent=23 // pred_region
        %p212 = scmp.lt.s32.totalorder %s12, 1
        %s213 = scalar_select %p212, %s12, 1
        %s214 = smul.addr %s213, 18
        %s215 = smul.addr %s214, 4
        %s216 = scalar_lea.vmem %s0, %s215
      $region28: #{base_encoder_forward.6} parent=23 // pred_fallthru
        _
      // Predicated region
      $region29: #{base_encoder_forward.6} parent=23 // pred_check
        %p217 = pneg %p58
      $region30: #{base_encoder_forward.6} parent=23 // pred_check_branch
        %219 = sbr.rel (%p217) target = $region32
      $region31: #{base_encoder_forward.6} parent=23 // pred_region
        %p220 = scmp.lt.s32.totalorder %s12, 1
        %s221 = scalar_select %p220, %s12, 1
        %s222 = smul.addr %s221, 18
        %s223 = smul.addr %s222, 4
        %s224 = scalar_lea.vmem %s1, %s223
      $region32: #{base_encoder_forward.6} parent=23 // pred_fallthru
        _
      // Predicated region
      $region33: #{base_encoder_forward.6} parent=23 // pred_check
        %p225 = pneg %p84
      $region34: #{base_encoder_forward.6} parent=23 // pred_check_branch
        %227 = sbr.rel (%p225) target = $region36
      $region35: #{base_encoder_forward.6} parent=23 // pred_region
        %p228 = scmp.lt.s32.totalorder %s12, 1
        %s229 = scalar_select %p228, %s12, 1
        %s230 = smul.addr %s229, 18
        %s231 = smul.addr %s230, 4
        %s232 = scalar_lea.vmem %s2, %s231
      $region36: #{base_encoder_forward.6} parent=23 // pred_fallthru
        _
      // Predicated region
      $region37: #{base_encoder_forward.6} parent=23 // pred_check
        %p233 = pneg %p110
      $region38: #{base_encoder_forward.6} parent=23 // pred_check_branch
        %235 = sbr.rel (%p233) target = $region40
      $region39: #{base_encoder_forward.6} parent=23 // pred_region
        %p236 = scmp.lt.s32.totalorder %s12, 1
        %s237 = scalar_select %p236, %s12, 1
        %s238 = smul.addr %s237, 18
        %s239 = smul.addr %s238, 4
        %s240 = scalar_lea.vmem %s3, %s239
      $region40: #{base_encoder_forward.6} parent=23 // pred_fallthru
        _
    $region24: #{base_encoder_forward.6} parent=5 // pred_fallthru
      _
    %p241 = scmp.le.s32.totalorder 1, %s12
    %p242 = scmp.lt.s32.totalorder %s12, 3
    %p243 = pnand %p241, %p242
    %p244 = pneg %p243
    // Predicated region
    $region41: #{base_encoder_forward.6} parent=5 // pred_check
      _
    $region42: #{base_encoder_forward.6} parent=5 // pred_check_branch
      %246 = sbr.rel (%p243) target = $region44
    $region43: #{base_encoder_forward.6} parent=5 // pred_region
      %s247 = ssub.s32 %s12, 1
      %p248 = scmp.lt.s32.totalorder %s17, 1
      %s249 = scalar_select %p248, %s17, 1
      %s250 = smul.addr %s249, 18
      %s251 = smul.addr %s250, 4
      %s252 = scalar_lea.vmem %s0, %s251
      %p253 = pneg %p38
      %p254 = pneg %p35
      %p255 = scmp.lt.s32.totalorder %s17, 1
      %s256 = scalar_select %p255, %s17, 1
      %s257 = smul.addr %s256, 18
      %s258 = smul.addr %s257, 4
      %s259 = scalar_lea.vmem %s1, %s258
      %p260 = pneg %p64
      %p261 = pneg %p61
      %p262 = scmp.lt.s32.totalorder %s17, 1
      %s263 = scalar_select %p262, %s17, 1
      %s264 = smul.addr %s263, 18
      %s265 = smul.addr %s264, 4
      %s266 = scalar_lea.vmem %s2, %s265
      %p267 = pneg %p90
      %p268 = pneg %p87
      %p269 = scmp.lt.s32.totalorder %s17, 1
      %s270 = scalar_select %p269, %s17, 1
      %s271 = smul.addr %s270, 18
      %s272 = smul.addr %s271, 4
      %s273 = scalar_lea.vmem %s3, %s272
      %p274 = pneg %p116
      %p275 = pneg %p113
      %p276 = pneg %p137
      %p277 = pneg %p134
      %p278 = pneg %p158
      %p279 = pneg %p155
      %p280 = pneg %p184
      %p281 = pneg %p181
      %p282 = scmp.lt.s32.totalorder %s17, 1
      %s283 = scalar_select %p282, %s17, 1
      %s284 = smul.addr %s283, 8
      %s285 = smul.addr %s284, 4
      %s286 = scalar_lea.vmem %s6, %s285
      %p287 = scmp.lt.s32.totalorder %s17, 1
      %s288 = scalar_select %p287, %s17, 1
      %s289 = smul.addr %s288, 18
      %s290 = smul.addr %s289, 4
      %s291 = scalar_lea.vmem %s0, %s290
      %p292 = scmp.lt.s32.totalorder %s17, 1
      %s293 = scalar_select %p292, %s17, 1
      %s294 = smul.addr %s293, 18
      %s295 = smul.addr %s294, 4
      %s296 = scalar_lea.vmem %s1, %s295
      %p297 = scmp.lt.s32.totalorder %s17, 1
      %s298 = scalar_select %p297, %s17, 1
      %s299 = smul.addr %s298, 18
      %s300 = smul.addr %s299, 4
      %s301 = scalar_lea.vmem %s2, %s300
      %p302 = scmp.lt.s32.totalorder %s17, 1
      %s303 = scalar_select %p302, %s17, 1
      %s304 = smul.addr %s303, 18
      %s305 = smul.addr %s304, 4
      %s306 = scalar_lea.vmem %s3, %s305
      %p307 = scmp.lt.s32.totalorder %s17, 1
      %s308 = scalar_select %p307, %s17, 1
      %s309 = smul.addr %s308, 8
      %s310 = smul.addr %s309, 4
      %s311 = scalar_lea.vmem %s6, %s310
      %v313 = vld [vmem:[%s291] sm:$0xf]
      %v314 = vld [vmem:[%s291 + $0x8] sm:$0xf]
      %v315 = vld [vmem:[%s291 + $0x10] sm:$0xf]
      %v316 = vld [vmem:[%s291 + $0x18] sm:$0xf]
      %v317 = vld [vmem:[%s291 + $0x20] sm:$0xf]
      %v318 = vld [vmem:[%s291 + $0x28] sm:$0xf]
      %v319 = vld [vmem:[%s291 + $0x30] sm:$0xf]
      %v320 = vld [vmem:[%s291 + $0x38] sm:$0xf]
      %v321 = vld [vmem:[%s4] sm:$0xf]
      %v322 = vld [vmem:[%s4 + $0x4] sm:$0xf]
      %v323 = vld [vmem:[%s4 + $0x8] sm:$0xf]
      %v324 = vld [vmem:[%s4 + $0xc] sm:$0xf]
      %v325 = vld [vmem:[%s4 + $0x10] sm:$0xf]
      %v326 = vld [vmem:[%s4 + $0x14] sm:$0xf]
      %v327 = vld [vmem:[%s4 + $0x18] sm:$0xf]
      %v328 = vld [vmem:[%s4 + $0x1c] sm:$0xf]
      %v329 = vld [vmem:[%s4 + $0x20] sm:$0xf]
      %v330 = vld [vmem:[%s4 + $0x24] sm:$0xf]
      %v331 = vld [vmem:[%s4 + $0x28] sm:$0xf]
      %v332 = vld [vmem:[%s4 + $0x2c] sm:$0xf]
      %v333 = vld [vmem:[%s4 + $0x30] sm:$0xf]
      %v334 = vld [vmem:[%s4 + $0x34] sm:$0xf]
      %v335 = vld [vmem:[%s4 + $0x38] sm:$0xf]
      %v336 = vld [vmem:[%s4 + $0x3c] sm:$0xf]
      %v337 = vld [vmem:[%s296] sm:$0xf]
      %v338 = vld [vmem:[%s296 + $0x8] sm:$0xf]
      %v339 = vld [vmem:[%s296 + $0x10] sm:$0xf]
      %v340 = vld [vmem:[%s296 + $0x18] sm:$0xf]
      %v341 = vld [vmem:[%s296 + $0x20] sm:$0xf]
      %v342 = vld [vmem:[%s296 + $0x28] sm:$0xf]
      %v343 = vld [vmem:[%s296 + $0x30] sm:$0xf]
      %v344 = vld [vmem:[%s296 + $0x38] sm:$0xf]
      %s345 = scalar_lea.vmem %s4, 64
      %v346 = vld [vmem:[%s345] sm:$0xf]
      %v347 = vld [vmem:[%s345 + $0x4] sm:$0xf]
      %v348 = vld [vmem:[%s345 + $0x8] sm:$0xf]
      %v349 = vld [vmem:[%s345 + $0xc] sm:$0xf]
      %v350 = vld [vmem:[%s345 + $0x10] sm:$0xf]
      %v351 = vld [vmem:[%s345 + $0x14] sm:$0xf]
      %v352 = vld [vmem:[%s345 + $0x18] sm:$0xf]
      %v353 = vld [vmem:[%s345 + $0x1c] sm:$0xf]
      %v354 = vld [vmem:[%s345 + $0x20] sm:$0xf]
      %v355 = vld [vmem:[%s345 + $0x24] sm:$0xf]
      %v356 = vld [vmem:[%s345 + $0x28] sm:$0xf]
      %v357 = vld [vmem:[%s345 + $0x2c] sm:$0xf]
      %v358 = vld [vmem:[%s345 + $0x30] sm:$0xf]
      %v359 = vld [vmem:[%s345 + $0x34] sm:$0xf]
      %v360 = vld [vmem:[%s345 + $0x38] sm:$0xf]
      %v361 = vld [vmem:[%s345 + $0x3c] sm:$0xf]
      %v370 = vunpack.c.l.b16 %v337
      %v371 = vunpack.c.l.b16 %v338
      %v372 = vunpack.c.l.b16 %v339
      %v373 = vunpack.c.l.b16 %v340
      %v374 = vunpack.c.l.b16 %v341
      %v375 = vunpack.c.l.b16 %v342
      %v376 = vunpack.c.l.b16 %v343
      %v377 = vunpack.c.l.b16 %v344
      %v378 = vpack.c.b16 %v371, %v370
      %v379 = vpack.c.b16 %v373, %v372
      %v380 = vpack.c.b16 %v375, %v374
      %v381 = vpack.c.b16 %v377, %v376
      %v402 = vunpack.c.l.b16 %v346
      %v403 = vunpack.c.l.b16 %v347
      %v404 = vunpack.c.l.b16 %v348
      %v405 = vunpack.c.l.b16 %v349
      %v406 = vunpack.c.l.b16 %v350
      %v407 = vunpack.c.l.b16 %v351
      %v408 = vunpack.c.l.b16 %v352
      %v409 = vunpack.c.l.b16 %v353
      %v410 = vunpack.c.l.b16 %v354
      %v411 = vunpack.c.l.b16 %v355
      %v412 = vunpack.c.l.b16 %v356
      %v413 = vunpack.c.l.b16 %v357
      %v414 = vunpack.c.l.b16 %v358
      %v415 = vunpack.c.l.b16 %v359
      %v416 = vunpack.c.l.b16 %v360
      %v417 = vunpack.c.l.b16 %v361
      %v418 = vpack.c.b16 %v403, %v402
      %v419 = vpack.c.b16 %v405, %v404
      %v420 = vpack.c.b16 %v407, %v406
      %v421 = vpack.c.b16 %v409, %v408
      %v422 = vpack.c.b16 %v411, %v410
      %v423 = vpack.c.b16 %v413, %v412
      %v424 = vpack.c.b16 %v415, %v414
      %v425 = vpack.c.b16 %v417, %v416
      %434 = vmatprep.subr.bf16.mxu0 0
      %435 = vmatpush1.bf16.msra.mxu0 %v418
      %436 = vmatprep.subr.bf16.mxu0 0
      %437 = vmatpush1.bf16.msra.mxu0 %v419
      %438 = vmatprep.subr.bf16.mxu0 0
      %439 = vmatpush1.bf16.msra.mxu0 %v420
      %440 = vmatprep.subr.bf16.mxu0 0
      %441 = vmatpush1.bf16.msra.mxu0 %v421
      %442 = vmatprep.subr.bf16.mxu0 0
      %443 = vmatpush1.bf16.msra.mxu0 %v422
      %444 = vmatprep.subr.bf16.mxu0 0
      %445 = vmatpush1.bf16.msra.mxu0 %v423
      %446 = vmatprep.subr.bf16.mxu0 0
      %447 = vmatpush1.bf16.msra.mxu0 %v424
      %448 = vmatprep.subr.bf16.mxu0 0
      %449 = vmatpush1.bf16.msra.mxu0 %v425
      %450 = vmatprep.subr.bf16.mxu0 0
      %451 = vmatpush1.bf16.msra.mxu0 0
      %452 = vmatprep.subr.bf16.mxu0 0
      %453 = vmatpush1.bf16.msra.mxu0 0
      %454 = vmatprep.subr.bf16.mxu0 0
      %455 = vmatpush1.bf16.msra.mxu0 0
      %456 = vmatprep.subr.bf16.mxu0 0
      %457 = vmatpush1.bf16.msra.mxu0 0
      %458 = vmatprep.subr.bf16.mxu0 0
      %459 = vmatpush1.bf16.msra.mxu0 0
      %460 = vmatprep.subr.bf16.mxu0 0
      %461 = vmatpush1.bf16.msra.mxu0 0
      %462 = vmatprep.subr.bf16.mxu0 0
      %463 = vmatpush1.bf16.msra.mxu0 0
      %464 = vmatprep.subr.bf16.mxu0 0
      %465 = vmatpush1.bf16.msra.mxu0 0
      %466 = vmatprep.mubr.bf16.mxu0 0
      %467 = vmatmul.mubr.bf16.gmra.mrb[0].mxu0 %v378
      %v468 = vpop.f32.mrb[0].mxu0
      %v469 = vadd.f32 0.0, %v468
      %v470 = vpop.f32.mrb[0].mxu0
      %v471 = vpop.f32.mrb[0].mxu0
      %v472 = vadd.f32 0.0, %v471
      %v473 = vpop.f32.mrb[0].mxu0
      %474 = vmatprep.mubr.bf16.mxu0 0
      %475 = vmatmul.mubr.bf16.gmra.mrb[0].mxu0 %v379
      %v476 = vpop.f32.mrb[0].mxu0
      %v477 = vadd.f32 0.0, %v476
      %v478 = vpop.f32.mrb[0].mxu0
      %v479 = vpop.f32.mrb[0].mxu0
      %v480 = vadd.f32 0.0, %v479
      %v481 = vpop.f32.mrb[0].mxu0
      %482 = vmatprep.mubr.bf16.mxu0 0
      %483 = vmatmul.mubr.bf16.gmra.mrb[0].mxu0 %v380
      %v484 = vpop.f32.mrb[0].mxu0
      %v485 = vadd.f32 0.0, %v484
      %v486 = vpop.f32.mrb[0].mxu0
      %v487 = vpop.f32.mrb[0].mxu0
      %v488 = vadd.f32 0.0, %v487
      %v489 = vpop.f32.mrb[0].mxu0
      %490 = vmatprep.mubr.bf16.mxu0 0
      %491 = vmatmul.mubr.bf16.gmra.mrb[0].mxu0 %v381
      %v492 = vpop.f32.mrb[0].mxu0
      %v493 = vadd.f32 0.0, %v492
      %v494 = vpop.f32.mrb[0].mxu0
      %v495 = vpop.f32.mrb[0].mxu0
      %v496 = vadd.f32 0.0, %v495
      %v497 = vpop.f32.mrb[0].mxu0
      %498 = vdwg.mxu0
      %v507 = vunpack.c.l.b16 %v313
      %v508 = vunpack.c.l.b16 %v314
      %v509 = vunpack.c.l.b16 %v315
      %v510 = vunpack.c.l.b16 %v316
      %v511 = vunpack.c.l.b16 %v317
      %v512 = vunpack.c.l.b16 %v318
      %v513 = vunpack.c.l.b16 %v319
      %v514 = vunpack.c.l.b16 %v320
      %v515 = vpack.c.b16 %v508, %v507
      %v516 = vpack.c.b16 %v510, %v509
      %v517 = vpack.c.b16 %v512, %v511
      %v518 = vpack.c.b16 %v514, %v513
      %v539 = vunpack.c.l.b16 %v321
      %v540 = vunpack.c.l.b16 %v322
      %v541 = vunpack.c.l.b16 %v323
      %v542 = vunpack.c.l.b16 %v324
      %v543 = vunpack.c.l.b16 %v325
      %v544 = vunpack.c.l.b16 %v326
      %v545 = vunpack.c.l.b16 %v327
      %v546 = vunpack.c.l.b16 %v328
      %v547 = vunpack.c.l.b16 %v329
      %v548 = vunpack.c.l.b16 %v330
      %v549 = vunpack.c.l.b16 %v331
      %v550 = vunpack.c.l.b16 %v332
      %v551 = vunpack.c.l.b16 %v333
      %v552 = vunpack.c.l.b16 %v334
      %v553 = vunpack.c.l.b16 %v335
      %v554 = vunpack.c.l.b16 %v336
      %v555 = vpack.c.b16 %v540, %v539
      %v556 = vpack.c.b16 %v542, %v541
      %v557 = vpack.c.b16 %v544, %v543
      %v558 = vpack.c.b16 %v546, %v545
      %v559 = vpack.c.b16 %v548, %v547
      %v560 = vpack.c.b16 %v550, %v549
      %v561 = vpack.c.b16 %v552, %v551
      %v562 = vpack.c.b16 %v554, %v553
      %571 = vmatprep.subr.bf16.mxu0 0
      %572 = vmatpush1.bf16.msra.mxu0 %v555
      %573 = vmatprep.subr.bf16.mxu0 0
      %574 = vmatpush1.bf16.msra.mxu0 %v556
      %575 = vmatprep.subr.bf16.mxu0 0
      %576 = vmatpush1.bf16.msra.mxu0 %v557
      %577 = vmatprep.subr.bf16.mxu0 0
      %578 = vmatpush1.bf16.msra.mxu0 %v558
      %579 = vmatprep.subr.bf16.mxu0 0
      %580 = vmatpush1.bf16.msra.mxu0 %v559
      %581 = vmatprep.subr.bf16.mxu0 0
      %582 = vmatpush1.bf16.msra.mxu0 %v560
      %583 = vmatprep.subr.bf16.mxu0 0
      %584 = vmatpush1.bf16.msra.mxu0 %v561
      %585 = vmatprep.subr.bf16.mxu0 0
      %586 = vmatpush1.bf16.msra.mxu0 %v562
      %587 = vmatprep.subr.bf16.mxu0 0
      %588 = vmatpush1.bf16.msra.mxu0 0
      %589 = vmatprep.subr.bf16.mxu0 0
      %590 = vmatpush1.bf16.msra.mxu0 0
      %591 = vmatprep.subr.bf16.mxu0 0
      %592 = vmatpush1.bf16.msra.mxu0 0
      %593 = vmatprep.subr.bf16.mxu0 0
      %594 = vmatpush1.bf16.msra.mxu0 0
      %595 = vmatprep.subr.bf16.mxu0 0
      %596 = vmatpush1.bf16.msra.mxu0 0
      %597 = vmatprep.subr.bf16.mxu0 0
      %598 = vmatpush1.bf16.msra.mxu0 0
      %599 = vmatprep.subr.bf16.mxu0 0
      %600 = vmatpush1.bf16.msra.mxu0 0
      %601 = vmatprep.subr.bf16.mxu0 0
      %602 = vmatpush1.bf16.msra.mxu0 0
      %603 = vmatprep.mubr.bf16.mxu0 0
      %604 = vmatmul.mubr.bf16.gmra.mrb[0].mxu0 %v515
      %v605 = vpop.f32.mrb[0].mxu0
      %v606 = vadd.f32 %v469, %v605
      %v607 = vpop.f32.mrb[0].mxu0
      %v608 = vpop.f32.mrb[0].mxu0
      %v609 = vadd.f32 %v472, %v608
      %v610 = vpop.f32.mrb[0].mxu0
      %611 = vmatprep.mubr.bf16.mxu0 0
      %612 = vmatmul.mubr.bf16.gmra.mrb[0].mxu0 %v516
      %v613 = vpop.f32.mrb[0].mxu0
      %v614 = vadd.f32 %v477, %v613
      %v615 = vpop.f32.mrb[0].mxu0
      %v616 = vpop.f32.mrb[0].mxu0
      %v617 = vadd.f32 %v480, %v616
      %v618 = vpop.f32.mrb[0].mxu0
      %619 = vmatprep.mubr.bf16.mxu0 0
      %620 = vmatmul.mubr.bf16.gmra.mrb[0].mxu0 %v517
      %v621 = vpop.f32.mrb[0].mxu0
      %v622 = vadd.f32 %v485, %v621
      %v623 = vpop.f32.mrb[0].mxu0
      %v624 = vpop.f32.mrb[0].mxu0
      %v625 = vadd.f32 %v488, %v624
      %v626 = vpop.f32.mrb[0].mxu0
      %627 = vmatprep.mubr.bf16.mxu0 0
      %628 = vmatmul.mubr.bf16.gmra.mrb[0].mxu0 %v518
      %v629 = vpop.f32.mrb[0].mxu0
      %v630 = vadd.f32 %v493, %v629
      %v631 = vpop.f32.mrb[0].mxu0
      %v632 = vpop.f32.mrb[0].mxu0
      %v633 = vadd.f32 %v496, %v632
      %v634 = vpop.f32.mrb[0].mxu0
      %635 = vdwg.mxu0
      %v636 = vld [vmem:[%s291] sm:$0xf]
      %v637 = vld [vmem:[%s291 + $0x4] sm:$0x1]
      %v638 = vld [vmem:[%s291 + $0x8] sm:$0xf]
      %v639 = vld [vmem:[%s291 + $0xc] sm:$0x1]
      %v640 = vld [vmem:[%s291 + $0x10] sm:$0xf]
      %v641 = vld [vmem:[%s291 + $0x14] sm:$0x1]
      %v642 = vld [vmem:[%s291 + $0x18] sm:$0xf]
      %v643 = vld [vmem:[%s291 + $0x1c] sm:$0x1]
      %v644 = vld [vmem:[%s291 + $0x20] sm:$0xf]
      %v645 = vld [vmem:[%s291 + $0x24] sm:$0x1]
      %v646 = vld [vmem:[%s291 + $0x28] sm:$0xf]
      %v647 = vld [vmem:[%s291 + $0x2c] sm:$0x1]
      %v648 = vld [vmem:[%s291 + $0x30] sm:$0xf]
      %v649 = vld [vmem:[%s291 + $0x34] sm:$0x1]
      %v650 = vld [vmem:[%s291 + $0x38] sm:$0xf]
      %v651 = vld [vmem:[%s291 + $0x3c] sm:$0x1]
      %vm652 = vsmask.f32 3328
      %vm653 = vsmask.f32 7440
      %vm654 = vmor %vm652, %vm653
      %v656 = vshrl.u32 %v636, 16
      %v658 = vrot.slane %v656, 4
      %v659 = vshll.u32 %v636, 16
      %v661 = vrot.slane %v659, 5
      %v662 = vor.u32 %v658, %v661
      %v663 = vrot.slane %v662, 4
      %v665 = vshll.u32 %v637, 16
      %v667 = vrot.slane %v665, 5
      %v668 = vsel %vm654, %v663, %v667
      %v670 = vshrl.u32 %v638, 16
      %v672 = vrot.slane %v670, 4
      %v673 = vshll.u32 %v638, 16
      %v675 = vrot.slane %v673, 5
      %v676 = vor.u32 %v672, %v675
      %v677 = vrot.slane %v676, 4
      %v679 = vshll.u32 %v639, 16
      %v681 = vrot.slane %v679, 5
      %v682 = vsel %vm654, %v677, %v681
      %v684 = vshrl.u32 %v640, 16
      %v686 = vrot.slane %v684, 4
      %v687 = vshll.u32 %v640, 16
      %v689 = vrot.slane %v687, 5
      %v690 = vor.u32 %v686, %v689
      %v691 = vrot.slane %v690, 4
      %v693 = vshll.u32 %v641, 16
      %v695 = vrot.slane %v693, 5
      %v696 = vsel %vm654, %v691, %v695
      %v698 = vshrl.u32 %v642, 16
      %v700 = vrot.slane %v698, 4
      %v701 = vshll.u32 %v642, 16
      %v703 = vrot.slane %v701, 5
      %v704 = vor.u32 %v700, %v703
      %v705 = vrot.slane %v704, 4
      %v707 = vshll.u32 %v643, 16
      %v709 = vrot.slane %v707, 5
      %v710 = vsel %vm654, %v705, %v709
      %v712 = vshrl.u32 %v644, 16
      %v714 = vrot.slane %v712, 4
      %v715 = vshll.u32 %v644, 16
      %v717 = vrot.slane %v715, 5
      %v718 = vor.u32 %v714, %v717
      %v719 = vrot.slane %v718, 4
      %v721 = vshll.u32 %v645, 16
      %v723 = vrot.slane %v721, 5
      %v724 = vsel %vm654, %v719, %v723
      %v726 = vshrl.u32 %v646, 16
      %v728 = vrot.slane %v726, 4
      %v729 = vshll.u32 %v646, 16
      %v731 = vrot.slane %v729, 5
      %v732 = vor.u32 %v728, %v731
      %v733 = vrot.slane %v732, 4
      %v735 = vshll.u32 %v647, 16
      %v737 = vrot.slane %v735, 5
      %v738 = vsel %vm654, %v733, %v737
      %v740 = vshrl.u32 %v648, 16
      %v742 = vrot.slane %v740, 4
      %v743 = vshll.u32 %v648, 16
      %v745 = vrot.slane %v743, 5
      %v746 = vor.u32 %v742, %v745
      %v747 = vrot.slane %v746, 4
      %v749 = vshll.u32 %v649, 16
      %v751 = vrot.slane %v749, 5
      %v752 = vsel %vm654, %v747, %v751
      %v754 = vshrl.u32 %v650, 16
      %v756 = vrot.slane %v754, 4
      %v757 = vshll.u32 %v650, 16
      %v759 = vrot.slane %v757, 5
      %v760 = vor.u32 %v756, %v759
      %v761 = vrot.slane %v760, 4
      %v763 = vshll.u32 %v651, 16
      %v765 = vrot.slane %v763, 5
      %v766 = vsel %vm654, %v761, %v765
      %s767 = scalar_lea.vmem %s4, 128
      %v768 = vld [vmem:[%s767] sm:$0xf]
      %v769 = vld [vmem:[%s767 + $0x4] sm:$0xf]
      %v770 = vld [vmem:[%s767 + $0x8] sm:$0xf]
      %v771 = vld [vmem:[%s767 + $0xc] sm:$0xf]
      %v772 = vld [vmem:[%s767 + $0x10] sm:$0xf]
      %v773 = vld [vmem:[%s767 + $0x14] sm:$0xf]
      %v774 = vld [vmem:[%s767 + $0x18] sm:$0xf]
      %v775 = vld [vmem:[%s767 + $0x1c] sm:$0xf]
      %v776 = vld [vmem:[%s767 + $0x20] sm:$0xf]
      %v777 = vld [vmem:[%s767 + $0x24] sm:$0xf]
      %v778 = vld [vmem:[%s767 + $0x28] sm:$0xf]
      %v779 = vld [vmem:[%s767 + $0x2c] sm:$0xf]
      %v780 = vld [vmem:[%s767 + $0x30] sm:$0xf]
      %v781 = vld [vmem:[%s767 + $0x34] sm:$0xf]
      %v782 = vld [vmem:[%s767 + $0x38] sm:$0xf]
      %v783 = vld [vmem:[%s767 + $0x3c] sm:$0xf]
      %v784 = vunpack.c.l.b16 %v668
      %v785 = vunpack.c.l.b16 %v682
      %v786 = vunpack.c.l.b16 %v696
      %v787 = vunpack.c.l.b16 %v710
      %v788 = vunpack.c.l.b16 %v724
      %v789 = vunpack.c.l.b16 %v738
      %v790 = vunpack.c.l.b16 %v752
      %v791 = vunpack.c.l.b16 %v766
      %v792 = vpack.c.b16 %v785, %v784
      %v793 = vpack.c.b16 %v787, %v786
      %v794 = vpack.c.b16 %v789, %v788
      %v795 = vpack.c.b16 %v791, %v790
      %v816 = vunpack.c.l.b16 %v768
      %v817 = vunpack.c.l.b16 %v769
      %v818 = vunpack.c.l.b16 %v770
      %v819 = vunpack.c.l.b16 %v771
      %v820 = vunpack.c.l.b16 %v772
      %v821 = vunpack.c.l.b16 %v773
      %v822 = vunpack.c.l.b16 %v774
      %v823 = vunpack.c.l.b16 %v775
      %v824 = vunpack.c.l.b16 %v776
      %v825 = vunpack.c.l.b16 %v777
      %v826 = vunpack.c.l.b16 %v778
      %v827 = vunpack.c.l.b16 %v779
      %v828 = vunpack.c.l.b16 %v780
      %v829 = vunpack.c.l.b16 %v781
      %v830 = vunpack.c.l.b16 %v782
      %v831 = vunpack.c.l.b16 %v783
      %v832 = vpack.c.b16 %v817, %v816
      %v833 = vpack.c.b16 %v819, %v818
      %v834 = vpack.c.b16 %v821, %v820
      %v835 = vpack.c.b16 %v823, %v822
      %v836 = vpack.c.b16 %v825, %v824
      %v837 = vpack.c.b16 %v827, %v826
      %v838 = vpack.c.b16 %v829, %v828
      %v839 = vpack.c.b16 %v831, %v830
      %848 = vmatprep.subr.bf16.mxu0 0
      %849 = vmatpush1.bf16.msra.mxu0 %v832
      %850 = vmatprep.subr.bf16.mxu0 0
      %851 = vmatpush1.bf16.msra.mxu0 %v833
      %852 = vmatprep.subr.bf16.mxu0 0
      %853 = vmatpush1.bf16.msra.mxu0 %v834
      %854 = vmatprep.subr.bf16.mxu0 0
      %855 = vmatpush1.bf16.msra.mxu0 %v835
      %856 = vmatprep.subr.bf16.mxu0 0
      %857 = vmatpush1.bf16.msra.mxu0 %v836
      %858 = vmatprep.subr.bf16.mxu0 0
      %859 = vmatpush1.bf16.msra.mxu0 %v837
      %860 = vmatprep.subr.bf16.mxu0 0
      %861 = vmatpush1.bf16.msra.mxu0 %v838
      %862 = vmatprep.subr.bf16.mxu0 0
      %863 = vmatpush1.bf16.msra.mxu0 %v839
      %864 = vmatprep.subr.bf16.mxu0 0
      %865 = vmatpush1.bf16.msra.mxu0 0
      %866 = vmatprep.subr.bf16.mxu0 0
      %867 = vmatpush1.bf16.msra.mxu0 0
      %868 = vmatprep.subr.bf16.mxu0 0
      %869 = vmatpush1.bf16.msra.mxu0 0
      %870 = vmatprep.subr.bf16.mxu0 0
      %871 = vmatpush1.bf16.msra.mxu0 0
      %872 = vmatprep.subr.bf16.mxu0 0
      %873 = vmatpush1.bf16.msra.mxu0 0
      %874 = vmatprep.subr.bf16.mxu0 0
      %875 = vmatpush1.bf16.msra.mxu0 0
      %876 = vmatprep.subr.bf16.mxu0 0
      %877 = vmatpush1.bf16.msra.mxu0 0
      %878 = vmatprep.subr.bf16.mxu0 0
      %879 = vmatpush1.bf16.msra.mxu0 0
      %880 = vmatprep.mubr.bf16.mxu0 0
      %881 = vmatmul.mubr.bf16.gmra.mrb[0].mxu0 %v792
      %v882 = vpop.f32.mrb[0].mxu0
      %v883 = vadd.f32 0.0, %v882
      %v884 = vpop.f32.mrb[0].mxu0
      %v885 = vpop.f32.mrb[0].mxu0
      %v886 = vadd.f32 0.0, %v885
      %v887 = vpop.f32.mrb[0].mxu0
      %888 = vmatprep.mubr.bf16.mxu0 0
      %889 = vmatmul.mubr.bf16.gmra.mrb[0].mxu0 %v793
      %v890 = vpop.f32.mrb[0].mxu0
      %v891 = vadd.f32 0.0, %v890
      %v892 = vpop.f32.mrb[0].mxu0
      %v893 = vpop.f32.mrb[0].mxu0
      %v894 = vadd.f32 0.0, %v893
      %v895 = vpop.f32.mrb[0].mxu0
      %896 = vmatprep.mubr.bf16.mxu0 0
      %897 = vmatmul.mubr.bf16.gmra.mrb[0].mxu0 %v794
      %v898 = vpop.f32.mrb[0].mxu0
      %v899 = vadd.f32 0.0, %v898
      %v900 = vpop.f32.mrb[0].mxu0
      %v901 = vpop.f32.mrb[0].mxu0
      %v902 = vadd.f32 0.0, %v901
      %v903 = vpop.f32.mrb[0].mxu0
      %904 = vmatprep.mubr.bf16.mxu0 0
      %905 = vmatmul.mubr.bf16.gmra.mrb[0].mxu0 %v795
      %v906 = vpop.f32.mrb[0].mxu0
      %v907 = vadd.f32 0.0, %v906
      %v908 = vpop.f32.mrb[0].mxu0
      %v909 = vpop.f32.mrb[0].mxu0
      %v910 = vadd.f32 0.0, %v909
      %v911 = vpop.f32.mrb[0].mxu0
      %912 = vdwg.mxu0
      %v913 = vadd.f32 %v606, %v883
      %v914 = vadd.f32 %v609, %v886
      %v915 = vadd.f32 %v614, %v891
      %v916 = vadd.f32 %v617, %v894
      %v917 = vadd.f32 %v622, %v899
      %v918 = vadd.f32 %v625, %v902
      %v919 = vadd.f32 %v630, %v907
      %v920 = vadd.f32 %v633, %v910
      %v921 = vld [vmem:[%s301] sm:$0xf]
      %v922 = vld [vmem:[%s301 + $0x8] sm:$0xf]
      %v923 = vld [vmem:[%s301 + $0x10] sm:$0xf]
      %v924 = vld [vmem:[%s301 + $0x18] sm:$0xf]
      %v925 = vld [vmem:[%s301 + $0x20] sm:$0xf]
      %v926 = vld [vmem:[%s301 + $0x28] sm:$0xf]
      %v927 = vld [vmem:[%s301 + $0x30] sm:$0xf]
      %v928 = vld [vmem:[%s301 + $0x38] sm:$0xf]
      %s929 = scalar_lea.vmem %s4, 192
      %v930 = vld [vmem:[%s929] sm:$0xf]
      %v931 = vld [vmem:[%s929 + $0x4] sm:$0xf]
      %v932 = vld [vmem:[%s929 + $0x8] sm:$0xf]
      %v933 = vld [vmem:[%s929 + $0xc] sm:$0xf]
      %v934 = vld [vmem:[%s929 + $0x10] sm:$0xf]
      %v935 = vld [vmem:[%s929 + $0x14] sm:$0xf]
      %v936 = vld [vmem:[%s929 + $0x18] sm:$0xf]
      %v937 = vld [vmem:[%s929 + $0x1c] sm:$0xf]
      %v938 = vld [vmem:[%s929 + $0x20] sm:$0xf]
      %v939 = vld [vmem:[%s929 + $0x24] sm:$0xf]
      %v940 = vld [vmem:[%s929 + $0x28] sm:$0xf]
      %v941 = vld [vmem:[%s929 + $0x2c] sm:$0xf]
      %v942 = vld [vmem:[%s929 + $0x30] sm:$0xf]
      %v943 = vld [vmem:[%s929 + $0x34] sm:$0xf]
      %v944 = vld [vmem:[%s929 + $0x38] sm:$0xf]
      %v945 = vld [vmem:[%s929 + $0x3c] sm:$0xf]
      %v954 = vunpack.c.l.b16 %v921
      %v955 = vunpack.c.l.b16 %v922
      %v956 = vunpack.c.l.b16 %v923
      %v957 = vunpack.c.l.b16 %v924
      %v958 = vunpack.c.l.b16 %v925
      %v959 = vunpack.c.l.b16 %v926
      %v960 = vunpack.c.l.b16 %v927
      %v961 = vunpack.c.l.b16 %v928
      %v962 = vpack.c.b16 %v955, %v954
      %v963 = vpack.c.b16 %v957, %v956
      %v964 = vpack.c.b16 %v959, %v958
      %v965 = vpack.c.b16 %v961, %v960
      %v986 = vunpack.c.l.b16 %v930
      %v987 = vunpack.c.l.b16 %v931
      %v988 = vunpack.c.l.b16 %v932
      %v989 = vunpack.c.l.b16 %v933
      %v990 = vunpack.c.l.b16 %v934
      %v991 = vunpack.c.l.b16 %v935
      %v992 = vunpack.c.l.b16 %v936
      %v993 = vunpack.c.l.b16 %v937
      %v994 = vunpack.c.l.b16 %v938
      %v995 = vunpack.c.l.b16 %v939
      %v996 = vunpack.c.l.b16 %v940
      %v997 = vunpack.c.l.b16 %v941
      %v998 = vunpack.c.l.b16 %v942
      %v999 = vunpack.c.l.b16 %v943
      %v1000 = vunpack.c.l.b16 %v944
      %v1001 = vunpack.c.l.b16 %v945
      %v1002 = vpack.c.b16 %v987, %v986
      %v1003 = vpack.c.b16 %v989, %v988
      %v1004 = vpack.c.b16 %v991, %v990
      %v1005 = vpack.c.b16 %v993, %v992
      %v1006 = vpack.c.b16 %v995, %v994
      %v1007 = vpack.c.b16 %v997, %v996
      %v1008 = vpack.c.b16 %v999, %v998
      %v1009 = vpack.c.b16 %v1001, %v1000
      %1018 = vmatprep.subr.bf16.mxu0 0
      %1019 = vmatpush1.bf16.msra.mxu0 %v1002
      %1020 = vmatprep.subr.bf16.mxu0 0
      %1021 = vmatpush1.bf16.msra.mxu0 %v1003
      %1022 = vmatprep.subr.bf16.mxu0 0
      %1023 = vmatpush1.bf16.msra.mxu0 %v1004
      %1024 = vmatprep.subr.bf16.mxu0 0
      %1025 = vmatpush1.bf16.msra.mxu0 %v1005
      %1026 = vmatprep.subr.bf16.mxu0 0
      %1027 = vmatpush1.bf16.msra.mxu0 %v1006
      %1028 = vmatprep.subr.bf16.mxu0 0
      %1029 = vmatpush1.bf16.msra.mxu0 %v1007
      %1030 = vmatprep.subr.bf16.mxu0 0
      %1031 = vmatpush1.bf16.msra.mxu0 %v1008
      %1032 = vmatprep.subr.bf16.mxu0 0
      %1033 = vmatpush1.bf16.msra.mxu0 %v1009
      %1034 = vmatprep.subr.bf16.mxu0 0
      %1035 = vmatpush1.bf16.msra.mxu0 0
      %1036 = vmatprep.subr.bf16.mxu0 0
      %1037 = vmatpush1.bf16.msra.mxu0 0
      %1038 = vmatprep.subr.bf16.mxu0 0
      %1039 = vmatpush1.bf16.msra.mxu0 0
      %1040 = vmatprep.subr.bf16.mxu0 0
      %1041 = vmatpush1.bf16.msra.mxu0 0
      %1042 = vmatprep.subr.bf16.mxu0 0
      %1043 = vmatpush1.bf16.msra.mxu0 0
      %1044 = vmatprep.subr.bf16.mxu0 0
      %1045 = vmatpush1.bf16.msra.mxu0 0
      %1046 = vmatprep.subr.bf16.mxu0 0
      %1047 = vmatpush1.bf16.msra.mxu0 0
      %1048 = vmatprep.subr.bf16.mxu0 0
      %1049 = vmatpush1.bf16.msra.mxu0 0
      %1050 = vmatprep.mubr.bf16.mxu0 0
      %1051 = vmatmul.mubr.bf16.gmra.mrb[0].mxu0 %v962
      %v1052 = vpop.f32.mrb[0].mxu0
      %v1053 = vadd.f32 0.0, %v1052
      %v1054 = vpop.f32.mrb[0].mxu0
      %v1055 = vpop.f32.mrb[0].mxu0
      %v1056 = vadd.f32 0.0, %v1055
      %v1057 = vpop.f32.mrb[0].mxu0
      %1058 = vmatprep.mubr.bf16.mxu0 0
      %1059 = vmatmul.mubr.bf16.gmra.mrb[0].mxu0 %v963
      %v1060 = vpop.f32.mrb[0].mxu0
      %v1061 = vadd.f32 0.0, %v1060
      %v1062 = vpop.f32.mrb[0].mxu0
      %v1063 = vpop.f32.mrb[0].mxu0
      %v1064 = vadd.f32 0.0, %v1063
      %v1065 = vpop.f32.mrb[0].mxu0
      %1066 = vmatprep.mubr.bf16.mxu0 0
      %1067 = vmatmul.mubr.bf16.gmra.mrb[0].mxu0 %v964
      %v1068 = vpop.f32.mrb[0].mxu0
      %v1069 = vadd.f32 0.0, %v1068
      %v1070 = vpop.f32.mrb[0].mxu0
      %v1071 = vpop.f32.mrb[0].mxu0
      %v1072 = vadd.f32 0.0, %v1071
      %v1073 = vpop.f32.mrb[0].mxu0
      %1074 = vmatprep.mubr.bf16.mxu0 0
      %1075 = vmatmul.mubr.bf16.gmra.mrb[0].mxu0 %v965
      %v1076 = vpop.f32.mrb[0].mxu0
      %v1077 = vadd.f32 0.0, %v1076
      %v1078 = vpop.f32.mrb[0].mxu0
      %v1079 = vpop.f32.mrb[0].mxu0
      %v1080 = vadd.f32 0.0, %v1079
      %v1081 = vpop.f32.mrb[0].mxu0
      %1082 = vdwg.mxu0
      %v1083 = vadd.f32 %v913, %v1053
      %v1084 = vadd.f32 %v914, %v1056
      %v1085 = vadd.f32 %v915, %v1061
      %v1086 = vadd.f32 %v916, %v1064
      %v1087 = vadd.f32 %v917, %v1069
      %v1088 = vadd.f32 %v918, %v1072
      %v1089 = vadd.f32 %v919, %v1077
      %v1090 = vadd.f32 %v920, %v1080
      %v1091 = vld [vmem:[%s306] sm:$0xf]
      %v1092 = vld [vmem:[%s306 + $0x8] sm:$0xf]
      %v1093 = vld [vmem:[%s306 + $0x10] sm:$0xf]
      %v1094 = vld [vmem:[%s306 + $0x18] sm:$0xf]
      %v1095 = vld [vmem:[%s306 + $0x20] sm:$0xf]
      %v1096 = vld [vmem:[%s306 + $0x28] sm:$0xf]
      %v1097 = vld [vmem:[%s306 + $0x30] sm:$0xf]
      %v1098 = vld [vmem:[%s306 + $0x38] sm:$0xf]
      %s1099 = scalar_lea.vmem %s4, 256
      %v1100 = vld [vmem:[%s1099] sm:$0xf]
      %v1101 = vld [vmem:[%s1099 + $0x4] sm:$0xf]
      %v1102 = vld [vmem:[%s1099 + $0x8] sm:$0xf]
      %v1103 = vld [vmem:[%s1099 + $0xc] sm:$0xf]
      %v1104 = vld [vmem:[%s1099 + $0x10] sm:$0xf]
      %v1105 = vld [vmem:[%s1099 + $0x14] sm:$0xf]
      %v1106 = vld [vmem:[%s1099 + $0x18] sm:$0xf]
      %v1107 = vld [vmem:[%s1099 + $0x1c] sm:$0xf]
      %v1108 = vld [vmem:[%s1099 + $0x20] sm:$0xf]
      %v1109 = vld [vmem:[%s1099 + $0x24] sm:$0xf]
      %v1110 = vld [vmem:[%s1099 + $0x28] sm:$0xf]
      %v1111 = vld [vmem:[%s1099 + $0x2c] sm:$0xf]
      %v1112 = vld [vmem:[%s1099 + $0x30] sm:$0xf]
      %v1113 = vld [vmem:[%s1099 + $0x34] sm:$0xf]
      %v1114 = vld [vmem:[%s1099 + $0x38] sm:$0xf]
      %v1115 = vld [vmem:[%s1099 + $0x3c] sm:$0xf]
      %v1124 = vunpack.c.l.b16 %v1091
      %v1125 = vunpack.c.l.b16 %v1092
      %v1126 = vunpack.c.l.b16 %v1093
      %v1127 = vunpack.c.l.b16 %v1094
      %v1128 = vunpack.c.l.b16 %v1095
      %v1129 = vunpack.c.l.b16 %v1096
      %v1130 = vunpack.c.l.b16 %v1097
      %v1131 = vunpack.c.l.b16 %v1098
      %v1132 = vpack.c.b16 %v1125, %v1124
      %v1133 = vpack.c.b16 %v1127, %v1126
      %v1134 = vpack.c.b16 %v1129, %v1128
      %v1135 = vpack.c.b16 %v1131, %v1130
      %v1156 = vunpack.c.l.b16 %v1100
      %v1157 = vunpack.c.l.b16 %v1101
      %v1158 = vunpack.c.l.b16 %v1102
      %v1159 = vunpack.c.l.b16 %v1103
      %v1160 = vunpack.c.l.b16 %v1104
      %v1161 = vunpack.c.l.b16 %v1105
      %v1162 = vunpack.c.l.b16 %v1106
      %v1163 = vunpack.c.l.b16 %v1107
      %v1164 = vunpack.c.l.b16 %v1108
      %v1165 = vunpack.c.l.b16 %v1109
      %v1166 = vunpack.c.l.b16 %v1110
      %v1167 = vunpack.c.l.b16 %v1111
      %v1168 = vunpack.c.l.b16 %v1112
      %v1169 = vunpack.c.l.b16 %v1113
      %v1170 = vunpack.c.l.b16 %v1114
      %v1171 = vunpack.c.l.b16 %v1115
      %v1172 = vpack.c.b16 %v1157, %v1156
      %v1173 = vpack.c.b16 %v1159, %v1158
      %v1174 = vpack.c.b16 %v1161, %v1160
      %v1175 = vpack.c.b16 %v1163, %v1162
      %v1176 = vpack.c.b16 %v1165, %v1164
      %v1177 = vpack.c.b16 %v1167, %v1166
      %v1178 = vpack.c.b16 %v1169, %v1168
      %v1179 = vpack.c.b16 %v1171, %v1170
      %1188 = vmatprep.subr.bf16.mxu0 0
      %1189 = vmatpush1.bf16.msra.mxu0 %v1172
      %1190 = vmatprep.subr.bf16.mxu0 0
      %1191 = vmatpush1.bf16.msra.mxu0 %v1173
      %1192 = vmatprep.subr.bf16.mxu0 0
      %1193 = vmatpush1.bf16.msra.mxu0 %v1174
      %1194 = vmatprep.subr.bf16.mxu0 0
      %1195 = vmatpush1.bf16.msra.mxu0 %v1175
      %1196 = vmatprep.subr.bf16.mxu0 0
      %1197 = vmatpush1.bf16.msra.mxu0 %v1176
      %1198 = vmatprep.subr.bf16.mxu0 0
      %1199 = vmatpush1.bf16.msra.mxu0 %v1177
      %1200 = vmatprep.subr.bf16.mxu0 0
      %1201 = vmatpush1.bf16.msra.mxu0 %v1178
      %1202 = vmatprep.subr.bf16.mxu0 0
      %1203 = vmatpush1.bf16.msra.mxu0 %v1179
      %1204 = vmatprep.subr.bf16.mxu0 0
      %1205 = vmatpush1.bf16.msra.mxu0 0
      %1206 = vmatprep.subr.bf16.mxu0 0
      %1207 = vmatpush1.bf16.msra.mxu0 0
      %1208 = vmatprep.subr.bf16.mxu0 0
      %1209 = vmatpush1.bf16.msra.mxu0 0
      %1210 = vmatprep.subr.bf16.mxu0 0
      %1211 = vmatpush1.bf16.msra.mxu0 0
      %1212 = vmatprep.subr.bf16.mxu0 0
      %1213 = vmatpush1.bf16.msra.mxu0 0
      %1214 = vmatprep.subr.bf16.mxu0 0
      %1215 = vmatpush1.bf16.msra.mxu0 0
      %1216 = vmatprep.subr.bf16.mxu0 0
      %1217 = vmatpush1.bf16.msra.mxu0 0
      %1218 = vmatprep.subr.bf16.mxu0 0
      %1219 = vmatpush1.bf16.msra.mxu0 0
      %1220 = vmatprep.mubr.bf16.mxu0 0
      %1221 = vmatmul.mubr.bf16.gmra.mrb[0].mxu0 %v1132
      %v1222 = vpop.f32.mrb[0].mxu0
      %v1223 = vadd.f32 0.0, %v1222
      %v1224 = vpop.f32.mrb[0].mxu0
      %v1225 = vpop.f32.mrb[0].mxu0
      %v1226 = vadd.f32 0.0, %v1225
      %v1227 = vpop.f32.mrb[0].mxu0
      %1228 = vmatprep.mubr.bf16.mxu0 0
      %1229 = vmatmul.mubr.bf16.gmra.mrb[0].mxu0 %v1133
      %v1230 = vpop.f32.mrb[0].mxu0
      %v1231 = vadd.f32 0.0, %v1230
      %v1232 = vpop.f32.mrb[0].mxu0
      %v1233 = vpop.f32.mrb[0].mxu0
      %v1234 = vadd.f32 0.0, %v1233
      %v1235 = vpop.f32.mrb[0].mxu0
      %1236 = vmatprep.mubr.bf16.mxu0 0
      %1237 = vmatmul.mubr.bf16.gmra.mrb[0].mxu0 %v1134
      %v1238 = vpop.f32.mrb[0].mxu0
      %v1239 = vadd.f32 0.0, %v1238
      %v1240 = vpop.f32.mrb[0].mxu0
      %v1241 = vpop.f32.mrb[0].mxu0
      %v1242 = vadd.f32 0.0, %v1241
      %v1243 = vpop.f32.mrb[0].mxu0
      %1244 = vmatprep.mubr.bf16.mxu0 0
      %1245 = vmatmul.mubr.bf16.gmra.mrb[0].mxu0 %v1135
      %v1246 = vpop.f32.mrb[0].mxu0
      %v1247 = vadd.f32 0.0, %v1246
      %v1248 = vpop.f32.mrb[0].mxu0
      %v1249 = vpop.f32.mrb[0].mxu0
      %v1250 = vadd.f32 0.0, %v1249
      %v1251 = vpop.f32.mrb[0].mxu0
      %1252 = vdwg.mxu0
      %v1253 = vadd.f32 %v1083, %v1223
      %v1254 = vadd.f32 %v1084, %v1226
      %v1255 = vadd.f32 %v1085, %v1231
      %v1256 = vadd.f32 %v1086, %v1234
      %v1257 = vadd.f32 %v1087, %v1239
      %v1258 = vadd.f32 %v1088, %v1242
      %v1259 = vadd.f32 %v1089, %v1247
      %v1260 = vadd.f32 %v1090, %v1250
      %v1261 = vld [vmem:[%s301] sm:$0xf]
      %v1262 = vld [vmem:[%s301 + $0x4] sm:$0x1]
      %v1263 = vld [vmem:[%s301 + $0x8] sm:$0xf]
      %v1264 = vld [vmem:[%s301 + $0xc] sm:$0x1]
      %v1265 = vld [vmem:[%s301 + $0x10] sm:$0xf]
      %v1266 = vld [vmem:[%s301 + $0x14] sm:$0x1]
      %v1267 = vld [vmem:[%s301 + $0x18] sm:$0xf]
      %v1268 = vld [vmem:[%s301 + $0x1c] sm:$0x1]
      %v1269 = vld [vmem:[%s301 + $0x20] sm:$0xf]
      %v1270 = vld [vmem:[%s301 + $0x24] sm:$0x1]
      %v1271 = vld [vmem:[%s301 + $0x28] sm:$0xf]
      %v1272 = vld [vmem:[%s301 + $0x2c] sm:$0x1]
      %v1273 = vld [vmem:[%s301 + $0x30] sm:$0xf]
      %v1274 = vld [vmem:[%s301 + $0x34] sm:$0x1]
      %v1275 = vld [vmem:[%s301 + $0x38] sm:$0xf]
      %v1276 = vld [vmem:[%s301 + $0x3c] sm:$0x1]
      %v1278 = vshrl.u32 %v1261, 16
      %v1280 = vrot.slane %v1278, 4
      %v1281 = vshll.u32 %v1261, 16
      %v1283 = vrot.slane %v1281, 5
      %v1284 = vor.u32 %v1280, %v1283
      %v1285 = vrot.slane %v1284, 4
      %v1287 = vshll.u32 %v1262, 16
      %v1289 = vrot.slane %v1287, 5
      %v1290 = vsel %vm654, %v1285, %v1289
      %v1292 = vshrl.u32 %v1263, 16
      %v1294 = vrot.slane %v1292, 4
      %v1295 = vshll.u32 %v1263, 16
      %v1297 = vrot.slane %v1295, 5
      %v1298 = vor.u32 %v1294, %v1297
      %v1299 = vrot.slane %v1298, 4
      %v1301 = vshll.u32 %v1264, 16
      %v1303 = vrot.slane %v1301, 5
      %v1304 = vsel %vm654, %v1299, %v1303
      %v1306 = vshrl.u32 %v1265, 16
      %v1308 = vrot.slane %v1306, 4
      %v1309 = vshll.u32 %v1265, 16
      %v1311 = vrot.slane %v1309, 5
      %v1312 = vor.u32 %v1308, %v1311
      %v1313 = vrot.slane %v1312, 4
      %v1315 = vshll.u32 %v1266, 16
      %v1317 = vrot.slane %v1315, 5
      %v1318 = vsel %vm654, %v1313, %v1317
      %v1320 = vshrl.u32 %v1267, 16
      %v1322 = vrot.slane %v1320, 4
      %v1323 = vshll.u32 %v1267, 16
      %v1325 = vrot.slane %v1323, 5
      %v1326 = vor.u32 %v1322, %v1325
      %v1327 = vrot.slane %v1326, 4
      %v1329 = vshll.u32 %v1268, 16
      %v1331 = vrot.slane %v1329, 5
      %v1332 = vsel %vm654, %v1327, %v1331
      %v1334 = vshrl.u32 %v1269, 16
      %v1336 = vrot.slane %v1334, 4
      %v1337 = vshll.u32 %v1269, 16
      %v1339 = vrot.slane %v1337, 5
      %v1340 = vor.u32 %v1336, %v1339
      %v1341 = vrot.slane %v1340, 4
      %v1343 = vshll.u32 %v1270, 16
      %v1345 = vrot.slane %v1343, 5
      %v1346 = vsel %vm654, %v1341, %v1345
      %v1348 = vshrl.u32 %v1271, 16
      %v1350 = vrot.slane %v1348, 4
      %v1351 = vshll.u32 %v1271, 16
      %v1353 = vrot.slane %v1351, 5
      %v1354 = vor.u32 %v1350, %v1353
      %v1355 = vrot.slane %v1354, 4
      %v1357 = vshll.u32 %v1272, 16
      %v1359 = vrot.slane %v1357, 5
      %v1360 = vsel %vm654, %v1355, %v1359
      %v1362 = vshrl.u32 %v1273, 16
      %v1364 = vrot.slane %v1362, 4
      %v1365 = vshll.u32 %v1273, 16
      %v1367 = vrot.slane %v1365, 5
      %v1368 = vor.u32 %v1364, %v1367
      %v1369 = vrot.slane %v1368, 4
      %v1371 = vshll.u32 %v1274, 16
      %v1373 = vrot.slane %v1371, 5
      %v1374 = vsel %vm654, %v1369, %v1373
      %v1376 = vshrl.u32 %v1275, 16
      %v1378 = vrot.slane %v1376, 4
      %v1379 = vshll.u32 %v1275, 16
      %v1381 = vrot.slane %v1379, 5
      %v1382 = vor.u32 %v1378, %v1381
      %v1383 = vrot.slane %v1382, 4
      %v1385 = vshll.u32 %v1276, 16
      %v1387 = vrot.slane %v1385, 5
      %v1388 = vsel %vm654, %v1383, %v1387
      %s1389 = scalar_lea.vmem %s4, 320
      %v1390 = vld [vmem:[%s1389] sm:$0xf]
      %v1391 = vld [vmem:[%s1389 + $0x4] sm:$0xf]
      %v1392 = vld [vmem:[%s1389 + $0x8] sm:$0xf]
      %v1393 = vld [vmem:[%s1389 + $0xc] sm:$0xf]
      %v1394 = vld [vmem:[%s1389 + $0x10] sm:$0xf]
      %v1395 = vld [vmem:[%s1389 + $0x14] sm:$0xf]
      %v1396 = vld [vmem:[%s1389 + $0x18] sm:$0xf]
      %v1397 = vld [vmem:[%s1389 + $0x1c] sm:$0xf]
      %v1398 = vld [vmem:[%s1389 + $0x20] sm:$0xf]
      %v1399 = vld [vmem:[%s1389 + $0x24] sm:$0xf]
      %v1400 = vld [vmem:[%s1389 + $0x28] sm:$0xf]
      %v1401 = vld [vmem:[%s1389 + $0x2c] sm:$0xf]
      %v1402 = vld [vmem:[%s1389 + $0x30] sm:$0xf]
      %v1403 = vld [vmem:[%s1389 + $0x34] sm:$0xf]
      %v1404 = vld [vmem:[%s1389 + $0x38] sm:$0xf]
      %v1405 = vld [vmem:[%s1389 + $0x3c] sm:$0xf]
      %v1406 = vunpack.c.l.b16 %v1290
      %v1407 = vunpack.c.l.b16 %v1304
      %v1408 = vunpack.c.l.b16 %v1318
      %v1409 = vunpack.c.l.b16 %v1332
      %v1410 = vunpack.c.l.b16 %v1346
      %v1411 = vunpack.c.l.b16 %v1360
      %v1412 = vunpack.c.l.b16 %v1374
      %v1413 = vunpack.c.l.b16 %v1388
      %v1414 = vpack.c.b16 %v1407, %v1406
      %v1415 = vpack.c.b16 %v1409, %v1408
      %v1416 = vpack.c.b16 %v1411, %v1410
      %v1417 = vpack.c.b16 %v1413, %v1412
      %v1438 = vunpack.c.l.b16 %v1390
      %v1439 = vunpack.c.l.b16 %v1391
      %v1440 = vunpack.c.l.b16 %v1392
      %v1441 = vunpack.c.l.b16 %v1393
      %v1442 = vunpack.c.l.b16 %v1394
      %v1443 = vunpack.c.l.b16 %v1395
      %v1444 = vunpack.c.l.b16 %v1396
      %v1445 = vunpack.c.l.b16 %v1397
      %v1446 = vunpack.c.l.b16 %v1398
      %v1447 = vunpack.c.l.b16 %v1399
      %v1448 = vunpack.c.l.b16 %v1400
      %v1449 = vunpack.c.l.b16 %v1401
      %v1450 = vunpack.c.l.b16 %v1402
      %v1451 = vunpack.c.l.b16 %v1403
      %v1452 = vunpack.c.l.b16 %v1404
      %v1453 = vunpack.c.l.b16 %v1405
      %v1454 = vpack.c.b16 %v1439, %v1438
      %v1455 = vpack.c.b16 %v1441, %v1440
      %v1456 = vpack.c.b16 %v1443, %v1442
      %v1457 = vpack.c.b16 %v1445, %v1444
      %v1458 = vpack.c.b16 %v1447, %v1446
      %v1459 = vpack.c.b16 %v1449, %v1448
      %v1460 = vpack.c.b16 %v1451, %v1450
      %v1461 = vpack.c.b16 %v1453, %v1452
      %1470 = vmatprep.subr.bf16.mxu0 0
      %1471 = vmatpush1.bf16.msra.mxu0 %v1454
      %1472 = vmatprep.subr.bf16.mxu0 0
      %1473 = vmatpush1.bf16.msra.mxu0 %v1455
      %1474 = vmatprep.subr.bf16.mxu0 0
      %1475 = vmatpush1.bf16.msra.mxu0 %v1456
      %1476 = vmatprep.subr.bf16.mxu0 0
      %1477 = vmatpush1.bf16.msra.mxu0 %v1457
      %1478 = vmatprep.subr.bf16.mxu0 0
      %1479 = vmatpush1.bf16.msra.mxu0 %v1458
      %1480 = vmatprep.subr.bf16.mxu0 0
      %1481 = vmatpush1.bf16.msra.mxu0 %v1459
      %1482 = vmatprep.subr.bf16.mxu0 0
      %1483 = vmatpush1.bf16.msra.mxu0 %v1460
      %1484 = vmatprep.subr.bf16.mxu0 0
      %1485 = vmatpush1.bf16.msra.mxu0 %v1461
      %1486 = vmatprep.subr.bf16.mxu0 0
      %1487 = vmatpush1.bf16.msra.mxu0 0
      %1488 = vmatprep.subr.bf16.mxu0 0
      %1489 = vmatpush1.bf16.msra.mxu0 0
      %1490 = vmatprep.subr.bf16.mxu0 0
      %1491 = vmatpush1.bf16.msra.mxu0 0
      %1492 = vmatprep.subr.bf16.mxu0 0
      %1493 = vmatpush1.bf16.msra.mxu0 0
      %1494 = vmatprep.subr.bf16.mxu0 0
      %1495 = vmatpush1.bf16.msra.mxu0 0
      %1496 = vmatprep.subr.bf16.mxu0 0
      %1497 = vmatpush1.bf16.msra.mxu0 0
      %1498 = vmatprep.subr.bf16.mxu0 0
      %1499 = vmatpush1.bf16.msra.mxu0 0
      %1500 = vmatprep.subr.bf16.mxu0 0
      %1501 = vmatpush1.bf16.msra.mxu0 0
      %1502 = vmatprep.mubr.bf16.mxu0 0
      %1503 = vmatmul.mubr.bf16.gmra.mrb[0].mxu0 %v1414
      %v1504 = vpop.f32.mrb[0].mxu0
      %v1505 = vadd.f32 0.0, %v1504
      %v1506 = vpop.f32.mrb[0].mxu0
      %v1507 = vpop.f32.mrb[0].mxu0
      %v1508 = vadd.f32 0.0, %v1507
      %v1509 = vpop.f32.mrb[0].mxu0
      %1510 = vmatprep.mubr.bf16.mxu0 0
      %1511 = vmatmul.mubr.bf16.gmra.mrb[0].mxu0 %v1415
      %v1512 = vpop.f32.mrb[0].mxu0
      %v1513 = vadd.f32 0.0, %v1512
      %v1514 = vpop.f32.mrb[0].mxu0
      %v1515 = vpop.f32.mrb[0].mxu0
      %v1516 = vadd.f32 0.0, %v1515
      %v1517 = vpop.f32.mrb[0].mxu0
      %1518 = vmatprep.mubr.bf16.mxu0 0
      %1519 = vmatmul.mubr.bf16.gmra.mrb[0].mxu0 %v1416
      %v1520 = vpop.f32.mrb[0].mxu0
      %v1521 = vadd.f32 0.0, %v1520
      %v1522 = vpop.f32.mrb[0].mxu0
      %v1523 = vpop.f32.mrb[0].mxu0
      %v1524 = vadd.f32 0.0, %v1523
      %v1525 = vpop.f32.mrb[0].mxu0
      %1526 = vmatprep.mubr.bf16.mxu0 0
      %1527 = vmatmul.mubr.bf16.gmra.mrb[0].mxu0 %v1417
      %v1528 = vpop.f32.mrb[0].mxu0
      %v1529 = vadd.f32 0.0, %v1528
      %v1530 = vpop.f32.mrb[0].mxu0
      %v1531 = vpop.f32.mrb[0].mxu0
      %v1532 = vadd.f32 0.0, %v1531
      %v1533 = vpop.f32.mrb[0].mxu0
      %1534 = vdwg.mxu0
      %v1535 = vadd.f32 %v1253, %v1505
      %v1536 = vadd.f32 %v1254, %v1508
      %v1537 = vadd.f32 %v1255, %v1513
      %v1538 = vadd.f32 %v1256, %v1516
      %v1539 = vadd.f32 %v1257, %v1521
      %v1540 = vadd.f32 %v1258, %v1524
      %v1541 = vadd.f32 %v1259, %v1529
      %v1542 = vadd.f32 %v1260, %v1532
      %s1543 = scalar_lea.vmem %s291, 8
      %v1544 = vld [vmem:[%s1543] sm:$0xf]
      %v1545 = vld [vmem:[%s1543 + $0x8] sm:$0xf]
      %v1546 = vld [vmem:[%s1543 + $0x10] sm:$0xf]
      %v1547 = vld [vmem:[%s1543 + $0x18] sm:$0xf]
      %v1548 = vld [vmem:[%s1543 + $0x20] sm:$0xf]
      %v1549 = vld [vmem:[%s1543 + $0x28] sm:$0xf]
      %v1550 = vld [vmem:[%s1543 + $0x30] sm:$0xf]
      %v1551 = vld [vmem:[%s1543 + $0x38] sm:$0xf]
      %s1552 = scalar_lea.vmem %s4, 384
      %v1553 = vld [vmem:[%s1552] sm:$0xf]
      %v1554 = vld [vmem:[%s1552 + $0x4] sm:$0xf]
      %v1555 = vld [vmem:[%s1552 + $0x8] sm:$0xf]
      %v1556 = vld [vmem:[%s1552 + $0xc] sm:$0xf]
      %v1557 = vld [vmem:[%s1552 + $0x10] sm:$0xf]
      %v1558 = vld [vmem:[%s1552 + $0x14] sm:$0xf]
      %v1559 = vld [vmem:[%s1552 + $0x18] sm:$0xf]
      %v1560 = vld [vmem:[%s1552 + $0x1c] sm:$0xf]
      %v1561 = vld [vmem:[%s1552 + $0x20] sm:$0xf]
      %v1562 = vld [vmem:[%s1552 + $0x24] sm:$0xf]
      %v1563 = vld [vmem:[%s1552 + $0x28] sm:$0xf]
      %v1564 = vld [vmem:[%s1552 + $0x2c] sm:$0xf]
      %v1565 = vld [vmem:[%s1552 + $0x30] sm:$0xf]
      %v1566 = vld [vmem:[%s1552 + $0x34] sm:$0xf]
      %v1567 = vld [vmem:[%s1552 + $0x38] sm:$0xf]
      %v1568 = vld [vmem:[%s1552 + $0x3c] sm:$0xf]
      %v1577 = vunpack.c.l.b16 %v1544
      %v1578 = vunpack.c.l.b16 %v1545
      %v1579 = vunpack.c.l.b16 %v1546
      %v1580 = vunpack.c.l.b16 %v1547
      %v1581 = vunpack.c.l.b16 %v1548
      %v1582 = vunpack.c.l.b16 %v1549
      %v1583 = vunpack.c.l.b16 %v1550
      %v1584 = vunpack.c.l.b16 %v1551
      %v1585 = vpack.c.b16 %v1578, %v1577
      %v1586 = vpack.c.b16 %v1580, %v1579
      %v1587 = vpack.c.b16 %v1582, %v1581
      %v1588 = vpack.c.b16 %v1584, %v1583
      %v1609 = vunpack.c.l.b16 %v1553
      %v1610 = vunpack.c.l.b16 %v1554
      %v1611 = vunpack.c.l.b16 %v1555
      %v1612 = vunpack.c.l.b16 %v1556
      %v1613 = vunpack.c.l.b16 %v1557
      %v1614 = vunpack.c.l.b16 %v1558
      %v1615 = vunpack.c.l.b16 %v1559
      %v1616 = vunpack.c.l.b16 %v1560
      %v1617 = vunpack.c.l.b16 %v1561
      %v1618 = vunpack.c.l.b16 %v1562
      %v1619 = vunpack.c.l.b16 %v1563
      %v1620 = vunpack.c.l.b16 %v1564
      %v1621 = vunpack.c.l.b16 %v1565
      %v1622 = vunpack.c.l.b16 %v1566
      %v1623 = vunpack.c.l.b16 %v1567
      %v1624 = vunpack.c.l.b16 %v1568
      %v1625 = vpack.c.b16 %v1610, %v1609
      %v1626 = vpack.c.b16 %v1612, %v1611
      %v1627 = vpack.c.b16 %v1614, %v1613
      %v1628 = vpack.c.b16 %v1616, %v1615
      %v1629 = vpack.c.b16 %v1618, %v1617
      %v1630 = vpack.c.b16 %v1620, %v1619
      %v1631 = vpack.c.b16 %v1622, %v1621
      %v1632 = vpack.c.b16 %v1624, %v1623
      %1641 = vmatprep.subr.bf16.mxu0 0
      %1642 = vmatpush1.bf16.msra.mxu0 %v1625
      %1643 = vmatprep.subr.bf16.mxu0 0
      %1644 = vmatpush1.bf16.msra.mxu0 %v1626
      %1645 = vmatprep.subr.bf16.mxu0 0
      %1646 = vmatpush1.bf16.msra.mxu0 %v1627
      %1647 = vmatprep.subr.bf16.mxu0 0
      %1648 = vmatpush1.bf16.msra.mxu0 %v1628
      %1649 = vmatprep.subr.bf16.mxu0 0
      %1650 = vmatpush1.bf16.msra.mxu0 %v1629
      %1651 = vmatprep.subr.bf16.mxu0 0
      %1652 = vmatpush1.bf16.msra.mxu0 %v1630
      %1653 = vmatprep.subr.bf16.mxu0 0
      %1654 = vmatpush1.bf16.msra.mxu0 %v1631
      %1655 = vmatprep.subr.bf16.mxu0 0
      %1656 = vmatpush1.bf16.msra.mxu0 %v1632
      %1657 = vmatprep.subr.bf16.mxu0 0
      %1658 = vmatpush1.bf16.msra.mxu0 0
      %1659 = vmatprep.subr.bf16.mxu0 0
      %1660 = vmatpush1.bf16.msra.mxu0 0
      %1661 = vmatprep.subr.bf16.mxu0 0
      %1662 = vmatpush1.bf16.msra.mxu0 0
      %1663 = vmatprep.subr.bf16.mxu0 0
      %1664 = vmatpush1.bf16.msra.mxu0 0
      %1665 = vmatprep.subr.bf16.mxu0 0
      %1666 = vmatpush1.bf16.msra.mxu0 0
      %1667 = vmatprep.subr.bf16.mxu0 0
      %1668 = vmatpush1.bf16.msra.mxu0 0
      %1669 = vmatprep.subr.bf16.mxu0 0
      %1670 = vmatpush1.bf16.msra.mxu0 0
      %1671 = vmatprep.subr.bf16.mxu0 0
      %1672 = vmatpush1.bf16.msra.mxu0 0
      %1673 = vmatprep.mubr.bf16.mxu0 0
      %1674 = vmatmul.mubr.bf16.gmra.mrb[0].mxu0 %v1585
      %v1675 = vpop.f32.mrb[0].mxu0
      %v1676 = vadd.f32 0.0, %v1675
      %v1677 = vpop.f32.mrb[0].mxu0
      %v1678 = vpop.f32.mrb[0].mxu0
      %v1679 = vadd.f32 0.0, %v1678
      %v1680 = vpop.f32.mrb[0].mxu0
      %1681 = vmatprep.mubr.bf16.mxu0 0
      %1682 = vmatmul.mubr.bf16.gmra.mrb[0].mxu0 %v1586
      %v1683 = vpop.f32.mrb[0].mxu0
      %v1684 = vadd.f32 0.0, %v1683
      %v1685 = vpop.f32.mrb[0].mxu0
      %v1686 = vpop.f32.mrb[0].mxu0
      %v1687 = vadd.f32 0.0, %v1686
      %v1688 = vpop.f32.mrb[0].mxu0
      %1689 = vmatprep.mubr.bf16.mxu0 0
      %1690 = vmatmul.mubr.bf16.gmra.mrb[0].mxu0 %v1587
      %v1691 = vpop.f32.mrb[0].mxu0
      %v1692 = vadd.f32 0.0, %v1691
      %v1693 = vpop.f32.mrb[0].mxu0
      %v1694 = vpop.f32.mrb[0].mxu0
      %v1695 = vadd.f32 0.0, %v1694
      %v1696 = vpop.f32.mrb[0].mxu0
      %1697 = vmatprep.mubr.bf16.mxu0 0
      %1698 = vmatmul.mubr.bf16.gmra.mrb[0].mxu0 %v1588
      %v1699 = vpop.f32.mrb[0].mxu0
      %v1700 = vadd.f32 0.0, %v1699
      %v1701 = vpop.f32.mrb[0].mxu0
      %v1702 = vpop.f32.mrb[0].mxu0
      %v1703 = vadd.f32 0.0, %v1702
      %v1704 = vpop.f32.mrb[0].mxu0
      %1705 = vdwg.mxu0
      %v1706 = vadd.f32 %v1535, %v1676
      %v1707 = vadd.f32 %v1536, %v1679
      %v1708 = vadd.f32 %v1537, %v1684
      %v1709 = vadd.f32 %v1538, %v1687
      %v1710 = vadd.f32 %v1539, %v1692
      %v1711 = vadd.f32 %v1540, %v1695
      %v1712 = vadd.f32 %v1541, %v1700
      %v1713 = vadd.f32 %v1542, %v1703
      %s1714 = scalar_lea.vmem %s296, 8
      %v1715 = vld [vmem:[%s1714] sm:$0xf]
      %v1716 = vld [vmem:[%s1714 + $0x8] sm:$0xf]
      %v1717 = vld [vmem:[%s1714 + $0x10] sm:$0xf]
      %v1718 = vld [vmem:[%s1714 + $0x18] sm:$0xf]
      %v1719 = vld [vmem:[%s1714 + $0x20] sm:$0xf]
      %v1720 = vld [vmem:[%s1714 + $0x28] sm:$0xf]
      %v1721 = vld [vmem:[%s1714 + $0x30] sm:$0xf]
      %v1722 = vld [vmem:[%s1714 + $0x38] sm:$0xf]
      %s1723 = scalar_lea.vmem %s4, 448
      %v1724 = vld [vmem:[%s1723] sm:$0xf]
      %v1725 = vld [vmem:[%s1723 + $0x4] sm:$0xf]
      %v1726 = vld [vmem:[%s1723 + $0x8] sm:$0xf]
      %v1727 = vld [vmem:[%s1723 + $0xc] sm:$0xf]
      %v1728 = vld [vmem:[%s1723 + $0x10] sm:$0xf]
      %v1729 = vld [vmem:[%s1723 + $0x14] sm:$0xf]
      %v1730 = vld [vmem:[%s1723 + $0x18] sm:$0xf]
      %v1731 = vld [vmem:[%s1723 + $0x1c] sm:$0xf]
      %v1732 = vld [vmem:[%s1723 + $0x20] sm:$0xf]
      %v1733 = vld [vmem:[%s1723 + $0x24] sm:$0xf]
      %v1734 = vld [vmem:[%s1723 + $0x28] sm:$0xf]
      %v1735 = vld [vmem:[%s1723 + $0x2c] sm:$0xf]
      %v1736 = vld [vmem:[%s1723 + $0x30] sm:$0xf]
      %v1737 = vld [vmem:[%s1723 + $0x34] sm:$0xf]
      %v1738 = vld [vmem:[%s1723 + $0x38] sm:$0xf]
      %v1739 = vld [vmem:[%s1723 + $0x3c] sm:$0xf]
      %v1748 = vunpack.c.l.b16 %v1715
      %v1749 = vunpack.c.l.b16 %v1716
      %v1750 = vunpack.c.l.b16 %v1717
      %v1751 = vunpack.c.l.b16 %v1718
      %v1752 = vunpack.c.l.b16 %v1719
      %v1753 = vunpack.c.l.b16 %v1720
      %v1754 = vunpack.c.l.b16 %v1721
      %v1755 = vunpack.c.l.b16 %v1722
      %v1756 = vpack.c.b16 %v1749, %v1748
      %v1757 = vpack.c.b16 %v1751, %v1750
      %v1758 = vpack.c.b16 %v1753, %v1752
      %v1759 = vpack.c.b16 %v1755, %v1754
      %v1780 = vunpack.c.l.b16 %v1724
      %v1781 = vunpack.c.l.b16 %v1725
      %v1782 = vunpack.c.l.b16 %v1726
      %v1783 = vunpack.c.l.b16 %v1727
      %v1784 = vunpack.c.l.b16 %v1728
      %v1785 = vunpack.c.l.b16 %v1729
      %v1786 = vunpack.c.l.b16 %v1730
      %v1787 = vunpack.c.l.b16 %v1731
      %v1788 = vunpack.c.l.b16 %v1732
      %v1789 = vunpack.c.l.b16 %v1733
      %v1790 = vunpack.c.l.b16 %v1734
      %v1791 = vunpack.c.l.b16 %v1735
      %v1792 = vunpack.c.l.b16 %v1736
      %v1793 = vunpack.c.l.b16 %v1737
      %v1794 = vunpack.c.l.b16 %v1738
      %v1795 = vunpack.c.l.b16 %v1739
      %v1796 = vpack.c.b16 %v1781, %v1780
      %v1797 = vpack.c.b16 %v1783, %v1782
      %v1798 = vpack.c.b16 %v1785, %v1784
      %v1799 = vpack.c.b16 %v1787, %v1786
      %v1800 = vpack.c.b16 %v1789, %v1788
      %v1801 = vpack.c.b16 %v1791, %v1790
      %v1802 = vpack.c.b16 %v1793, %v1792
      %v1803 = vpack.c.b16 %v1795, %v1794
      %1812 = vmatprep.subr.bf16.mxu0 0
      %1813 = vmatpush1.bf16.msra.mxu0 %v1796
      %1814 = vmatprep.subr.bf16.mxu0 0
      %1815 = vmatpush1.bf16.msra.mxu0 %v1797
      %1816 = vmatprep.subr.bf16.mxu0 0
      %1817 = vmatpush1.bf16.msra.mxu0 %v1798
      %1818 = vmatprep.subr.bf16.mxu0 0
      %1819 = vmatpush1.bf16.msra.mxu0 %v1799
      %1820 = vmatprep.subr.bf16.mxu0 0
      %1821 = vmatpush1.bf16.msra.mxu0 %v1800
      %1822 = vmatprep.subr.bf16.mxu0 0
      %1823 = vmatpush1.bf16.msra.mxu0 %v1801
      %1824 = vmatprep.subr.bf16.mxu0 0
      %1825 = vmatpush1.bf16.msra.mxu0 %v1802
      %1826 = vmatprep.subr.bf16.mxu0 0
      %1827 = vmatpush1.bf16.msra.mxu0 %v1803
      %1828 = vmatprep.subr.bf16.mxu0 0
      %1829 = vmatpush1.bf16.msra.mxu0 0
      %1830 = vmatprep.subr.bf16.mxu0 0
      %1831 = vmatpush1.bf16.msra.mxu0 0
      %1832 = vmatprep.subr.bf16.mxu0 0
      %1833 = vmatpush1.bf16.msra.mxu0 0
      %1834 = vmatprep.subr.bf16.mxu0 0
      %1835 = vmatpush1.bf16.msra.mxu0 0
      %1836 = vmatprep.subr.bf16.mxu0 0
      %1837 = vmatpush1.bf16.msra.mxu0 0
      %1838 = vmatprep.subr.bf16.mxu0 0
      %1839 = vmatpush1.bf16.msra.mxu0 0
      %1840 = vmatprep.subr.bf16.mxu0 0
      %1841 = vmatpush1.bf16.msra.mxu0 0
      %1842 = vmatprep.subr.bf16.mxu0 0
      %1843 = vmatpush1.bf16.msra.mxu0 0
      %1844 = vmatprep.mubr.bf16.mxu0 0
      %1845 = vmatmul.mubr.bf16.gmra.mrb[0].mxu0 %v1756
      %v1846 = vpop.f32.mrb[0].mxu0
      %v1847 = vadd.f32 0.0, %v1846
      %v1848 = vpop.f32.mrb[0].mxu0
      %v1849 = vpop.f32.mrb[0].mxu0
      %v1850 = vadd.f32 0.0, %v1849
      %v1851 = vpop.f32.mrb[0].mxu0
      %1852 = vmatprep.mubr.bf16.mxu0 0
      %1853 = vmatmul.mubr.bf16.gmra.mrb[0].mxu0 %v1757
      %v1854 = vpop.f32.mrb[0].mxu0
      %v1855 = vadd.f32 0.0, %v1854
      %v1856 = vpop.f32.mrb[0].mxu0
      %v1857 = vpop.f32.mrb[0].mxu0
      %v1858 = vadd.f32 0.0, %v1857
      %v1859 = vpop.f32.mrb[0].mxu0
      %1860 = vmatprep.mubr.bf16.mxu0 0
      %1861 = vmatmul.mubr.bf16.gmra.mrb[0].mxu0 %v1758
      %v1862 = vpop.f32.mrb[0].mxu0
      %v1863 = vadd.f32 0.0, %v1862
      %v1864 = vpop.f32.mrb[0].mxu0
      %v1865 = vpop.f32.mrb[0].mxu0
      %v1866 = vadd.f32 0.0, %v1865
      %v1867 = vpop.f32.mrb[0].mxu0
      %1868 = vmatprep.mubr.bf16.mxu0 0
      %1869 = vmatmul.mubr.bf16.gmra.mrb[0].mxu0 %v1759
      %v1870 = vpop.f32.mrb[0].mxu0
      %v1871 = vadd.f32 0.0, %v1870
      %v1872 = vpop.f32.mrb[0].mxu0
      %v1873 = vpop.f32.mrb[0].mxu0
      %v1874 = vadd.f32 0.0, %v1873
      %v1875 = vpop.f32.mrb[0].mxu0
      %1876 = vdwg.mxu0
      %v1877 = vadd.f32 %v1706, %v1847
      %v1878 = vadd.f32 %v1707, %v1850
      %v1879 = vadd.f32 %v1708, %v1855
      %v1880 = vadd.f32 %v1709, %v1858
      %v1881 = vadd.f32 %v1710, %v1863
      %v1882 = vadd.f32 %v1711, %v1866
      %v1883 = vadd.f32 %v1712, %v1871
      %v1884 = vadd.f32 %v1713, %v1874
      %v1885 = vld [vmem:[%s1543] sm:$0xf]
      %v1886 = vld [vmem:[%s1543 + $0x4] sm:$0x1]
      %v1887 = vld [vmem:[%s1543 + $0x8] sm:$0xf]
      %v1888 = vld [vmem:[%s1543 + $0xc] sm:$0x1]
      %v1889 = vld [vmem:[%s1543 + $0x10] sm:$0xf]
      %v1890 = vld [vmem:[%s1543 + $0x14] sm:$0x1]
      %v1891 = vld [vmem:[%s1543 + $0x18] sm:$0xf]
      %v1892 = vld [vmem:[%s1543 + $0x1c] sm:$0x1]
      %v1893 = vld [vmem:[%s1543 + $0x20] sm:$0xf]
      %v1894 = vld [vmem:[%s1543 + $0x24] sm:$0x1]
      %v1895 = vld [vmem:[%s1543 + $0x28] sm:$0xf]
      %v1896 = vld [vmem:[%s1543 + $0x2c] sm:$0x1]
      %v1897 = vld [vmem:[%s1543 + $0x30] sm:$0xf]
      %v1898 = vld [vmem:[%s1543 + $0x34] sm:$0x1]
      %v1899 = vld [vmem:[%s1543 + $0x38] sm:$0xf]
      %v1900 = vld [vmem:[%s1543 + $0x3c] sm:$0x1]
      %v1902 = vshrl.u32 %v1885, 16
      %v1904 = vrot.slane %v1902, 4
      %v1905 = vshll.u32 %v1885, 16
      %v1907 = vrot.slane %v1905, 5
      %v1908 = vor.u32 %v1904, %v1907
      %v1909 = vrot.slane %v1908, 4
      %v1911 = vshll.u32 %v1886, 16
      %v1913 = vrot.slane %v1911, 5
      %v1914 = vsel %vm654, %v1909, %v1913
      %v1916 = vshrl.u32 %v1887, 16
      %v1918 = vrot.slane %v1916, 4
      %v1919 = vshll.u32 %v1887, 16
      %v1921 = vrot.slane %v1919, 5
      %v1922 = vor.u32 %v1918, %v1921
      %v1923 = vrot.slane %v1922, 4
      %v1925 = vshll.u32 %v1888, 16
      %v1927 = vrot.slane %v1925, 5
      %v1928 = vsel %vm654, %v1923, %v1927
      %v1930 = vshrl.u32 %v1889, 16
      %v1932 = vrot.slane %v1930, 4
      %v1933 = vshll.u32 %v1889, 16
      %v1935 = vrot.slane %v1933, 5
      %v1936 = vor.u32 %v1932, %v1935
      %v1937 = vrot.slane %v1936, 4
      %v1939 = vshll.u32 %v1890, 16
      %v1941 = vrot.slane %v1939, 5
      %v1942 = vsel %vm654, %v1937, %v1941
      %v1944 = vshrl.u32 %v1891, 16
      %v1946 = vrot.slane %v1944, 4
      %v1947 = vshll.u32 %v1891, 16
      %v1949 = vrot.slane %v1947, 5
      %v1950 = vor.u32 %v1946, %v1949
      %v1951 = vrot.slane %v1950, 4
      %v1953 = vshll.u32 %v1892, 16
      %v1955 = vrot.slane %v1953, 5
      %v1956 = vsel %vm654, %v1951, %v1955
      %v1958 = vshrl.u32 %v1893, 16
      %v1960 = vrot.slane %v1958, 4
      %v1961 = vshll.u32 %v1893, 16
      %v1963 = vrot.slane %v1961, 5
      %v1964 = vor.u32 %v1960, %v1963
      %v1965 = vrot.slane %v1964, 4
      %v1967 = vshll.u32 %v1894, 16
      %v1969 = vrot.slane %v1967, 5
      %v1970 = vsel %vm654, %v1965, %v1969
      %v1972 = vshrl.u32 %v1895, 16
      %v1974 = vrot.slane %v1972, 4
      %v1975 = vshll.u32 %v1895, 16
      %v1977 = vrot.slane %v1975, 5
      %v1978 = vor.u32 %v1974, %v1977
      %v1979 = vrot.slane %v1978, 4
      %v1981 = vshll.u32 %v1896, 16
      %v1983 = vrot.slane %v1981, 5
      %v1984 = vsel %vm654, %v1979, %v1983
      %v1986 = vshrl.u32 %v1897, 16
      %v1988 = vrot.slane %v1986, 4
      %v1989 = vshll.u32 %v1897, 16
      %v1991 = vrot.slane %v1989, 5
      %v1992 = vor.u32 %v1988, %v1991
      %v1993 = vrot.slane %v1992, 4
      %v1995 = vshll.u32 %v1898, 16
      %v1997 = vrot.slane %v1995, 5
      %v1998 = vsel %vm654, %v1993, %v1997
      %v2000 = vshrl.u32 %v1899, 16
      %v2002 = vrot.slane %v2000, 4
      %v2003 = vshll.u32 %v1899, 16
      %v2005 = vrot.slane %v2003, 5
      %v2006 = vor.u32 %v2002, %v2005
      %v2007 = vrot.slane %v2006, 4
      %v2009 = vshll.u32 %v1900, 16
      %v2011 = vrot.slane %v2009, 5
      %v2012 = vsel %vm654, %v2007, %v2011
      %s2013 = scalar_lea.vmem %s4, 512
      %v2014 = vld [vmem:[%s2013] sm:$0xf]
      %v2015 = vld [vmem:[%s2013 + $0x4] sm:$0xf]
      %v2016 = vld [vmem:[%s2013 + $0x8] sm:$0xf]
      %v2017 = vld [vmem:[%s2013 + $0xc] sm:$0xf]
      %v2018 = vld [vmem:[%s2013 + $0x10] sm:$0xf]
      %v2019 = vld [vmem:[%s2013 + $0x14] sm:$0xf]
      %v2020 = vld [vmem:[%s2013 + $0x18] sm:$0xf]
      %v2021 = vld [vmem:[%s2013 + $0x1c] sm:$0xf]
      %v2022 = vld [vmem:[%s2013 + $0x20] sm:$0xf]
      %v2023 = vld [vmem:[%s2013 + $0x24] sm:$0xf]
      %v2024 = vld [vmem:[%s2013 + $0x28] sm:$0xf]
      %v2025 = vld [vmem:[%s2013 + $0x2c] sm:$0xf]
      %v2026 = vld [vmem:[%s2013 + $0x30] sm:$0xf]
      %v2027 = vld [vmem:[%s2013 + $0x34] sm:$0xf]
      %v2028 = vld [vmem:[%s2013 + $0x38] sm:$0xf]
      %v2029 = vld [vmem:[%s2013 + $0x3c] sm:$0xf]
      %v2030 = vunpack.c.l.b16 %v1914
      %v2031 = vunpack.c.l.b16 %v1928
      %v2032 = vunpack.c.l.b16 %v1942
      %v2033 = vunpack.c.l.b16 %v1956
      %v2034 = vunpack.c.l.b16 %v1970
      %v2035 = vunpack.c.l.b16 %v1984
      %v2036 = vunpack.c.l.b16 %v1998
      %v2037 = vunpack.c.l.b16 %v2012
      %v2038 = vpack.c.b16 %v2031, %v2030
      %v2039 = vpack.c.b16 %v2033, %v2032
      %v2040 = vpack.c.b16 %v2035, %v2034
      %v2041 = vpack.c.b16 %v2037, %v2036
      %v2062 = vunpack.c.l.b16 %v2014
      %v2063 = vunpack.c.l.b16 %v2015
      %v2064 = vunpack.c.l.b16 %v2016
      %v2065 = vunpack.c.l.b16 %v2017
      %v2066 = vunpack.c.l.b16 %v2018
      %v2067 = vunpack.c.l.b16 %v2019
      %v2068 = vunpack.c.l.b16 %v2020
      %v2069 = vunpack.c.l.b16 %v2021
      %v2070 = vunpack.c.l.b16 %v2022
      %v2071 = vunpack.c.l.b16 %v2023
      %v2072 = vunpack.c.l.b16 %v2024
      %v2073 = vunpack.c.l.b16 %v2025
      %v2074 = vunpack.c.l.b16 %v2026
      %v2075 = vunpack.c.l.b16 %v2027
      %v2076 = vunpack.c.l.b16 %v2028
      %v2077 = vunpack.c.l.b16 %v2029
      %v2078 = vpack.c.b16 %v2063, %v2062
      %v2079 = vpack.c.b16 %v2065, %v2064
      %v2080 = vpack.c.b16 %v2067, %v2066
      %v2081 = vpack.c.b16 %v2069, %v2068
      %v2082 = vpack.c.b16 %v2071, %v2070
      %v2083 = vpack.c.b16 %v2073, %v2072
      %v2084 = vpack.c.b16 %v2075, %v2074
      %v2085 = vpack.c.b16 %v2077, %v2076
      %2094 = vmatprep.subr.bf16.mxu0 0
      %2095 = vmatpush1.bf16.msra.mxu0 %v2078
      %2096 = vmatprep.subr.bf16.mxu0 0
      %2097 = vmatpush1.bf16.msra.mxu0 %v2079
      %2098 = vmatprep.subr.bf16.mxu0 0
      %2099 = vmatpush1.bf16.msra.mxu0 %v2080
      %2100 = vmatprep.subr.bf16.mxu0 0
      %2101 = vmatpush1.bf16.msra.mxu0 %v2081
      %2102 = vmatprep.subr.bf16.mxu0 0
      %2103 = vmatpush1.bf16.msra.mxu0 %v2082
      %2104 = vmatprep.subr.bf16.mxu0 0
      %2105 = vmatpush1.bf16.msra.mxu0 %v2083
      %2106 = vmatprep.subr.bf16.mxu0 0
      %2107 = vmatpush1.bf16.msra.mxu0 %v2084
      %2108 = vmatprep.subr.bf16.mxu0 0
      %2109 = vmatpush1.bf16.msra.mxu0 %v2085
      %2110 = vmatprep.subr.bf16.mxu0 0
      %2111 = vmatpush1.bf16.msra.mxu0 0
      %2112 = vmatprep.subr.bf16.mxu0 0
      %2113 = vmatpush1.bf16.msra.mxu0 0
      %2114 = vmatprep.subr.bf16.mxu0 0
      %2115 = vmatpush1.bf16.msra.mxu0 0
      %2116 = vmatprep.subr.bf16.mxu0 0
      %2117 = vmatpush1.bf16.msra.mxu0 0
      %2118 = vmatprep.subr.bf16.mxu0 0
      %2119 = vmatpush1.bf16.msra.mxu0 0
      %2120 = vmatprep.subr.bf16.mxu0 0
      %2121 = vmatpush1.bf16.msra.mxu0 0
      %2122 = vmatprep.subr.bf16.mxu0 0
      %2123 = vmatpush1.bf16.msra.mxu0 0
      %2124 = vmatprep.subr.bf16.mxu0 0
      %2125 = vmatpush1.bf16.msra.mxu0 0
      %2126 = vmatprep.mubr.bf16.mxu0 0
      %2127 = vmatmul.mubr.bf16.gmra.mrb[0].mxu0 %v2038
      %v2128 = vpop.f32.mrb[0].mxu0
      %v2129 = vadd.f32 0.0, %v2128
      %v2130 = vpop.f32.mrb[0].mxu0
      %v2131 = vpop.f32.mrb[0].mxu0
      %v2132 = vadd.f32 0.0, %v2131
      %v2133 = vpop.f32.mrb[0].mxu0
      %2134 = vmatprep.mubr.bf16.mxu0 0
      %2135 = vmatmul.mubr.bf16.gmra.mrb[0].mxu0 %v2039
      %v2136 = vpop.f32.mrb[0].mxu0
      %v2137 = vadd.f32 0.0, %v2136
      %v2138 = vpop.f32.mrb[0].mxu0
      %v2139 = vpop.f32.mrb[0].mxu0
      %v2140 = vadd.f32 0.0, %v2139
      %v2141 = vpop.f32.mrb[0].mxu0
      %2142 = vmatprep.mubr.bf16.mxu0 0
      %2143 = vmatmul.mubr.bf16.gmra.mrb[0].mxu0 %v2040
      %v2144 = vpop.f32.mrb[0].mxu0
      %v2145 = vadd.f32 0.0, %v2144
      %v2146 = vpop.f32.mrb[0].mxu0
      %v2147 = vpop.f32.mrb[0].mxu0
      %v2148 = vadd.f32 0.0, %v2147
      %v2149 = vpop.f32.mrb[0].mxu0
      %2150 = vmatprep.mubr.bf16.mxu0 0
      %2151 = vmatmul.mubr.bf16.gmra.mrb[0].mxu0 %v2041
      %v2152 = vpop.f32.mrb[0].mxu0
      %v2153 = vadd.f32 0.0, %v2152
      %v2154 = vpop.f32.mrb[0].mxu0
      %v2155 = vpop.f32.mrb[0].mxu0
      %v2156 = vadd.f32 0.0, %v2155
      %v2157 = vpop.f32.mrb[0].mxu0
      %2158 = vdwg.mxu0
      %v2159 = vadd.f32 %v1877, %v2129
      %v2160 = vadd.f32 %v1878, %v2132
      %v2161 = vadd.f32 %v1879, %v2137
      %v2162 = vadd.f32 %v1880, %v2140
      %v2163 = vadd.f32 %v1881, %v2145
      %v2164 = vadd.f32 %v1882, %v2148
      %v2165 = vadd.f32 %v1883, %v2153
      %v2166 = vadd.f32 %v1884, %v2156
      %v2167 = vld [vmem:[%s5] sm:$0x1]
      %v2169 = vlaneseq
      %v2170 = vshrl.u32 %v2169, 7
      %v2171 = vsub.s32 0, %v2170
      %v2172 = vrot.slane %v2167, %v2171
      %v2174 = vadd.f32 %v2159, %v2172
      %v2175 = vadd.f32 %v2160, %v2172
      %v2176 = vadd.f32 %v2161, %v2172
      %v2177 = vadd.f32 %v2162, %v2172
      %v2178 = vadd.f32 %v2163, %v2172
      %v2179 = vadd.f32 %v2164, %v2172
      %v2180 = vadd.f32 %v2165, %v2172
      %v2181 = vadd.f32 %v2166, %v2172
      %v2182 = vmax.f32 %v2174, 0.0
      %v2183 = vmax.f32 %v2175, 0.0
      %v2184 = vmax.f32 %v2176, 0.0
      %v2185 = vmax.f32 %v2177, 0.0
      %v2186 = vmax.f32 %v2178, 0.0
      %v2187 = vmax.f32 %v2179, 0.0
      %v2188 = vmax.f32 %v2180, 0.0
      %v2189 = vmax.f32 %v2181, 0.0
      %v2190 = vpack.c.bf16 %v2183, %v2182
      %v2191 = vpack.c.bf16 %v2185, %v2184
      %v2192 = vpack.c.bf16 %v2187, %v2186
      %v2193 = vpack.c.bf16 %v2189, %v2188
      %v2198 = vunpack.c.l.b16 %v2190
      %v2199 = vunpack.c.h.b16 %v2190
      %v2200 = vunpack.c.l.b16 %v2191
      %v2201 = vunpack.c.h.b16 %v2191
      %v2202 = vunpack.c.l.b16 %v2192
      %v2203 = vunpack.c.h.b16 %v2192
      %v2204 = vunpack.c.l.b16 %v2193
      %v2205 = vunpack.c.h.b16 %v2193
      %v2206 = vpack.c.b16 %v2198, %v2198
      %v2207 = vpack.c.b16 %v2199, %v2199
      %v2208 = vpack.c.b16 %v2200, %v2200
      %v2209 = vpack.c.b16 %v2201, %v2201
      %v2210 = vpack.c.b16 %v2202, %v2202
      %v2211 = vpack.c.b16 %v2203, %v2203
      %v2212 = vpack.c.b16 %v2204, %v2204
      %v2213 = vpack.c.b16 %v2205, %v2205
      %2222 = vst [vmem:[%s311] sm:$0xf] %v2206
      %2223 = vst [vmem:[%s311 + $0x4] sm:$0xf] %v2207
      %2224 = vst [vmem:[%s311 + $0x8] sm:$0xf] %v2208
      %2225 = vst [vmem:[%s311 + $0xc] sm:$0xf] %v2209
      %2226 = vst [vmem:[%s311 + $0x10] sm:$0xf] %v2210
      %2227 = vst [vmem:[%s311 + $0x14] sm:$0xf] %v2211
      %2228 = vst [vmem:[%s311 + $0x18] sm:$0xf] %v2212
      %2229 = vst [vmem:[%s311 + $0x1c] sm:$0xf] %v2213
      %p2230 = scmp.lt.s32.totalorder %s17, 1
      %s2231 = scalar_select %p2230, %s17, 1
      %s2232 = smul.addr %s2231, 8
      %s2233 = smul.addr %s2232, 4
      %s2234 = scalar_lea.vmem %s6, %s2233
      // Predicated region
      $region45: #{base_encoder_forward.6} parent=43 // pred_check
        %p2235 = pneg %p181
      $region46: #{base_encoder_forward.6} parent=43 // pred_check_branch
        %2237 = sbr.rel (%p2235) target = $region48
      $region47: #{base_encoder_forward.6} parent=43 // pred_region
        _
      $region48: #{base_encoder_forward.6} parent=43 // pred_fallthru
        _
    $region44: #{base_encoder_forward.6} parent=5 // pred_fallthru
      _
    %p2238 = scmp.le.s32.totalorder 2, %s12
    // Predicated region
    $region49: #{base_encoder_forward.6} parent=5 // pred_check
      %p2239 = pneg %p2238
    $region50: #{base_encoder_forward.6} parent=5 // pred_check_branch
      %2241 = sbr.rel (%p2239) target = $region52
    $region51: #{base_encoder_forward.6} parent=5 // pred_region
      %s2242 = ssub.s32 %s12, 2
      // Predicated region
      $region53: #{base_encoder_forward.6} parent=51 // pred_check
        %p2243 = pneg %p187
      $region54: #{base_encoder_forward.6} parent=51 // pred_check_branch
        %2245 = sbr.rel (%p2243) target = $region56
      $region55: #{base_encoder_forward.6} parent=51 // pred_region
        %p2246 = scmp.lt.s32.totalorder %s18, 1
        %s2247 = scalar_select %p2246, %s18, 1
        %s2248 = smul.addr %s2247, 8
        %s2249 = smul.addr %s2248, 4
        %s2250 = scalar_lea.vmem %s6, %s2249
      $region56: #{base_encoder_forward.6} parent=51 // pred_fallthru
        _
    $region52: #{base_encoder_forward.6} parent=5 // pred_fallthru
      _
  $region6: #{base_encoder_forward.6} parent=0 // loop_footer
    %s16 = sadd.s32 1, %s12
  $region7: #{base_encoder_forward.6} parent=0 // loop_footer_branch
    %11 = sbr.rel target = $region3
  $region8: #{base_encoder_forward.6} parent=0 // loop_exit
    _

// kernel: base_encoder_forward.7
$region0: #{base_encoder_forward.7}
  #allocation0 [shape = 'u32[]', space=smem, size = 0x4, offset = 0x4, fixed_abs, tag = 'smem constant byte address 0x4 - core index']
  #allocation1 [shape = 'u32[144,128]{1,0:T(1,128)}', space=vmem, size = 0x12000, scoped, tag = 'internal scratch']
  %s0 = inlined_call_operand.vmem [shape: bf16[2,5,5,128], index: 0, kind: input, shape index: {}]
  %s1 = inlined_call_operand.vmem [shape: bf16[2,5,5,128], index: 1, kind: input, shape index: {}]
  %s2 = inlined_call_operand.vmem [shape: bf16[2,5,5,128], index: 2, kind: input, shape index: {}]
  %s3 = inlined_call_operand.vmem [shape: bf16[2,5,5,128], index: 3, kind: input, shape index: {}]
  %s4 = inlined_call_operand.vmem [shape: bf16[9,128,128], index: 4, kind: input, shape index: {}]
  %s5 = inlined_call_operand.vmem [shape: f32[1,128], index: 5, kind: input, shape index: {}]
  %s6 = inlined_call_operand.vmem [shape: bf16[2,16,128], index: 6, kind: output, shape index: {}]
  %s7 = sld [smem:[#allocation0]]
  $region57: #{base_encoder_forward.7} parent=0
    _
  %s9 = ssub.s32 1, %s7
  %s10 = scalar_select 0, %s9, %s7
  loop: start=0, step=1, limit=4
  $region2: #{base_encoder_forward.7} parent=0 // loop_pre_header
    _
  $region3: #{base_encoder_forward.7} parent=0 // loop_header
    %s12 = sphi 0, %s16
    %p13 = scmp.ge.s32.totalorder %s12, 4
    %s22 = sphi 0, %s24
    %s25 = sphi 0, %s22
    %s26 = sphi 0, %s25
    %s42 = sphi 0, %s26
    %s48 = sphi 0, %s50
    %s51 = sphi 0, %s48
    %s52 = sphi 0, %s51
    %s68 = sphi 0, %s52
    %s74 = sphi 0, %s76
    %s77 = sphi 0, %s74
    %s78 = sphi 0, %s77
    %s94 = sphi 0, %s78
    %s100 = sphi 0, %s102
    %s103 = sphi 0, %s100
    %s104 = sphi 0, %s103
    %s120 = sphi 0, %s104
    %s124 = sphi 0, %s124
    %s126 = sphi 0, %s124
    %s127 = sphi 0, %s126
    %s141 = sphi 0, %s127
    %s145 = sphi 0, %s145
    %s147 = sphi 0, %s145
    %s148 = sphi 0, %s147
    %s162 = sphi 0, %s148
    %s168 = sphi 0, %s170
    %s171 = sphi 0, %s168
    %s172 = sphi 0, %s171
    %s188 = sphi 0, %s172
  $region4: #{base_encoder_forward.7} parent=0 // loop_header_branch
    %15 = sbr.rel (%p13) target = $region8
  $region5: #{base_encoder_forward.7} parent=0 // loop_body
    %s17 = ssub.s32 %s12, 1
    %s18 = ssub.s32 %s12, 2
    %s19 = sadd.s32 %s12, 1
    %s20 = ssub.s32 %s12, %s19
    %p21 = scmp.eq.s32.totalorder %s20, 0
    %s23 = sadd.s32 %s22, 1
    %s24 = scalar_select %p21, %s22, %s23
    %p27 = pneg %p21
    %p28 = scmp.eq.s32.totalorder %s12, 1
    %p29 = por %p27, %p28
    %p30 = scmp.ne.s32.totalorder %s22, %s25
    %p31 = scmp.eq.s32.totalorder %s12, 0
    %p32 = por %p30, %p31
    %p33 = scmp.ne.s32.totalorder %s22, %s25
    %p34 = scmp.eq.s32.totalorder %s17, 1
    %p35 = por %p33, %p34
    %p36 = scmp.ne.s32.totalorder %s25, %s26
    %p37 = scmp.eq.s32.totalorder %s17, 0
    %p38 = por %p36, %p37
    %p39 = scmp.ne.s32.totalorder %s25, %s26
    %p40 = scmp.eq.s32.totalorder %s18, 1
    %p41 = por %p39, %p40
    %p43 = scmp.ne.s32.totalorder %s26, %s42
    %p44 = scmp.eq.s32.totalorder %s18, 0
    %p45 = por %p43, %p44
    %s46 = ssub.s32 %s12, %s19
    %p47 = scmp.eq.s32.totalorder %s46, 0
    %s49 = sadd.s32 %s48, 1
    %s50 = scalar_select %p47, %s48, %s49
    %p53 = pneg %p47
    %p54 = scmp.eq.s32.totalorder %s12, 1
    %p55 = por %p53, %p54
    %p56 = scmp.ne.s32.totalorder %s48, %s51
    %p57 = scmp.eq.s32.totalorder %s12, 0
    %p58 = por %p56, %p57
    %p59 = scmp.ne.s32.totalorder %s48, %s51
    %p60 = scmp.eq.s32.totalorder %s17, 1
    %p61 = por %p59, %p60
    %p62 = scmp.ne.s32.totalorder %s51, %s52
    %p63 = scmp.eq.s32.totalorder %s17, 0
    %p64 = por %p62, %p63
    %p65 = scmp.ne.s32.totalorder %s51, %s52
    %p66 = scmp.eq.s32.totalorder %s18, 1
    %p67 = por %p65, %p66
    %p69 = scmp.ne.s32.totalorder %s52, %s68
    %p70 = scmp.eq.s32.totalorder %s18, 0
    %p71 = por %p69, %p70
    %s72 = ssub.s32 %s12, %s19
    %p73 = scmp.eq.s32.totalorder %s72, 0
    %s75 = sadd.s32 %s74, 1
    %s76 = scalar_select %p73, %s74, %s75
    %p79 = pneg %p73
    %p80 = scmp.eq.s32.totalorder %s12, 1
    %p81 = por %p79, %p80
    %p82 = scmp.ne.s32.totalorder %s74, %s77
    %p83 = scmp.eq.s32.totalorder %s12, 0
    %p84 = por %p82, %p83
    %p85 = scmp.ne.s32.totalorder %s74, %s77
    %p86 = scmp.eq.s32.totalorder %s17, 1
    %p87 = por %p85, %p86
    %p88 = scmp.ne.s32.totalorder %s77, %s78
    %p89 = scmp.eq.s32.totalorder %s17, 0
    %p90 = por %p88, %p89
    %p91 = scmp.ne.s32.totalorder %s77, %s78
    %p92 = scmp.eq.s32.totalorder %s18, 1
    %p93 = por %p91, %p92
    %p95 = scmp.ne.s32.totalorder %s78, %s94
    %p96 = scmp.eq.s32.totalorder %s18, 0
    %p97 = por %p95, %p96
    %s98 = ssub.s32 %s12, %s19
    %p99 = scmp.eq.s32.totalorder %s98, 0
    %s101 = sadd.s32 %s100, 1
    %s102 = scalar_select %p99, %s100, %s101
    %p105 = pneg %p99
    %p106 = scmp.eq.s32.totalorder %s12, 1
    %p107 = por %p105, %p106
    %p108 = scmp.ne.s32.totalorder %s100, %s103
    %p109 = scmp.eq.s32.totalorder %s12, 0
    %p110 = por %p108, %p109
    %p111 = scmp.ne.s32.totalorder %s100, %s103
    %p112 = scmp.eq.s32.totalorder %s17, 1
    %p113 = por %p111, %p112
    %p114 = scmp.ne.s32.totalorder %s103, %s104
    %p115 = scmp.eq.s32.totalorder %s17, 0
    %p116 = por %p114, %p115
    %p117 = scmp.ne.s32.totalorder %s103, %s104
    %p118 = scmp.eq.s32.totalorder %s18, 1
    %p119 = por %p117, %p118
    %p121 = scmp.ne.s32.totalorder %s104, %s120
    %p122 = scmp.eq.s32.totalorder %s18, 0
    %p123 = por %p121, %p122
    %s125 = sadd.s32 %s124, 1
    %p128 = scmp.eq.s32.totalorder %s12, 1
    %p129 = scmp.ne.s32.totalorder %s124, %s126
    %p130 = scmp.eq.s32.totalorder %s12, 0
    %p131 = por %p129, %p130
    %p132 = scmp.ne.s32.totalorder %s124, %s126
    %p133 = scmp.eq.s32.totalorder %s17, 1
    %p134 = por %p132, %p133
    %p135 = scmp.ne.s32.totalorder %s126, %s127
    %p136 = scmp.eq.s32.totalorder %s17, 0
    %p137 = por %p135, %p136
    %p138 = scmp.ne.s32.totalorder %s126, %s127
    %p139 = scmp.eq.s32.totalorder %s18, 1
    %p140 = por %p138, %p139
    %p142 = scmp.ne.s32.totalorder %s127, %s141
    %p143 = scmp.eq.s32.totalorder %s18, 0
    %p144 = por %p142, %p143
    %s146 = sadd.s32 %s145, 1
    %p149 = scmp.eq.s32.totalorder %s12, 1
    %p150 = scmp.ne.s32.totalorder %s145, %s147
    %p151 = scmp.eq.s32.totalorder %s12, 0
    %p152 = por %p150, %p151
    %p153 = scmp.ne.s32.totalorder %s145, %s147
    %p154 = scmp.eq.s32.totalorder %s17, 1
    %p155 = por %p153, %p154
    %p156 = scmp.ne.s32.totalorder %s147, %s148
    %p157 = scmp.eq.s32.totalorder %s17, 0
    %p158 = por %p156, %p157
    %p159 = scmp.ne.s32.totalorder %s147, %s148
    %p160 = scmp.eq.s32.totalorder %s18, 1
    %p161 = por %p159, %p160
    %p163 = scmp.ne.s32.totalorder %s148, %s162
    %p164 = scmp.eq.s32.totalorder %s18, 0
    %p165 = por %p163, %p164
    %s166 = ssub.s32 %s12, %s19
    %p167 = scmp.eq.s32.totalorder %s166, 0
    %s169 = sadd.s32 %s168, 1
    %s170 = scalar_select %p167, %s168, %s169
    %p173 = pneg %p167
    %p174 = scmp.eq.s32.totalorder %s12, 1
    %p175 = por %p173, %p174
    %p176 = scmp.ne.s32.totalorder %s168, %s171
    %p177 = scmp.eq.s32.totalorder %s12, 0
    %p178 = por %p176, %p177
    %p179 = scmp.ne.s32.totalorder %s168, %s171
    %p180 = scmp.eq.s32.totalorder %s17, 1
    %p181 = por %p179, %p180
    %p182 = scmp.ne.s32.totalorder %s171, %s172
    %p183 = scmp.eq.s32.totalorder %s17, 0
    %p184 = por %p182, %p183
    %p185 = scmp.ne.s32.totalorder %s171, %s172
    %p186 = scmp.eq.s32.totalorder %s18, 1
    %p187 = por %p185, %p186
    %p189 = scmp.ne.s32.totalorder %s172, %s188
    %p190 = scmp.eq.s32.totalorder %s18, 0
    %p191 = por %p189, %p190
    %p192 = scmp.le.s32.totalorder 1, %s12
    %p193 = scmp.lt.s32.totalorder %s12, 3
    %p194 = pnand %p192, %p193
    %p195 = pneg %p194
    // Predicated region
    $region9: #{base_encoder_forward.7} parent=5 // pred_check
      _
    $region10: #{base_encoder_forward.7} parent=5 // pred_check_branch
      %197 = sbr.rel (%p194) target = $region12
    $region11: #{base_encoder_forward.7} parent=5 // pred_region
      %s198 = ssub.s32 %s12, 1
      // Predicated region
      $region13: #{base_encoder_forward.7} parent=11 // pred_check
        %p199 = pneg %p137
      $region14: #{base_encoder_forward.7} parent=11 // pred_check_branch
        %201 = sbr.rel (%p199) target = $region16
      $region15: #{base_encoder_forward.7} parent=11 // pred_region
        _
      $region16: #{base_encoder_forward.7} parent=11 // pred_fallthru
        _
      // Predicated region
      $region17: #{base_encoder_forward.7} parent=11 // pred_check
        %p202 = pneg %p158
      $region18: #{base_encoder_forward.7} parent=11 // pred_check_branch
        %204 = sbr.rel (%p202) target = $region20
      $region19: #{base_encoder_forward.7} parent=11 // pred_region
        _
      $region20: #{base_encoder_forward.7} parent=11 // pred_fallthru
        _
    $region12: #{base_encoder_forward.7} parent=5 // pred_fallthru
      _
    %p205 = scmp.lt.s32.totalorder %s12, 2
    // Predicated region
    $region21: #{base_encoder_forward.7} parent=5 // pred_check
      %p206 = pneg %p205
    $region22: #{base_encoder_forward.7} parent=5 // pred_check_branch
      %208 = sbr.rel (%p206) target = $region24
    $region23: #{base_encoder_forward.7} parent=5 // pred_region
      // Predicated region
      $region25: #{base_encoder_forward.7} parent=23 // pred_check
        %p209 = pneg %p32
      $region26: #{base_encoder_forward.7} parent=23 // pred_check_branch
        %211 = sbr.rel (%p209) target = $region28
      $region27: #{base_encoder_forward.7} parent=23 // pred_region
        %p212 = scmp.lt.s32.totalorder %s12, 1
        %s213 = scalar_select %p212, %s12, 1
        %s214 = smul.addr %s213, 5
        %s215 = smul.addr %s214, 4
        %s216 = scalar_lea.vmem %s0, %s215
      $region28: #{base_encoder_forward.7} parent=23 // pred_fallthru
        _
      // Predicated region
      $region29: #{base_encoder_forward.7} parent=23 // pred_check
        %p217 = pneg %p58
      $region30: #{base_encoder_forward.7} parent=23 // pred_check_branch
        %219 = sbr.rel (%p217) target = $region32
      $region31: #{base_encoder_forward.7} parent=23 // pred_region
        %p220 = scmp.lt.s32.totalorder %s12, 1
        %s221 = scalar_select %p220, %s12, 1
        %s222 = smul.addr %s221, 5
        %s223 = smul.addr %s222, 4
        %s224 = scalar_lea.vmem %s1, %s223
      $region32: #{base_encoder_forward.7} parent=23 // pred_fallthru
        _
      // Predicated region
      $region33: #{base_encoder_forward.7} parent=23 // pred_check
        %p225 = pneg %p84
      $region34: #{base_encoder_forward.7} parent=23 // pred_check_branch
        %227 = sbr.rel (%p225) target = $region36
      $region35: #{base_encoder_forward.7} parent=23 // pred_region
        %p228 = scmp.lt.s32.totalorder %s12, 1
        %s229 = scalar_select %p228, %s12, 1
        %s230 = smul.addr %s229, 5
        %s231 = smul.addr %s230, 4
        %s232 = scalar_lea.vmem %s2, %s231
      $region36: #{base_encoder_forward.7} parent=23 // pred_fallthru
        _
      // Predicated region
      $region37: #{base_encoder_forward.7} parent=23 // pred_check
        %p233 = pneg %p110
      $region38: #{base_encoder_forward.7} parent=23 // pred_check_branch
        %235 = sbr.rel (%p233) target = $region40
      $region39: #{base_encoder_forward.7} parent=23 // pred_region
        %p236 = scmp.lt.s32.totalorder %s12, 1
        %s237 = scalar_select %p236, %s12, 1
        %s238 = smul.addr %s237, 5
        %s239 = smul.addr %s238, 4
        %s240 = scalar_lea.vmem %s3, %s239
      $region40: #{base_encoder_forward.7} parent=23 // pred_fallthru
        _
    $region24: #{base_encoder_forward.7} parent=5 // pred_fallthru
      _
    %p241 = scmp.le.s32.totalorder 1, %s12
    %p242 = scmp.lt.s32.totalorder %s12, 3
    %p243 = pnand %p241, %p242
    %p244 = pneg %p243
    // Predicated region
    $region41: #{base_encoder_forward.7} parent=5 // pred_check
      _
    $region42: #{base_encoder_forward.7} parent=5 // pred_check_branch
      %246 = sbr.rel (%p243) target = $region44
    $region43: #{base_encoder_forward.7} parent=5 // pred_region
      %s247 = ssub.s32 %s12, 1
      %p248 = scmp.lt.s32.totalorder %s17, 1
      %s249 = scalar_select %p248, %s17, 1
      %s250 = smul.addr %s249, 5
      %s251 = smul.addr %s250, 4
      %s252 = scalar_lea.vmem %s0, %s251
      %p253 = pneg %p38
      %p254 = pneg %p35
      %p255 = scmp.lt.s32.totalorder %s17, 1
      %s256 = scalar_select %p255, %s17, 1
      %s257 = smul.addr %s256, 5
      %s258 = smul.addr %s257, 4
      %s259 = scalar_lea.vmem %s1, %s258
      %p260 = pneg %p64
      %p261 = pneg %p61
      %p262 = scmp.lt.s32.totalorder %s17, 1
      %s263 = scalar_select %p262, %s17, 1
      %s264 = smul.addr %s263, 5
      %s265 = smul.addr %s264, 4
      %s266 = scalar_lea.vmem %s2, %s265
      %p267 = pneg %p90
      %p268 = pneg %p87
      %p269 = scmp.lt.s32.totalorder %s17, 1
      %s270 = scalar_select %p269, %s17, 1
      %s271 = smul.addr %s270, 5
      %s272 = smul.addr %s271, 4
      %s273 = scalar_lea.vmem %s3, %s272
      %p274 = pneg %p116
      %p275 = pneg %p113
      %p276 = pneg %p137
      %p277 = pneg %p134
      %p278 = pneg %p158
      %p279 = pneg %p155
      %p280 = pneg %p184
      %p281 = pneg %p181
      %p282 = scmp.lt.s32.totalorder %s17, 1
      %s283 = scalar_select %p282, %s17, 1
      %s284 = smul.addr %s283, 2
      %s285 = smul.addr %s284, 4
      %s286 = scalar_lea.vmem %s6, %s285
      %p287 = scmp.lt.s32.totalorder %s17, 1
      %s288 = scalar_select %p287, %s17, 1
      %s289 = smul.addr %s288, 5
      %s290 = smul.addr %s289, 4
      %s291 = scalar_lea.vmem %s0, %s290
      %p292 = scmp.lt.s32.totalorder %s17, 1
      %s293 = scalar_select %p292, %s17, 1
      %s294 = smul.addr %s293, 5
      %s295 = smul.addr %s294, 4
      %s296 = scalar_lea.vmem %s1, %s295
      %p297 = scmp.lt.s32.totalorder %s17, 1
      %s298 = scalar_select %p297, %s17, 1
      %s299 = smul.addr %s298, 5
      %s300 = smul.addr %s299, 4
      %s301 = scalar_lea.vmem %s2, %s300
      %p302 = scmp.lt.s32.totalorder %s17, 1
      %s303 = scalar_select %p302, %s17, 1
      %s304 = smul.addr %s303, 5
      %s305 = smul.addr %s304, 4
      %s306 = scalar_lea.vmem %s3, %s305
      %p307 = scmp.lt.s32.totalorder %s17, 1
      %s308 = scalar_select %p307, %s17, 1
      %s309 = smul.addr %s308, 2
      %s310 = smul.addr %s309, 4
      %s311 = scalar_lea.vmem %s6, %s310
      %v313 = vld [vmem:[%s291] sm:$0x3]
      %v314 = vld [vmem:[%s291 + $0x4] sm:$0x3]
      %v315 = vld [vmem:[%s291 + $0x8] sm:$0x3]
      %v316 = vld [vmem:[%s291 + $0xc] sm:$0x3]
      %v317 = vld [vmem:[%s4] sm:$0xf]
      %v318 = vld [vmem:[%s4 + $0x4] sm:$0xf]
      %v319 = vld [vmem:[%s4 + $0x8] sm:$0xf]
      %v320 = vld [vmem:[%s4 + $0xc] sm:$0xf]
      %v321 = vld [vmem:[%s4 + $0x10] sm:$0xf]
      %v322 = vld [vmem:[%s4 + $0x14] sm:$0xf]
      %v323 = vld [vmem:[%s4 + $0x18] sm:$0xf]
      %v324 = vld [vmem:[%s4 + $0x1c] sm:$0xf]
      %v325 = vld [vmem:[%s4 + $0x20] sm:$0xf]
      %v326 = vld [vmem:[%s4 + $0x24] sm:$0xf]
      %v327 = vld [vmem:[%s4 + $0x28] sm:$0xf]
      %v328 = vld [vmem:[%s4 + $0x2c] sm:$0xf]
      %v329 = vld [vmem:[%s4 + $0x30] sm:$0xf]
      %v330 = vld [vmem:[%s4 + $0x34] sm:$0xf]
      %v331 = vld [vmem:[%s4 + $0x38] sm:$0xf]
      %v332 = vld [vmem:[%s4 + $0x3c] sm:$0xf]
      %v333 = vld [vmem:[%s296] sm:$0x3]
      %v334 = vld [vmem:[%s296 + $0x4] sm:$0x3]
      %v335 = vld [vmem:[%s296 + $0x8] sm:$0x3]
      %v336 = vld [vmem:[%s296 + $0xc] sm:$0x3]
      %s337 = scalar_lea.vmem %s4, 64
      %v338 = vld [vmem:[%s337] sm:$0xf]
      %v339 = vld [vmem:[%s337 + $0x4] sm:$0xf]
      %v340 = vld [vmem:[%s337 + $0x8] sm:$0xf]
      %v341 = vld [vmem:[%s337 + $0xc] sm:$0xf]
      %v342 = vld [vmem:[%s337 + $0x10] sm:$0xf]
      %v343 = vld [vmem:[%s337 + $0x14] sm:$0xf]
      %v344 = vld [vmem:[%s337 + $0x18] sm:$0xf]
      %v345 = vld [vmem:[%s337 + $0x1c] sm:$0xf]
      %v346 = vld [vmem:[%s337 + $0x20] sm:$0xf]
      %v347 = vld [vmem:[%s337 + $0x24] sm:$0xf]
      %v348 = vld [vmem:[%s337 + $0x28] sm:$0xf]
      %v349 = vld [vmem:[%s337 + $0x2c] sm:$0xf]
      %v350 = vld [vmem:[%s337 + $0x30] sm:$0xf]
      %v351 = vld [vmem:[%s337 + $0x34] sm:$0xf]
      %v352 = vld [vmem:[%s337 + $0x38] sm:$0xf]
      %v353 = vld [vmem:[%s337 + $0x3c] sm:$0xf]
      %v358 = vcombine.low %v333, %v334
      %v359 = vcombine.low %v335, %v336
      %v361 = vunpack.c.l.s4 1983009808
      %v362 = vunpack.c.0.s8 %v361
      %v363 = vlaneseq
      %v364 = vshrl.u32 %v363, 7
      %v365 = vsub.s32 %v362, %v364
      %v366 = vrot.slane %v358, %v365
      %v368 = vunpack.c.l.s4 1983009808
      %v369 = vunpack.c.0.s8 %v368
      %v370 = vlaneseq
      %v371 = vshrl.u32 %v370, 7
      %v372 = vsub.s32 %v369, %v371
      %v373 = vrot.slane %v359, %v372
      %v374 = vcombine.low %v366, %v373
      %v392 = vunpack.c.l.b16 %v338
      %v393 = vunpack.c.l.b16 %v339
      %v394 = vunpack.c.l.b16 %v340
      %v395 = vunpack.c.l.b16 %v341
      %v396 = vunpack.c.l.b16 %v342
      %v397 = vunpack.c.l.b16 %v343
      %v398 = vunpack.c.l.b16 %v344
      %v399 = vunpack.c.l.b16 %v345
      %v400 = vunpack.c.l.b16 %v346
      %v401 = vunpack.c.l.b16 %v347
      %v402 = vunpack.c.l.b16 %v348
      %v403 = vunpack.c.l.b16 %v349
      %v404 = vunpack.c.l.b16 %v350
      %v405 = vunpack.c.l.b16 %v351
      %v406 = vunpack.c.l.b16 %v352
      %v407 = vunpack.c.l.b16 %v353
      %v408 = vpack.c.b16 %v393, %v392
      %v409 = vpack.c.b16 %v395, %v394
      %v410 = vpack.c.b16 %v397, %v396
      %v411 = vpack.c.b16 %v399, %v398
      %v412 = vpack.c.b16 %v401, %v400
      %v413 = vpack.c.b16 %v403, %v402
      %v414 = vpack.c.b16 %v405, %v404
      %v415 = vpack.c.b16 %v407, %v406
      %424 = vmatprep.subr.bf16.mxu0 0
      %425 = vmatpush1.bf16.msra.mxu0 %v408
      %426 = vmatprep.subr.bf16.mxu0 0
      %427 = vmatpush1.bf16.msra.mxu0 %v409
      %428 = vmatprep.subr.bf16.mxu0 0
      %429 = vmatpush1.bf16.msra.mxu0 %v410
      %430 = vmatprep.subr.bf16.mxu0 0
      %431 = vmatpush1.bf16.msra.mxu0 %v411
      %432 = vmatprep.subr.bf16.mxu0 0
      %433 = vmatpush1.bf16.msra.mxu0 %v412
      %434 = vmatprep.subr.bf16.mxu0 0
      %435 = vmatpush1.bf16.msra.mxu0 %v413
      %436 = vmatprep.subr.bf16.mxu0 0
      %437 = vmatpush1.bf16.msra.mxu0 %v414
      %438 = vmatprep.subr.bf16.mxu0 0
      %439 = vmatpush1.bf16.msra.mxu0 %v415
      %440 = vmatprep.subr.bf16.mxu0 0
      %441 = vmatpush1.bf16.msra.mxu0 0
      %442 = vmatprep.subr.bf16.mxu0 0
      %443 = vmatpush1.bf16.msra.mxu0 0
      %444 = vmatprep.subr.bf16.mxu0 0
      %445 = vmatpush1.bf16.msra.mxu0 0
      %446 = vmatprep.subr.bf16.mxu0 0
      %447 = vmatpush1.bf16.msra.mxu0 0
      %448 = vmatprep.subr.bf16.mxu0 0
      %449 = vmatpush1.bf16.msra.mxu0 0
      %450 = vmatprep.subr.bf16.mxu0 0
      %451 = vmatpush1.bf16.msra.mxu0 0
      %452 = vmatprep.subr.bf16.mxu0 0
      %453 = vmatpush1.bf16.msra.mxu0 0
      %454 = vmatprep.subr.bf16.mxu0 0
      %455 = vmatpush1.bf16.msra.mxu0 0
      %456 = vmatprep.mubr.bf16.mxu0 0
      %457 = vmatmul.mubr.bf16.gmra.mrb[0].mxu0 %v374
      %v458 = vpop.f32.mrb[0].mxu0
      %v459 = vadd.f32 0.0, %v458
      %v460 = vpop.f32.mrb[0].mxu0
      %v461 = vpop.f32.mrb[0].mxu0
      %v462 = vadd.f32 0.0, %v461
      %v463 = vpop.f32.mrb[0].mxu0
      %464 = vdwg.mxu0
      %v469 = vcombine.low %v313, %v314
      %v470 = vcombine.low %v315, %v316
      %v472 = vunpack.c.l.s4 1983009808
      %v473 = vunpack.c.0.s8 %v472
      %v474 = vlaneseq
      %v475 = vshrl.u32 %v474, 7
      %v476 = vsub.s32 %v473, %v475
      %v477 = vrot.slane %v469, %v476
      %v479 = vunpack.c.l.s4 1983009808
      %v480 = vunpack.c.0.s8 %v479
      %v481 = vlaneseq
      %v482 = vshrl.u32 %v481, 7
      %v483 = vsub.s32 %v480, %v482
      %v484 = vrot.slane %v470, %v483
      %v485 = vcombine.low %v477, %v484
      %v503 = vunpack.c.l.b16 %v317
      %v504 = vunpack.c.l.b16 %v318
      %v505 = vunpack.c.l.b16 %v319
      %v506 = vunpack.c.l.b16 %v320
      %v507 = vunpack.c.l.b16 %v321
      %v508 = vunpack.c.l.b16 %v322
      %v509 = vunpack.c.l.b16 %v323
      %v510 = vunpack.c.l.b16 %v324
      %v511 = vunpack.c.l.b16 %v325
      %v512 = vunpack.c.l.b16 %v326
      %v513 = vunpack.c.l.b16 %v327
      %v514 = vunpack.c.l.b16 %v328
      %v515 = vunpack.c.l.b16 %v329
      %v516 = vunpack.c.l.b16 %v330
      %v517 = vunpack.c.l.b16 %v331
      %v518 = vunpack.c.l.b16 %v332
      %v519 = vpack.c.b16 %v504, %v503
      %v520 = vpack.c.b16 %v506, %v505
      %v521 = vpack.c.b16 %v508, %v507
      %v522 = vpack.c.b16 %v510, %v509
      %v523 = vpack.c.b16 %v512, %v511
      %v524 = vpack.c.b16 %v514, %v513
      %v525 = vpack.c.b16 %v516, %v515
      %v526 = vpack.c.b16 %v518, %v517
      %535 = vmatprep.subr.bf16.mxu0 0
      %536 = vmatpush1.bf16.msra.mxu0 %v519
      %537 = vmatprep.subr.bf16.mxu0 0
      %538 = vmatpush1.bf16.msra.mxu0 %v520
      %539 = vmatprep.subr.bf16.mxu0 0
      %540 = vmatpush1.bf16.msra.mxu0 %v521
      %541 = vmatprep.subr.bf16.mxu0 0
      %542 = vmatpush1.bf16.msra.mxu0 %v522
      %543 = vmatprep.subr.bf16.mxu0 0
      %544 = vmatpush1.bf16.msra.mxu0 %v523
      %545 = vmatprep.subr.bf16.mxu0 0
      %546 = vmatpush1.bf16.msra.mxu0 %v524
      %547 = vmatprep.subr.bf16.mxu0 0
      %548 = vmatpush1.bf16.msra.mxu0 %v525
      %549 = vmatprep.subr.bf16.mxu0 0
      %550 = vmatpush1.bf16.msra.mxu0 %v526
      %551 = vmatprep.subr.bf16.mxu0 0
      %552 = vmatpush1.bf16.msra.mxu0 0
      %553 = vmatprep.subr.bf16.mxu0 0
      %554 = vmatpush1.bf16.msra.mxu0 0
      %555 = vmatprep.subr.bf16.mxu0 0
      %556 = vmatpush1.bf16.msra.mxu0 0
      %557 = vmatprep.subr.bf16.mxu0 0
      %558 = vmatpush1.bf16.msra.mxu0 0
      %559 = vmatprep.subr.bf16.mxu0 0
      %560 = vmatpush1.bf16.msra.mxu0 0
      %561 = vmatprep.subr.bf16.mxu0 0
      %562 = vmatpush1.bf16.msra.mxu0 0
      %563 = vmatprep.subr.bf16.mxu0 0
      %564 = vmatpush1.bf16.msra.mxu0 0
      %565 = vmatprep.subr.bf16.mxu0 0
      %566 = vmatpush1.bf16.msra.mxu0 0
      %567 = vmatprep.mubr.bf16.mxu0 0
      %568 = vmatmul.mubr.bf16.gmra.mrb[0].mxu0 %v485
      %v569 = vpop.f32.mrb[0].mxu0
      %v570 = vadd.f32 %v459, %v569
      %v571 = vpop.f32.mrb[0].mxu0
      %v572 = vpop.f32.mrb[0].mxu0
      %v573 = vadd.f32 %v462, %v572
      %v574 = vpop.f32.mrb[0].mxu0
      %575 = vdwg.mxu0
      %v576 = vld [vmem:[%s291] sm:$0x7]
      %v577 = vld [vmem:[%s291 + $0x4] sm:$0x7]
      %v578 = vld [vmem:[%s291 + $0x8] sm:$0x7]
      %v579 = vld [vmem:[%s291 + $0xc] sm:$0x7]
      %v585 = vunpack.c.l.s4 1983009808
      %v586 = vunpack.c.0.s8 %v585
      %v587 = vlaneseq
      %v588 = vshrl.u32 %v587, 7
      %v589 = vsub.s32 %v586, %v588
      %v590 = vrot.slane %v576, %v589
      %v591 = vcombine.high %v590, %v590
      %v593 = vunpack.c.l.s4 1983009808
      %v594 = vunpack.c.0.s8 %v593
      %v595 = vlaneseq
      %v596 = vshrl.u32 %v595, 7
      %v597 = vsub.s32 %v594, %v596
      %v598 = vrot.slane %v577, %v597
      %v599 = vcombine.high %v598, %v598
      %v601 = vunpack.c.l.s4 1983009808
      %v602 = vunpack.c.0.s8 %v601
      %v603 = vlaneseq
      %v604 = vshrl.u32 %v603, 7
      %v605 = vsub.s32 %v602, %v604
      %v606 = vrot.slane %v578, %v605
      %v607 = vcombine.high %v606, %v606
      %v609 = vunpack.c.l.s4 1983009808
      %v610 = vunpack.c.0.s8 %v609
      %v611 = vlaneseq
      %v612 = vshrl.u32 %v611, 7
      %v613 = vsub.s32 %v610, %v612
      %v614 = vrot.slane %v579, %v613
      %v615 = vcombine.high %v614, %v614
      %vm616 = vsmask.f32 1280
      %vm617 = vsmask.f32 3336
      %vm618 = vmor %vm616, %vm617
      %vm619 = vsmask.f32 5392
      %vm620 = vmor %vm618, %vm619
      %vm621 = vsmask.f32 7448
      %vm622 = vmor %vm620, %vm621
      %v624 = vshrl.u32 %v590, 16
      %v626 = vrot.slane %v624, 6
      %v627 = vshll.u32 %v590, 16
      %v629 = vrot.slane %v627, 7
      %v630 = vor.u32 %v626, %v629
      %v631 = vrot.slane %v630, 2
      %v633 = vshll.u32 %v591, 16
      %v635 = vrot.slane %v633, 7
      %v636 = vsel %vm622, %v631, %v635
      %v638 = vshrl.u32 %v598, 16
      %v640 = vrot.slane %v638, 6
      %v641 = vshll.u32 %v598, 16
      %v643 = vrot.slane %v641, 7
      %v644 = vor.u32 %v640, %v643
      %v645 = vrot.slane %v644, 2
      %v647 = vshll.u32 %v599, 16
      %v649 = vrot.slane %v647, 7
      %v650 = vsel %vm622, %v645, %v649
      %v652 = vshrl.u32 %v606, 16
      %v654 = vrot.slane %v652, 6
      %v655 = vshll.u32 %v606, 16
      %v657 = vrot.slane %v655, 7
      %v658 = vor.u32 %v654, %v657
      %v659 = vrot.slane %v658, 2
      %v661 = vshll.u32 %v607, 16
      %v663 = vrot.slane %v661, 7
      %v664 = vsel %vm622, %v659, %v663
      %v666 = vshrl.u32 %v614, 16
      %v668 = vrot.slane %v666, 6
      %v669 = vshll.u32 %v614, 16
      %v671 = vrot.slane %v669, 7
      %v672 = vor.u32 %v668, %v671
      %v673 = vrot.slane %v672, 2
      %v675 = vshll.u32 %v615, 16
      %v677 = vrot.slane %v675, 7
      %v678 = vsel %vm622, %v673, %v677
      %s679 = scalar_lea.vmem %s4, 128
      %v680 = vld [vmem:[%s679] sm:$0xf]
      %v681 = vld [vmem:[%s679 + $0x4] sm:$0xf]
      %v682 = vld [vmem:[%s679 + $0x8] sm:$0xf]
      %v683 = vld [vmem:[%s679 + $0xc] sm:$0xf]
      %v684 = vld [vmem:[%s679 + $0x10] sm:$0xf]
      %v685 = vld [vmem:[%s679 + $0x14] sm:$0xf]
      %v686 = vld [vmem:[%s679 + $0x18] sm:$0xf]
      %v687 = vld [vmem:[%s679 + $0x1c] sm:$0xf]
      %v688 = vld [vmem:[%s679 + $0x20] sm:$0xf]
      %v689 = vld [vmem:[%s679 + $0x24] sm:$0xf]
      %v690 = vld [vmem:[%s679 + $0x28] sm:$0xf]
      %v691 = vld [vmem:[%s679 + $0x2c] sm:$0xf]
      %v692 = vld [vmem:[%s679 + $0x30] sm:$0xf]
      %v693 = vld [vmem:[%s679 + $0x34] sm:$0xf]
      %v694 = vld [vmem:[%s679 + $0x38] sm:$0xf]
      %v695 = vld [vmem:[%s679 + $0x3c] sm:$0xf]
      %v696 = vcombine.low %v636, %v650
      %v697 = vcombine.low %v664, %v678
      %v699 = vunpack.c.l.s4 1983009808
      %v700 = vunpack.c.0.s8 %v699
      %v701 = vlaneseq
      %v702 = vshrl.u32 %v701, 7
      %v703 = vsub.s32 %v700, %v702
      %v704 = vrot.slane %v696, %v703
      %v706 = vunpack.c.l.s4 1983009808
      %v707 = vunpack.c.0.s8 %v706
      %v708 = vlaneseq
      %v709 = vshrl.u32 %v708, 7
      %v710 = vsub.s32 %v707, %v709
      %v711 = vrot.slane %v697, %v710
      %v712 = vcombine.low %v704, %v711
      %v730 = vunpack.c.l.b16 %v680
      %v731 = vunpack.c.l.b16 %v681
      %v732 = vunpack.c.l.b16 %v682
      %v733 = vunpack.c.l.b16 %v683
      %v734 = vunpack.c.l.b16 %v684
      %v735 = vunpack.c.l.b16 %v685
      %v736 = vunpack.c.l.b16 %v686
      %v737 = vunpack.c.l.b16 %v687
      %v738 = vunpack.c.l.b16 %v688
      %v739 = vunpack.c.l.b16 %v689
      %v740 = vunpack.c.l.b16 %v690
      %v741 = vunpack.c.l.b16 %v691
      %v742 = vunpack.c.l.b16 %v692
      %v743 = vunpack.c.l.b16 %v693
      %v744 = vunpack.c.l.b16 %v694
      %v745 = vunpack.c.l.b16 %v695
      %v746 = vpack.c.b16 %v731, %v730
      %v747 = vpack.c.b16 %v733, %v732
      %v748 = vpack.c.b16 %v735, %v734
      %v749 = vpack.c.b16 %v737, %v736
      %v750 = vpack.c.b16 %v739, %v738
      %v751 = vpack.c.b16 %v741, %v740
      %v752 = vpack.c.b16 %v743, %v742
      %v753 = vpack.c.b16 %v745, %v744
      %762 = vmatprep.subr.bf16.mxu0 0
      %763 = vmatpush1.bf16.msra.mxu0 %v746
      %764 = vmatprep.subr.bf16.mxu0 0
      %765 = vmatpush1.bf16.msra.mxu0 %v747
      %766 = vmatprep.subr.bf16.mxu0 0
      %767 = vmatpush1.bf16.msra.mxu0 %v748
      %768 = vmatprep.subr.bf16.mxu0 0
      %769 = vmatpush1.bf16.msra.mxu0 %v749
      %770 = vmatprep.subr.bf16.mxu0 0
      %771 = vmatpush1.bf16.msra.mxu0 %v750
      %772 = vmatprep.subr.bf16.mxu0 0
      %773 = vmatpush1.bf16.msra.mxu0 %v751
      %774 = vmatprep.subr.bf16.mxu0 0
      %775 = vmatpush1.bf16.msra.mxu0 %v752
      %776 = vmatprep.subr.bf16.mxu0 0
      %777 = vmatpush1.bf16.msra.mxu0 %v753
      %778 = vmatprep.subr.bf16.mxu0 0
      %779 = vmatpush1.bf16.msra.mxu0 0
      %780 = vmatprep.subr.bf16.mxu0 0
      %781 = vmatpush1.bf16.msra.mxu0 0
      %782 = vmatprep.subr.bf16.mxu0 0
      %783 = vmatpush1.bf16.msra.mxu0 0
      %784 = vmatprep.subr.bf16.mxu0 0
      %785 = vmatpush1.bf16.msra.mxu0 0
      %786 = vmatprep.subr.bf16.mxu0 0
      %787 = vmatpush1.bf16.msra.mxu0 0
      %788 = vmatprep.subr.bf16.mxu0 0
      %789 = vmatpush1.bf16.msra.mxu0 0
      %790 = vmatprep.subr.bf16.mxu0 0
      %791 = vmatpush1.bf16.msra.mxu0 0
      %792 = vmatprep.subr.bf16.mxu0 0
      %793 = vmatpush1.bf16.msra.mxu0 0
      %794 = vmatprep.mubr.bf16.mxu0 0
      %795 = vmatmul.mubr.bf16.gmra.mrb[0].mxu0 %v712
      %v796 = vpop.f32.mrb[0].mxu0
      %v797 = vadd.f32 0.0, %v796
      %v798 = vpop.f32.mrb[0].mxu0
      %v799 = vpop.f32.mrb[0].mxu0
      %v800 = vadd.f32 0.0, %v799
      %v801 = vpop.f32.mrb[0].mxu0
      %802 = vdwg.mxu0
      %v803 = vadd.f32 %v570, %v797
      %v804 = vadd.f32 %v573, %v800
      %v805 = vld [vmem:[%s301] sm:$0x3]
      %v806 = vld [vmem:[%s301 + $0x4] sm:$0x3]
      %v807 = vld [vmem:[%s301 + $0x8] sm:$0x3]
      %v808 = vld [vmem:[%s301 + $0xc] sm:$0x3]
      %s809 = scalar_lea.vmem %s4, 192
      %v810 = vld [vmem:[%s809] sm:$0xf]
      %v811 = vld [vmem:[%s809 + $0x4] sm:$0xf]
      %v812 = vld [vmem:[%s809 + $0x8] sm:$0xf]
      %v813 = vld [vmem:[%s809 + $0xc] sm:$0xf]
      %v814 = vld [vmem:[%s809 + $0x10] sm:$0xf]
      %v815 = vld [vmem:[%s809 + $0x14] sm:$0xf]
      %v816 = vld [vmem:[%s809 + $0x18] sm:$0xf]
      %v817 = vld [vmem:[%s809 + $0x1c] sm:$0xf]
      %v818 = vld [vmem:[%s809 + $0x20] sm:$0xf]
      %v819 = vld [vmem:[%s809 + $0x24] sm:$0xf]
      %v820 = vld [vmem:[%s809 + $0x28] sm:$0xf]
      %v821 = vld [vmem:[%s809 + $0x2c] sm:$0xf]
      %v822 = vld [vmem:[%s809 + $0x30] sm:$0xf]
      %v823 = vld [vmem:[%s809 + $0x34] sm:$0xf]
      %v824 = vld [vmem:[%s809 + $0x38] sm:$0xf]
      %v825 = vld [vmem:[%s809 + $0x3c] sm:$0xf]
      %v830 = vcombine.low %v805, %v806
      %v831 = vcombine.low %v807, %v808
      %v833 = vunpack.c.l.s4 1983009808
      %v834 = vunpack.c.0.s8 %v833
      %v835 = vlaneseq
      %v836 = vshrl.u32 %v835, 7
      %v837 = vsub.s32 %v834, %v836
      %v838 = vrot.slane %v830, %v837
      %v840 = vunpack.c.l.s4 1983009808
      %v841 = vunpack.c.0.s8 %v840
      %v842 = vlaneseq
      %v843 = vshrl.u32 %v842, 7
      %v844 = vsub.s32 %v841, %v843
      %v845 = vrot.slane %v831, %v844
      %v846 = vcombine.low %v838, %v845
      %v864 = vunpack.c.l.b16 %v810
      %v865 = vunpack.c.l.b16 %v811
      %v866 = vunpack.c.l.b16 %v812
      %v867 = vunpack.c.l.b16 %v813
      %v868 = vunpack.c.l.b16 %v814
      %v869 = vunpack.c.l.b16 %v815
      %v870 = vunpack.c.l.b16 %v816
      %v871 = vunpack.c.l.b16 %v817
      %v872 = vunpack.c.l.b16 %v818
      %v873 = vunpack.c.l.b16 %v819
      %v874 = vunpack.c.l.b16 %v820
      %v875 = vunpack.c.l.b16 %v821
      %v876 = vunpack.c.l.b16 %v822
      %v877 = vunpack.c.l.b16 %v823
      %v878 = vunpack.c.l.b16 %v824
      %v879 = vunpack.c.l.b16 %v825
      %v880 = vpack.c.b16 %v865, %v864
      %v881 = vpack.c.b16 %v867, %v866
      %v882 = vpack.c.b16 %v869, %v868
      %v883 = vpack.c.b16 %v871, %v870
      %v884 = vpack.c.b16 %v873, %v872
      %v885 = vpack.c.b16 %v875, %v874
      %v886 = vpack.c.b16 %v877, %v876
      %v887 = vpack.c.b16 %v879, %v878
      %896 = vmatprep.subr.bf16.mxu0 0
      %897 = vmatpush1.bf16.msra.mxu0 %v880
      %898 = vmatprep.subr.bf16.mxu0 0
      %899 = vmatpush1.bf16.msra.mxu0 %v881
      %900 = vmatprep.subr.bf16.mxu0 0
      %901 = vmatpush1.bf16.msra.mxu0 %v882
      %902 = vmatprep.subr.bf16.mxu0 0
      %903 = vmatpush1.bf16.msra.mxu0 %v883
      %904 = vmatprep.subr.bf16.mxu0 0
      %905 = vmatpush1.bf16.msra.mxu0 %v884
      %906 = vmatprep.subr.bf16.mxu0 0
      %907 = vmatpush1.bf16.msra.mxu0 %v885
      %908 = vmatprep.subr.bf16.mxu0 0
      %909 = vmatpush1.bf16.msra.mxu0 %v886
      %910 = vmatprep.subr.bf16.mxu0 0
      %911 = vmatpush1.bf16.msra.mxu0 %v887
      %912 = vmatprep.subr.bf16.mxu0 0
      %913 = vmatpush1.bf16.msra.mxu0 0
      %914 = vmatprep.subr.bf16.mxu0 0
      %915 = vmatpush1.bf16.msra.mxu0 0
      %916 = vmatprep.subr.bf16.mxu0 0
      %917 = vmatpush1.bf16.msra.mxu0 0
      %918 = vmatprep.subr.bf16.mxu0 0
      %919 = vmatpush1.bf16.msra.mxu0 0
      %920 = vmatprep.subr.bf16.mxu0 0
      %921 = vmatpush1.bf16.msra.mxu0 0
      %922 = vmatprep.subr.bf16.mxu0 0
      %923 = vmatpush1.bf16.msra.mxu0 0
      %924 = vmatprep.subr.bf16.mxu0 0
      %925 = vmatpush1.bf16.msra.mxu0 0
      %926 = vmatprep.subr.bf16.mxu0 0
      %927 = vmatpush1.bf16.msra.mxu0 0
      %928 = vmatprep.mubr.bf16.mxu0 0
      %929 = vmatmul.mubr.bf16.gmra.mrb[0].mxu0 %v846
      %v930 = vpop.f32.mrb[0].mxu0
      %v931 = vadd.f32 0.0, %v930
      %v932 = vpop.f32.mrb[0].mxu0
      %v933 = vpop.f32.mrb[0].mxu0
      %v934 = vadd.f32 0.0, %v933
      %v935 = vpop.f32.mrb[0].mxu0
      %936 = vdwg.mxu0
      %v937 = vadd.f32 %v803, %v931
      %v938 = vadd.f32 %v804, %v934
      %v939 = vld [vmem:[%s306] sm:$0x3]
      %v940 = vld [vmem:[%s306 + $0x4] sm:$0x3]
      %v941 = vld [vmem:[%s306 + $0x8] sm:$0x3]
      %v942 = vld [vmem:[%s306 + $0xc] sm:$0x3]
      %s943 = scalar_lea.vmem %s4, 256
      %v944 = vld [vmem:[%s943] sm:$0xf]
      %v945 = vld [vmem:[%s943 + $0x4] sm:$0xf]
      %v946 = vld [vmem:[%s943 + $0x8] sm:$0xf]
      %v947 = vld [vmem:[%s943 + $0xc] sm:$0xf]
      %v948 = vld [vmem:[%s943 + $0x10] sm:$0xf]
      %v949 = vld [vmem:[%s943 + $0x14] sm:$0xf]
      %v950 = vld [vmem:[%s943 + $0x18] sm:$0xf]
      %v951 = vld [vmem:[%s943 + $0x1c] sm:$0xf]
      %v952 = vld [vmem:[%s943 + $0x20] sm:$0xf]
      %v953 = vld [vmem:[%s943 + $0x24] sm:$0xf]
      %v954 = vld [vmem:[%s943 + $0x28] sm:$0xf]
      %v955 = vld [vmem:[%s943 + $0x2c] sm:$0xf]
      %v956 = vld [vmem:[%s943 + $0x30] sm:$0xf]
      %v957 = vld [vmem:[%s943 + $0x34] sm:$0xf]
      %v958 = vld [vmem:[%s943 + $0x38] sm:$0xf]
      %v959 = vld [vmem:[%s943 + $0x3c] sm:$0xf]
      %v964 = vcombine.low %v939, %v940
      %v965 = vcombine.low %v941, %v942
      %v967 = vunpack.c.l.s4 1983009808
      %v968 = vunpack.c.0.s8 %v967
      %v969 = vlaneseq
      %v970 = vshrl.u32 %v969, 7
      %v971 = vsub.s32 %v968, %v970
      %v972 = vrot.slane %v964, %v971
      %v974 = vunpack.c.l.s4 1983009808
      %v975 = vunpack.c.0.s8 %v974
      %v976 = vlaneseq
      %v977 = vshrl.u32 %v976, 7
      %v978 = vsub.s32 %v975, %v977
      %v979 = vrot.slane %v965, %v978
      %v980 = vcombine.low %v972, %v979
      %v998 = vunpack.c.l.b16 %v944
      %v999 = vunpack.c.l.b16 %v945
      %v1000 = vunpack.c.l.b16 %v946
      %v1001 = vunpack.c.l.b16 %v947
      %v1002 = vunpack.c.l.b16 %v948
      %v1003 = vunpack.c.l.b16 %v949
      %v1004 = vunpack.c.l.b16 %v950
      %v1005 = vunpack.c.l.b16 %v951
      %v1006 = vunpack.c.l.b16 %v952
      %v1007 = vunpack.c.l.b16 %v953
      %v1008 = vunpack.c.l.b16 %v954
      %v1009 = vunpack.c.l.b16 %v955
      %v1010 = vunpack.c.l.b16 %v956
      %v1011 = vunpack.c.l.b16 %v957
      %v1012 = vunpack.c.l.b16 %v958
      %v1013 = vunpack.c.l.b16 %v959
      %v1014 = vpack.c.b16 %v999, %v998
      %v1015 = vpack.c.b16 %v1001, %v1000
      %v1016 = vpack.c.b16 %v1003, %v1002
      %v1017 = vpack.c.b16 %v1005, %v1004
      %v1018 = vpack.c.b16 %v1007, %v1006
      %v1019 = vpack.c.b16 %v1009, %v1008
      %v1020 = vpack.c.b16 %v1011, %v1010
      %v1021 = vpack.c.b16 %v1013, %v1012
      %1030 = vmatprep.subr.bf16.mxu0 0
      %1031 = vmatpush1.bf16.msra.mxu0 %v1014
      %1032 = vmatprep.subr.bf16.mxu0 0
      %1033 = vmatpush1.bf16.msra.mxu0 %v1015
      %1034 = vmatprep.subr.bf16.mxu0 0
      %1035 = vmatpush1.bf16.msra.mxu0 %v1016
      %1036 = vmatprep.subr.bf16.mxu0 0
      %1037 = vmatpush1.bf16.msra.mxu0 %v1017
      %1038 = vmatprep.subr.bf16.mxu0 0
      %1039 = vmatpush1.bf16.msra.mxu0 %v1018
      %1040 = vmatprep.subr.bf16.mxu0 0
      %1041 = vmatpush1.bf16.msra.mxu0 %v1019
      %1042 = vmatprep.subr.bf16.mxu0 0
      %1043 = vmatpush1.bf16.msra.mxu0 %v1020
      %1044 = vmatprep.subr.bf16.mxu0 0
      %1045 = vmatpush1.bf16.msra.mxu0 %v1021
      %1046 = vmatprep.subr.bf16.mxu0 0
      %1047 = vmatpush1.bf16.msra.mxu0 0
      %1048 = vmatprep.subr.bf16.mxu0 0
      %1049 = vmatpush1.bf16.msra.mxu0 0
      %1050 = vmatprep.subr.bf16.mxu0 0
      %1051 = vmatpush1.bf16.msra.mxu0 0
      %1052 = vmatprep.subr.bf16.mxu0 0
      %1053 = vmatpush1.bf16.msra.mxu0 0
      %1054 = vmatprep.subr.bf16.mxu0 0
      %1055 = vmatpush1.bf16.msra.mxu0 0
      %1056 = vmatprep.subr.bf16.mxu0 0
      %1057 = vmatpush1.bf16.msra.mxu0 0
      %1058 = vmatprep.subr.bf16.mxu0 0
      %1059 = vmatpush1.bf16.msra.mxu0 0
      %1060 = vmatprep.subr.bf16.mxu0 0
      %1061 = vmatpush1.bf16.msra.mxu0 0
      %1062 = vmatprep.mubr.bf16.mxu0 0
      %1063 = vmatmul.mubr.bf16.gmra.mrb[0].mxu0 %v980
      %v1064 = vpop.f32.mrb[0].mxu0
      %v1065 = vadd.f32 0.0, %v1064
      %v1066 = vpop.f32.mrb[0].mxu0
      %v1067 = vpop.f32.mrb[0].mxu0
      %v1068 = vadd.f32 0.0, %v1067
      %v1069 = vpop.f32.mrb[0].mxu0
      %1070 = vdwg.mxu0
      %v1071 = vadd.f32 %v937, %v1065
      %v1072 = vadd.f32 %v938, %v1068
      %v1073 = vld [vmem:[%s301] sm:$0x7]
      %v1074 = vld [vmem:[%s301 + $0x4] sm:$0x7]
      %v1075 = vld [vmem:[%s301 + $0x8] sm:$0x7]
      %v1076 = vld [vmem:[%s301 + $0xc] sm:$0x7]
      %v1082 = vunpack.c.l.s4 1983009808
      %v1083 = vunpack.c.0.s8 %v1082
      %v1084 = vlaneseq
      %v1085 = vshrl.u32 %v1084, 7
      %v1086 = vsub.s32 %v1083, %v1085
      %v1087 = vrot.slane %v1073, %v1086
      %v1088 = vcombine.high %v1087, %v1087
      %v1090 = vunpack.c.l.s4 1983009808
      %v1091 = vunpack.c.0.s8 %v1090
      %v1092 = vlaneseq
      %v1093 = vshrl.u32 %v1092, 7
      %v1094 = vsub.s32 %v1091, %v1093
      %v1095 = vrot.slane %v1074, %v1094
      %v1096 = vcombine.high %v1095, %v1095
      %v1098 = vunpack.c.l.s4 1983009808
      %v1099 = vunpack.c.0.s8 %v1098
      %v1100 = vlaneseq
      %v1101 = vshrl.u32 %v1100, 7
      %v1102 = vsub.s32 %v1099, %v1101
      %v1103 = vrot.slane %v1075, %v1102
      %v1104 = vcombine.high %v1103, %v1103
      %v1106 = vunpack.c.l.s4 1983009808
      %v1107 = vunpack.c.0.s8 %v1106
      %v1108 = vlaneseq
      %v1109 = vshrl.u32 %v1108, 7
      %v1110 = vsub.s32 %v1107, %v1109
      %v1111 = vrot.slane %v1076, %v1110
      %v1112 = vcombine.high %v1111, %v1111
      %v1114 = vshrl.u32 %v1087, 16
      %v1116 = vrot.slane %v1114, 6
      %v1117 = vshll.u32 %v1087, 16
      %v1119 = vrot.slane %v1117, 7
      %v1120 = vor.u32 %v1116, %v1119
      %v1121 = vrot.slane %v1120, 2
      %v1123 = vshll.u32 %v1088, 16
      %v1125 = vrot.slane %v1123, 7
      %v1126 = vsel %vm622, %v1121, %v1125
      %v1128 = vshrl.u32 %v1095, 16
      %v1130 = vrot.slane %v1128, 6
      %v1131 = vshll.u32 %v1095, 16
      %v1133 = vrot.slane %v1131, 7
      %v1134 = vor.u32 %v1130, %v1133
      %v1135 = vrot.slane %v1134, 2
      %v1137 = vshll.u32 %v1096, 16
      %v1139 = vrot.slane %v1137, 7
      %v1140 = vsel %vm622, %v1135, %v1139
      %v1142 = vshrl.u32 %v1103, 16
      %v1144 = vrot.slane %v1142, 6
      %v1145 = vshll.u32 %v1103, 16
      %v1147 = vrot.slane %v1145, 7
      %v1148 = vor.u32 %v1144, %v1147
      %v1149 = vrot.slane %v1148, 2
      %v1151 = vshll.u32 %v1104, 16
      %v1153 = vrot.slane %v1151, 7
      %v1154 = vsel %vm622, %v1149, %v1153
      %v1156 = vshrl.u32 %v1111, 16
      %v1158 = vrot.slane %v1156, 6
      %v1159 = vshll.u32 %v1111, 16
      %v1161 = vrot.slane %v1159, 7
      %v1162 = vor.u32 %v1158, %v1161
      %v1163 = vrot.slane %v1162, 2
      %v1165 = vshll.u32 %v1112, 16
      %v1167 = vrot.slane %v1165, 7
      %v1168 = vsel %vm622, %v1163, %v1167
      %s1169 = scalar_lea.vmem %s4, 320
      %v1170 = vld [vmem:[%s1169] sm:$0xf]
      %v1171 = vld [vmem:[%s1169 + $0x4] sm:$0xf]
      %v1172 = vld [vmem:[%s1169 + $0x8] sm:$0xf]
      %v1173 = vld [vmem:[%s1169 + $0xc] sm:$0xf]
      %v1174 = vld [vmem:[%s1169 + $0x10] sm:$0xf]
      %v1175 = vld [vmem:[%s1169 + $0x14] sm:$0xf]
      %v1176 = vld [vmem:[%s1169 + $0x18] sm:$0xf]
      %v1177 = vld [vmem:[%s1169 + $0x1c] sm:$0xf]
      %v1178 = vld [vmem:[%s1169 + $0x20] sm:$0xf]
      %v1179 = vld [vmem:[%s1169 + $0x24] sm:$0xf]
      %v1180 = vld [vmem:[%s1169 + $0x28] sm:$0xf]
      %v1181 = vld [vmem:[%s1169 + $0x2c] sm:$0xf]
      %v1182 = vld [vmem:[%s1169 + $0x30] sm:$0xf]
      %v1183 = vld [vmem:[%s1169 + $0x34] sm:$0xf]
      %v1184 = vld [vmem:[%s1169 + $0x38] sm:$0xf]
      %v1185 = vld [vmem:[%s1169 + $0x3c] sm:$0xf]
      %v1186 = vcombine.low %v1126, %v1140
      %v1187 = vcombine.low %v1154, %v1168
      %v1189 = vunpack.c.l.s4 1983009808
      %v1190 = vunpack.c.0.s8 %v1189
      %v1191 = vlaneseq
      %v1192 = vshrl.u32 %v1191, 7
      %v1193 = vsub.s32 %v1190, %v1192
      %v1194 = vrot.slane %v1186, %v1193
      %v1196 = vunpack.c.l.s4 1983009808
      %v1197 = vunpack.c.0.s8 %v1196
      %v1198 = vlaneseq
      %v1199 = vshrl.u32 %v1198, 7
      %v1200 = vsub.s32 %v1197, %v1199
      %v1201 = vrot.slane %v1187, %v1200
      %v1202 = vcombine.low %v1194, %v1201
      %v1220 = vunpack.c.l.b16 %v1170
      %v1221 = vunpack.c.l.b16 %v1171
      %v1222 = vunpack.c.l.b16 %v1172
      %v1223 = vunpack.c.l.b16 %v1173
      %v1224 = vunpack.c.l.b16 %v1174
      %v1225 = vunpack.c.l.b16 %v1175
      %v1226 = vunpack.c.l.b16 %v1176
      %v1227 = vunpack.c.l.b16 %v1177
      %v1228 = vunpack.c.l.b16 %v1178
      %v1229 = vunpack.c.l.b16 %v1179
      %v1230 = vunpack.c.l.b16 %v1180
      %v1231 = vunpack.c.l.b16 %v1181
      %v1232 = vunpack.c.l.b16 %v1182
      %v1233 = vunpack.c.l.b16 %v1183
      %v1234 = vunpack.c.l.b16 %v1184
      %v1235 = vunpack.c.l.b16 %v1185
      %v1236 = vpack.c.b16 %v1221, %v1220
      %v1237 = vpack.c.b16 %v1223, %v1222
      %v1238 = vpack.c.b16 %v1225, %v1224
      %v1239 = vpack.c.b16 %v1227, %v1226
      %v1240 = vpack.c.b16 %v1229, %v1228
      %v1241 = vpack.c.b16 %v1231, %v1230
      %v1242 = vpack.c.b16 %v1233, %v1232
      %v1243 = vpack.c.b16 %v1235, %v1234
      %1252 = vmatprep.subr.bf16.mxu0 0
      %1253 = vmatpush1.bf16.msra.mxu0 %v1236
      %1254 = vmatprep.subr.bf16.mxu0 0
      %1255 = vmatpush1.bf16.msra.mxu0 %v1237
      %1256 = vmatprep.subr.bf16.mxu0 0
      %1257 = vmatpush1.bf16.msra.mxu0 %v1238
      %1258 = vmatprep.subr.bf16.mxu0 0
      %1259 = vmatpush1.bf16.msra.mxu0 %v1239
      %1260 = vmatprep.subr.bf16.mxu0 0
      %1261 = vmatpush1.bf16.msra.mxu0 %v1240
      %1262 = vmatprep.subr.bf16.mxu0 0
      %1263 = vmatpush1.bf16.msra.mxu0 %v1241
      %1264 = vmatprep.subr.bf16.mxu0 0
      %1265 = vmatpush1.bf16.msra.mxu0 %v1242
      %1266 = vmatprep.subr.bf16.mxu0 0
      %1267 = vmatpush1.bf16.msra.mxu0 %v1243
      %1268 = vmatprep.subr.bf16.mxu0 0
      %1269 = vmatpush1.bf16.msra.mxu0 0
      %1270 = vmatprep.subr.bf16.mxu0 0
      %1271 = vmatpush1.bf16.msra.mxu0 0
      %1272 = vmatprep.subr.bf16.mxu0 0
      %1273 = vmatpush1.bf16.msra.mxu0 0
      %1274 = vmatprep.subr.bf16.mxu0 0
      %1275 = vmatpush1.bf16.msra.mxu0 0
      %1276 = vmatprep.subr.bf16.mxu0 0
      %1277 = vmatpush1.bf16.msra.mxu0 0
      %1278 = vmatprep.subr.bf16.mxu0 0
      %1279 = vmatpush1.bf16.msra.mxu0 0
      %1280 = vmatprep.subr.bf16.mxu0 0
      %1281 = vmatpush1.bf16.msra.mxu0 0
      %1282 = vmatprep.subr.bf16.mxu0 0
      %1283 = vmatpush1.bf16.msra.mxu0 0
      %1284 = vmatprep.mubr.bf16.mxu0 0
      %1285 = vmatmul.mubr.bf16.gmra.mrb[0].mxu0 %v1202
      %v1286 = vpop.f32.mrb[0].mxu0
      %v1287 = vadd.f32 0.0, %v1286
      %v1288 = vpop.f32.mrb[0].mxu0
      %v1289 = vpop.f32.mrb[0].mxu0
      %v1290 = vadd.f32 0.0, %v1289
      %v1291 = vpop.f32.mrb[0].mxu0
      %1292 = vdwg.mxu0
      %v1293 = vadd.f32 %v1071, %v1287
      %v1294 = vadd.f32 %v1072, %v1290
      %s1295 = scalar_lea.vmem %s291, 4
      %v1296 = vld [vmem:[%s1295] sm:$0x3]
      %v1297 = vld [vmem:[%s1295 + $0x4] sm:$0x3]
      %v1298 = vld [vmem:[%s1295 + $0x8] sm:$0x3]
      %v1299 = vld [vmem:[%s1295 + $0xc] sm:$0x3]
      %s1300 = scalar_lea.vmem %s4, 384
      %v1301 = vld [vmem:[%s1300] sm:$0xf]
      %v1302 = vld [vmem:[%s1300 + $0x4] sm:$0xf]
      %v1303 = vld [vmem:[%s1300 + $0x8] sm:$0xf]
      %v1304 = vld [vmem:[%s1300 + $0xc] sm:$0xf]
      %v1305 = vld [vmem:[%s1300 + $0x10] sm:$0xf]
      %v1306 = vld [vmem:[%s1300 + $0x14] sm:$0xf]
      %v1307 = vld [vmem:[%s1300 + $0x18] sm:$0xf]
      %v1308 = vld [vmem:[%s1300 + $0x1c] sm:$0xf]
      %v1309 = vld [vmem:[%s1300 + $0x20] sm:$0xf]
      %v1310 = vld [vmem:[%s1300 + $0x24] sm:$0xf]
      %v1311 = vld [vmem:[%s1300 + $0x28] sm:$0xf]
      %v1312 = vld [vmem:[%s1300 + $0x2c] sm:$0xf]
      %v1313 = vld [vmem:[%s1300 + $0x30] sm:$0xf]
      %v1314 = vld [vmem:[%s1300 + $0x34] sm:$0xf]
      %v1315 = vld [vmem:[%s1300 + $0x38] sm:$0xf]
      %v1316 = vld [vmem:[%s1300 + $0x3c] sm:$0xf]
      %v1321 = vcombine.low %v1296, %v1297
      %v1322 = vcombine.low %v1298, %v1299
      %v1324 = vunpack.c.l.s4 1983009808
      %v1325 = vunpack.c.0.s8 %v1324
      %v1326 = vlaneseq
      %v1327 = vshrl.u32 %v1326, 7
      %v1328 = vsub.s32 %v1325, %v1327
      %v1329 = vrot.slane %v1321, %v1328
      %v1331 = vunpack.c.l.s4 1983009808
      %v1332 = vunpack.c.0.s8 %v1331
      %v1333 = vlaneseq
      %v1334 = vshrl.u32 %v1333, 7
      %v1335 = vsub.s32 %v1332, %v1334
      %v1336 = vrot.slane %v1322, %v1335
      %v1337 = vcombine.low %v1329, %v1336
      %v1355 = vunpack.c.l.b16 %v1301
      %v1356 = vunpack.c.l.b16 %v1302
      %v1357 = vunpack.c.l.b16 %v1303
      %v1358 = vunpack.c.l.b16 %v1304
      %v1359 = vunpack.c.l.b16 %v1305
      %v1360 = vunpack.c.l.b16 %v1306
      %v1361 = vunpack.c.l.b16 %v1307
      %v1362 = vunpack.c.l.b16 %v1308
      %v1363 = vunpack.c.l.b16 %v1309
      %v1364 = vunpack.c.l.b16 %v1310
      %v1365 = vunpack.c.l.b16 %v1311
      %v1366 = vunpack.c.l.b16 %v1312
      %v1367 = vunpack.c.l.b16 %v1313
      %v1368 = vunpack.c.l.b16 %v1314
      %v1369 = vunpack.c.l.b16 %v1315
      %v1370 = vunpack.c.l.b16 %v1316
      %v1371 = vpack.c.b16 %v1356, %v1355
      %v1372 = vpack.c.b16 %v1358, %v1357
      %v1373 = vpack.c.b16 %v1360, %v1359
      %v1374 = vpack.c.b16 %v1362, %v1361
      %v1375 = vpack.c.b16 %v1364, %v1363
      %v1376 = vpack.c.b16 %v1366, %v1365
      %v1377 = vpack.c.b16 %v1368, %v1367
      %v1378 = vpack.c.b16 %v1370, %v1369
      %1387 = vmatprep.subr.bf16.mxu0 0
      %1388 = vmatpush1.bf16.msra.mxu0 %v1371
      %1389 = vmatprep.subr.bf16.mxu0 0
      %1390 = vmatpush1.bf16.msra.mxu0 %v1372
      %1391 = vmatprep.subr.bf16.mxu0 0
      %1392 = vmatpush1.bf16.msra.mxu0 %v1373
      %1393 = vmatprep.subr.bf16.mxu0 0
      %1394 = vmatpush1.bf16.msra.mxu0 %v1374
      %1395 = vmatprep.subr.bf16.mxu0 0
      %1396 = vmatpush1.bf16.msra.mxu0 %v1375
      %1397 = vmatprep.subr.bf16.mxu0 0
      %1398 = vmatpush1.bf16.msra.mxu0 %v1376
      %1399 = vmatprep.subr.bf16.mxu0 0
      %1400 = vmatpush1.bf16.msra.mxu0 %v1377
      %1401 = vmatprep.subr.bf16.mxu0 0
      %1402 = vmatpush1.bf16.msra.mxu0 %v1378
      %1403 = vmatprep.subr.bf16.mxu0 0
      %1404 = vmatpush1.bf16.msra.mxu0 0
      %1405 = vmatprep.subr.bf16.mxu0 0
      %1406 = vmatpush1.bf16.msra.mxu0 0
      %1407 = vmatprep.subr.bf16.mxu0 0
      %1408 = vmatpush1.bf16.msra.mxu0 0
      %1409 = vmatprep.subr.bf16.mxu0 0
      %1410 = vmatpush1.bf16.msra.mxu0 0
      %1411 = vmatprep.subr.bf16.mxu0 0
      %1412 = vmatpush1.bf16.msra.mxu0 0
      %1413 = vmatprep.subr.bf16.mxu0 0
      %1414 = vmatpush1.bf16.msra.mxu0 0
      %1415 = vmatprep.subr.bf16.mxu0 0
      %1416 = vmatpush1.bf16.msra.mxu0 0
      %1417 = vmatprep.subr.bf16.mxu0 0
      %1418 = vmatpush1.bf16.msra.mxu0 0
      %1419 = vmatprep.mubr.bf16.mxu0 0
      %1420 = vmatmul.mubr.bf16.gmra.mrb[0].mxu0 %v1337
      %v1421 = vpop.f32.mrb[0].mxu0
      %v1422 = vadd.f32 0.0, %v1421
      %v1423 = vpop.f32.mrb[0].mxu0
      %v1424 = vpop.f32.mrb[0].mxu0
      %v1425 = vadd.f32 0.0, %v1424
      %v1426 = vpop.f32.mrb[0].mxu0
      %1427 = vdwg.mxu0
      %v1428 = vadd.f32 %v1293, %v1422
      %v1429 = vadd.f32 %v1294, %v1425
      %s1430 = scalar_lea.vmem %s296, 4
      %v1431 = vld [vmem:[%s1430] sm:$0x3]
      %v1432 = vld [vmem:[%s1430 + $0x4] sm:$0x3]
      %v1433 = vld [vmem:[%s1430 + $0x8] sm:$0x3]
      %v1434 = vld [vmem:[%s1430 + $0xc] sm:$0x3]
      %s1435 = scalar_lea.vmem %s4, 448
      %v1436 = vld [vmem:[%s1435] sm:$0xf]
      %v1437 = vld [vmem:[%s1435 + $0x4] sm:$0xf]
      %v1438 = vld [vmem:[%s1435 + $0x8] sm:$0xf]
      %v1439 = vld [vmem:[%s1435 + $0xc] sm:$0xf]
      %v1440 = vld [vmem:[%s1435 + $0x10] sm:$0xf]
      %v1441 = vld [vmem:[%s1435 + $0x14] sm:$0xf]
      %v1442 = vld [vmem:[%s1435 + $0x18] sm:$0xf]
      %v1443 = vld [vmem:[%s1435 + $0x1c] sm:$0xf]
      %v1444 = vld [vmem:[%s1435 + $0x20] sm:$0xf]
      %v1445 = vld [vmem:[%s1435 + $0x24] sm:$0xf]
      %v1446 = vld [vmem:[%s1435 + $0x28] sm:$0xf]
      %v1447 = vld [vmem:[%s1435 + $0x2c] sm:$0xf]
      %v1448 = vld [vmem:[%s1435 + $0x30] sm:$0xf]
      %v1449 = vld [vmem:[%s1435 + $0x34] sm:$0xf]
      %v1450 = vld [vmem:[%s1435 + $0x38] sm:$0xf]
      %v1451 = vld [vmem:[%s1435 + $0x3c] sm:$0xf]
      %v1456 = vcombine.low %v1431, %v1432
      %v1457 = vcombine.low %v1433, %v1434
      %v1459 = vunpack.c.l.s4 1983009808
      %v1460 = vunpack.c.0.s8 %v1459
      %v1461 = vlaneseq
      %v1462 = vshrl.u32 %v1461, 7
      %v1463 = vsub.s32 %v1460, %v1462
      %v1464 = vrot.slane %v1456, %v1463
      %v1466 = vunpack.c.l.s4 1983009808
      %v1467 = vunpack.c.0.s8 %v1466
      %v1468 = vlaneseq
      %v1469 = vshrl.u32 %v1468, 7
      %v1470 = vsub.s32 %v1467, %v1469
      %v1471 = vrot.slane %v1457, %v1470
      %v1472 = vcombine.low %v1464, %v1471
      %v1490 = vunpack.c.l.b16 %v1436
      %v1491 = vunpack.c.l.b16 %v1437
      %v1492 = vunpack.c.l.b16 %v1438
      %v1493 = vunpack.c.l.b16 %v1439
      %v1494 = vunpack.c.l.b16 %v1440
      %v1495 = vunpack.c.l.b16 %v1441
      %v1496 = vunpack.c.l.b16 %v1442
      %v1497 = vunpack.c.l.b16 %v1443
      %v1498 = vunpack.c.l.b16 %v1444
      %v1499 = vunpack.c.l.b16 %v1445
      %v1500 = vunpack.c.l.b16 %v1446
      %v1501 = vunpack.c.l.b16 %v1447
      %v1502 = vunpack.c.l.b16 %v1448
      %v1503 = vunpack.c.l.b16 %v1449
      %v1504 = vunpack.c.l.b16 %v1450
      %v1505 = vunpack.c.l.b16 %v1451
      %v1506 = vpack.c.b16 %v1491, %v1490
      %v1507 = vpack.c.b16 %v1493, %v1492
      %v1508 = vpack.c.b16 %v1495, %v1494
      %v1509 = vpack.c.b16 %v1497, %v1496
      %v1510 = vpack.c.b16 %v1499, %v1498
      %v1511 = vpack.c.b16 %v1501, %v1500
      %v1512 = vpack.c.b16 %v1503, %v1502
      %v1513 = vpack.c.b16 %v1505, %v1504
      %1522 = vmatprep.subr.bf16.mxu0 0
      %1523 = vmatpush1.bf16.msra.mxu0 %v1506
      %1524 = vmatprep.subr.bf16.mxu0 0
      %1525 = vmatpush1.bf16.msra.mxu0 %v1507
      %1526 = vmatprep.subr.bf16.mxu0 0
      %1527 = vmatpush1.bf16.msra.mxu0 %v1508
      %1528 = vmatprep.subr.bf16.mxu0 0
      %1529 = vmatpush1.bf16.msra.mxu0 %v1509
      %1530 = vmatprep.subr.bf16.mxu0 0
      %1531 = vmatpush1.bf16.msra.mxu0 %v1510
      %1532 = vmatprep.subr.bf16.mxu0 0
      %1533 = vmatpush1.bf16.msra.mxu0 %v1511
      %1534 = vmatprep.subr.bf16.mxu0 0
      %1535 = vmatpush1.bf16.msra.mxu0 %v1512
      %1536 = vmatprep.subr.bf16.mxu0 0
      %1537 = vmatpush1.bf16.msra.mxu0 %v1513
      %1538 = vmatprep.subr.bf16.mxu0 0
      %1539 = vmatpush1.bf16.msra.mxu0 0
      %1540 = vmatprep.subr.bf16.mxu0 0
      %1541 = vmatpush1.bf16.msra.mxu0 0
      %1542 = vmatprep.subr.bf16.mxu0 0
      %1543 = vmatpush1.bf16.msra.mxu0 0
      %1544 = vmatprep.subr.bf16.mxu0 0
      %1545 = vmatpush1.bf16.msra.mxu0 0
      %1546 = vmatprep.subr.bf16.mxu0 0
      %1547 = vmatpush1.bf16.msra.mxu0 0
      %1548 = vmatprep.subr.bf16.mxu0 0
      %1549 = vmatpush1.bf16.msra.mxu0 0
      %1550 = vmatprep.subr.bf16.mxu0 0
      %1551 = vmatpush1.bf16.msra.mxu0 0
      %1552 = vmatprep.subr.bf16.mxu0 0
      %1553 = vmatpush1.bf16.msra.mxu0 0
      %1554 = vmatprep.mubr.bf16.mxu0 0
      %1555 = vmatmul.mubr.bf16.gmra.mrb[0].mxu0 %v1472
      %v1556 = vpop.f32.mrb[0].mxu0
      %v1557 = vadd.f32 0.0, %v1556
      %v1558 = vpop.f32.mrb[0].mxu0
      %v1559 = vpop.f32.mrb[0].mxu0
      %v1560 = vadd.f32 0.0, %v1559
      %v1561 = vpop.f32.mrb[0].mxu0
      %1562 = vdwg.mxu0
      %v1563 = vadd.f32 %v1428, %v1557
      %v1564 = vadd.f32 %v1429, %v1560
      %v1565 = vld [vmem:[%s1295] sm:$0x7]
      %v1566 = vld [vmem:[%s1295 + $0x4] sm:$0x7]
      %v1567 = vld [vmem:[%s1295 + $0x8] sm:$0x7]
      %v1568 = vld [vmem:[%s1295 + $0xc] sm:$0x7]
      %v1574 = vunpack.c.l.s4 1983009808
      %v1575 = vunpack.c.0.s8 %v1574
      %v1576 = vlaneseq
      %v1577 = vshrl.u32 %v1576, 7
      %v1578 = vsub.s32 %v1575, %v1577
      %v1579 = vrot.slane %v1565, %v1578
      %v1580 = vcombine.high %v1579, %v1579
      %v1582 = vunpack.c.l.s4 1983009808
      %v1583 = vunpack.c.0.s8 %v1582
      %v1584 = vlaneseq
      %v1585 = vshrl.u32 %v1584, 7
      %v1586 = vsub.s32 %v1583, %v1585
      %v1587 = vrot.slane %v1566, %v1586
      %v1588 = vcombine.high %v1587, %v1587
      %v1590 = vunpack.c.l.s4 1983009808
      %v1591 = vunpack.c.0.s8 %v1590
      %v1592 = vlaneseq
      %v1593 = vshrl.u32 %v1592, 7
      %v1594 = vsub.s32 %v1591, %v1593
      %v1595 = vrot.slane %v1567, %v1594
      %v1596 = vcombine.high %v1595, %v1595
      %v1598 = vunpack.c.l.s4 1983009808
      %v1599 = vunpack.c.0.s8 %v1598
      %v1600 = vlaneseq
      %v1601 = vshrl.u32 %v1600, 7
      %v1602 = vsub.s32 %v1599, %v1601
      %v1603 = vrot.slane %v1568, %v1602
      %v1604 = vcombine.high %v1603, %v1603
      %v1606 = vshrl.u32 %v1579, 16
      %v1608 = vrot.slane %v1606, 6
      %v1609 = vshll.u32 %v1579, 16
      %v1611 = vrot.slane %v1609, 7
      %v1612 = vor.u32 %v1608, %v1611
      %v1613 = vrot.slane %v1612, 2
      %v1615 = vshll.u32 %v1580, 16
      %v1617 = vrot.slane %v1615, 7
      %v1618 = vsel %vm622, %v1613, %v1617
      %v1620 = vshrl.u32 %v1587, 16
      %v1622 = vrot.slane %v1620, 6
      %v1623 = vshll.u32 %v1587, 16
      %v1625 = vrot.slane %v1623, 7
      %v1626 = vor.u32 %v1622, %v1625
      %v1627 = vrot.slane %v1626, 2
      %v1629 = vshll.u32 %v1588, 16
      %v1631 = vrot.slane %v1629, 7
      %v1632 = vsel %vm622, %v1627, %v1631
      %v1634 = vshrl.u32 %v1595, 16
      %v1636 = vrot.slane %v1634, 6
      %v1637 = vshll.u32 %v1595, 16
      %v1639 = vrot.slane %v1637, 7
      %v1640 = vor.u32 %v1636, %v1639
      %v1641 = vrot.slane %v1640, 2
      %v1643 = vshll.u32 %v1596, 16
      %v1645 = vrot.slane %v1643, 7
      %v1646 = vsel %vm622, %v1641, %v1645
      %v1648 = vshrl.u32 %v1603, 16
      %v1650 = vrot.slane %v1648, 6
      %v1651 = vshll.u32 %v1603, 16
      %v1653 = vrot.slane %v1651, 7
      %v1654 = vor.u32 %v1650, %v1653
      %v1655 = vrot.slane %v1654, 2
      %v1657 = vshll.u32 %v1604, 16
      %v1659 = vrot.slane %v1657, 7
      %v1660 = vsel %vm622, %v1655, %v1659
      %s1661 = scalar_lea.vmem %s4, 512
      %v1662 = vld [vmem:[%s1661] sm:$0xf]
      %v1663 = vld [vmem:[%s1661 + $0x4] sm:$0xf]
      %v1664 = vld [vmem:[%s1661 + $0x8] sm:$0xf]
      %v1665 = vld [vmem:[%s1661 + $0xc] sm:$0xf]
      %v1666 = vld [vmem:[%s1661 + $0x10] sm:$0xf]
      %v1667 = vld [vmem:[%s1661 + $0x14] sm:$0xf]
      %v1668 = vld [vmem:[%s1661 + $0x18] sm:$0xf]
      %v1669 = vld [vmem:[%s1661 + $0x1c] sm:$0xf]
      %v1670 = vld [vmem:[%s1661 + $0x20] sm:$0xf]
      %v1671 = vld [vmem:[%s1661 + $0x24] sm:$0xf]
      %v1672 = vld [vmem:[%s1661 + $0x28] sm:$0xf]
      %v1673 = vld [vmem:[%s1661 + $0x2c] sm:$0xf]
      %v1674 = vld [vmem:[%s1661 + $0x30] sm:$0xf]
      %v1675 = vld [vmem:[%s1661 + $0x34] sm:$0xf]
      %v1676 = vld [vmem:[%s1661 + $0x38] sm:$0xf]
      %v1677 = vld [vmem:[%s1661 + $0x3c] sm:$0xf]
      %v1678 = vcombine.low %v1618, %v1632
      %v1679 = vcombine.low %v1646, %v1660
      %v1681 = vunpack.c.l.s4 1983009808
      %v1682 = vunpack.c.0.s8 %v1681
      %v1683 = vlaneseq
      %v1684 = vshrl.u32 %v1683, 7
      %v1685 = vsub.s32 %v1682, %v1684
      %v1686 = vrot.slane %v1678, %v1685
      %v1688 = vunpack.c.l.s4 1983009808
      %v1689 = vunpack.c.0.s8 %v1688
      %v1690 = vlaneseq
      %v1691 = vshrl.u32 %v1690, 7
      %v1692 = vsub.s32 %v1689, %v1691
      %v1693 = vrot.slane %v1679, %v1692
      %v1694 = vcombine.low %v1686, %v1693
      %v1712 = vunpack.c.l.b16 %v1662
      %v1713 = vunpack.c.l.b16 %v1663
      %v1714 = vunpack.c.l.b16 %v1664
      %v1715 = vunpack.c.l.b16 %v1665
      %v1716 = vunpack.c.l.b16 %v1666
      %v1717 = vunpack.c.l.b16 %v1667
      %v1718 = vunpack.c.l.b16 %v1668
      %v1719 = vunpack.c.l.b16 %v1669
      %v1720 = vunpack.c.l.b16 %v1670
      %v1721 = vunpack.c.l.b16 %v1671
      %v1722 = vunpack.c.l.b16 %v1672
      %v1723 = vunpack.c.l.b16 %v1673
      %v1724 = vunpack.c.l.b16 %v1674
      %v1725 = vunpack.c.l.b16 %v1675
      %v1726 = vunpack.c.l.b16 %v1676
      %v1727 = vunpack.c.l.b16 %v1677
      %v1728 = vpack.c.b16 %v1713, %v1712
      %v1729 = vpack.c.b16 %v1715, %v1714
      %v1730 = vpack.c.b16 %v1717, %v1716
      %v1731 = vpack.c.b16 %v1719, %v1718
      %v1732 = vpack.c.b16 %v1721, %v1720
      %v1733 = vpack.c.b16 %v1723, %v1722
      %v1734 = vpack.c.b16 %v1725, %v1724
      %v1735 = vpack.c.b16 %v1727, %v1726
      %1744 = vmatprep.subr.bf16.mxu0 0
      %1745 = vmatpush1.bf16.msra.mxu0 %v1728
      %1746 = vmatprep.subr.bf16.mxu0 0
      %1747 = vmatpush1.bf16.msra.mxu0 %v1729
      %1748 = vmatprep.subr.bf16.mxu0 0
      %1749 = vmatpush1.bf16.msra.mxu0 %v1730
      %1750 = vmatprep.subr.bf16.mxu0 0
      %1751 = vmatpush1.bf16.msra.mxu0 %v1731
      %1752 = vmatprep.subr.bf16.mxu0 0
      %1753 = vmatpush1.bf16.msra.mxu0 %v1732
      %1754 = vmatprep.subr.bf16.mxu0 0
      %1755 = vmatpush1.bf16.msra.mxu0 %v1733
      %1756 = vmatprep.subr.bf16.mxu0 0
      %1757 = vmatpush1.bf16.msra.mxu0 %v1734
      %1758 = vmatprep.subr.bf16.mxu0 0
      %1759 = vmatpush1.bf16.msra.mxu0 %v1735
      %1760 = vmatprep.subr.bf16.mxu0 0
      %1761 = vmatpush1.bf16.msra.mxu0 0
      %1762 = vmatprep.subr.bf16.mxu0 0
      %1763 = vmatpush1.bf16.msra.mxu0 0
      %1764 = vmatprep.subr.bf16.mxu0 0
      %1765 = vmatpush1.bf16.msra.mxu0 0
      %1766 = vmatprep.subr.bf16.mxu0 0
      %1767 = vmatpush1.bf16.msra.mxu0 0
      %1768 = vmatprep.subr.bf16.mxu0 0
      %1769 = vmatpush1.bf16.msra.mxu0 0
      %1770 = vmatprep.subr.bf16.mxu0 0
      %1771 = vmatpush1.bf16.msra.mxu0 0
      %1772 = vmatprep.subr.bf16.mxu0 0
      %1773 = vmatpush1.bf16.msra.mxu0 0
      %1774 = vmatprep.subr.bf16.mxu0 0
      %1775 = vmatpush1.bf16.msra.mxu0 0
      %1776 = vmatprep.mubr.bf16.mxu0 0
      %1777 = vmatmul.mubr.bf16.gmra.mrb[0].mxu0 %v1694
      %v1778 = vpop.f32.mrb[0].mxu0
      %v1779 = vadd.f32 0.0, %v1778
      %v1780 = vpop.f32.mrb[0].mxu0
      %v1781 = vpop.f32.mrb[0].mxu0
      %v1782 = vadd.f32 0.0, %v1781
      %v1783 = vpop.f32.mrb[0].mxu0
      %1784 = vdwg.mxu0
      %v1785 = vadd.f32 %v1563, %v1779
      %v1786 = vadd.f32 %v1564, %v1782
      %v1787 = vld [vmem:[%s5] sm:$0x1]
      %v1789 = vlaneseq
      %v1790 = vshrl.u32 %v1789, 7
      %v1791 = vsub.s32 0, %v1790
      %v1792 = vrot.slane %v1787, %v1791
      %v1794 = vadd.f32 %v1785, %v1792
      %v1795 = vadd.f32 %v1786, %v1792
      %v1796 = vmax.f32 %v1794, 0.0
      %v1797 = vmax.f32 %v1795, 0.0
      %v1798 = vpack.c.bf16 %v1797, %v1796
      %v1800 = vunpack.c.l.b16 %v1798
      %v1801 = vunpack.c.h.b16 %v1798
      %v1802 = vpack.c.b16 %v1800, %v1800
      %v1803 = vpack.c.b16 %v1801, %v1801
      %1806 = vst [vmem:[%s311] sm:$0xf] %v1802
      %1807 = vst [vmem:[%s311 + $0x4] sm:$0xf] %v1803
      %p1808 = scmp.lt.s32.totalorder %s17, 1
      %s1809 = scalar_select %p1808, %s17, 1
      %s1810 = smul.addr %s1809, 2
      %s1811 = smul.addr %s1810, 4
      %s1812 = scalar_lea.vmem %s6, %s1811
      // Predicated region
      $region45: #{base_encoder_forward.7} parent=43 // pred_check
        %p1813 = pneg %p181
      $region46: #{base_encoder_forward.7} parent=43 // pred_check_branch
        %1815 = sbr.rel (%p1813) target = $region48
      $region47: #{base_encoder_forward.7} parent=43 // pred_region
        _
      $region48: #{base_encoder_forward.7} parent=43 // pred_fallthru
        _
    $region44: #{base_encoder_forward.7} parent=5 // pred_fallthru
      _
    %p1816 = scmp.le.s32.totalorder 2, %s12
    // Predicated region
    $region49: #{base_encoder_forward.7} parent=5 // pred_check
      %p1817 = pneg %p1816
    $region50: #{base_encoder_forward.7} parent=5 // pred_check_branch
      %1819 = sbr.rel (%p1817) target = $region52
    $region51: #{base_encoder_forward.7} parent=5 // pred_region
      %s1820 = ssub.s32 %s12, 2
      // Predicated region
      $region53: #{base_encoder_forward.7} parent=51 // pred_check
        %p1821 = pneg %p187
      $region54: #{base_encoder_forward.7} parent=51 // pred_check_branch
        %1823 = sbr.rel (%p1821) target = $region56
      $region55: #{base_encoder_forward.7} parent=51 // pred_region
        %p1824 = scmp.lt.s32.totalorder %s18, 1
        %s1825 = scalar_select %p1824, %s18, 1
        %s1826 = smul.addr %s1825, 2
        %s1827 = smul.addr %s1826, 4
        %s1828 = scalar_lea.vmem %s6, %s1827
      $region56: #{base_encoder_forward.7} parent=51 // pred_fallthru
        _
    $region52: #{base_encoder_forward.7} parent=5 // pred_fallthru
      _
  $region6: #{base_encoder_forward.7} parent=0 // loop_footer
    %s16 = sadd.s32 1, %s12
  $region7: #{base_encoder_forward.7} parent=0 // loop_footer_branch
    %11 = sbr.rel target = $region3
  $region8: #{base_encoder_forward.7} parent=0 // loop_exit
    _

// kernel: base_encoder_forward.5
$region0: #{base_encoder_forward.5}
  #allocation0 [shape = 'u32[]', space=smem, size = 0x4, offset = 0x4, fixed_abs, tag = 'smem constant byte address 0x4 - core index']
  #allocation1 [shape = 'u32[144,128]{1,0:T(1,128)}', space=vmem, size = 0x12000, scoped, tag = 'internal scratch']
  %s0 = inlined_call_operand.vmem [shape: bf16[2,18,18,8], index: 0, kind: input, shape index: {}]
  %s1 = inlined_call_operand.vmem [shape: bf16[9,8,128], index: 1, kind: input, shape index: {}]
  %s2 = inlined_call_operand.vmem [shape: f32[1,128], index: 2, kind: input, shape index: {}]
  %s3 = inlined_call_operand.vmem [shape: bf16[2,256,128], index: 3, kind: output, shape index: {}]
  %s4 = sld [smem:[#allocation0]]
  $region45: #{base_encoder_forward.5} parent=0
    _
  %s6 = ssub.s32 1, %s4
  %s7 = scalar_select 0, %s6, %s4
  loop: start=0, step=1, limit=4
  $region2: #{base_encoder_forward.5} parent=0 // loop_pre_header
    _
  $region3: #{base_encoder_forward.5} parent=0 // loop_header
    %s9 = sphi 0, %s13
    %p10 = scmp.ge.s32.totalorder %s9, 4
    %s19 = sphi 0, %s21
    %s22 = sphi 0, %s19
    %s23 = sphi 0, %s22
    %s39 = sphi 0, %s23
    %s43 = sphi 0, %s43
    %s45 = sphi 0, %s43
    %s46 = sphi 0, %s45
    %s60 = sphi 0, %s46
    %s64 = sphi 0, %s64
    %s66 = sphi 0, %s64
    %s67 = sphi 0, %s66
    %s81 = sphi 0, %s67
    %s87 = sphi 0, %s89
    %s90 = sphi 0, %s87
    %s91 = sphi 0, %s90
    %s107 = sphi 0, %s91
  $region4: #{base_encoder_forward.5} parent=0 // loop_header_branch
    %12 = sbr.rel (%p10) target = $region8
  $region5: #{base_encoder_forward.5} parent=0 // loop_body
    %s14 = ssub.s32 %s9, 1
    %s15 = ssub.s32 %s9, 2
    %s16 = sadd.s32 %s9, 1
    %s17 = ssub.s32 %s9, %s16
    %p18 = scmp.eq.s32.totalorder %s17, 0
    %s20 = sadd.s32 %s19, 1
    %s21 = scalar_select %p18, %s19, %s20
    %p24 = pneg %p18
    %p25 = scmp.eq.s32.totalorder %s9, 1
    %p26 = por %p24, %p25
    %p27 = scmp.ne.s32.totalorder %s19, %s22
    %p28 = scmp.eq.s32.totalorder %s9, 0
    %p29 = por %p27, %p28
    %p30 = scmp.ne.s32.totalorder %s19, %s22
    %p31 = scmp.eq.s32.totalorder %s14, 1
    %p32 = por %p30, %p31
    %p33 = scmp.ne.s32.totalorder %s22, %s23
    %p34 = scmp.eq.s32.totalorder %s14, 0
    %p35 = por %p33, %p34
    %p36 = scmp.ne.s32.totalorder %s22, %s23
    %p37 = scmp.eq.s32.totalorder %s15, 1
    %p38 = por %p36, %p37
    %p40 = scmp.ne.s32.totalorder %s23, %s39
    %p41 = scmp.eq.s32.totalorder %s15, 0
    %p42 = por %p40, %p41
    %s44 = sadd.s32 %s43, 1
    %p47 = scmp.eq.s32.totalorder %s9, 1
    %p48 = scmp.ne.s32.totalorder %s43, %s45
    %p49 = scmp.eq.s32.totalorder %s9, 0
    %p50 = por %p48, %p49
    %p51 = scmp.ne.s32.totalorder %s43, %s45
    %p52 = scmp.eq.s32.totalorder %s14, 1
    %p53 = por %p51, %p52
    %p54 = scmp.ne.s32.totalorder %s45, %s46
    %p55 = scmp.eq.s32.totalorder %s14, 0
    %p56 = por %p54, %p55
    %p57 = scmp.ne.s32.totalorder %s45, %s46
    %p58 = scmp.eq.s32.totalorder %s15, 1
    %p59 = por %p57, %p58
    %p61 = scmp.ne.s32.totalorder %s46, %s60
    %p62 = scmp.eq.s32.totalorder %s15, 0
    %p63 = por %p61, %p62
    %s65 = sadd.s32 %s64, 1
    %p68 = scmp.eq.s32.totalorder %s9, 1
    %p69 = scmp.ne.s32.totalorder %s64, %s66
    %p70 = scmp.eq.s32.totalorder %s9, 0
    %p71 = por %p69, %p70
    %p72 = scmp.ne.s32.totalorder %s64, %s66
    %p73 = scmp.eq.s32.totalorder %s14, 1
    %p74 = por %p72, %p73
    %p75 = scmp.ne.s32.totalorder %s66, %s67
    %p76 = scmp.eq.s32.totalorder %s14, 0
    %p77 = por %p75, %p76
    %p78 = scmp.ne.s32.totalorder %s66, %s67
    %p79 = scmp.eq.s32.totalorder %s15, 1
    %p80 = por %p78, %p79
    %p82 = scmp.ne.s32.totalorder %s67, %s81
    %p83 = scmp.eq.s32.totalorder %s15, 0
    %p84 = por %p82, %p83
    %s85 = ssub.s32 %s9, %s16
    %p86 = scmp.eq.s32.totalorder %s85, 0
    %s88 = sadd.s32 %s87, 1
    %s89 = scalar_select %p86, %s87, %s88
    %p92 = pneg %p86
    %p93 = scmp.eq.s32.totalorder %s9, 1
    %p94 = por %p92, %p93
    %p95 = scmp.ne.s32.totalorder %s87, %s90
    %p96 = scmp.eq.s32.totalorder %s9, 0
    %p97 = por %p95, %p96
    %p98 = scmp.ne.s32.totalorder %s87, %s90
    %p99 = scmp.eq.s32.totalorder %s14, 1
    %p100 = por %p98, %p99
    %p101 = scmp.ne.s32.totalorder %s90, %s91
    %p102 = scmp.eq.s32.totalorder %s14, 0
    %p103 = por %p101, %p102
    %p104 = scmp.ne.s32.totalorder %s90, %s91
    %p105 = scmp.eq.s32.totalorder %s15, 1
    %p106 = por %p104, %p105
    %p108 = scmp.ne.s32.totalorder %s91, %s107
    %p109 = scmp.eq.s32.totalorder %s15, 0
    %p110 = por %p108, %p109
    %p111 = scmp.le.s32.totalorder 1, %s9
    %p112 = scmp.lt.s32.totalorder %s9, 3
    %p113 = pnand %p111, %p112
    %p114 = pneg %p113
    // Predicated region
    $region9: #{base_encoder_forward.5} parent=5 // pred_check
      _
    $region10: #{base_encoder_forward.5} parent=5 // pred_check_branch
      %116 = sbr.rel (%p113) target = $region12
    $region11: #{base_encoder_forward.5} parent=5 // pred_region
      %s117 = ssub.s32 %s9, 1
      // Predicated region
      $region13: #{base_encoder_forward.5} parent=11 // pred_check
        %p118 = pneg %p56
      $region14: #{base_encoder_forward.5} parent=11 // pred_check_branch
        %120 = sbr.rel (%p118) target = $region16
      $region15: #{base_encoder_forward.5} parent=11 // pred_region
        _
      $region16: #{base_encoder_forward.5} parent=11 // pred_fallthru
        _
      // Predicated region
      $region17: #{base_encoder_forward.5} parent=11 // pred_check
        %p121 = pneg %p77
      $region18: #{base_encoder_forward.5} parent=11 // pred_check_branch
        %123 = sbr.rel (%p121) target = $region20
      $region19: #{base_encoder_forward.5} parent=11 // pred_region
        _
      $region20: #{base_encoder_forward.5} parent=11 // pred_fallthru
        _
    $region12: #{base_encoder_forward.5} parent=5 // pred_fallthru
      _
    %p124 = scmp.lt.s32.totalorder %s9, 2
    // Predicated region
    $region21: #{base_encoder_forward.5} parent=5 // pred_check
      %p125 = pneg %p124
    $region22: #{base_encoder_forward.5} parent=5 // pred_check_branch
      %127 = sbr.rel (%p125) target = $region24
    $region23: #{base_encoder_forward.5} parent=5 // pred_region
      // Predicated region
      $region25: #{base_encoder_forward.5} parent=23 // pred_check
        %p128 = pneg %p29
      $region26: #{base_encoder_forward.5} parent=23 // pred_check_branch
        %130 = sbr.rel (%p128) target = $region28
      $region27: #{base_encoder_forward.5} parent=23 // pred_region
        %p131 = scmp.lt.s32.totalorder %s9, 1
        %s132 = scalar_select %p131, %s9, 1
        %s133 = smul.addr %s132, 54
        %s134 = smul.addr %s133, 4
        %s135 = scalar_lea.vmem %s0, %s134
      $region28: #{base_encoder_forward.5} parent=23 // pred_fallthru
        _
    $region24: #{base_encoder_forward.5} parent=5 // pred_fallthru
      _
    %p136 = scmp.le.s32.totalorder 1, %s9
    %p137 = scmp.lt.s32.totalorder %s9, 3
    %p138 = pnand %p136, %p137
    %p139 = pneg %p138
    // Predicated region
    $region29: #{base_encoder_forward.5} parent=5 // pred_check
      _
    $region30: #{base_encoder_forward.5} parent=5 // pred_check_branch
      %141 = sbr.rel (%p138) target = $region32
    $region31: #{base_encoder_forward.5} parent=5 // pred_region
      %s142 = ssub.s32 %s9, 1
      %p143 = scmp.lt.s32.totalorder %s14, 1
      %s144 = scalar_select %p143, %s14, 1
      %s145 = smul.addr %s144, 54
      %s146 = smul.addr %s145, 4
      %s147 = scalar_lea.vmem %s0, %s146
      %p148 = pneg %p35
      %p149 = pneg %p32
      %p150 = pneg %p56
      %p151 = pneg %p53
      %p152 = pneg %p77
      %p153 = pneg %p74
      %p154 = pneg %p103
      %p155 = pneg %p100
      %p156 = scmp.lt.s32.totalorder %s14, 1
      %s157 = scalar_select %p156, %s14, 1
      %s158 = smul.addr %s157, 32
      %s159 = smul.addr %s158, 4
      %s160 = scalar_lea.vmem %s3, %s159
      %p161 = scmp.lt.s32.totalorder %s14, 1
      %s162 = scalar_select %p161, %s14, 1
      %s163 = smul.addr %s162, 54
      %s164 = smul.addr %s163, 4
      %s165 = scalar_lea.vmem %s0, %s164
      %p166 = scmp.lt.s32.totalorder %s14, 1
      %s167 = scalar_select %p166, %s14, 1
      %s168 = smul.addr %s167, 32
      %s169 = smul.addr %s168, 4
      %s170 = scalar_lea.vmem %s3, %s169
      %v172 = vld [vmem:[%s165] sm:$0xf]
      %v173 = vld [vmem:[%s165 + $0x4] sm:$0xf]
      %v174 = vld [vmem:[%s165 + $0xc] sm:$0xf]
      %v175 = vld [vmem:[%s165 + $0x10] sm:$0xf]
      %v176 = vld [vmem:[%s165 + $0x18] sm:$0xf]
      %v177 = vld [vmem:[%s165 + $0x1c] sm:$0xf]
      %v178 = vld [vmem:[%s165 + $0x24] sm:$0xf]
      %v179 = vld [vmem:[%s165 + $0x28] sm:$0xf]
      %v180 = vld [vmem:[%s165 + $0x30] sm:$0xf]
      %v181 = vld [vmem:[%s165 + $0x34] sm:$0xf]
      %v182 = vld [vmem:[%s165 + $0x3c] sm:$0xf]
      %v183 = vld [vmem:[%s165 + $0x40] sm:$0xf]
      %v184 = vld [vmem:[%s165 + $0x48] sm:$0xf]
      %v185 = vld [vmem:[%s165 + $0x4c] sm:$0xf]
      %v186 = vld [vmem:[%s165 + $0x54] sm:$0xf]
      %v187 = vld [vmem:[%s165 + $0x58] sm:$0xf]
      %v188 = vld [vmem:[%s165 + $0x60] sm:$0xf]
      %v189 = vld [vmem:[%s165 + $0x64] sm:$0xf]
      %v190 = vld [vmem:[%s165 + $0x6c] sm:$0xf]
      %v191 = vld [vmem:[%s165 + $0x70] sm:$0xf]
      %v192 = vld [vmem:[%s165 + $0x78] sm:$0xf]
      %v193 = vld [vmem:[%s165 + $0x7c] sm:$0xf]
      %v194 = vld [vmem:[%s165 + $0x84] sm:$0xf]
      %v195 = vld [vmem:[%s165 + $0x88] sm:$0xf]
      %v196 = vld [vmem:[%s165 + $0x90] sm:$0xf]
      %v197 = vld [vmem:[%s165 + $0x94] sm:$0xf]
      %v198 = vld [vmem:[%s165 + $0x9c] sm:$0xf]
      %v199 = vld [vmem:[%s165 + $0xa0] sm:$0xf]
      %v200 = vld [vmem:[%s165 + $0xa8] sm:$0xf]
      %v201 = vld [vmem:[%s165 + $0xac] sm:$0xf]
      %v202 = vld [vmem:[%s165 + $0xb4] sm:$0xf]
      %v203 = vld [vmem:[%s165 + $0xb8] sm:$0xf]
      %v204 = vld [vmem:[%s1] sm:$0xf]
      %v205 = vld [vmem:[%s165 + $0x8] sm:$0x1]
      %v206 = vld [vmem:[%s165 + $0x14] sm:$0x1]
      %v207 = vld [vmem:[%s165 + $0x20] sm:$0x1]
      %v208 = vld [vmem:[%s165 + $0x2c] sm:$0x1]
      %v209 = vld [vmem:[%s165 + $0x38] sm:$0x1]
      %v210 = vld [vmem:[%s165 + $0x44] sm:$0x1]
      %v211 = vld [vmem:[%s165 + $0x50] sm:$0x1]
      %v212 = vld [vmem:[%s165 + $0x5c] sm:$0x1]
      %v213 = vld [vmem:[%s165 + $0x68] sm:$0x1]
      %v214 = vld [vmem:[%s165 + $0x74] sm:$0x1]
      %v215 = vld [vmem:[%s165 + $0x80] sm:$0x1]
      %v216 = vld [vmem:[%s165 + $0x8c] sm:$0x1]
      %v217 = vld [vmem:[%s165 + $0x98] sm:$0x1]
      %v218 = vld [vmem:[%s165 + $0xa4] sm:$0x1]
      %v219 = vld [vmem:[%s165 + $0xb0] sm:$0x1]
      %v220 = vld [vmem:[%s165 + $0xbc] sm:$0x1]
      %vm221 = vsmask.f32 3328
      %vm222 = vsmask.f32 7440
      %vm223 = vmor %vm221, %vm222
      %v225 = vshrl.u32 %v172, 16
      %v227 = vrot.slane %v225, 4
      %v228 = vshll.u32 %v172, 16
      %v230 = vrot.slane %v228, 5
      %v231 = vor.u32 %v227, %v230
      %v232 = vrot.slane %v231, 4
      %v234 = vshll.u32 %v173, 16
      %v236 = vrot.slane %v234, 5
      %v237 = vsel %vm223, %v232, %v236
      %v238 = vshrl.u32 %v173, 16
      %v240 = vrot.slane %v238, 4
      %v241 = vor.u32 %v240, %v236
      %v242 = vrot.slane %v241, 4
      %v244 = vshll.u32 %v205, 16
      %v246 = vrot.slane %v244, 5
      %v247 = vsel %vm223, %v242, %v246
      %v249 = vshrl.u32 %v174, 16
      %v251 = vrot.slane %v249, 4
      %v252 = vshll.u32 %v174, 16
      %v254 = vrot.slane %v252, 5
      %v255 = vor.u32 %v251, %v254
      %v256 = vrot.slane %v255, 4
      %v258 = vshll.u32 %v175, 16
      %v260 = vrot.slane %v258, 5
      %v261 = vsel %vm223, %v256, %v260
      %v262 = vshrl.u32 %v175, 16
      %v264 = vrot.slane %v262, 4
      %v265 = vor.u32 %v264, %v260
      %v266 = vrot.slane %v265, 4
      %v268 = vshll.u32 %v206, 16
      %v270 = vrot.slane %v268, 5
      %v271 = vsel %vm223, %v266, %v270
      %v273 = vshrl.u32 %v176, 16
      %v275 = vrot.slane %v273, 4
      %v276 = vshll.u32 %v176, 16
      %v278 = vrot.slane %v276, 5
      %v279 = vor.u32 %v275, %v278
      %v280 = vrot.slane %v279, 4
      %v282 = vshll.u32 %v177, 16
      %v284 = vrot.slane %v282, 5
      %v285 = vsel %vm223, %v280, %v284
      %v286 = vshrl.u32 %v177, 16
      %v288 = vrot.slane %v286, 4
      %v289 = vor.u32 %v288, %v284
      %v290 = vrot.slane %v289, 4
      %v292 = vshll.u32 %v207, 16
      %v294 = vrot.slane %v292, 5
      %v295 = vsel %vm223, %v290, %v294
      %v297 = vshrl.u32 %v178, 16
      %v299 = vrot.slane %v297, 4
      %v300 = vshll.u32 %v178, 16
      %v302 = vrot.slane %v300, 5
      %v303 = vor.u32 %v299, %v302
      %v304 = vrot.slane %v303, 4
      %v306 = vshll.u32 %v179, 16
      %v308 = vrot.slane %v306, 5
      %v309 = vsel %vm223, %v304, %v308
      %v310 = vshrl.u32 %v179, 16
      %v312 = vrot.slane %v310, 4
      %v313 = vor.u32 %v312, %v308
      %v314 = vrot.slane %v313, 4
      %v316 = vshll.u32 %v208, 16
      %v318 = vrot.slane %v316, 5
      %v319 = vsel %vm223, %v314, %v318
      %v321 = vshrl.u32 %v180, 16
      %v323 = vrot.slane %v321, 4
      %v324 = vshll.u32 %v180, 16
      %v326 = vrot.slane %v324, 5
      %v327 = vor.u32 %v323, %v326
      %v328 = vrot.slane %v327, 4
      %v330 = vshll.u32 %v181, 16
      %v332 = vrot.slane %v330, 5
      %v333 = vsel %vm223, %v328, %v332
      %v334 = vshrl.u32 %v181, 16
      %v336 = vrot.slane %v334, 4
      %v337 = vor.u32 %v336, %v332
      %v338 = vrot.slane %v337, 4
      %v340 = vshll.u32 %v209, 16
      %v342 = vrot.slane %v340, 5
      %v343 = vsel %vm223, %v338, %v342
      %v345 = vshrl.u32 %v182, 16
      %v347 = vrot.slane %v345, 4
      %v348 = vshll.u32 %v182, 16
      %v350 = vrot.slane %v348, 5
      %v351 = vor.u32 %v347, %v350
      %v352 = vrot.slane %v351, 4
      %v354 = vshll.u32 %v183, 16
      %v356 = vrot.slane %v354, 5
      %v357 = vsel %vm223, %v352, %v356
      %v358 = vshrl.u32 %v183, 16
      %v360 = vrot.slane %v358, 4
      %v361 = vor.u32 %v360, %v356
      %v362 = vrot.slane %v361, 4
      %v364 = vshll.u32 %v210, 16
      %v366 = vrot.slane %v364, 5
      %v367 = vsel %vm223, %v362, %v366
      %v369 = vshrl.u32 %v184, 16
      %v371 = vrot.slane %v369, 4
      %v372 = vshll.u32 %v184, 16
      %v374 = vrot.slane %v372, 5
      %v375 = vor.u32 %v371, %v374
      %v376 = vrot.slane %v375, 4
      %v378 = vshll.u32 %v185, 16
      %v380 = vrot.slane %v378, 5
      %v381 = vsel %vm223, %v376, %v380
      %v382 = vshrl.u32 %v185, 16
      %v384 = vrot.slane %v382, 4
      %v385 = vor.u32 %v384, %v380
      %v386 = vrot.slane %v385, 4
      %v388 = vshll.u32 %v211, 16
      %v390 = vrot.slane %v388, 5
      %v391 = vsel %vm223, %v386, %v390
      %v393 = vshrl.u32 %v186, 16
      %v395 = vrot.slane %v393, 4
      %v396 = vshll.u32 %v186, 16
      %v398 = vrot.slane %v396, 5
      %v399 = vor.u32 %v395, %v398
      %v400 = vrot.slane %v399, 4
      %v402 = vshll.u32 %v187, 16
      %v404 = vrot.slane %v402, 5
      %v405 = vsel %vm223, %v400, %v404
      %v406 = vshrl.u32 %v187, 16
      %v408 = vrot.slane %v406, 4
      %v409 = vor.u32 %v408, %v404
      %v410 = vrot.slane %v409, 4
      %v412 = vshll.u32 %v212, 16
      %v414 = vrot.slane %v412, 5
      %v415 = vsel %vm223, %v410, %v414
      %v417 = vshrl.u32 %v188, 16
      %v419 = vrot.slane %v417, 4
      %v420 = vshll.u32 %v188, 16
      %v422 = vrot.slane %v420, 5
      %v423 = vor.u32 %v419, %v422
      %v424 = vrot.slane %v423, 4
      %v426 = vshll.u32 %v189, 16
      %v428 = vrot.slane %v426, 5
      %v429 = vsel %vm223, %v424, %v428
      %v430 = vshrl.u32 %v189, 16
      %v432 = vrot.slane %v430, 4
      %v433 = vor.u32 %v432, %v428
      %v434 = vrot.slane %v433, 4
      %v436 = vshll.u32 %v213, 16
      %v438 = vrot.slane %v436, 5
      %v439 = vsel %vm223, %v434, %v438
      %v441 = vshrl.u32 %v190, 16
      %v443 = vrot.slane %v441, 4
      %v444 = vshll.u32 %v190, 16
      %v446 = vrot.slane %v444, 5
      %v447 = vor.u32 %v443, %v446
      %v448 = vrot.slane %v447, 4
      %v450 = vshll.u32 %v191, 16
      %v452 = vrot.slane %v450, 5
      %v453 = vsel %vm223, %v448, %v452
      %v454 = vshrl.u32 %v191, 16
      %v456 = vrot.slane %v454, 4
      %v457 = vor.u32 %v456, %v452
      %v458 = vrot.slane %v457, 4
      %v460 = vshll.u32 %v214, 16
      %v462 = vrot.slane %v460, 5
      %v463 = vsel %vm223, %v458, %v462
      %v465 = vshrl.u32 %v192, 16
      %v467 = vrot.slane %v465, 4
      %v468 = vshll.u32 %v192, 16
      %v470 = vrot.slane %v468, 5
      %v471 = vor.u32 %v467, %v470
      %v472 = vrot.slane %v471, 4
      %v474 = vshll.u32 %v193, 16
      %v476 = vrot.slane %v474, 5
      %v477 = vsel %vm223, %v472, %v476
      %v478 = vshrl.u32 %v193, 16
      %v480 = vrot.slane %v478, 4
      %v481 = vor.u32 %v480, %v476
      %v482 = vrot.slane %v481, 4
      %v484 = vshll.u32 %v215, 16
      %v486 = vrot.slane %v484, 5
      %v487 = vsel %vm223, %v482, %v486
      %v489 = vshrl.u32 %v194, 16
      %v491 = vrot.slane %v489, 4
      %v492 = vshll.u32 %v194, 16
      %v494 = vrot.slane %v492, 5
      %v495 = vor.u32 %v491, %v494
      %v496 = vrot.slane %v495, 4
      %v498 = vshll.u32 %v195, 16
      %v500 = vrot.slane %v498, 5
      %v501 = vsel %vm223, %v496, %v500
      %v502 = vshrl.u32 %v195, 16
      %v504 = vrot.slane %v502, 4
      %v505 = vor.u32 %v504, %v500
      %v506 = vrot.slane %v505, 4
      %v508 = vshll.u32 %v216, 16
      %v510 = vrot.slane %v508, 5
      %v511 = vsel %vm223, %v506, %v510
      %v513 = vshrl.u32 %v196, 16
      %v515 = vrot.slane %v513, 4
      %v516 = vshll.u32 %v196, 16
      %v518 = vrot.slane %v516, 5
      %v519 = vor.u32 %v515, %v518
      %v520 = vrot.slane %v519, 4
      %v522 = vshll.u32 %v197, 16
      %v524 = vrot.slane %v522, 5
      %v525 = vsel %vm223, %v520, %v524
      %v526 = vshrl.u32 %v197, 16
      %v528 = vrot.slane %v526, 4
      %v529 = vor.u32 %v528, %v524
      %v530 = vrot.slane %v529, 4
      %v532 = vshll.u32 %v217, 16
      %v534 = vrot.slane %v532, 5
      %v535 = vsel %vm223, %v530, %v534
      %v537 = vshrl.u32 %v198, 16
      %v539 = vrot.slane %v537, 4
      %v540 = vshll.u32 %v198, 16
      %v542 = vrot.slane %v540, 5
      %v543 = vor.u32 %v539, %v542
      %v544 = vrot.slane %v543, 4
      %v546 = vshll.u32 %v199, 16
      %v548 = vrot.slane %v546, 5
      %v549 = vsel %vm223, %v544, %v548
      %v550 = vshrl.u32 %v199, 16
      %v552 = vrot.slane %v550, 4
      %v553 = vor.u32 %v552, %v548
      %v554 = vrot.slane %v553, 4
      %v556 = vshll.u32 %v218, 16
      %v558 = vrot.slane %v556, 5
      %v559 = vsel %vm223, %v554, %v558
      %v561 = vshrl.u32 %v200, 16
      %v563 = vrot.slane %v561, 4
      %v564 = vshll.u32 %v200, 16
      %v566 = vrot.slane %v564, 5
      %v567 = vor.u32 %v563, %v566
      %v568 = vrot.slane %v567, 4
      %v570 = vshll.u32 %v201, 16
      %v572 = vrot.slane %v570, 5
      %v573 = vsel %vm223, %v568, %v572
      %v574 = vshrl.u32 %v201, 16
      %v576 = vrot.slane %v574, 4
      %v577 = vor.u32 %v576, %v572
      %v578 = vrot.slane %v577, 4
      %v580 = vshll.u32 %v219, 16
      %v582 = vrot.slane %v580, 5
      %v583 = vsel %vm223, %v578, %v582
      %v585 = vshrl.u32 %v202, 16
      %v587 = vrot.slane %v585, 4
      %v588 = vshll.u32 %v202, 16
      %v590 = vrot.slane %v588, 5
      %v591 = vor.u32 %v587, %v590
      %v592 = vrot.slane %v591, 4
      %v594 = vshll.u32 %v203, 16
      %v596 = vrot.slane %v594, 5
      %v597 = vsel %vm223, %v592, %v596
      %v598 = vshrl.u32 %v203, 16
      %v600 = vrot.slane %v598, 4
      %v601 = vor.u32 %v600, %v596
      %v602 = vrot.slane %v601, 4
      %v604 = vshll.u32 %v220, 16
      %v606 = vrot.slane %v604, 5
      %v607 = vsel %vm223, %v602, %v606
      %s608 = scalar_lea.vmem %s1, 4
      %v609 = vld [vmem:[%s608] sm:$0xf]
      %v610 = vunpack.c.l.b16 %v237
      %v611 = vunpack.c.l.b16 %v247
      %v612 = vunpack.c.l.b16 %v261
      %v613 = vunpack.c.l.b16 %v271
      %v614 = vunpack.c.l.b16 %v285
      %v615 = vunpack.c.l.b16 %v295
      %v616 = vunpack.c.l.b16 %v309
      %v617 = vunpack.c.l.b16 %v319
      %v618 = vunpack.c.l.b16 %v333
      %v619 = vunpack.c.l.b16 %v343
      %v620 = vunpack.c.l.b16 %v357
      %v621 = vunpack.c.l.b16 %v367
      %v622 = vunpack.c.l.b16 %v381
      %v623 = vunpack.c.l.b16 %v391
      %v624 = vunpack.c.l.b16 %v405
      %v625 = vunpack.c.l.b16 %v415
      %v626 = vunpack.c.l.b16 %v429
      %v627 = vunpack.c.l.b16 %v439
      %v628 = vunpack.c.l.b16 %v453
      %v629 = vunpack.c.l.b16 %v463
      %v630 = vunpack.c.l.b16 %v477
      %v631 = vunpack.c.l.b16 %v487
      %v632 = vunpack.c.l.b16 %v501
      %v633 = vunpack.c.l.b16 %v511
      %v634 = vunpack.c.l.b16 %v525
      %v635 = vunpack.c.l.b16 %v535
      %v636 = vunpack.c.l.b16 %v549
      %v637 = vunpack.c.l.b16 %v559
      %v638 = vunpack.c.l.b16 %v573
      %v639 = vunpack.c.l.b16 %v583
      %v640 = vunpack.c.l.b16 %v597
      %v641 = vunpack.c.l.b16 %v607
      %v642 = vpack.c.b16 %v611, %v610
      %v643 = vpack.c.b16 %v613, %v612
      %v644 = vpack.c.b16 %v615, %v614
      %v645 = vpack.c.b16 %v617, %v616
      %v646 = vpack.c.b16 %v619, %v618
      %v647 = vpack.c.b16 %v621, %v620
      %v648 = vpack.c.b16 %v623, %v622
      %v649 = vpack.c.b16 %v625, %v624
      %v650 = vpack.c.b16 %v627, %v626
      %v651 = vpack.c.b16 %v629, %v628
      %v652 = vpack.c.b16 %v631, %v630
      %v653 = vpack.c.b16 %v633, %v632
      %v654 = vpack.c.b16 %v635, %v634
      %v655 = vpack.c.b16 %v637, %v636
      %v656 = vpack.c.b16 %v639, %v638
      %v657 = vpack.c.b16 %v641, %v640
      %vm658 = vcmask 64512
      %v660 = vsel %vm658, %v642, 0
      %v663 = vsel %vm658, %v643, 0
      %v666 = vsel %vm658, %v644, 0
      %v669 = vsel %vm658, %v645, 0
      %v672 = vsel %vm658, %v646, 0
      %v675 = vsel %vm658, %v647, 0
      %v678 = vsel %vm658, %v648, 0
      %v681 = vsel %vm658, %v649, 0
      %v684 = vsel %vm658, %v650, 0
      %v687 = vsel %vm658, %v651, 0
      %v690 = vsel %vm658, %v652, 0
      %v693 = vsel %vm658, %v653, 0
      %v696 = vsel %vm658, %v654, 0
      %v699 = vsel %vm658, %v655, 0
      %v702 = vsel %vm658, %v656, 0
      %v705 = vsel %vm658, %v657, 0
      %vm707 = vcmask 1043456
      %v709 = vsel %vm707, %v609, 0
      %711 = vmatprep.subr.bf16.mxu0 0
      %712 = vmatpush1.bf16.msra.mxu0 %v709
      %713 = vmatprep.subr.bf16.mxu0 0
      %714 = vmatpush1.bf16.msra.mxu0 0
      %715 = vmatprep.subr.bf16.mxu0 0
      %716 = vmatpush1.bf16.msra.mxu0 0
      %717 = vmatprep.subr.bf16.mxu0 0
      %718 = vmatpush1.bf16.msra.mxu0 0
      %719 = vmatprep.subr.bf16.mxu0 0
      %720 = vmatpush1.bf16.msra.mxu0 0
      %721 = vmatprep.subr.bf16.mxu0 0
      %722 = vmatpush1.bf16.msra.mxu0 0
      %723 = vmatprep.subr.bf16.mxu0 0
      %724 = vmatpush1.bf16.msra.mxu0 0
      %725 = vmatprep.subr.bf16.mxu0 0
      %726 = vmatpush1.bf16.msra.mxu0 0
      %727 = vmatprep.subr.bf16.mxu0 0
      %728 = vmatpush1.bf16.msra.mxu0 0
      %729 = vmatprep.subr.bf16.mxu0 0
      %730 = vmatpush1.bf16.msra.mxu0 0
      %731 = vmatprep.subr.bf16.mxu0 0
      %732 = vmatpush1.bf16.msra.mxu0 0
      %733 = vmatprep.subr.bf16.mxu0 0
      %734 = vmatpush1.bf16.msra.mxu0 0
      %735 = vmatprep.subr.bf16.mxu0 0
      %736 = vmatpush1.bf16.msra.mxu0 0
      %737 = vmatprep.subr.bf16.mxu0 0
      %738 = vmatpush1.bf16.msra.mxu0 0
      %739 = vmatprep.subr.bf16.mxu0 0
      %740 = vmatpush1.bf16.msra.mxu0 0
      %741 = vmatprep.subr.bf16.mxu0 0
      %742 = vmatpush1.bf16.msra.mxu0 0
      %743 = vmatprep.mubr.bf16.mxu0 0
      %744 = vmatmul.mubr.bf16.gmra.mrb[0].mxu0 %v660
      %v745 = vpop.f32.mrb[0].mxu0
      %v746 = vadd.f32 0.0, %v745
      %v747 = vpop.f32.mrb[0].mxu0
      %v748 = vpop.f32.mrb[0].mxu0
      %v749 = vadd.f32 0.0, %v748
      %v750 = vpop.f32.mrb[0].mxu0
      %751 = vmatprep.mubr.bf16.mxu0 0
      %752 = vmatmul.mubr.bf16.gmra.mrb[0].mxu0 %v663
      %v753 = vpop.f32.mrb[0].mxu0
      %v754 = vadd.f32 0.0, %v753
      %v755 = vpop.f32.mrb[0].mxu0
      %v756 = vpop.f32.mrb[0].mxu0
      %v757 = vadd.f32 0.0, %v756
      %v758 = vpop.f32.mrb[0].mxu0
      %759 = vmatprep.mubr.bf16.mxu0 0
      %760 = vmatmul.mubr.bf16.gmra.mrb[0].mxu0 %v666
      %v761 = vpop.f32.mrb[0].mxu0
      %v762 = vadd.f32 0.0, %v761
      %v763 = vpop.f32.mrb[0].mxu0
      %v764 = vpop.f32.mrb[0].mxu0
      %v765 = vadd.f32 0.0, %v764
      %v766 = vpop.f32.mrb[0].mxu0
      %767 = vmatprep.mubr.bf16.mxu0 0
      %768 = vmatmul.mubr.bf16.gmra.mrb[0].mxu0 %v669
      %v769 = vpop.f32.mrb[0].mxu0
      %v770 = vadd.f32 0.0, %v769
      %v771 = vpop.f32.mrb[0].mxu0
      %v772 = vpop.f32.mrb[0].mxu0
      %v773 = vadd.f32 0.0, %v772
      %v774 = vpop.f32.mrb[0].mxu0
      %775 = vmatprep.mubr.bf16.mxu0 0
      %776 = vmatmul.mubr.bf16.gmra.mrb[0].mxu0 %v672
      %v777 = vpop.f32.mrb[0].mxu0
      %v778 = vadd.f32 0.0, %v777
      %v779 = vpop.f32.mrb[0].mxu0
      %v780 = vpop.f32.mrb[0].mxu0
      %v781 = vadd.f32 0.0, %v780
      %v782 = vpop.f32.mrb[0].mxu0
      %783 = vmatprep.mubr.bf16.mxu0 0
      %784 = vmatmul.mubr.bf16.gmra.mrb[0].mxu0 %v675
      %v785 = vpop.f32.mrb[0].mxu0
      %v786 = vadd.f32 0.0, %v785
      %v787 = vpop.f32.mrb[0].mxu0
      %v788 = vpop.f32.mrb[0].mxu0
      %v789 = vadd.f32 0.0, %v788
      %v790 = vpop.f32.mrb[0].mxu0
      %791 = vmatprep.mubr.bf16.mxu0 0
      %792 = vmatmul.mubr.bf16.gmra.mrb[0].mxu0 %v678
      %v793 = vpop.f32.mrb[0].mxu0
      %v794 = vadd.f32 0.0, %v793
      %v795 = vpop.f32.mrb[0].mxu0
      %v796 = vpop.f32.mrb[0].mxu0
      %v797 = vadd.f32 0.0, %v796
      %v798 = vpop.f32.mrb[0].mxu0
      %799 = vmatprep.mubr.bf16.mxu0 0
      %800 = vmatmul.mubr.bf16.gmra.mrb[0].mxu0 %v681
      %v801 = vpop.f32.mrb[0].mxu0
      %v802 = vadd.f32 0.0, %v801
      %v803 = vpop.f32.mrb[0].mxu0
      %v804 = vpop.f32.mrb[0].mxu0
      %v805 = vadd.f32 0.0, %v804
      %v806 = vpop.f32.mrb[0].mxu0
      %807 = vmatprep.mubr.bf16.mxu0 0
      %808 = vmatmul.mubr.bf16.gmra.mrb[0].mxu0 %v684
      %v809 = vpop.f32.mrb[0].mxu0
      %v810 = vadd.f32 0.0, %v809
      %v811 = vpop.f32.mrb[0].mxu0
      %v812 = vpop.f32.mrb[0].mxu0
      %v813 = vadd.f32 0.0, %v812
      %v814 = vpop.f32.mrb[0].mxu0
      %815 = vmatprep.mubr.bf16.mxu0 0
      %816 = vmatmul.mubr.bf16.gmra.mrb[0].mxu0 %v687
      %v817 = vpop.f32.mrb[0].mxu0
      %v818 = vadd.f32 0.0, %v817
      %v819 = vpop.f32.mrb[0].mxu0
      %v820 = vpop.f32.mrb[0].mxu0
      %v821 = vadd.f32 0.0, %v820
      %v822 = vpop.f32.mrb[0].mxu0
      %823 = vmatprep.mubr.bf16.mxu0 0
      %824 = vmatmul.mubr.bf16.gmra.mrb[0].mxu0 %v690
      %v825 = vpop.f32.mrb[0].mxu0
      %v826 = vadd.f32 0.0, %v825
      %v827 = vpop.f32.mrb[0].mxu0
      %v828 = vpop.f32.mrb[0].mxu0
      %v829 = vadd.f32 0.0, %v828
      %v830 = vpop.f32.mrb[0].mxu0
      %831 = vmatprep.mubr.bf16.mxu0 0
      %832 = vmatmul.mubr.bf16.gmra.mrb[0].mxu0 %v693
      %v833 = vpop.f32.mrb[0].mxu0
      %v834 = vadd.f32 0.0, %v833
      %v835 = vpop.f32.mrb[0].mxu0
      %v836 = vpop.f32.mrb[0].mxu0
      %v837 = vadd.f32 0.0, %v836
      %v838 = vpop.f32.mrb[0].mxu0
      %839 = vmatprep.mubr.bf16.mxu0 0
      %840 = vmatmul.mubr.bf16.gmra.mrb[0].mxu0 %v696
      %v841 = vpop.f32.mrb[0].mxu0
      %v842 = vadd.f32 0.0, %v841
      %v843 = vpop.f32.mrb[0].mxu0
      %v844 = vpop.f32.mrb[0].mxu0
      %v845 = vadd.f32 0.0, %v844
      %v846 = vpop.f32.mrb[0].mxu0
      %847 = vmatprep.mubr.bf16.mxu0 0
      %848 = vmatmul.mubr.bf16.gmra.mrb[0].mxu0 %v699
      %v849 = vpop.f32.mrb[0].mxu0
      %v850 = vadd.f32 0.0, %v849
      %v851 = vpop.f32.mrb[0].mxu0
      %v852 = vpop.f32.mrb[0].mxu0
      %v853 = vadd.f32 0.0, %v852
      %v854 = vpop.f32.mrb[0].mxu0
      %855 = vmatprep.mubr.bf16.mxu0 0
      %856 = vmatmul.mubr.bf16.gmra.mrb[0].mxu0 %v702
      %v857 = vpop.f32.mrb[0].mxu0
      %v858 = vadd.f32 0.0, %v857
      %v859 = vpop.f32.mrb[0].mxu0
      %v860 = vpop.f32.mrb[0].mxu0
      %v861 = vadd.f32 0.0, %v860
      %v862 = vpop.f32.mrb[0].mxu0
      %863 = vmatprep.mubr.bf16.mxu0 0
      %864 = vmatmul.mubr.bf16.gmra.mrb[0].mxu0 %v705
      %v865 = vpop.f32.mrb[0].mxu0
      %v866 = vadd.f32 0.0, %v865
      %v867 = vpop.f32.mrb[0].mxu0
      %v868 = vpop.f32.mrb[0].mxu0
      %v869 = vadd.f32 0.0, %v868
      %v870 = vpop.f32.mrb[0].mxu0
      %871 = vdwg.mxu0
      %v904 = vunpack.c.l.b16 %v172
      %v905 = vunpack.c.l.b16 %v173
      %v906 = vunpack.c.l.b16 %v174
      %v907 = vunpack.c.l.b16 %v175
      %v908 = vunpack.c.l.b16 %v176
      %v909 = vunpack.c.l.b16 %v177
      %v910 = vunpack.c.l.b16 %v178
      %v911 = vunpack.c.l.b16 %v179
      %v912 = vunpack.c.l.b16 %v180
      %v913 = vunpack.c.l.b16 %v181
      %v914 = vunpack.c.l.b16 %v182
      %v915 = vunpack.c.l.b16 %v183
      %v916 = vunpack.c.l.b16 %v184
      %v917 = vunpack.c.l.b16 %v185
      %v918 = vunpack.c.l.b16 %v186
      %v919 = vunpack.c.l.b16 %v187
      %v920 = vunpack.c.l.b16 %v188
      %v921 = vunpack.c.l.b16 %v189
      %v922 = vunpack.c.l.b16 %v190
      %v923 = vunpack.c.l.b16 %v191
      %v924 = vunpack.c.l.b16 %v192
      %v925 = vunpack.c.l.b16 %v193
      %v926 = vunpack.c.l.b16 %v194
      %v927 = vunpack.c.l.b16 %v195
      %v928 = vunpack.c.l.b16 %v196
      %v929 = vunpack.c.l.b16 %v197
      %v930 = vunpack.c.l.b16 %v198
      %v931 = vunpack.c.l.b16 %v199
      %v932 = vunpack.c.l.b16 %v200
      %v933 = vunpack.c.l.b16 %v201
      %v934 = vunpack.c.l.b16 %v202
      %v935 = vunpack.c.l.b16 %v203
      %v936 = vpack.c.b16 %v905, %v904
      %v937 = vpack.c.b16 %v907, %v906
      %v938 = vpack.c.b16 %v909, %v908
      %v939 = vpack.c.b16 %v911, %v910
      %v940 = vpack.c.b16 %v913, %v912
      %v941 = vpack.c.b16 %v915, %v914
      %v942 = vpack.c.b16 %v917, %v916
      %v943 = vpack.c.b16 %v919, %v918
      %v944 = vpack.c.b16 %v921, %v920
      %v945 = vpack.c.b16 %v923, %v922
      %v946 = vpack.c.b16 %v925, %v924
      %v947 = vpack.c.b16 %v927, %v926
      %v948 = vpack.c.b16 %v929, %v928
      %v949 = vpack.c.b16 %v931, %v930
      %v950 = vpack.c.b16 %v933, %v932
      %v951 = vpack.c.b16 %v935, %v934
      %v953 = vsel %vm658, %v936, 0
      %v956 = vsel %vm658, %v937, 0
      %v959 = vsel %vm658, %v938, 0
      %v962 = vsel %vm658, %v939, 0
      %v965 = vsel %vm658, %v940, 0
      %v968 = vsel %vm658, %v941, 0
      %v971 = vsel %vm658, %v942, 0
      %v974 = vsel %vm658, %v943, 0
      %v977 = vsel %vm658, %v944, 0
      %v980 = vsel %vm658, %v945, 0
      %v983 = vsel %vm658, %v946, 0
      %v986 = vsel %vm658, %v947, 0
      %v989 = vsel %vm658, %v948, 0
      %v992 = vsel %vm658, %v949, 0
      %v995 = vsel %vm658, %v950, 0
      %v998 = vsel %vm658, %v951, 0
      %v1001 = vsel %vm707, %v204, 0
      %1003 = vmatprep.subr.bf16.mxu0 0
      %1004 = vmatpush1.bf16.msra.mxu0 %v1001
      %1005 = vmatprep.subr.bf16.mxu0 0
      %1006 = vmatpush1.bf16.msra.mxu0 0
      %1007 = vmatprep.subr.bf16.mxu0 0
      %1008 = vmatpush1.bf16.msra.mxu0 0
      %1009 = vmatprep.subr.bf16.mxu0 0
      %1010 = vmatpush1.bf16.msra.mxu0 0
      %1011 = vmatprep.subr.bf16.mxu0 0
      %1012 = vmatpush1.bf16.msra.mxu0 0
      %1013 = vmatprep.subr.bf16.mxu0 0
      %1014 = vmatpush1.bf16.msra.mxu0 0
      %1015 = vmatprep.subr.bf16.mxu0 0
      %1016 = vmatpush1.bf16.msra.mxu0 0
      %1017 = vmatprep.subr.bf16.mxu0 0
      %1018 = vmatpush1.bf16.msra.mxu0 0
      %1019 = vmatprep.subr.bf16.mxu0 0
      %1020 = vmatpush1.bf16.msra.mxu0 0
      %1021 = vmatprep.subr.bf16.mxu0 0
      %1022 = vmatpush1.bf16.msra.mxu0 0
      %1023 = vmatprep.subr.bf16.mxu0 0
      %1024 = vmatpush1.bf16.msra.mxu0 0
      %1025 = vmatprep.subr.bf16.mxu0 0
      %1026 = vmatpush1.bf16.msra.mxu0 0
      %1027 = vmatprep.subr.bf16.mxu0 0
      %1028 = vmatpush1.bf16.msra.mxu0 0
      %1029 = vmatprep.subr.bf16.mxu0 0
      %1030 = vmatpush1.bf16.msra.mxu0 0
      %1031 = vmatprep.subr.bf16.mxu0 0
      %1032 = vmatpush1.bf16.msra.mxu0 0
      %1033 = vmatprep.subr.bf16.mxu0 0
      %1034 = vmatpush1.bf16.msra.mxu0 0
      %1035 = vmatprep.mubr.bf16.mxu0 0
      %1036 = vmatmul.mubr.bf16.gmra.mrb[0].mxu0 %v953
      %v1037 = vpop.f32.mrb[0].mxu0
      %v1038 = vadd.f32 %v746, %v1037
      %v1039 = vpop.f32.mrb[0].mxu0
      %v1040 = vpop.f32.mrb[0].mxu0
      %v1041 = vadd.f32 %v749, %v1040
      %v1042 = vpop.f32.mrb[0].mxu0
      %1043 = vmatprep.mubr.bf16.mxu0 0
      %1044 = vmatmul.mubr.bf16.gmra.mrb[0].mxu0 %v956
      %v1045 = vpop.f32.mrb[0].mxu0
      %v1046 = vadd.f32 %v754, %v1045
      %v1047 = vpop.f32.mrb[0].mxu0
      %v1048 = vpop.f32.mrb[0].mxu0
      %v1049 = vadd.f32 %v757, %v1048
      %v1050 = vpop.f32.mrb[0].mxu0
      %1051 = vmatprep.mubr.bf16.mxu0 0
      %1052 = vmatmul.mubr.bf16.gmra.mrb[0].mxu0 %v959
      %v1053 = vpop.f32.mrb[0].mxu0
      %v1054 = vadd.f32 %v762, %v1053
      %v1055 = vpop.f32.mrb[0].mxu0
      %v1056 = vpop.f32.mrb[0].mxu0
      %v1057 = vadd.f32 %v765, %v1056
      %v1058 = vpop.f32.mrb[0].mxu0
      %1059 = vmatprep.mubr.bf16.mxu0 0
      %1060 = vmatmul.mubr.bf16.gmra.mrb[0].mxu0 %v962
      %v1061 = vpop.f32.mrb[0].mxu0
      %v1062 = vadd.f32 %v770, %v1061
      %v1063 = vpop.f32.mrb[0].mxu0
      %v1064 = vpop.f32.mrb[0].mxu0
      %v1065 = vadd.f32 %v773, %v1064
      %v1066 = vpop.f32.mrb[0].mxu0
      %1067 = vmatprep.mubr.bf16.mxu0 0
      %1068 = vmatmul.mubr.bf16.gmra.mrb[0].mxu0 %v965
      %v1069 = vpop.f32.mrb[0].mxu0
      %v1070 = vadd.f32 %v778, %v1069
      %v1071 = vpop.f32.mrb[0].mxu0
      %v1072 = vpop.f32.mrb[0].mxu0
      %v1073 = vadd.f32 %v781, %v1072
      %v1074 = vpop.f32.mrb[0].mxu0
      %1075 = vmatprep.mubr.bf16.mxu0 0
      %1076 = vmatmul.mubr.bf16.gmra.mrb[0].mxu0 %v968
      %v1077 = vpop.f32.mrb[0].mxu0
      %v1078 = vadd.f32 %v786, %v1077
      %v1079 = vpop.f32.mrb[0].mxu0
      %v1080 = vpop.f32.mrb[0].mxu0
      %v1081 = vadd.f32 %v789, %v1080
      %v1082 = vpop.f32.mrb[0].mxu0
      %1083 = vmatprep.mubr.bf16.mxu0 0
      %1084 = vmatmul.mubr.bf16.gmra.mrb[0].mxu0 %v971
      %v1085 = vpop.f32.mrb[0].mxu0
      %v1086 = vadd.f32 %v794, %v1085
      %v1087 = vpop.f32.mrb[0].mxu0
      %v1088 = vpop.f32.mrb[0].mxu0
      %v1089 = vadd.f32 %v797, %v1088
      %v1090 = vpop.f32.mrb[0].mxu0
      %1091 = vmatprep.mubr.bf16.mxu0 0
      %1092 = vmatmul.mubr.bf16.gmra.mrb[0].mxu0 %v974
      %v1093 = vpop.f32.mrb[0].mxu0
      %v1094 = vadd.f32 %v802, %v1093
      %v1095 = vpop.f32.mrb[0].mxu0
      %v1096 = vpop.f32.mrb[0].mxu0
      %v1097 = vadd.f32 %v805, %v1096
      %v1098 = vpop.f32.mrb[0].mxu0
      %1099 = vmatprep.mubr.bf16.mxu0 0
      %1100 = vmatmul.mubr.bf16.gmra.mrb[0].mxu0 %v977
      %v1101 = vpop.f32.mrb[0].mxu0
      %v1102 = vadd.f32 %v810, %v1101
      %v1103 = vpop.f32.mrb[0].mxu0
      %v1104 = vpop.f32.mrb[0].mxu0
      %v1105 = vadd.f32 %v813, %v1104
      %v1106 = vpop.f32.mrb[0].mxu0
      %1107 = vmatprep.mubr.bf16.mxu0 0
      %1108 = vmatmul.mubr.bf16.gmra.mrb[0].mxu0 %v980
      %v1109 = vpop.f32.mrb[0].mxu0
      %v1110 = vadd.f32 %v818, %v1109
      %v1111 = vpop.f32.mrb[0].mxu0
      %v1112 = vpop.f32.mrb[0].mxu0
      %v1113 = vadd.f32 %v821, %v1112
      %v1114 = vpop.f32.mrb[0].mxu0
      %1115 = vmatprep.mubr.bf16.mxu0 0
      %1116 = vmatmul.mubr.bf16.gmra.mrb[0].mxu0 %v983
      %v1117 = vpop.f32.mrb[0].mxu0
      %v1118 = vadd.f32 %v826, %v1117
      %v1119 = vpop.f32.mrb[0].mxu0
      %v1120 = vpop.f32.mrb[0].mxu0
      %v1121 = vadd.f32 %v829, %v1120
      %v1122 = vpop.f32.mrb[0].mxu0
      %1123 = vmatprep.mubr.bf16.mxu0 0
      %1124 = vmatmul.mubr.bf16.gmra.mrb[0].mxu0 %v986
      %v1125 = vpop.f32.mrb[0].mxu0
      %v1126 = vadd.f32 %v834, %v1125
      %v1127 = vpop.f32.mrb[0].mxu0
      %v1128 = vpop.f32.mrb[0].mxu0
      %v1129 = vadd.f32 %v837, %v1128
      %v1130 = vpop.f32.mrb[0].mxu0
      %1131 = vmatprep.mubr.bf16.mxu0 0
      %1132 = vmatmul.mubr.bf16.gmra.mrb[0].mxu0 %v989
      %v1133 = vpop.f32.mrb[0].mxu0
      %v1134 = vadd.f32 %v842, %v1133
      %v1135 = vpop.f32.mrb[0].mxu0
      %v1136 = vpop.f32.mrb[0].mxu0
      %v1137 = vadd.f32 %v845, %v1136
      %v1138 = vpop.f32.mrb[0].mxu0
      %1139 = vmatprep.mubr.bf16.mxu0 0
      %1140 = vmatmul.mubr.bf16.gmra.mrb[0].mxu0 %v992
      %v1141 = vpop.f32.mrb[0].mxu0
      %v1142 = vadd.f32 %v850, %v1141
      %v1143 = vpop.f32.mrb[0].mxu0
      %v1144 = vpop.f32.mrb[0].mxu0
      %v1145 = vadd.f32 %v853, %v1144
      %v1146 = vpop.f32.mrb[0].mxu0
      %1147 = vmatprep.mubr.bf16.mxu0 0
      %1148 = vmatmul.mubr.bf16.gmra.mrb[0].mxu0 %v995
      %v1149 = vpop.f32.mrb[0].mxu0
      %v1150 = vadd.f32 %v858, %v1149
      %v1151 = vpop.f32.mrb[0].mxu0
      %v1152 = vpop.f32.mrb[0].mxu0
      %v1153 = vadd.f32 %v861, %v1152
      %v1154 = vpop.f32.mrb[0].mxu0
      %1155 = vmatprep.mubr.bf16.mxu0 0
      %1156 = vmatmul.mubr.bf16.gmra.mrb[0].mxu0 %v998
      %v1157 = vpop.f32.mrb[0].mxu0
      %v1158 = vadd.f32 %v866, %v1157
      %v1159 = vpop.f32.mrb[0].mxu0
      %v1160 = vpop.f32.mrb[0].mxu0
      %v1161 = vadd.f32 %v869, %v1160
      %v1162 = vpop.f32.mrb[0].mxu0
      %1163 = vdwg.mxu0
      %v1164 = vld [vmem:[%s165] sm:$0xe]
      %v1165 = vld [vmem:[%s165 + $0xc] sm:$0xe]
      %v1166 = vld [vmem:[%s165 + $0x18] sm:$0xe]
      %v1167 = vld [vmem:[%s165 + $0x24] sm:$0xe]
      %v1168 = vld [vmem:[%s165 + $0x30] sm:$0xe]
      %v1169 = vld [vmem:[%s165 + $0x3c] sm:$0xe]
      %v1170 = vld [vmem:[%s165 + $0x48] sm:$0xe]
      %v1171 = vld [vmem:[%s165 + $0x54] sm:$0xe]
      %v1172 = vld [vmem:[%s165 + $0x60] sm:$0xe]
      %v1173 = vld [vmem:[%s165 + $0x6c] sm:$0xe]
      %v1174 = vld [vmem:[%s165 + $0x78] sm:$0xe]
      %v1175 = vld [vmem:[%s165 + $0x84] sm:$0xe]
      %v1176 = vld [vmem:[%s165 + $0x90] sm:$0xe]
      %v1177 = vld [vmem:[%s165 + $0x9c] sm:$0xe]
      %v1178 = vld [vmem:[%s165 + $0xa8] sm:$0xe]
      %v1179 = vld [vmem:[%s165 + $0xb4] sm:$0xe]
      %vm1212 = vcmask 1042432
      %vm1213 = vcmask 1046532
      %vm1214 = vmor %vm1212, %vm1213
      %v1215 = vrot.slane %v1164, 5
      %v1216 = vrot.slane %v1215, 4
      %v1217 = vrot.slane %v173, 5
      %v1218 = vsel %vm1214, %v1216, %v1217
      %v1219 = vrot.slane %v1217, 4
      %v1220 = vrot.slane %v205, 5
      %v1221 = vsel %vm1214, %v1219, %v1220
      %v1222 = vrot.slane %v1165, 5
      %v1223 = vrot.slane %v1222, 4
      %v1224 = vrot.slane %v175, 5
      %v1225 = vsel %vm1214, %v1223, %v1224
      %v1226 = vrot.slane %v1224, 4
      %v1227 = vrot.slane %v206, 5
      %v1228 = vsel %vm1214, %v1226, %v1227
      %v1229 = vrot.slane %v1166, 5
      %v1230 = vrot.slane %v1229, 4
      %v1231 = vrot.slane %v177, 5
      %v1232 = vsel %vm1214, %v1230, %v1231
      %v1233 = vrot.slane %v1231, 4
      %v1234 = vrot.slane %v207, 5
      %v1235 = vsel %vm1214, %v1233, %v1234
      %v1236 = vrot.slane %v1167, 5
      %v1237 = vrot.slane %v1236, 4
      %v1238 = vrot.slane %v179, 5
      %v1239 = vsel %vm1214, %v1237, %v1238
      %v1240 = vrot.slane %v1238, 4
      %v1241 = vrot.slane %v208, 5
      %v1242 = vsel %vm1214, %v1240, %v1241
      %v1243 = vrot.slane %v1168, 5
      %v1244 = vrot.slane %v1243, 4
      %v1245 = vrot.slane %v181, 5
      %v1246 = vsel %vm1214, %v1244, %v1245
      %v1247 = vrot.slane %v1245, 4
      %v1248 = vrot.slane %v209, 5
      %v1249 = vsel %vm1214, %v1247, %v1248
      %v1250 = vrot.slane %v1169, 5
      %v1251 = vrot.slane %v1250, 4
      %v1252 = vrot.slane %v183, 5
      %v1253 = vsel %vm1214, %v1251, %v1252
      %v1254 = vrot.slane %v1252, 4
      %v1255 = vrot.slane %v210, 5
      %v1256 = vsel %vm1214, %v1254, %v1255
      %v1257 = vrot.slane %v1170, 5
      %v1258 = vrot.slane %v1257, 4
      %v1259 = vrot.slane %v185, 5
      %v1260 = vsel %vm1214, %v1258, %v1259
      %v1261 = vrot.slane %v1259, 4
      %v1262 = vrot.slane %v211, 5
      %v1263 = vsel %vm1214, %v1261, %v1262
      %v1264 = vrot.slane %v1171, 5
      %v1265 = vrot.slane %v1264, 4
      %v1266 = vrot.slane %v187, 5
      %v1267 = vsel %vm1214, %v1265, %v1266
      %v1268 = vrot.slane %v1266, 4
      %v1269 = vrot.slane %v212, 5
      %v1270 = vsel %vm1214, %v1268, %v1269
      %v1271 = vrot.slane %v1172, 5
      %v1272 = vrot.slane %v1271, 4
      %v1273 = vrot.slane %v189, 5
      %v1274 = vsel %vm1214, %v1272, %v1273
      %v1275 = vrot.slane %v1273, 4
      %v1276 = vrot.slane %v213, 5
      %v1277 = vsel %vm1214, %v1275, %v1276
      %v1278 = vrot.slane %v1173, 5
      %v1279 = vrot.slane %v1278, 4
      %v1280 = vrot.slane %v191, 5
      %v1281 = vsel %vm1214, %v1279, %v1280
      %v1282 = vrot.slane %v1280, 4
      %v1283 = vrot.slane %v214, 5
      %v1284 = vsel %vm1214, %v1282, %v1283
      %v1285 = vrot.slane %v1174, 5
      %v1286 = vrot.slane %v1285, 4
      %v1287 = vrot.slane %v193, 5
      %v1288 = vsel %vm1214, %v1286, %v1287
      %v1289 = vrot.slane %v1287, 4
      %v1290 = vrot.slane %v215, 5
      %v1291 = vsel %vm1214, %v1289, %v1290
      %v1292 = vrot.slane %v1175, 5
      %v1293 = vrot.slane %v1292, 4
      %v1294 = vrot.slane %v195, 5
      %v1295 = vsel %vm1214, %v1293, %v1294
      %v1296 = vrot.slane %v1294, 4
      %v1297 = vrot.slane %v216, 5
      %v1298 = vsel %vm1214, %v1296, %v1297
      %v1299 = vrot.slane %v1176, 5
      %v1300 = vrot.slane %v1299, 4
      %v1301 = vrot.slane %v197, 5
      %v1302 = vsel %vm1214, %v1300, %v1301
      %v1303 = vrot.slane %v1301, 4
      %v1304 = vrot.slane %v217, 5
      %v1305 = vsel %vm1214, %v1303, %v1304
      %v1306 = vrot.slane %v1177, 5
      %v1307 = vrot.slane %v1306, 4
      %v1308 = vrot.slane %v199, 5
      %v1309 = vsel %vm1214, %v1307, %v1308
      %v1310 = vrot.slane %v1308, 4
      %v1311 = vrot.slane %v218, 5
      %v1312 = vsel %vm1214, %v1310, %v1311
      %v1313 = vrot.slane %v1178, 5
      %v1314 = vrot.slane %v1313, 4
      %v1315 = vrot.slane %v201, 5
      %v1316 = vsel %vm1214, %v1314, %v1315
      %v1317 = vrot.slane %v1315, 4
      %v1318 = vrot.slane %v219, 5
      %v1319 = vsel %vm1214, %v1317, %v1318
      %v1320 = vrot.slane %v1179, 5
      %v1321 = vrot.slane %v1320, 4
      %v1322 = vrot.slane %v203, 5
      %v1323 = vsel %vm1214, %v1321, %v1322
      %v1324 = vrot.slane %v1322, 4
      %v1325 = vrot.slane %v220, 5
      %v1326 = vsel %vm1214, %v1324, %v1325
      %s1327 = scalar_lea.vmem %s1, 8
      %v1328 = vld [vmem:[%s1327] sm:$0xf]
      %v1329 = vunpack.c.l.b16 %v1218
      %v1330 = vunpack.c.l.b16 %v1221
      %v1331 = vunpack.c.l.b16 %v1225
      %v1332 = vunpack.c.l.b16 %v1228
      %v1333 = vunpack.c.l.b16 %v1232
      %v1334 = vunpack.c.l.b16 %v1235
      %v1335 = vunpack.c.l.b16 %v1239
      %v1336 = vunpack.c.l.b16 %v1242
      %v1337 = vunpack.c.l.b16 %v1246
      %v1338 = vunpack.c.l.b16 %v1249
      %v1339 = vunpack.c.l.b16 %v1253
      %v1340 = vunpack.c.l.b16 %v1256
      %v1341 = vunpack.c.l.b16 %v1260
      %v1342 = vunpack.c.l.b16 %v1263
      %v1343 = vunpack.c.l.b16 %v1267
      %v1344 = vunpack.c.l.b16 %v1270
      %v1345 = vunpack.c.l.b16 %v1274
      %v1346 = vunpack.c.l.b16 %v1277
      %v1347 = vunpack.c.l.b16 %v1281
      %v1348 = vunpack.c.l.b16 %v1284
      %v1349 = vunpack.c.l.b16 %v1288
      %v1350 = vunpack.c.l.b16 %v1291
      %v1351 = vunpack.c.l.b16 %v1295
      %v1352 = vunpack.c.l.b16 %v1298
      %v1353 = vunpack.c.l.b16 %v1302
      %v1354 = vunpack.c.l.b16 %v1305
      %v1355 = vunpack.c.l.b16 %v1309
      %v1356 = vunpack.c.l.b16 %v1312
      %v1357 = vunpack.c.l.b16 %v1316
      %v1358 = vunpack.c.l.b16 %v1319
      %v1359 = vunpack.c.l.b16 %v1323
      %v1360 = vunpack.c.l.b16 %v1326
      %v1361 = vpack.c.b16 %v1330, %v1329
      %v1362 = vpack.c.b16 %v1332, %v1331
      %v1363 = vpack.c.b16 %v1334, %v1333
      %v1364 = vpack.c.b16 %v1336, %v1335
      %v1365 = vpack.c.b16 %v1338, %v1337
      %v1366 = vpack.c.b16 %v1340, %v1339
      %v1367 = vpack.c.b16 %v1342, %v1341
      %v1368 = vpack.c.b16 %v1344, %v1343
      %v1369 = vpack.c.b16 %v1346, %v1345
      %v1370 = vpack.c.b16 %v1348, %v1347
      %v1371 = vpack.c.b16 %v1350, %v1349
      %v1372 = vpack.c.b16 %v1352, %v1351
      %v1373 = vpack.c.b16 %v1354, %v1353
      %v1374 = vpack.c.b16 %v1356, %v1355
      %v1375 = vpack.c.b16 %v1358, %v1357
      %v1376 = vpack.c.b16 %v1360, %v1359
      %v1378 = vsel %vm658, %v1361, 0
      %v1381 = vsel %vm658, %v1362, 0
      %v1384 = vsel %vm658, %v1363, 0
      %v1387 = vsel %vm658, %v1364, 0
      %v1390 = vsel %vm658, %v1365, 0
      %v1393 = vsel %vm658, %v1366, 0
      %v1396 = vsel %vm658, %v1367, 0
      %v1399 = vsel %vm658, %v1368, 0
      %v1402 = vsel %vm658, %v1369, 0
      %v1405 = vsel %vm658, %v1370, 0
      %v1408 = vsel %vm658, %v1371, 0
      %v1411 = vsel %vm658, %v1372, 0
      %v1414 = vsel %vm658, %v1373, 0
      %v1417 = vsel %vm658, %v1374, 0
      %v1420 = vsel %vm658, %v1375, 0
      %v1423 = vsel %vm658, %v1376, 0
      %v1426 = vsel %vm707, %v1328, 0
      %1428 = vmatprep.subr.bf16.mxu0 0
      %1429 = vmatpush1.bf16.msra.mxu0 %v1426
      %1430 = vmatprep.subr.bf16.mxu0 0
      %1431 = vmatpush1.bf16.msra.mxu0 0
      %1432 = vmatprep.subr.bf16.mxu0 0
      %1433 = vmatpush1.bf16.msra.mxu0 0
      %1434 = vmatprep.subr.bf16.mxu0 0
      %1435 = vmatpush1.bf16.msra.mxu0 0
      %1436 = vmatprep.subr.bf16.mxu0 0
      %1437 = vmatpush1.bf16.msra.mxu0 0
      %1438 = vmatprep.subr.bf16.mxu0 0
      %1439 = vmatpush1.bf16.msra.mxu0 0
      %1440 = vmatprep.subr.bf16.mxu0 0
      %1441 = vmatpush1.bf16.msra.mxu0 0
      %1442 = vmatprep.subr.bf16.mxu0 0
      %1443 = vmatpush1.bf16.msra.mxu0 0
      %1444 = vmatprep.subr.bf16.mxu0 0
      %1445 = vmatpush1.bf16.msra.mxu0 0
      %1446 = vmatprep.subr.bf16.mxu0 0
      %1447 = vmatpush1.bf16.msra.mxu0 0
      %1448 = vmatprep.subr.bf16.mxu0 0
      %1449 = vmatpush1.bf16.msra.mxu0 0
      %1450 = vmatprep.subr.bf16.mxu0 0
      %1451 = vmatpush1.bf16.msra.mxu0 0
      %1452 = vmatprep.subr.bf16.mxu0 0
      %1453 = vmatpush1.bf16.msra.mxu0 0
      %1454 = vmatprep.subr.bf16.mxu0 0
      %1455 = vmatpush1.bf16.msra.mxu0 0
      %1456 = vmatprep.subr.bf16.mxu0 0
      %1457 = vmatpush1.bf16.msra.mxu0 0
      %1458 = vmatprep.subr.bf16.mxu0 0
      %1459 = vmatpush1.bf16.msra.mxu0 0
      %1460 = vmatprep.mubr.bf16.mxu0 0
      %1461 = vmatmul.mubr.bf16.gmra.mrb[0].mxu0 %v1378
      %v1462 = vpop.f32.mrb[0].mxu0
      %v1463 = vadd.f32 0.0, %v1462
      %v1464 = vpop.f32.mrb[0].mxu0
      %v1465 = vpop.f32.mrb[0].mxu0
      %v1466 = vadd.f32 0.0, %v1465
      %v1467 = vpop.f32.mrb[0].mxu0
      %1468 = vmatprep.mubr.bf16.mxu0 0
      %1469 = vmatmul.mubr.bf16.gmra.mrb[0].mxu0 %v1381
      %v1470 = vpop.f32.mrb[0].mxu0
      %v1471 = vadd.f32 0.0, %v1470
      %v1472 = vpop.f32.mrb[0].mxu0
      %v1473 = vpop.f32.mrb[0].mxu0
      %v1474 = vadd.f32 0.0, %v1473
      %v1475 = vpop.f32.mrb[0].mxu0
      %1476 = vmatprep.mubr.bf16.mxu0 0
      %1477 = vmatmul.mubr.bf16.gmra.mrb[0].mxu0 %v1384
      %v1478 = vpop.f32.mrb[0].mxu0
      %v1479 = vadd.f32 0.0, %v1478
      %v1480 = vpop.f32.mrb[0].mxu0
      %v1481 = vpop.f32.mrb[0].mxu0
      %v1482 = vadd.f32 0.0, %v1481
      %v1483 = vpop.f32.mrb[0].mxu0
      %1484 = vmatprep.mubr.bf16.mxu0 0
      %1485 = vmatmul.mubr.bf16.gmra.mrb[0].mxu0 %v1387
      %v1486 = vpop.f32.mrb[0].mxu0
      %v1487 = vadd.f32 0.0, %v1486
      %v1488 = vpop.f32.mrb[0].mxu0
      %v1489 = vpop.f32.mrb[0].mxu0
      %v1490 = vadd.f32 0.0, %v1489
      %v1491 = vpop.f32.mrb[0].mxu0
      %1492 = vmatprep.mubr.bf16.mxu0 0
      %1493 = vmatmul.mubr.bf16.gmra.mrb[0].mxu0 %v1390
      %v1494 = vpop.f32.mrb[0].mxu0
      %v1495 = vadd.f32 0.0, %v1494
      %v1496 = vpop.f32.mrb[0].mxu0
      %v1497 = vpop.f32.mrb[0].mxu0
      %v1498 = vadd.f32 0.0, %v1497
      %v1499 = vpop.f32.mrb[0].mxu0
      %1500 = vmatprep.mubr.bf16.mxu0 0
      %1501 = vmatmul.mubr.bf16.gmra.mrb[0].mxu0 %v1393
      %v1502 = vpop.f32.mrb[0].mxu0
      %v1503 = vadd.f32 0.0, %v1502
      %v1504 = vpop.f32.mrb[0].mxu0
      %v1505 = vpop.f32.mrb[0].mxu0
      %v1506 = vadd.f32 0.0, %v1505
      %v1507 = vpop.f32.mrb[0].mxu0
      %1508 = vmatprep.mubr.bf16.mxu0 0
      %1509 = vmatmul.mubr.bf16.gmra.mrb[0].mxu0 %v1396
      %v1510 = vpop.f32.mrb[0].mxu0
      %v1511 = vadd.f32 0.0, %v1510
      %v1512 = vpop.f32.mrb[0].mxu0
      %v1513 = vpop.f32.mrb[0].mxu0
      %v1514 = vadd.f32 0.0, %v1513
      %v1515 = vpop.f32.mrb[0].mxu0
      %1516 = vmatprep.mubr.bf16.mxu0 0
      %1517 = vmatmul.mubr.bf16.gmra.mrb[0].mxu0 %v1399
      %v1518 = vpop.f32.mrb[0].mxu0
      %v1519 = vadd.f32 0.0, %v1518
      %v1520 = vpop.f32.mrb[0].mxu0
      %v1521 = vpop.f32.mrb[0].mxu0
      %v1522 = vadd.f32 0.0, %v1521
      %v1523 = vpop.f32.mrb[0].mxu0
      %1524 = vmatprep.mubr.bf16.mxu0 0
      %1525 = vmatmul.mubr.bf16.gmra.mrb[0].mxu0 %v1402
      %v1526 = vpop.f32.mrb[0].mxu0
      %v1527 = vadd.f32 0.0, %v1526
      %v1528 = vpop.f32.mrb[0].mxu0
      %v1529 = vpop.f32.mrb[0].mxu0
      %v1530 = vadd.f32 0.0, %v1529
      %v1531 = vpop.f32.mrb[0].mxu0
      %1532 = vmatprep.mubr.bf16.mxu0 0
      %1533 = vmatmul.mubr.bf16.gmra.mrb[0].mxu0 %v1405
      %v1534 = vpop.f32.mrb[0].mxu0
      %v1535 = vadd.f32 0.0, %v1534
      %v1536 = vpop.f32.mrb[0].mxu0
      %v1537 = vpop.f32.mrb[0].mxu0
      %v1538 = vadd.f32 0.0, %v1537
      %v1539 = vpop.f32.mrb[0].mxu0
      %1540 = vmatprep.mubr.bf16.mxu0 0
      %1541 = vmatmul.mubr.bf16.gmra.mrb[0].mxu0 %v1408
      %v1542 = vpop.f32.mrb[0].mxu0
      %v1543 = vadd.f32 0.0, %v1542
      %v1544 = vpop.f32.mrb[0].mxu0
      %v1545 = vpop.f32.mrb[0].mxu0
      %v1546 = vadd.f32 0.0, %v1545
      %v1547 = vpop.f32.mrb[0].mxu0
      %1548 = vmatprep.mubr.bf16.mxu0 0
      %1549 = vmatmul.mubr.bf16.gmra.mrb[0].mxu0 %v1411
      %v1550 = vpop.f32.mrb[0].mxu0
      %v1551 = vadd.f32 0.0, %v1550
      %v1552 = vpop.f32.mrb[0].mxu0
      %v1553 = vpop.f32.mrb[0].mxu0
      %v1554 = vadd.f32 0.0, %v1553
      %v1555 = vpop.f32.mrb[0].mxu0
      %1556 = vmatprep.mubr.bf16.mxu0 0
      %1557 = vmatmul.mubr.bf16.gmra.mrb[0].mxu0 %v1414
      %v1558 = vpop.f32.mrb[0].mxu0
      %v1559 = vadd.f32 0.0, %v1558
      %v1560 = vpop.f32.mrb[0].mxu0
      %v1561 = vpop.f32.mrb[0].mxu0
      %v1562 = vadd.f32 0.0, %v1561
      %v1563 = vpop.f32.mrb[0].mxu0
      %1564 = vmatprep.mubr.bf16.mxu0 0
      %1565 = vmatmul.mubr.bf16.gmra.mrb[0].mxu0 %v1417
      %v1566 = vpop.f32.mrb[0].mxu0
      %v1567 = vadd.f32 0.0, %v1566
      %v1568 = vpop.f32.mrb[0].mxu0
      %v1569 = vpop.f32.mrb[0].mxu0
      %v1570 = vadd.f32 0.0, %v1569
      %v1571 = vpop.f32.mrb[0].mxu0
      %1572 = vmatprep.mubr.bf16.mxu0 0
      %1573 = vmatmul.mubr.bf16.gmra.mrb[0].mxu0 %v1420
      %v1574 = vpop.f32.mrb[0].mxu0
      %v1575 = vadd.f32 0.0, %v1574
      %v1576 = vpop.f32.mrb[0].mxu0
      %v1577 = vpop.f32.mrb[0].mxu0
      %v1578 = vadd.f32 0.0, %v1577
      %v1579 = vpop.f32.mrb[0].mxu0
      %1580 = vmatprep.mubr.bf16.mxu0 0
      %1581 = vmatmul.mubr.bf16.gmra.mrb[0].mxu0 %v1423
      %v1582 = vpop.f32.mrb[0].mxu0
      %v1583 = vadd.f32 0.0, %v1582
      %v1584 = vpop.f32.mrb[0].mxu0
      %v1585 = vpop.f32.mrb[0].mxu0
      %v1586 = vadd.f32 0.0, %v1585
      %v1587 = vpop.f32.mrb[0].mxu0
      %1588 = vdwg.mxu0
      %v1589 = vadd.f32 %v1038, %v1463
      %v1590 = vadd.f32 %v1041, %v1466
      %v1591 = vadd.f32 %v1046, %v1471
      %v1592 = vadd.f32 %v1049, %v1474
      %v1593 = vadd.f32 %v1054, %v1479
      %v1594 = vadd.f32 %v1057, %v1482
      %v1595 = vadd.f32 %v1062, %v1487
      %v1596 = vadd.f32 %v1065, %v1490
      %v1597 = vadd.f32 %v1070, %v1495
      %v1598 = vadd.f32 %v1073, %v1498
      %v1599 = vadd.f32 %v1078, %v1503
      %v1600 = vadd.f32 %v1081, %v1506
      %v1601 = vadd.f32 %v1086, %v1511
      %v1602 = vadd.f32 %v1089, %v1514
      %v1603 = vadd.f32 %v1094, %v1519
      %v1604 = vadd.f32 %v1097, %v1522
      %v1605 = vadd.f32 %v1102, %v1527
      %v1606 = vadd.f32 %v1105, %v1530
      %v1607 = vadd.f32 %v1110, %v1535
      %v1608 = vadd.f32 %v1113, %v1538
      %v1609 = vadd.f32 %v1118, %v1543
      %v1610 = vadd.f32 %v1121, %v1546
      %v1611 = vadd.f32 %v1126, %v1551
      %v1612 = vadd.f32 %v1129, %v1554
      %v1613 = vadd.f32 %v1134, %v1559
      %v1614 = vadd.f32 %v1137, %v1562
      %v1615 = vadd.f32 %v1142, %v1567
      %v1616 = vadd.f32 %v1145, %v1570
      %v1617 = vadd.f32 %v1150, %v1575
      %v1618 = vadd.f32 %v1153, %v1578
      %v1619 = vadd.f32 %v1158, %v1583
      %v1620 = vadd.f32 %v1161, %v1586
      %s1621 = scalar_lea.vmem %s165, 12
      %v1622 = vld [vmem:[%s1621] sm:$0xf]
      %v1623 = vld [vmem:[%s1621 + $0x4] sm:$0xf]
      %v1624 = vld [vmem:[%s1621 + $0xc] sm:$0xf]
      %v1625 = vld [vmem:[%s1621 + $0x10] sm:$0xf]
      %v1626 = vld [vmem:[%s1621 + $0x18] sm:$0xf]
      %v1627 = vld [vmem:[%s1621 + $0x1c] sm:$0xf]
      %v1628 = vld [vmem:[%s1621 + $0x24] sm:$0xf]
      %v1629 = vld [vmem:[%s1621 + $0x28] sm:$0xf]
      %v1630 = vld [vmem:[%s1621 + $0x30] sm:$0xf]
      %v1631 = vld [vmem:[%s1621 + $0x34] sm:$0xf]
      %v1632 = vld [vmem:[%s1621 + $0x3c] sm:$0xf]
      %v1633 = vld [vmem:[%s1621 + $0x40] sm:$0xf]
      %v1634 = vld [vmem:[%s1621 + $0x48] sm:$0xf]
      %v1635 = vld [vmem:[%s1621 + $0x4c] sm:$0xf]
      %v1636 = vld [vmem:[%s1621 + $0x54] sm:$0xf]
      %v1637 = vld [vmem:[%s1621 + $0x58] sm:$0xf]
      %v1638 = vld [vmem:[%s1621 + $0x60] sm:$0xf]
      %v1639 = vld [vmem:[%s1621 + $0x64] sm:$0xf]
      %v1640 = vld [vmem:[%s1621 + $0x6c] sm:$0xf]
      %v1641 = vld [vmem:[%s1621 + $0x70] sm:$0xf]
      %v1642 = vld [vmem:[%s1621 + $0x78] sm:$0xf]
      %v1643 = vld [vmem:[%s1621 + $0x7c] sm:$0xf]
      %v1644 = vld [vmem:[%s1621 + $0x84] sm:$0xf]
      %v1645 = vld [vmem:[%s1621 + $0x88] sm:$0xf]
      %v1646 = vld [vmem:[%s1621 + $0x90] sm:$0xf]
      %v1647 = vld [vmem:[%s1621 + $0x94] sm:$0xf]
      %v1648 = vld [vmem:[%s1621 + $0x9c] sm:$0xf]
      %v1649 = vld [vmem:[%s1621 + $0xa0] sm:$0xf]
      %v1650 = vld [vmem:[%s1621 + $0xa8] sm:$0xf]
      %v1651 = vld [vmem:[%s1621 + $0xac] sm:$0xf]
      %v1652 = vld [vmem:[%s1621 + $0xb4] sm:$0xf]
      %v1653 = vld [vmem:[%s1621 + $0xb8] sm:$0xf]
      %s1654 = scalar_lea.vmem %s1, 12
      %v1655 = vld [vmem:[%s1654] sm:$0xf]
      %v1688 = vunpack.c.l.b16 %v1622
      %v1689 = vunpack.c.l.b16 %v1623
      %v1690 = vunpack.c.l.b16 %v1624
      %v1691 = vunpack.c.l.b16 %v1625
      %v1692 = vunpack.c.l.b16 %v1626
      %v1693 = vunpack.c.l.b16 %v1627
      %v1694 = vunpack.c.l.b16 %v1628
      %v1695 = vunpack.c.l.b16 %v1629
      %v1696 = vunpack.c.l.b16 %v1630
      %v1697 = vunpack.c.l.b16 %v1631
      %v1698 = vunpack.c.l.b16 %v1632
      %v1699 = vunpack.c.l.b16 %v1633
      %v1700 = vunpack.c.l.b16 %v1634
      %v1701 = vunpack.c.l.b16 %v1635
      %v1702 = vunpack.c.l.b16 %v1636
      %v1703 = vunpack.c.l.b16 %v1637
      %v1704 = vunpack.c.l.b16 %v1638
      %v1705 = vunpack.c.l.b16 %v1639
      %v1706 = vunpack.c.l.b16 %v1640
      %v1707 = vunpack.c.l.b16 %v1641
      %v1708 = vunpack.c.l.b16 %v1642
      %v1709 = vunpack.c.l.b16 %v1643
      %v1710 = vunpack.c.l.b16 %v1644
      %v1711 = vunpack.c.l.b16 %v1645
      %v1712 = vunpack.c.l.b16 %v1646
      %v1713 = vunpack.c.l.b16 %v1647
      %v1714 = vunpack.c.l.b16 %v1648
      %v1715 = vunpack.c.l.b16 %v1649
      %v1716 = vunpack.c.l.b16 %v1650
      %v1717 = vunpack.c.l.b16 %v1651
      %v1718 = vunpack.c.l.b16 %v1652
      %v1719 = vunpack.c.l.b16 %v1653
      %v1720 = vpack.c.b16 %v1689, %v1688
      %v1721 = vpack.c.b16 %v1691, %v1690
      %v1722 = vpack.c.b16 %v1693, %v1692
      %v1723 = vpack.c.b16 %v1695, %v1694
      %v1724 = vpack.c.b16 %v1697, %v1696
      %v1725 = vpack.c.b16 %v1699, %v1698
      %v1726 = vpack.c.b16 %v1701, %v1700
      %v1727 = vpack.c.b16 %v1703, %v1702
      %v1728 = vpack.c.b16 %v1705, %v1704
      %v1729 = vpack.c.b16 %v1707, %v1706
      %v1730 = vpack.c.b16 %v1709, %v1708
      %v1731 = vpack.c.b16 %v1711, %v1710
      %v1732 = vpack.c.b16 %v1713, %v1712
      %v1733 = vpack.c.b16 %v1715, %v1714
      %v1734 = vpack.c.b16 %v1717, %v1716
      %v1735 = vpack.c.b16 %v1719, %v1718
      %v1737 = vsel %vm658, %v1720, 0
      %v1740 = vsel %vm658, %v1721, 0
      %v1743 = vsel %vm658, %v1722, 0
      %v1746 = vsel %vm658, %v1723, 0
      %v1749 = vsel %vm658, %v1724, 0
      %v1752 = vsel %vm658, %v1725, 0
      %v1755 = vsel %vm658, %v1726, 0
      %v1758 = vsel %vm658, %v1727, 0
      %v1761 = vsel %vm658, %v1728, 0
      %v1764 = vsel %vm658, %v1729, 0
      %v1767 = vsel %vm658, %v1730, 0
      %v1770 = vsel %vm658, %v1731, 0
      %v1773 = vsel %vm658, %v1732, 0
      %v1776 = vsel %vm658, %v1733, 0
      %v1779 = vsel %vm658, %v1734, 0
      %v1782 = vsel %vm658, %v1735, 0
      %v1785 = vsel %vm707, %v1655, 0
      %1787 = vmatprep.subr.bf16.mxu0 0
      %1788 = vmatpush1.bf16.msra.mxu0 %v1785
      %1789 = vmatprep.subr.bf16.mxu0 0
      %1790 = vmatpush1.bf16.msra.mxu0 0
      %1791 = vmatprep.subr.bf16.mxu0 0
      %1792 = vmatpush1.bf16.msra.mxu0 0
      %1793 = vmatprep.subr.bf16.mxu0 0
      %1794 = vmatpush1.bf16.msra.mxu0 0
      %1795 = vmatprep.subr.bf16.mxu0 0
      %1796 = vmatpush1.bf16.msra.mxu0 0
      %1797 = vmatprep.subr.bf16.mxu0 0
      %1798 = vmatpush1.bf16.msra.mxu0 0
      %1799 = vmatprep.subr.bf16.mxu0 0
      %1800 = vmatpush1.bf16.msra.mxu0 0
      %1801 = vmatprep.subr.bf16.mxu0 0
      %1802 = vmatpush1.bf16.msra.mxu0 0
      %1803 = vmatprep.subr.bf16.mxu0 0
      %1804 = vmatpush1.bf16.msra.mxu0 0
      %1805 = vmatprep.subr.bf16.mxu0 0
      %1806 = vmatpush1.bf16.msra.mxu0 0
      %1807 = vmatprep.subr.bf16.mxu0 0
      %1808 = vmatpush1.bf16.msra.mxu0 0
      %1809 = vmatprep.subr.bf16.mxu0 0
      %1810 = vmatpush1.bf16.msra.mxu0 0
      %1811 = vmatprep.subr.bf16.mxu0 0
      %1812 = vmatpush1.bf16.msra.mxu0 0
      %1813 = vmatprep.subr.bf16.mxu0 0
      %1814 = vmatpush1.bf16.msra.mxu0 0
      %1815 = vmatprep.subr.bf16.mxu0 0
      %1816 = vmatpush1.bf16.msra.mxu0 0
      %1817 = vmatprep.subr.bf16.mxu0 0
      %1818 = vmatpush1.bf16.msra.mxu0 0
      %1819 = vmatprep.mubr.bf16.mxu0 0
      %1820 = vmatmul.mubr.bf16.gmra.mrb[0].mxu0 %v1737
      %v1821 = vpop.f32.mrb[0].mxu0
      %v1822 = vadd.f32 0.0, %v1821
      %v1823 = vpop.f32.mrb[0].mxu0
      %v1824 = vpop.f32.mrb[0].mxu0
      %v1825 = vadd.f32 0.0, %v1824
      %v1826 = vpop.f32.mrb[0].mxu0
      %1827 = vmatprep.mubr.bf16.mxu0 0
      %1828 = vmatmul.mubr.bf16.gmra.mrb[0].mxu0 %v1740
      %v1829 = vpop.f32.mrb[0].mxu0
      %v1830 = vadd.f32 0.0, %v1829
      %v1831 = vpop.f32.mrb[0].mxu0
      %v1832 = vpop.f32.mrb[0].mxu0
      %v1833 = vadd.f32 0.0, %v1832
      %v1834 = vpop.f32.mrb[0].mxu0
      %1835 = vmatprep.mubr.bf16.mxu0 0
      %1836 = vmatmul.mubr.bf16.gmra.mrb[0].mxu0 %v1743
      %v1837 = vpop.f32.mrb[0].mxu0
      %v1838 = vadd.f32 0.0, %v1837
      %v1839 = vpop.f32.mrb[0].mxu0
      %v1840 = vpop.f32.mrb[0].mxu0
      %v1841 = vadd.f32 0.0, %v1840
      %v1842 = vpop.f32.mrb[0].mxu0
      %1843 = vmatprep.mubr.bf16.mxu0 0
      %1844 = vmatmul.mubr.bf16.gmra.mrb[0].mxu0 %v1746
      %v1845 = vpop.f32.mrb[0].mxu0
      %v1846 = vadd.f32 0.0, %v1845
      %v1847 = vpop.f32.mrb[0].mxu0
      %v1848 = vpop.f32.mrb[0].mxu0
      %v1849 = vadd.f32 0.0, %v1848
      %v1850 = vpop.f32.mrb[0].mxu0
      %1851 = vmatprep.mubr.bf16.mxu0 0
      %1852 = vmatmul.mubr.bf16.gmra.mrb[0].mxu0 %v1749
      %v1853 = vpop.f32.mrb[0].mxu0
      %v1854 = vadd.f32 0.0, %v1853
      %v1855 = vpop.f32.mrb[0].mxu0
      %v1856 = vpop.f32.mrb[0].mxu0
      %v1857 = vadd.f32 0.0, %v1856
      %v1858 = vpop.f32.mrb[0].mxu0
      %1859 = vmatprep.mubr.bf16.mxu0 0
      %1860 = vmatmul.mubr.bf16.gmra.mrb[0].mxu0 %v1752
      %v1861 = vpop.f32.mrb[0].mxu0
      %v1862 = vadd.f32 0.0, %v1861
      %v1863 = vpop.f32.mrb[0].mxu0
      %v1864 = vpop.f32.mrb[0].mxu0
      %v1865 = vadd.f32 0.0, %v1864
      %v1866 = vpop.f32.mrb[0].mxu0
      %1867 = vmatprep.mubr.bf16.mxu0 0
      %1868 = vmatmul.mubr.bf16.gmra.mrb[0].mxu0 %v1755
      %v1869 = vpop.f32.mrb[0].mxu0
      %v1870 = vadd.f32 0.0, %v1869
      %v1871 = vpop.f32.mrb[0].mxu0
      %v1872 = vpop.f32.mrb[0].mxu0
      %v1873 = vadd.f32 0.0, %v1872
      %v1874 = vpop.f32.mrb[0].mxu0
      %1875 = vmatprep.mubr.bf16.mxu0 0
      %1876 = vmatmul.mubr.bf16.gmra.mrb[0].mxu0 %v1758
      %v1877 = vpop.f32.mrb[0].mxu0
      %v1878 = vadd.f32 0.0, %v1877
      %v1879 = vpop.f32.mrb[0].mxu0
      %v1880 = vpop.f32.mrb[0].mxu0
      %v1881 = vadd.f32 0.0, %v1880
      %v1882 = vpop.f32.mrb[0].mxu0
      %1883 = vmatprep.mubr.bf16.mxu0 0
      %1884 = vmatmul.mubr.bf16.gmra.mrb[0].mxu0 %v1761
      %v1885 = vpop.f32.mrb[0].mxu0
      %v1886 = vadd.f32 0.0, %v1885
      %v1887 = vpop.f32.mrb[0].mxu0
      %v1888 = vpop.f32.mrb[0].mxu0
      %v1889 = vadd.f32 0.0, %v1888
      %v1890 = vpop.f32.mrb[0].mxu0
      %1891 = vmatprep.mubr.bf16.mxu0 0
      %1892 = vmatmul.mubr.bf16.gmra.mrb[0].mxu0 %v1764
      %v1893 = vpop.f32.mrb[0].mxu0
      %v1894 = vadd.f32 0.0, %v1893
      %v1895 = vpop.f32.mrb[0].mxu0
      %v1896 = vpop.f32.mrb[0].mxu0
      %v1897 = vadd.f32 0.0, %v1896
      %v1898 = vpop.f32.mrb[0].mxu0
      %1899 = vmatprep.mubr.bf16.mxu0 0
      %1900 = vmatmul.mubr.bf16.gmra.mrb[0].mxu0 %v1767
      %v1901 = vpop.f32.mrb[0].mxu0
      %v1902 = vadd.f32 0.0, %v1901
      %v1903 = vpop.f32.mrb[0].mxu0
      %v1904 = vpop.f32.mrb[0].mxu0
      %v1905 = vadd.f32 0.0, %v1904
      %v1906 = vpop.f32.mrb[0].mxu0
      %1907 = vmatprep.mubr.bf16.mxu0 0
      %1908 = vmatmul.mubr.bf16.gmra.mrb[0].mxu0 %v1770
      %v1909 = vpop.f32.mrb[0].mxu0
      %v1910 = vadd.f32 0.0, %v1909
      %v1911 = vpop.f32.mrb[0].mxu0
      %v1912 = vpop.f32.mrb[0].mxu0
      %v1913 = vadd.f32 0.0, %v1912
      %v1914 = vpop.f32.mrb[0].mxu0
      %1915 = vmatprep.mubr.bf16.mxu0 0
      %1916 = vmatmul.mubr.bf16.gmra.mrb[0].mxu0 %v1773
      %v1917 = vpop.f32.mrb[0].mxu0
      %v1918 = vadd.f32 0.0, %v1917
      %v1919 = vpop.f32.mrb[0].mxu0
      %v1920 = vpop.f32.mrb[0].mxu0
      %v1921 = vadd.f32 0.0, %v1920
      %v1922 = vpop.f32.mrb[0].mxu0
      %1923 = vmatprep.mubr.bf16.mxu0 0
      %1924 = vmatmul.mubr.bf16.gmra.mrb[0].mxu0 %v1776
      %v1925 = vpop.f32.mrb[0].mxu0
      %v1926 = vadd.f32 0.0, %v1925
      %v1927 = vpop.f32.mrb[0].mxu0
      %v1928 = vpop.f32.mrb[0].mxu0
      %v1929 = vadd.f32 0.0, %v1928
      %v1930 = vpop.f32.mrb[0].mxu0
      %1931 = vmatprep.mubr.bf16.mxu0 0
      %1932 = vmatmul.mubr.bf16.gmra.mrb[0].mxu0 %v1779
      %v1933 = vpop.f32.mrb[0].mxu0
      %v1934 = vadd.f32 0.0, %v1933
      %v1935 = vpop.f32.mrb[0].mxu0
      %v1936 = vpop.f32.mrb[0].mxu0
      %v1937 = vadd.f32 0.0, %v1936
      %v1938 = vpop.f32.mrb[0].mxu0
      %1939 = vmatprep.mubr.bf16.mxu0 0
      %1940 = vmatmul.mubr.bf16.gmra.mrb[0].mxu0 %v1782
      %v1941 = vpop.f32.mrb[0].mxu0
      %v1942 = vadd.f32 0.0, %v1941
      %v1943 = vpop.f32.mrb[0].mxu0
      %v1944 = vpop.f32.mrb[0].mxu0
      %v1945 = vadd.f32 0.0, %v1944
      %v1946 = vpop.f32.mrb[0].mxu0
      %1947 = vdwg.mxu0
      %v1948 = vadd.f32 %v1589, %v1822
      %v1949 = vadd.f32 %v1590, %v1825
      %v1950 = vadd.f32 %v1591, %v1830
      %v1951 = vadd.f32 %v1592, %v1833
      %v1952 = vadd.f32 %v1593, %v1838
      %v1953 = vadd.f32 %v1594, %v1841
      %v1954 = vadd.f32 %v1595, %v1846
      %v1955 = vadd.f32 %v1596, %v1849
      %v1956 = vadd.f32 %v1597, %v1854
      %v1957 = vadd.f32 %v1598, %v1857
      %v1958 = vadd.f32 %v1599, %v1862
      %v1959 = vadd.f32 %v1600, %v1865
      %v1960 = vadd.f32 %v1601, %v1870
      %v1961 = vadd.f32 %v1602, %v1873
      %v1962 = vadd.f32 %v1603, %v1878
      %v1963 = vadd.f32 %v1604, %v1881
      %v1964 = vadd.f32 %v1605, %v1886
      %v1965 = vadd.f32 %v1606, %v1889
      %v1966 = vadd.f32 %v1607, %v1894
      %v1967 = vadd.f32 %v1608, %v1897
      %v1968 = vadd.f32 %v1609, %v1902
      %v1969 = vadd.f32 %v1610, %v1905
      %v1970 = vadd.f32 %v1611, %v1910
      %v1971 = vadd.f32 %v1612, %v1913
      %v1972 = vadd.f32 %v1613, %v1918
      %v1973 = vadd.f32 %v1614, %v1921
      %v1974 = vadd.f32 %v1615, %v1926
      %v1975 = vadd.f32 %v1616, %v1929
      %v1976 = vadd.f32 %v1617, %v1934
      %v1977 = vadd.f32 %v1618, %v1937
      %v1978 = vadd.f32 %v1619, %v1942
      %v1979 = vadd.f32 %v1620, %v1945
      %v1980 = vld [vmem:[%s1621] sm:$0xf]
      %v1981 = vld [vmem:[%s1621 + $0x4] sm:$0xf]
      %v1982 = vld [vmem:[%s1621 + $0x8] sm:$0x1]
      %v1983 = vld [vmem:[%s1621 + $0xc] sm:$0xf]
      %v1984 = vld [vmem:[%s1621 + $0x10] sm:$0xf]
      %v1985 = vld [vmem:[%s1621 + $0x14] sm:$0x1]
      %v1986 = vld [vmem:[%s1621 + $0x18] sm:$0xf]
      %v1987 = vld [vmem:[%s1621 + $0x1c] sm:$0xf]
      %v1988 = vld [vmem:[%s1621 + $0x20] sm:$0x1]
      %v1989 = vld [vmem:[%s1621 + $0x24] sm:$0xf]
      %v1990 = vld [vmem:[%s1621 + $0x28] sm:$0xf]
      %v1991 = vld [vmem:[%s1621 + $0x2c] sm:$0x1]
      %v1992 = vld [vmem:[%s1621 + $0x30] sm:$0xf]
      %v1993 = vld [vmem:[%s1621 + $0x34] sm:$0xf]
      %v1994 = vld [vmem:[%s1621 + $0x38] sm:$0x1]
      %v1995 = vld [vmem:[%s1621 + $0x3c] sm:$0xf]
      %v1996 = vld [vmem:[%s1621 + $0x40] sm:$0xf]
      %v1997 = vld [vmem:[%s1621 + $0x44] sm:$0x1]
      %v1998 = vld [vmem:[%s1621 + $0x48] sm:$0xf]
      %v1999 = vld [vmem:[%s1621 + $0x4c] sm:$0xf]
      %v2000 = vld [vmem:[%s1621 + $0x50] sm:$0x1]
      %v2001 = vld [vmem:[%s1621 + $0x54] sm:$0xf]
      %v2002 = vld [vmem:[%s1621 + $0x58] sm:$0xf]
      %v2003 = vld [vmem:[%s1621 + $0x5c] sm:$0x1]
      %v2004 = vld [vmem:[%s1621 + $0x60] sm:$0xf]
      %v2005 = vld [vmem:[%s1621 + $0x64] sm:$0xf]
      %v2006 = vld [vmem:[%s1621 + $0x68] sm:$0x1]
      %v2007 = vld [vmem:[%s1621 + $0x6c] sm:$0xf]
      %v2008 = vld [vmem:[%s1621 + $0x70] sm:$0xf]
      %v2009 = vld [vmem:[%s1621 + $0x74] sm:$0x1]
      %v2010 = vld [vmem:[%s1621 + $0x78] sm:$0xf]
      %v2011 = vld [vmem:[%s1621 + $0x7c] sm:$0xf]
      %v2012 = vld [vmem:[%s1621 + $0x80] sm:$0x1]
      %v2013 = vld [vmem:[%s1621 + $0x84] sm:$0xf]
      %v2014 = vld [vmem:[%s1621 + $0x88] sm:$0xf]
      %v2015 = vld [vmem:[%s1621 + $0x8c] sm:$0x1]
      %v2016 = vld [vmem:[%s1621 + $0x90] sm:$0xf]
      %v2017 = vld [vmem:[%s1621 + $0x94] sm:$0xf]
      %v2018 = vld [vmem:[%s1621 + $0x98] sm:$0x1]
      %v2019 = vld [vmem:[%s1621 + $0x9c] sm:$0xf]
      %v2020 = vld [vmem:[%s1621 + $0xa0] sm:$0xf]
      %v2021 = vld [vmem:[%s1621 + $0xa4] sm:$0x1]
      %v2022 = vld [vmem:[%s1621 + $0xa8] sm:$0xf]
      %v2023 = vld [vmem:[%s1621 + $0xac] sm:$0xf]
      %v2024 = vld [vmem:[%s1621 + $0xb0] sm:$0x1]
      %v2025 = vld [vmem:[%s1621 + $0xb4] sm:$0xf]
      %v2026 = vld [vmem:[%s1621 + $0xb8] sm:$0xf]
      %v2027 = vld [vmem:[%s1621 + $0xbc] sm:$0x1]
      %v2029 = vshrl.u32 %v1980, 16
      %v2031 = vrot.slane %v2029, 4
      %v2032 = vshll.u32 %v1980, 16
      %v2034 = vrot.slane %v2032, 5
      %v2035 = vor.u32 %v2031, %v2034
      %v2036 = vrot.slane %v2035, 4
      %v2038 = vshll.u32 %v1981, 16
      %v2040 = vrot.slane %v2038, 5
      %v2041 = vsel %vm223, %v2036, %v2040
      %v2042 = vshrl.u32 %v1981, 16
      %v2044 = vrot.slane %v2042, 4
      %v2045 = vor.u32 %v2044, %v2040
      %v2046 = vrot.slane %v2045, 4
      %v2048 = vshll.u32 %v1982, 16
      %v2050 = vrot.slane %v2048, 5
      %v2051 = vsel %vm223, %v2046, %v2050
      %v2053 = vshrl.u32 %v1983, 16
      %v2055 = vrot.slane %v2053, 4
      %v2056 = vshll.u32 %v1983, 16
      %v2058 = vrot.slane %v2056, 5
      %v2059 = vor.u32 %v2055, %v2058
      %v2060 = vrot.slane %v2059, 4
      %v2062 = vshll.u32 %v1984, 16
      %v2064 = vrot.slane %v2062, 5
      %v2065 = vsel %vm223, %v2060, %v2064
      %v2066 = vshrl.u32 %v1984, 16
      %v2068 = vrot.slane %v2066, 4
      %v2069 = vor.u32 %v2068, %v2064
      %v2070 = vrot.slane %v2069, 4
      %v2072 = vshll.u32 %v1985, 16
      %v2074 = vrot.slane %v2072, 5
      %v2075 = vsel %vm223, %v2070, %v2074
      %v2077 = vshrl.u32 %v1986, 16
      %v2079 = vrot.slane %v2077, 4
      %v2080 = vshll.u32 %v1986, 16
      %v2082 = vrot.slane %v2080, 5
      %v2083 = vor.u32 %v2079, %v2082
      %v2084 = vrot.slane %v2083, 4
      %v2086 = vshll.u32 %v1987, 16
      %v2088 = vrot.slane %v2086, 5
      %v2089 = vsel %vm223, %v2084, %v2088
      %v2090 = vshrl.u32 %v1987, 16
      %v2092 = vrot.slane %v2090, 4
      %v2093 = vor.u32 %v2092, %v2088
      %v2094 = vrot.slane %v2093, 4
      %v2096 = vshll.u32 %v1988, 16
      %v2098 = vrot.slane %v2096, 5
      %v2099 = vsel %vm223, %v2094, %v2098
      %v2101 = vshrl.u32 %v1989, 16
      %v2103 = vrot.slane %v2101, 4
      %v2104 = vshll.u32 %v1989, 16
      %v2106 = vrot.slane %v2104, 5
      %v2107 = vor.u32 %v2103, %v2106
      %v2108 = vrot.slane %v2107, 4
      %v2110 = vshll.u32 %v1990, 16
      %v2112 = vrot.slane %v2110, 5
      %v2113 = vsel %vm223, %v2108, %v2112
      %v2114 = vshrl.u32 %v1990, 16
      %v2116 = vrot.slane %v2114, 4
      %v2117 = vor.u32 %v2116, %v2112
      %v2118 = vrot.slane %v2117, 4
      %v2120 = vshll.u32 %v1991, 16
      %v2122 = vrot.slane %v2120, 5
      %v2123 = vsel %vm223, %v2118, %v2122
      %v2125 = vshrl.u32 %v1992, 16
      %v2127 = vrot.slane %v2125, 4
      %v2128 = vshll.u32 %v1992, 16
      %v2130 = vrot.slane %v2128, 5
      %v2131 = vor.u32 %v2127, %v2130
      %v2132 = vrot.slane %v2131, 4
      %v2134 = vshll.u32 %v1993, 16
      %v2136 = vrot.slane %v2134, 5
      %v2137 = vsel %vm223, %v2132, %v2136
      %v2138 = vshrl.u32 %v1993, 16
      %v2140 = vrot.slane %v2138, 4
      %v2141 = vor.u32 %v2140, %v2136
      %v2142 = vrot.slane %v2141, 4
      %v2144 = vshll.u32 %v1994, 16
      %v2146 = vrot.slane %v2144, 5
      %v2147 = vsel %vm223, %v2142, %v2146
      %v2149 = vshrl.u32 %v1995, 16
      %v2151 = vrot.slane %v2149, 4
      %v2152 = vshll.u32 %v1995, 16
      %v2154 = vrot.slane %v2152, 5
      %v2155 = vor.u32 %v2151, %v2154
      %v2156 = vrot.slane %v2155, 4
      %v2158 = vshll.u32 %v1996, 16
      %v2160 = vrot.slane %v2158, 5
      %v2161 = vsel %vm223, %v2156, %v2160
      %v2162 = vshrl.u32 %v1996, 16
      %v2164 = vrot.slane %v2162, 4
      %v2165 = vor.u32 %v2164, %v2160
      %v2166 = vrot.slane %v2165, 4
      %v2168 = vshll.u32 %v1997, 16
      %v2170 = vrot.slane %v2168, 5
      %v2171 = vsel %vm223, %v2166, %v2170
      %v2173 = vshrl.u32 %v1998, 16
      %v2175 = vrot.slane %v2173, 4
      %v2176 = vshll.u32 %v1998, 16
      %v2178 = vrot.slane %v2176, 5
      %v2179 = vor.u32 %v2175, %v2178
      %v2180 = vrot.slane %v2179, 4
      %v2182 = vshll.u32 %v1999, 16
      %v2184 = vrot.slane %v2182, 5
      %v2185 = vsel %vm223, %v2180, %v2184
      %v2186 = vshrl.u32 %v1999, 16
      %v2188 = vrot.slane %v2186, 4
      %v2189 = vor.u32 %v2188, %v2184
      %v2190 = vrot.slane %v2189, 4
      %v2192 = vshll.u32 %v2000, 16
      %v2194 = vrot.slane %v2192, 5
      %v2195 = vsel %vm223, %v2190, %v2194
      %v2197 = vshrl.u32 %v2001, 16
      %v2199 = vrot.slane %v2197, 4
      %v2200 = vshll.u32 %v2001, 16
      %v2202 = vrot.slane %v2200, 5
      %v2203 = vor.u32 %v2199, %v2202
      %v2204 = vrot.slane %v2203, 4
      %v2206 = vshll.u32 %v2002, 16
      %v2208 = vrot.slane %v2206, 5
      %v2209 = vsel %vm223, %v2204, %v2208
      %v2210 = vshrl.u32 %v2002, 16
      %v2212 = vrot.slane %v2210, 4
      %v2213 = vor.u32 %v2212, %v2208
      %v2214 = vrot.slane %v2213, 4
      %v2216 = vshll.u32 %v2003, 16
      %v2218 = vrot.slane %v2216, 5
      %v2219 = vsel %vm223, %v2214, %v2218
      %v2221 = vshrl.u32 %v2004, 16
      %v2223 = vrot.slane %v2221, 4
      %v2224 = vshll.u32 %v2004, 16
      %v2226 = vrot.slane %v2224, 5
      %v2227 = vor.u32 %v2223, %v2226
      %v2228 = vrot.slane %v2227, 4
      %v2230 = vshll.u32 %v2005, 16
      %v2232 = vrot.slane %v2230, 5
      %v2233 = vsel %vm223, %v2228, %v2232
      %v2234 = vshrl.u32 %v2005, 16
      %v2236 = vrot.slane %v2234, 4
      %v2237 = vor.u32 %v2236, %v2232
      %v2238 = vrot.slane %v2237, 4
      %v2240 = vshll.u32 %v2006, 16
      %v2242 = vrot.slane %v2240, 5
      %v2243 = vsel %vm223, %v2238, %v2242
      %v2245 = vshrl.u32 %v2007, 16
      %v2247 = vrot.slane %v2245, 4
      %v2248 = vshll.u32 %v2007, 16
      %v2250 = vrot.slane %v2248, 5
      %v2251 = vor.u32 %v2247, %v2250
      %v2252 = vrot.slane %v2251, 4
      %v2254 = vshll.u32 %v2008, 16
      %v2256 = vrot.slane %v2254, 5
      %v2257 = vsel %vm223, %v2252, %v2256
      %v2258 = vshrl.u32 %v2008, 16
      %v2260 = vrot.slane %v2258, 4
      %v2261 = vor.u32 %v2260, %v2256
      %v2262 = vrot.slane %v2261, 4
      %v2264 = vshll.u32 %v2009, 16
      %v2266 = vrot.slane %v2264, 5
      %v2267 = vsel %vm223, %v2262, %v2266
      %v2269 = vshrl.u32 %v2010, 16
      %v2271 = vrot.slane %v2269, 4
      %v2272 = vshll.u32 %v2010, 16
      %v2274 = vrot.slane %v2272, 5
      %v2275 = vor.u32 %v2271, %v2274
      %v2276 = vrot.slane %v2275, 4
      %v2278 = vshll.u32 %v2011, 16
      %v2280 = vrot.slane %v2278, 5
      %v2281 = vsel %vm223, %v2276, %v2280
      %v2282 = vshrl.u32 %v2011, 16
      %v2284 = vrot.slane %v2282, 4
      %v2285 = vor.u32 %v2284, %v2280
      %v2286 = vrot.slane %v2285, 4
      %v2288 = vshll.u32 %v2012, 16
      %v2290 = vrot.slane %v2288, 5
      %v2291 = vsel %vm223, %v2286, %v2290
      %v2293 = vshrl.u32 %v2013, 16
      %v2295 = vrot.slane %v2293, 4
      %v2296 = vshll.u32 %v2013, 16
      %v2298 = vrot.slane %v2296, 5
      %v2299 = vor.u32 %v2295, %v2298
      %v2300 = vrot.slane %v2299, 4
      %v2302 = vshll.u32 %v2014, 16
      %v2304 = vrot.slane %v2302, 5
      %v2305 = vsel %vm223, %v2300, %v2304
      %v2306 = vshrl.u32 %v2014, 16
      %v2308 = vrot.slane %v2306, 4
      %v2309 = vor.u32 %v2308, %v2304
      %v2310 = vrot.slane %v2309, 4
      %v2312 = vshll.u32 %v2015, 16
      %v2314 = vrot.slane %v2312, 5
      %v2315 = vsel %vm223, %v2310, %v2314
      %v2317 = vshrl.u32 %v2016, 16
      %v2319 = vrot.slane %v2317, 4
      %v2320 = vshll.u32 %v2016, 16
      %v2322 = vrot.slane %v2320, 5
      %v2323 = vor.u32 %v2319, %v2322
      %v2324 = vrot.slane %v2323, 4
      %v2326 = vshll.u32 %v2017, 16
      %v2328 = vrot.slane %v2326, 5
      %v2329 = vsel %vm223, %v2324, %v2328
      %v2330 = vshrl.u32 %v2017, 16
      %v2332 = vrot.slane %v2330, 4
      %v2333 = vor.u32 %v2332, %v2328
      %v2334 = vrot.slane %v2333, 4
      %v2336 = vshll.u32 %v2018, 16
      %v2338 = vrot.slane %v2336, 5
      %v2339 = vsel %vm223, %v2334, %v2338
      %v2341 = vshrl.u32 %v2019, 16
      %v2343 = vrot.slane %v2341, 4
      %v2344 = vshll.u32 %v2019, 16
      %v2346 = vrot.slane %v2344, 5
      %v2347 = vor.u32 %v2343, %v2346
      %v2348 = vrot.slane %v2347, 4
      %v2350 = vshll.u32 %v2020, 16
      %v2352 = vrot.slane %v2350, 5
      %v2353 = vsel %vm223, %v2348, %v2352
      %v2354 = vshrl.u32 %v2020, 16
      %v2356 = vrot.slane %v2354, 4
      %v2357 = vor.u32 %v2356, %v2352
      %v2358 = vrot.slane %v2357, 4
      %v2360 = vshll.u32 %v2021, 16
      %v2362 = vrot.slane %v2360, 5
      %v2363 = vsel %vm223, %v2358, %v2362
      %v2365 = vshrl.u32 %v2022, 16
      %v2367 = vrot.slane %v2365, 4
      %v2368 = vshll.u32 %v2022, 16
      %v2370 = vrot.slane %v2368, 5
      %v2371 = vor.u32 %v2367, %v2370
      %v2372 = vrot.slane %v2371, 4
      %v2374 = vshll.u32 %v2023, 16
      %v2376 = vrot.slane %v2374, 5
      %v2377 = vsel %vm223, %v2372, %v2376
      %v2378 = vshrl.u32 %v2023, 16
      %v2380 = vrot.slane %v2378, 4
      %v2381 = vor.u32 %v2380, %v2376
      %v2382 = vrot.slane %v2381, 4
      %v2384 = vshll.u32 %v2024, 16
      %v2386 = vrot.slane %v2384, 5
      %v2387 = vsel %vm223, %v2382, %v2386
      %v2389 = vshrl.u32 %v2025, 16
      %v2391 = vrot.slane %v2389, 4
      %v2392 = vshll.u32 %v2025, 16
      %v2394 = vrot.slane %v2392, 5
      %v2395 = vor.u32 %v2391, %v2394
      %v2396 = vrot.slane %v2395, 4
      %v2398 = vshll.u32 %v2026, 16
      %v2400 = vrot.slane %v2398, 5
      %v2401 = vsel %vm223, %v2396, %v2400
      %v2402 = vshrl.u32 %v2026, 16
      %v2404 = vrot.slane %v2402, 4
      %v2405 = vor.u32 %v2404, %v2400
      %v2406 = vrot.slane %v2405, 4
      %v2408 = vshll.u32 %v2027, 16
      %v2410 = vrot.slane %v2408, 5
      %v2411 = vsel %vm223, %v2406, %v2410
      %s2412 = scalar_lea.vmem %s1, 16
      %v2413 = vld [vmem:[%s2412] sm:$0xf]
      %v2414 = vunpack.c.l.b16 %v2041
      %v2415 = vunpack.c.l.b16 %v2051
      %v2416 = vunpack.c.l.b16 %v2065
      %v2417 = vunpack.c.l.b16 %v2075
      %v2418 = vunpack.c.l.b16 %v2089
      %v2419 = vunpack.c.l.b16 %v2099
      %v2420 = vunpack.c.l.b16 %v2113
      %v2421 = vunpack.c.l.b16 %v2123
      %v2422 = vunpack.c.l.b16 %v2137
      %v2423 = vunpack.c.l.b16 %v2147
      %v2424 = vunpack.c.l.b16 %v2161
      %v2425 = vunpack.c.l.b16 %v2171
      %v2426 = vunpack.c.l.b16 %v2185
      %v2427 = vunpack.c.l.b16 %v2195
      %v2428 = vunpack.c.l.b16 %v2209
      %v2429 = vunpack.c.l.b16 %v2219
      %v2430 = vunpack.c.l.b16 %v2233
      %v2431 = vunpack.c.l.b16 %v2243
      %v2432 = vunpack.c.l.b16 %v2257
      %v2433 = vunpack.c.l.b16 %v2267
      %v2434 = vunpack.c.l.b16 %v2281
      %v2435 = vunpack.c.l.b16 %v2291
      %v2436 = vunpack.c.l.b16 %v2305
      %v2437 = vunpack.c.l.b16 %v2315
      %v2438 = vunpack.c.l.b16 %v2329
      %v2439 = vunpack.c.l.b16 %v2339
      %v2440 = vunpack.c.l.b16 %v2353
      %v2441 = vunpack.c.l.b16 %v2363
      %v2442 = vunpack.c.l.b16 %v2377
      %v2443 = vunpack.c.l.b16 %v2387
      %v2444 = vunpack.c.l.b16 %v2401
      %v2445 = vunpack.c.l.b16 %v2411
      %v2446 = vpack.c.b16 %v2415, %v2414
      %v2447 = vpack.c.b16 %v2417, %v2416
      %v2448 = vpack.c.b16 %v2419, %v2418
      %v2449 = vpack.c.b16 %v2421, %v2420
      %v2450 = vpack.c.b16 %v2423, %v2422
      %v2451 = vpack.c.b16 %v2425, %v2424
      %v2452 = vpack.c.b16 %v2427, %v2426
      %v2453 = vpack.c.b16 %v2429, %v2428
      %v2454 = vpack.c.b16 %v2431, %v2430
      %v2455 = vpack.c.b16 %v2433, %v2432
      %v2456 = vpack.c.b16 %v2435, %v2434
      %v2457 = vpack.c.b16 %v2437, %v2436
      %v2458 = vpack.c.b16 %v2439, %v2438
      %v2459 = vpack.c.b16 %v2441, %v2440
      %v2460 = vpack.c.b16 %v2443, %v2442
      %v2461 = vpack.c.b16 %v2445, %v2444
      %v2463 = vsel %vm658, %v2446, 0
      %v2466 = vsel %vm658, %v2447, 0
      %v2469 = vsel %vm658, %v2448, 0
      %v2472 = vsel %vm658, %v2449, 0
      %v2475 = vsel %vm658, %v2450, 0
      %v2478 = vsel %vm658, %v2451, 0
      %v2481 = vsel %vm658, %v2452, 0
      %v2484 = vsel %vm658, %v2453, 0
      %v2487 = vsel %vm658, %v2454, 0
      %v2490 = vsel %vm658, %v2455, 0
      %v2493 = vsel %vm658, %v2456, 0
      %v2496 = vsel %vm658, %v2457, 0
      %v2499 = vsel %vm658, %v2458, 0
      %v2502 = vsel %vm658, %v2459, 0
      %v2505 = vsel %vm658, %v2460, 0
      %v2508 = vsel %vm658, %v2461, 0
      %v2511 = vsel %vm707, %v2413, 0
      %2513 = vmatprep.subr.bf16.mxu0 0
      %2514 = vmatpush1.bf16.msra.mxu0 %v2511
      %2515 = vmatprep.subr.bf16.mxu0 0
      %2516 = vmatpush1.bf16.msra.mxu0 0
      %2517 = vmatprep.subr.bf16.mxu0 0
      %2518 = vmatpush1.bf16.msra.mxu0 0
      %2519 = vmatprep.subr.bf16.mxu0 0
      %2520 = vmatpush1.bf16.msra.mxu0 0
      %2521 = vmatprep.subr.bf16.mxu0 0
      %2522 = vmatpush1.bf16.msra.mxu0 0
      %2523 = vmatprep.subr.bf16.mxu0 0
      %2524 = vmatpush1.bf16.msra.mxu0 0
      %2525 = vmatprep.subr.bf16.mxu0 0
      %2526 = vmatpush1.bf16.msra.mxu0 0
      %2527 = vmatprep.subr.bf16.mxu0 0
      %2528 = vmatpush1.bf16.msra.mxu0 0
      %2529 = vmatprep.subr.bf16.mxu0 0
      %2530 = vmatpush1.bf16.msra.mxu0 0
      %2531 = vmatprep.subr.bf16.mxu0 0
      %2532 = vmatpush1.bf16.msra.mxu0 0
      %2533 = vmatprep.subr.bf16.mxu0 0
      %2534 = vmatpush1.bf16.msra.mxu0 0
      %2535 = vmatprep.subr.bf16.mxu0 0
      %2536 = vmatpush1.bf16.msra.mxu0 0
      %2537 = vmatprep.subr.bf16.mxu0 0
      %2538 = vmatpush1.bf16.msra.mxu0 0
      %2539 = vmatprep.subr.bf16.mxu0 0
      %2540 = vmatpush1.bf16.msra.mxu0 0
      %2541 = vmatprep.subr.bf16.mxu0 0
      %2542 = vmatpush1.bf16.msra.mxu0 0
      %2543 = vmatprep.subr.bf16.mxu0 0
      %2544 = vmatpush1.bf16.msra.mxu0 0
      %2545 = vmatprep.mubr.bf16.mxu0 0
      %2546 = vmatmul.mubr.bf16.gmra.mrb[0].mxu0 %v2463
      %v2547 = vpop.f32.mrb[0].mxu0
      %v2548 = vadd.f32 0.0, %v2547
      %v2549 = vpop.f32.mrb[0].mxu0
      %v2550 = vpop.f32.mrb[0].mxu0
      %v2551 = vadd.f32 0.0, %v2550
      %v2552 = vpop.f32.mrb[0].mxu0
      %2553 = vmatprep.mubr.bf16.mxu0 0
      %2554 = vmatmul.mubr.bf16.gmra.mrb[0].mxu0 %v2466
      %v2555 = vpop.f32.mrb[0].mxu0
      %v2556 = vadd.f32 0.0, %v2555
      %v2557 = vpop.f32.mrb[0].mxu0
      %v2558 = vpop.f32.mrb[0].mxu0
      %v2559 = vadd.f32 0.0, %v2558
      %v2560 = vpop.f32.mrb[0].mxu0
      %2561 = vmatprep.mubr.bf16.mxu0 0
      %2562 = vmatmul.mubr.bf16.gmra.mrb[0].mxu0 %v2469
      %v2563 = vpop.f32.mrb[0].mxu0
      %v2564 = vadd.f32 0.0, %v2563
      %v2565 = vpop.f32.mrb[0].mxu0
      %v2566 = vpop.f32.mrb[0].mxu0
      %v2567 = vadd.f32 0.0, %v2566
      %v2568 = vpop.f32.mrb[0].mxu0
      %2569 = vmatprep.mubr.bf16.mxu0 0
      %2570 = vmatmul.mubr.bf16.gmra.mrb[0].mxu0 %v2472
      %v2571 = vpop.f32.mrb[0].mxu0
      %v2572 = vadd.f32 0.0, %v2571
      %v2573 = vpop.f32.mrb[0].mxu0
      %v2574 = vpop.f32.mrb[0].mxu0
      %v2575 = vadd.f32 0.0, %v2574
      %v2576 = vpop.f32.mrb[0].mxu0
      %2577 = vmatprep.mubr.bf16.mxu0 0
      %2578 = vmatmul.mubr.bf16.gmra.mrb[0].mxu0 %v2475
      %v2579 = vpop.f32.mrb[0].mxu0
      %v2580 = vadd.f32 0.0, %v2579
      %v2581 = vpop.f32.mrb[0].mxu0
      %v2582 = vpop.f32.mrb[0].mxu0
      %v2583 = vadd.f32 0.0, %v2582
      %v2584 = vpop.f32.mrb[0].mxu0
      %2585 = vmatprep.mubr.bf16.mxu0 0
      %2586 = vmatmul.mubr.bf16.gmra.mrb[0].mxu0 %v2478
      %v2587 = vpop.f32.mrb[0].mxu0
      %v2588 = vadd.f32 0.0, %v2587
      %v2589 = vpop.f32.mrb[0].mxu0
      %v2590 = vpop.f32.mrb[0].mxu0
      %v2591 = vadd.f32 0.0, %v2590
      %v2592 = vpop.f32.mrb[0].mxu0
      %2593 = vmatprep.mubr.bf16.mxu0 0
      %2594 = vmatmul.mubr.bf16.gmra.mrb[0].mxu0 %v2481
      %v2595 = vpop.f32.mrb[0].mxu0
      %v2596 = vadd.f32 0.0, %v2595
      %v2597 = vpop.f32.mrb[0].mxu0
      %v2598 = vpop.f32.mrb[0].mxu0
      %v2599 = vadd.f32 0.0, %v2598
      %v2600 = vpop.f32.mrb[0].mxu0
      %2601 = vmatprep.mubr.bf16.mxu0 0
      %2602 = vmatmul.mubr.bf16.gmra.mrb[0].mxu0 %v2484
      %v2603 = vpop.f32.mrb[0].mxu0
      %v2604 = vadd.f32 0.0, %v2603
      %v2605 = vpop.f32.mrb[0].mxu0
      %v2606 = vpop.f32.mrb[0].mxu0
      %v2607 = vadd.f32 0.0, %v2606
      %v2608 = vpop.f32.mrb[0].mxu0
      %2609 = vmatprep.mubr.bf16.mxu0 0
      %2610 = vmatmul.mubr.bf16.gmra.mrb[0].mxu0 %v2487
      %v2611 = vpop.f32.mrb[0].mxu0
      %v2612 = vadd.f32 0.0, %v2611
      %v2613 = vpop.f32.mrb[0].mxu0
      %v2614 = vpop.f32.mrb[0].mxu0
      %v2615 = vadd.f32 0.0, %v2614
      %v2616 = vpop.f32.mrb[0].mxu0
      %2617 = vmatprep.mubr.bf16.mxu0 0
      %2618 = vmatmul.mubr.bf16.gmra.mrb[0].mxu0 %v2490
      %v2619 = vpop.f32.mrb[0].mxu0
      %v2620 = vadd.f32 0.0, %v2619
      %v2621 = vpop.f32.mrb[0].mxu0
      %v2622 = vpop.f32.mrb[0].mxu0
      %v2623 = vadd.f32 0.0, %v2622
      %v2624 = vpop.f32.mrb[0].mxu0
      %2625 = vmatprep.mubr.bf16.mxu0 0
      %2626 = vmatmul.mubr.bf16.gmra.mrb[0].mxu0 %v2493
      %v2627 = vpop.f32.mrb[0].mxu0
      %v2628 = vadd.f32 0.0, %v2627
      %v2629 = vpop.f32.mrb[0].mxu0
      %v2630 = vpop.f32.mrb[0].mxu0
      %v2631 = vadd.f32 0.0, %v2630
      %v2632 = vpop.f32.mrb[0].mxu0
      %2633 = vmatprep.mubr.bf16.mxu0 0
      %2634 = vmatmul.mubr.bf16.gmra.mrb[0].mxu0 %v2496
      %v2635 = vpop.f32.mrb[0].mxu0
      %v2636 = vadd.f32 0.0, %v2635
      %v2637 = vpop.f32.mrb[0].mxu0
      %v2638 = vpop.f32.mrb[0].mxu0
      %v2639 = vadd.f32 0.0, %v2638
      %v2640 = vpop.f32.mrb[0].mxu0
      %2641 = vmatprep.mubr.bf16.mxu0 0
      %2642 = vmatmul.mubr.bf16.gmra.mrb[0].mxu0 %v2499
      %v2643 = vpop.f32.mrb[0].mxu0
      %v2644 = vadd.f32 0.0, %v2643
      %v2645 = vpop.f32.mrb[0].mxu0
      %v2646 = vpop.f32.mrb[0].mxu0
      %v2647 = vadd.f32 0.0, %v2646
      %v2648 = vpop.f32.mrb[0].mxu0
      %2649 = vmatprep.mubr.bf16.mxu0 0
      %2650 = vmatmul.mubr.bf16.gmra.mrb[0].mxu0 %v2502
      %v2651 = vpop.f32.mrb[0].mxu0
      %v2652 = vadd.f32 0.0, %v2651
      %v2653 = vpop.f32.mrb[0].mxu0
      %v2654 = vpop.f32.mrb[0].mxu0
      %v2655 = vadd.f32 0.0, %v2654
      %v2656 = vpop.f32.mrb[0].mxu0
      %2657 = vmatprep.mubr.bf16.mxu0 0
      %2658 = vmatmul.mubr.bf16.gmra.mrb[0].mxu0 %v2505
      %v2659 = vpop.f32.mrb[0].mxu0
      %v2660 = vadd.f32 0.0, %v2659
      %v2661 = vpop.f32.mrb[0].mxu0
      %v2662 = vpop.f32.mrb[0].mxu0
      %v2663 = vadd.f32 0.0, %v2662
      %v2664 = vpop.f32.mrb[0].mxu0
      %2665 = vmatprep.mubr.bf16.mxu0 0
      %2666 = vmatmul.mubr.bf16.gmra.mrb[0].mxu0 %v2508
      %v2667 = vpop.f32.mrb[0].mxu0
      %v2668 = vadd.f32 0.0, %v2667
      %v2669 = vpop.f32.mrb[0].mxu0
      %v2670 = vpop.f32.mrb[0].mxu0
      %v2671 = vadd.f32 0.0, %v2670
      %v2672 = vpop.f32.mrb[0].mxu0
      %2673 = vdwg.mxu0
      %v2674 = vadd.f32 %v1948, %v2548
      %v2675 = vadd.f32 %v1949, %v2551
      %v2676 = vadd.f32 %v1950, %v2556
      %v2677 = vadd.f32 %v1951, %v2559
      %v2678 = vadd.f32 %v1952, %v2564
      %v2679 = vadd.f32 %v1953, %v2567
      %v2680 = vadd.f32 %v1954, %v2572
      %v2681 = vadd.f32 %v1955, %v2575
      %v2682 = vadd.f32 %v1956, %v2580
      %v2683 = vadd.f32 %v1957, %v2583
      %v2684 = vadd.f32 %v1958, %v2588
      %v2685 = vadd.f32 %v1959, %v2591
      %v2686 = vadd.f32 %v1960, %v2596
      %v2687 = vadd.f32 %v1961, %v2599
      %v2688 = vadd.f32 %v1962, %v2604
      %v2689 = vadd.f32 %v1963, %v2607
      %v2690 = vadd.f32 %v1964, %v2612
      %v2691 = vadd.f32 %v1965, %v2615
      %v2692 = vadd.f32 %v1966, %v2620
      %v2693 = vadd.f32 %v1967, %v2623
      %v2694 = vadd.f32 %v1968, %v2628
      %v2695 = vadd.f32 %v1969, %v2631
      %v2696 = vadd.f32 %v1970, %v2636
      %v2697 = vadd.f32 %v1971, %v2639
      %v2698 = vadd.f32 %v1972, %v2644
      %v2699 = vadd.f32 %v1973, %v2647
      %v2700 = vadd.f32 %v1974, %v2652
      %v2701 = vadd.f32 %v1975, %v2655
      %v2702 = vadd.f32 %v1976, %v2660
      %v2703 = vadd.f32 %v1977, %v2663
      %v2704 = vadd.f32 %v1978, %v2668
      %v2705 = vadd.f32 %v1979, %v2671
      %v2706 = vld [vmem:[%s1621] sm:$0xe]
      %v2707 = vld [vmem:[%s1621 + $0xc] sm:$0xe]
      %v2708 = vld [vmem:[%s1621 + $0x18] sm:$0xe]
      %v2709 = vld [vmem:[%s1621 + $0x24] sm:$0xe]
      %v2710 = vld [vmem:[%s1621 + $0x30] sm:$0xe]
      %v2711 = vld [vmem:[%s1621 + $0x3c] sm:$0xe]
      %v2712 = vld [vmem:[%s1621 + $0x48] sm:$0xe]
      %v2713 = vld [vmem:[%s1621 + $0x54] sm:$0xe]
      %v2714 = vld [vmem:[%s1621 + $0x60] sm:$0xe]
      %v2715 = vld [vmem:[%s1621 + $0x6c] sm:$0xe]
      %v2716 = vld [vmem:[%s1621 + $0x78] sm:$0xe]
      %v2717 = vld [vmem:[%s1621 + $0x84] sm:$0xe]
      %v2718 = vld [vmem:[%s1621 + $0x90] sm:$0xe]
      %v2719 = vld [vmem:[%s1621 + $0x9c] sm:$0xe]
      %v2720 = vld [vmem:[%s1621 + $0xa8] sm:$0xe]
      %v2721 = vld [vmem:[%s1621 + $0xb4] sm:$0xe]
      %v2770 = vrot.slane %v2706, 5
      %v2771 = vrot.slane %v2770, 4
      %v2772 = vrot.slane %v1981, 5
      %v2773 = vsel %vm1214, %v2771, %v2772
      %v2774 = vrot.slane %v2772, 4
      %v2775 = vrot.slane %v1982, 5
      %v2776 = vsel %vm1214, %v2774, %v2775
      %v2777 = vrot.slane %v2707, 5
      %v2778 = vrot.slane %v2777, 4
      %v2779 = vrot.slane %v1984, 5
      %v2780 = vsel %vm1214, %v2778, %v2779
      %v2781 = vrot.slane %v2779, 4
      %v2782 = vrot.slane %v1985, 5
      %v2783 = vsel %vm1214, %v2781, %v2782
      %v2784 = vrot.slane %v2708, 5
      %v2785 = vrot.slane %v2784, 4
      %v2786 = vrot.slane %v1987, 5
      %v2787 = vsel %vm1214, %v2785, %v2786
      %v2788 = vrot.slane %v2786, 4
      %v2789 = vrot.slane %v1988, 5
      %v2790 = vsel %vm1214, %v2788, %v2789
      %v2791 = vrot.slane %v2709, 5
      %v2792 = vrot.slane %v2791, 4
      %v2793 = vrot.slane %v1990, 5
      %v2794 = vsel %vm1214, %v2792, %v2793
      %v2795 = vrot.slane %v2793, 4
      %v2796 = vrot.slane %v1991, 5
      %v2797 = vsel %vm1214, %v2795, %v2796
      %v2798 = vrot.slane %v2710, 5
      %v2799 = vrot.slane %v2798, 4
      %v2800 = vrot.slane %v1993, 5
      %v2801 = vsel %vm1214, %v2799, %v2800
      %v2802 = vrot.slane %v2800, 4
      %v2803 = vrot.slane %v1994, 5
      %v2804 = vsel %vm1214, %v2802, %v2803
      %v2805 = vrot.slane %v2711, 5
      %v2806 = vrot.slane %v2805, 4
      %v2807 = vrot.slane %v1996, 5
      %v2808 = vsel %vm1214, %v2806, %v2807
      %v2809 = vrot.slane %v2807, 4
      %v2810 = vrot.slane %v1997, 5
      %v2811 = vsel %vm1214, %v2809, %v2810
      %v2812 = vrot.slane %v2712, 5
      %v2813 = vrot.slane %v2812, 4
      %v2814 = vrot.slane %v1999, 5
      %v2815 = vsel %vm1214, %v2813, %v2814
      %v2816 = vrot.slane %v2814, 4
      %v2817 = vrot.slane %v2000, 5
      %v2818 = vsel %vm1214, %v2816, %v2817
      %v2819 = vrot.slane %v2713, 5
      %v2820 = vrot.slane %v2819, 4
      %v2821 = vrot.slane %v2002, 5
      %v2822 = vsel %vm1214, %v2820, %v2821
      %v2823 = vrot.slane %v2821, 4
      %v2824 = vrot.slane %v2003, 5
      %v2825 = vsel %vm1214, %v2823, %v2824
      %v2826 = vrot.slane %v2714, 5
      %v2827 = vrot.slane %v2826, 4
      %v2828 = vrot.slane %v2005, 5
      %v2829 = vsel %vm1214, %v2827, %v2828
      %v2830 = vrot.slane %v2828, 4
      %v2831 = vrot.slane %v2006, 5
      %v2832 = vsel %vm1214, %v2830, %v2831
      %v2833 = vrot.slane %v2715, 5
      %v2834 = vrot.slane %v2833, 4
      %v2835 = vrot.slane %v2008, 5
      %v2836 = vsel %vm1214, %v2834, %v2835
      %v2837 = vrot.slane %v2835, 4
      %v2838 = vrot.slane %v2009, 5
      %v2839 = vsel %vm1214, %v2837, %v2838
      %v2840 = vrot.slane %v2716, 5
      %v2841 = vrot.slane %v2840, 4
      %v2842 = vrot.slane %v2011, 5
      %v2843 = vsel %vm1214, %v2841, %v2842
      %v2844 = vrot.slane %v2842, 4
      %v2845 = vrot.slane %v2012, 5
      %v2846 = vsel %vm1214, %v2844, %v2845
      %v2847 = vrot.slane %v2717, 5
      %v2848 = vrot.slane %v2847, 4
      %v2849 = vrot.slane %v2014, 5
      %v2850 = vsel %vm1214, %v2848, %v2849
      %v2851 = vrot.slane %v2849, 4
      %v2852 = vrot.slane %v2015, 5
      %v2853 = vsel %vm1214, %v2851, %v2852
      %v2854 = vrot.slane %v2718, 5
      %v2855 = vrot.slane %v2854, 4
      %v2856 = vrot.slane %v2017, 5
      %v2857 = vsel %vm1214, %v2855, %v2856
      %v2858 = vrot.slane %v2856, 4
      %v2859 = vrot.slane %v2018, 5
      %v2860 = vsel %vm1214, %v2858, %v2859
      %v2861 = vrot.slane %v2719, 5
      %v2862 = vrot.slane %v2861, 4
      %v2863 = vrot.slane %v2020, 5
      %v2864 = vsel %vm1214, %v2862, %v2863
      %v2865 = vrot.slane %v2863, 4
      %v2866 = vrot.slane %v2021, 5
      %v2867 = vsel %vm1214, %v2865, %v2866
      %v2868 = vrot.slane %v2720, 5
      %v2869 = vrot.slane %v2868, 4
      %v2870 = vrot.slane %v2023, 5
      %v2871 = vsel %vm1214, %v2869, %v2870
      %v2872 = vrot.slane %v2870, 4
      %v2873 = vrot.slane %v2024, 5
      %v2874 = vsel %vm1214, %v2872, %v2873
      %v2875 = vrot.slane %v2721, 5
      %v2876 = vrot.slane %v2875, 4
      %v2877 = vrot.slane %v2026, 5
      %v2878 = vsel %vm1214, %v2876, %v2877
      %v2879 = vrot.slane %v2877, 4
      %v2880 = vrot.slane %v2027, 5
      %v2881 = vsel %vm1214, %v2879, %v2880
      %s2882 = scalar_lea.vmem %s1, 20
      %v2883 = vld [vmem:[%s2882] sm:$0xf]
      %v2884 = vunpack.c.l.b16 %v2773
      %v2885 = vunpack.c.l.b16 %v2776
      %v2886 = vunpack.c.l.b16 %v2780
      %v2887 = vunpack.c.l.b16 %v2783
      %v2888 = vunpack.c.l.b16 %v2787
      %v2889 = vunpack.c.l.b16 %v2790
      %v2890 = vunpack.c.l.b16 %v2794
      %v2891 = vunpack.c.l.b16 %v2797
      %v2892 = vunpack.c.l.b16 %v2801
      %v2893 = vunpack.c.l.b16 %v2804
      %v2894 = vunpack.c.l.b16 %v2808
      %v2895 = vunpack.c.l.b16 %v2811
      %v2896 = vunpack.c.l.b16 %v2815
      %v2897 = vunpack.c.l.b16 %v2818
      %v2898 = vunpack.c.l.b16 %v2822
      %v2899 = vunpack.c.l.b16 %v2825
      %v2900 = vunpack.c.l.b16 %v2829
      %v2901 = vunpack.c.l.b16 %v2832
      %v2902 = vunpack.c.l.b16 %v2836
      %v2903 = vunpack.c.l.b16 %v2839
      %v2904 = vunpack.c.l.b16 %v2843
      %v2905 = vunpack.c.l.b16 %v2846
      %v2906 = vunpack.c.l.b16 %v2850
      %v2907 = vunpack.c.l.b16 %v2853
      %v2908 = vunpack.c.l.b16 %v2857
      %v2909 = vunpack.c.l.b16 %v2860
      %v2910 = vunpack.c.l.b16 %v2864
      %v2911 = vunpack.c.l.b16 %v2867
      %v2912 = vunpack.c.l.b16 %v2871
      %v2913 = vunpack.c.l.b16 %v2874
      %v2914 = vunpack.c.l.b16 %v2878
      %v2915 = vunpack.c.l.b16 %v2881
      %v2916 = vpack.c.b16 %v2885, %v2884
      %v2917 = vpack.c.b16 %v2887, %v2886
      %v2918 = vpack.c.b16 %v2889, %v2888
      %v2919 = vpack.c.b16 %v2891, %v2890
      %v2920 = vpack.c.b16 %v2893, %v2892
      %v2921 = vpack.c.b16 %v2895, %v2894
      %v2922 = vpack.c.b16 %v2897, %v2896
      %v2923 = vpack.c.b16 %v2899, %v2898
      %v2924 = vpack.c.b16 %v2901, %v2900
      %v2925 = vpack.c.b16 %v2903, %v2902
      %v2926 = vpack.c.b16 %v2905, %v2904
      %v2927 = vpack.c.b16 %v2907, %v2906
      %v2928 = vpack.c.b16 %v2909, %v2908
      %v2929 = vpack.c.b16 %v2911, %v2910
      %v2930 = vpack.c.b16 %v2913, %v2912
      %v2931 = vpack.c.b16 %v2915, %v2914
      %v2933 = vsel %vm658, %v2916, 0
      %v2936 = vsel %vm658, %v2917, 0
      %v2939 = vsel %vm658, %v2918, 0
      %v2942 = vsel %vm658, %v2919, 0
      %v2945 = vsel %vm658, %v2920, 0
      %v2948 = vsel %vm658, %v2921, 0
      %v2951 = vsel %vm658, %v2922, 0
      %v2954 = vsel %vm658, %v2923, 0
      %v2957 = vsel %vm658, %v2924, 0
      %v2960 = vsel %vm658, %v2925, 0
      %v2963 = vsel %vm658, %v2926, 0
      %v2966 = vsel %vm658, %v2927, 0
      %v2969 = vsel %vm658, %v2928, 0
      %v2972 = vsel %vm658, %v2929, 0
      %v2975 = vsel %vm658, %v2930, 0
      %v2978 = vsel %vm658, %v2931, 0
      %v2981 = vsel %vm707, %v2883, 0
      %2983 = vmatprep.subr.bf16.mxu0 0
      %2984 = vmatpush1.bf16.msra.mxu0 %v2981
      %2985 = vmatprep.subr.bf16.mxu0 0
      %2986 = vmatpush1.bf16.msra.mxu0 0
      %2987 = vmatprep.subr.bf16.mxu0 0
      %2988 = vmatpush1.bf16.msra.mxu0 0
      %2989 = vmatprep.subr.bf16.mxu0 0
      %2990 = vmatpush1.bf16.msra.mxu0 0
      %2991 = vmatprep.subr.bf16.mxu0 0
      %2992 = vmatpush1.bf16.msra.mxu0 0
      %2993 = vmatprep.subr.bf16.mxu0 0
      %2994 = vmatpush1.bf16.msra.mxu0 0
      %2995 = vmatprep.subr.bf16.mxu0 0
      %2996 = vmatpush1.bf16.msra.mxu0 0
      %2997 = vmatprep.subr.bf16.mxu0 0
      %2998 = vmatpush1.bf16.msra.mxu0 0
      %2999 = vmatprep.subr.bf16.mxu0 0
      %3000 = vmatpush1.bf16.msra.mxu0 0
      %3001 = vmatprep.subr.bf16.mxu0 0
      %3002 = vmatpush1.bf16.msra.mxu0 0
      %3003 = vmatprep.subr.bf16.mxu0 0
      %3004 = vmatpush1.bf16.msra.mxu0 0
      %3005 = vmatprep.subr.bf16.mxu0 0
      %3006 = vmatpush1.bf16.msra.mxu0 0
      %3007 = vmatprep.subr.bf16.mxu0 0
      %3008 = vmatpush1.bf16.msra.mxu0 0
      %3009 = vmatprep.subr.bf16.mxu0 0
      %3010 = vmatpush1.bf16.msra.mxu0 0
      %3011 = vmatprep.subr.bf16.mxu0 0
      %3012 = vmatpush1.bf16.msra.mxu0 0
      %3013 = vmatprep.subr.bf16.mxu0 0
      %3014 = vmatpush1.bf16.msra.mxu0 0
      %3015 = vmatprep.mubr.bf16.mxu0 0
      %3016 = vmatmul.mubr.bf16.gmra.mrb[0].mxu0 %v2933
      %v3017 = vpop.f32.mrb[0].mxu0
      %v3018 = vadd.f32 0.0, %v3017
      %v3019 = vpop.f32.mrb[0].mxu0
      %v3020 = vpop.f32.mrb[0].mxu0
      %v3021 = vadd.f32 0.0, %v3020
      %v3022 = vpop.f32.mrb[0].mxu0
      %3023 = vmatprep.mubr.bf16.mxu0 0
      %3024 = vmatmul.mubr.bf16.gmra.mrb[0].mxu0 %v2936
      %v3025 = vpop.f32.mrb[0].mxu0
      %v3026 = vadd.f32 0.0, %v3025
      %v3027 = vpop.f32.mrb[0].mxu0
      %v3028 = vpop.f32.mrb[0].mxu0
      %v3029 = vadd.f32 0.0, %v3028
      %v3030 = vpop.f32.mrb[0].mxu0
      %3031 = vmatprep.mubr.bf16.mxu0 0
      %3032 = vmatmul.mubr.bf16.gmra.mrb[0].mxu0 %v2939
      %v3033 = vpop.f32.mrb[0].mxu0
      %v3034 = vadd.f32 0.0, %v3033
      %v3035 = vpop.f32.mrb[0].mxu0
      %v3036 = vpop.f32.mrb[0].mxu0
      %v3037 = vadd.f32 0.0, %v3036
      %v3038 = vpop.f32.mrb[0].mxu0
      %3039 = vmatprep.mubr.bf16.mxu0 0
      %3040 = vmatmul.mubr.bf16.gmra.mrb[0].mxu0 %v2942
      %v3041 = vpop.f32.mrb[0].mxu0
      %v3042 = vadd.f32 0.0, %v3041
      %v3043 = vpop.f32.mrb[0].mxu0
      %v3044 = vpop.f32.mrb[0].mxu0
      %v3045 = vadd.f32 0.0, %v3044
      %v3046 = vpop.f32.mrb[0].mxu0
      %3047 = vmatprep.mubr.bf16.mxu0 0
      %3048 = vmatmul.mubr.bf16.gmra.mrb[0].mxu0 %v2945
      %v3049 = vpop.f32.mrb[0].mxu0
      %v3050 = vadd.f32 0.0, %v3049
      %v3051 = vpop.f32.mrb[0].mxu0
      %v3052 = vpop.f32.mrb[0].mxu0
      %v3053 = vadd.f32 0.0, %v3052
      %v3054 = vpop.f32.mrb[0].mxu0
      %3055 = vmatprep.mubr.bf16.mxu0 0
      %3056 = vmatmul.mubr.bf16.gmra.mrb[0].mxu0 %v2948
      %v3057 = vpop.f32.mrb[0].mxu0
      %v3058 = vadd.f32 0.0, %v3057
      %v3059 = vpop.f32.mrb[0].mxu0
      %v3060 = vpop.f32.mrb[0].mxu0
      %v3061 = vadd.f32 0.0, %v3060
      %v3062 = vpop.f32.mrb[0].mxu0
      %3063 = vmatprep.mubr.bf16.mxu0 0
      %3064 = vmatmul.mubr.bf16.gmra.mrb[0].mxu0 %v2951
      %v3065 = vpop.f32.mrb[0].mxu0
      %v3066 = vadd.f32 0.0, %v3065
      %v3067 = vpop.f32.mrb[0].mxu0
      %v3068 = vpop.f32.mrb[0].mxu0
      %v3069 = vadd.f32 0.0, %v3068
      %v3070 = vpop.f32.mrb[0].mxu0
      %3071 = vmatprep.mubr.bf16.mxu0 0
      %3072 = vmatmul.mubr.bf16.gmra.mrb[0].mxu0 %v2954
      %v3073 = vpop.f32.mrb[0].mxu0
      %v3074 = vadd.f32 0.0, %v3073
      %v3075 = vpop.f32.mrb[0].mxu0
      %v3076 = vpop.f32.mrb[0].mxu0
      %v3077 = vadd.f32 0.0, %v3076
      %v3078 = vpop.f32.mrb[0].mxu0
      %3079 = vmatprep.mubr.bf16.mxu0 0
      %3080 = vmatmul.mubr.bf16.gmra.mrb[0].mxu0 %v2957
      %v3081 = vpop.f32.mrb[0].mxu0
      %v3082 = vadd.f32 0.0, %v3081
      %v3083 = vpop.f32.mrb[0].mxu0
      %v3084 = vpop.f32.mrb[0].mxu0
      %v3085 = vadd.f32 0.0, %v3084
      %v3086 = vpop.f32.mrb[0].mxu0
      %3087 = vmatprep.mubr.bf16.mxu0 0
      %3088 = vmatmul.mubr.bf16.gmra.mrb[0].mxu0 %v2960
      %v3089 = vpop.f32.mrb[0].mxu0
      %v3090 = vadd.f32 0.0, %v3089
      %v3091 = vpop.f32.mrb[0].mxu0
      %v3092 = vpop.f32.mrb[0].mxu0
      %v3093 = vadd.f32 0.0, %v3092
      %v3094 = vpop.f32.mrb[0].mxu0
      %3095 = vmatprep.mubr.bf16.mxu0 0
      %3096 = vmatmul.mubr.bf16.gmra.mrb[0].mxu0 %v2963
      %v3097 = vpop.f32.mrb[0].mxu0
      %v3098 = vadd.f32 0.0, %v3097
      %v3099 = vpop.f32.mrb[0].mxu0
      %v3100 = vpop.f32.mrb[0].mxu0
      %v3101 = vadd.f32 0.0, %v3100
      %v3102 = vpop.f32.mrb[0].mxu0
      %3103 = vmatprep.mubr.bf16.mxu0 0
      %3104 = vmatmul.mubr.bf16.gmra.mrb[0].mxu0 %v2966
      %v3105 = vpop.f32.mrb[0].mxu0
      %v3106 = vadd.f32 0.0, %v3105
      %v3107 = vpop.f32.mrb[0].mxu0
      %v3108 = vpop.f32.mrb[0].mxu0
      %v3109 = vadd.f32 0.0, %v3108
      %v3110 = vpop.f32.mrb[0].mxu0
      %3111 = vmatprep.mubr.bf16.mxu0 0
      %3112 = vmatmul.mubr.bf16.gmra.mrb[0].mxu0 %v2969
      %v3113 = vpop.f32.mrb[0].mxu0
      %v3114 = vadd.f32 0.0, %v3113
      %v3115 = vpop.f32.mrb[0].mxu0
      %v3116 = vpop.f32.mrb[0].mxu0
      %v3117 = vadd.f32 0.0, %v3116
      %v3118 = vpop.f32.mrb[0].mxu0
      %3119 = vmatprep.mubr.bf16.mxu0 0
      %3120 = vmatmul.mubr.bf16.gmra.mrb[0].mxu0 %v2972
      %v3121 = vpop.f32.mrb[0].mxu0
      %v3122 = vadd.f32 0.0, %v3121
      %v3123 = vpop.f32.mrb[0].mxu0
      %v3124 = vpop.f32.mrb[0].mxu0
      %v3125 = vadd.f32 0.0, %v3124
      %v3126 = vpop.f32.mrb[0].mxu0
      %3127 = vmatprep.mubr.bf16.mxu0 0
      %3128 = vmatmul.mubr.bf16.gmra.mrb[0].mxu0 %v2975
      %v3129 = vpop.f32.mrb[0].mxu0
      %v3130 = vadd.f32 0.0, %v3129
      %v3131 = vpop.f32.mrb[0].mxu0
      %v3132 = vpop.f32.mrb[0].mxu0
      %v3133 = vadd.f32 0.0, %v3132
      %v3134 = vpop.f32.mrb[0].mxu0
      %3135 = vmatprep.mubr.bf16.mxu0 0
      %3136 = vmatmul.mubr.bf16.gmra.mrb[0].mxu0 %v2978
      %v3137 = vpop.f32.mrb[0].mxu0
      %v3138 = vadd.f32 0.0, %v3137
      %v3139 = vpop.f32.mrb[0].mxu0
      %v3140 = vpop.f32.mrb[0].mxu0
      %v3141 = vadd.f32 0.0, %v3140
      %v3142 = vpop.f32.mrb[0].mxu0
      %3143 = vdwg.mxu0
      %v3144 = vadd.f32 %v2674, %v3018
      %v3145 = vadd.f32 %v2675, %v3021
      %v3146 = vadd.f32 %v2676, %v3026
      %v3147 = vadd.f32 %v2677, %v3029
      %v3148 = vadd.f32 %v2678, %v3034
      %v3149 = vadd.f32 %v2679, %v3037
      %v3150 = vadd.f32 %v2680, %v3042
      %v3151 = vadd.f32 %v2681, %v3045
      %v3152 = vadd.f32 %v2682, %v3050
      %v3153 = vadd.f32 %v2683, %v3053
      %v3154 = vadd.f32 %v2684, %v3058
      %v3155 = vadd.f32 %v2685, %v3061
      %v3156 = vadd.f32 %v2686, %v3066
      %v3157 = vadd.f32 %v2687, %v3069
      %v3158 = vadd.f32 %v2688, %v3074
      %v3159 = vadd.f32 %v2689, %v3077
      %v3160 = vadd.f32 %v2690, %v3082
      %v3161 = vadd.f32 %v2691, %v3085
      %v3162 = vadd.f32 %v2692, %v3090
      %v3163 = vadd.f32 %v2693, %v3093
      %v3164 = vadd.f32 %v2694, %v3098
      %v3165 = vadd.f32 %v2695, %v3101
      %v3166 = vadd.f32 %v2696, %v3106
      %v3167 = vadd.f32 %v2697, %v3109
      %v3168 = vadd.f32 %v2698, %v3114
      %v3169 = vadd.f32 %v2699, %v3117
      %v3170 = vadd.f32 %v2700, %v3122
      %v3171 = vadd.f32 %v2701, %v3125
      %v3172 = vadd.f32 %v2702, %v3130
      %v3173 = vadd.f32 %v2703, %v3133
      %v3174 = vadd.f32 %v2704, %v3138
      %v3175 = vadd.f32 %v2705, %v3141
      %s3176 = scalar_lea.vmem %s165, 24
      %v3177 = vld [vmem:[%s3176] sm:$0xf]
      %v3178 = vld [vmem:[%s3176 + $0x4] sm:$0xf]
      %v3179 = vld [vmem:[%s3176 + $0xc] sm:$0xf]
      %v3180 = vld [vmem:[%s3176 + $0x10] sm:$0xf]
      %v3181 = vld [vmem:[%s3176 + $0x18] sm:$0xf]
      %v3182 = vld [vmem:[%s3176 + $0x1c] sm:$0xf]
      %v3183 = vld [vmem:[%s3176 + $0x24] sm:$0xf]
      %v3184 = vld [vmem:[%s3176 + $0x28] sm:$0xf]
      %v3185 = vld [vmem:[%s3176 + $0x30] sm:$0xf]
      %v3186 = vld [vmem:[%s3176 + $0x34] sm:$0xf]
      %v3187 = vld [vmem:[%s3176 + $0x3c] sm:$0xf]
      %v3188 = vld [vmem:[%s3176 + $0x40] sm:$0xf]
      %v3189 = vld [vmem:[%s3176 + $0x48] sm:$0xf]
      %v3190 = vld [vmem:[%s3176 + $0x4c] sm:$0xf]
      %v3191 = vld [vmem:[%s3176 + $0x54] sm:$0xf]
      %v3192 = vld [vmem:[%s3176 + $0x58] sm:$0xf]
      %v3193 = vld [vmem:[%s3176 + $0x60] sm:$0xf]
      %v3194 = vld [vmem:[%s3176 + $0x64] sm:$0xf]
      %v3195 = vld [vmem:[%s3176 + $0x6c] sm:$0xf]
      %v3196 = vld [vmem:[%s3176 + $0x70] sm:$0xf]
      %v3197 = vld [vmem:[%s3176 + $0x78] sm:$0xf]
      %v3198 = vld [vmem:[%s3176 + $0x7c] sm:$0xf]
      %v3199 = vld [vmem:[%s3176 + $0x84] sm:$0xf]
      %v3200 = vld [vmem:[%s3176 + $0x88] sm:$0xf]
      %v3201 = vld [vmem:[%s3176 + $0x90] sm:$0xf]
      %v3202 = vld [vmem:[%s3176 + $0x94] sm:$0xf]
      %v3203 = vld [vmem:[%s3176 + $0x9c] sm:$0xf]
      %v3204 = vld [vmem:[%s3176 + $0xa0] sm:$0xf]
      %v3205 = vld [vmem:[%s3176 + $0xa8] sm:$0xf]
      %v3206 = vld [vmem:[%s3176 + $0xac] sm:$0xf]
      %v3207 = vld [vmem:[%s3176 + $0xb4] sm:$0xf]
      %v3208 = vld [vmem:[%s3176 + $0xb8] sm:$0xf]
      %s3209 = scalar_lea.vmem %s1, 24
      %v3210 = vld [vmem:[%s3209] sm:$0xf]
      %v3243 = vunpack.c.l.b16 %v3177
      %v3244 = vunpack.c.l.b16 %v3178
      %v3245 = vunpack.c.l.b16 %v3179
      %v3246 = vunpack.c.l.b16 %v3180
      %v3247 = vunpack.c.l.b16 %v3181
      %v3248 = vunpack.c.l.b16 %v3182
      %v3249 = vunpack.c.l.b16 %v3183
      %v3250 = vunpack.c.l.b16 %v3184
      %v3251 = vunpack.c.l.b16 %v3185
      %v3252 = vunpack.c.l.b16 %v3186
      %v3253 = vunpack.c.l.b16 %v3187
      %v3254 = vunpack.c.l.b16 %v3188
      %v3255 = vunpack.c.l.b16 %v3189
      %v3256 = vunpack.c.l.b16 %v3190
      %v3257 = vunpack.c.l.b16 %v3191
      %v3258 = vunpack.c.l.b16 %v3192
      %v3259 = vunpack.c.l.b16 %v3193
      %v3260 = vunpack.c.l.b16 %v3194
      %v3261 = vunpack.c.l.b16 %v3195
      %v3262 = vunpack.c.l.b16 %v3196
      %v3263 = vunpack.c.l.b16 %v3197
      %v3264 = vunpack.c.l.b16 %v3198
      %v3265 = vunpack.c.l.b16 %v3199
      %v3266 = vunpack.c.l.b16 %v3200
      %v3267 = vunpack.c.l.b16 %v3201
      %v3268 = vunpack.c.l.b16 %v3202
      %v3269 = vunpack.c.l.b16 %v3203
      %v3270 = vunpack.c.l.b16 %v3204
      %v3271 = vunpack.c.l.b16 %v3205
      %v3272 = vunpack.c.l.b16 %v3206
      %v3273 = vunpack.c.l.b16 %v3207
      %v3274 = vunpack.c.l.b16 %v3208
      %v3275 = vpack.c.b16 %v3244, %v3243
      %v3276 = vpack.c.b16 %v3246, %v3245
      %v3277 = vpack.c.b16 %v3248, %v3247
      %v3278 = vpack.c.b16 %v3250, %v3249
      %v3279 = vpack.c.b16 %v3252, %v3251
      %v3280 = vpack.c.b16 %v3254, %v3253
      %v3281 = vpack.c.b16 %v3256, %v3255
      %v3282 = vpack.c.b16 %v3258, %v3257
      %v3283 = vpack.c.b16 %v3260, %v3259
      %v3284 = vpack.c.b16 %v3262, %v3261
      %v3285 = vpack.c.b16 %v3264, %v3263
      %v3286 = vpack.c.b16 %v3266, %v3265
      %v3287 = vpack.c.b16 %v3268, %v3267
      %v3288 = vpack.c.b16 %v3270, %v3269
      %v3289 = vpack.c.b16 %v3272, %v3271
      %v3290 = vpack.c.b16 %v3274, %v3273
      %v3292 = vsel %vm658, %v3275, 0
      %v3295 = vsel %vm658, %v3276, 0
      %v3298 = vsel %vm658, %v3277, 0
      %v3301 = vsel %vm658, %v3278, 0
      %v3304 = vsel %vm658, %v3279, 0
      %v3307 = vsel %vm658, %v3280, 0
      %v3310 = vsel %vm658, %v3281, 0
      %v3313 = vsel %vm658, %v3282, 0
      %v3316 = vsel %vm658, %v3283, 0
      %v3319 = vsel %vm658, %v3284, 0
      %v3322 = vsel %vm658, %v3285, 0
      %v3325 = vsel %vm658, %v3286, 0
      %v3328 = vsel %vm658, %v3287, 0
      %v3331 = vsel %vm658, %v3288, 0
      %v3334 = vsel %vm658, %v3289, 0
      %v3337 = vsel %vm658, %v3290, 0
      %v3340 = vsel %vm707, %v3210, 0
      %3342 = vmatprep.subr.bf16.mxu0 0
      %3343 = vmatpush1.bf16.msra.mxu0 %v3340
      %3344 = vmatprep.subr.bf16.mxu0 0
      %3345 = vmatpush1.bf16.msra.mxu0 0
      %3346 = vmatprep.subr.bf16.mxu0 0
      %3347 = vmatpush1.bf16.msra.mxu0 0
      %3348 = vmatprep.subr.bf16.mxu0 0
      %3349 = vmatpush1.bf16.msra.mxu0 0
      %3350 = vmatprep.subr.bf16.mxu0 0
      %3351 = vmatpush1.bf16.msra.mxu0 0
      %3352 = vmatprep.subr.bf16.mxu0 0
      %3353 = vmatpush1.bf16.msra.mxu0 0
      %3354 = vmatprep.subr.bf16.mxu0 0
      %3355 = vmatpush1.bf16.msra.mxu0 0
      %3356 = vmatprep.subr.bf16.mxu0 0
      %3357 = vmatpush1.bf16.msra.mxu0 0
      %3358 = vmatprep.subr.bf16.mxu0 0
      %3359 = vmatpush1.bf16.msra.mxu0 0
      %3360 = vmatprep.subr.bf16.mxu0 0
      %3361 = vmatpush1.bf16.msra.mxu0 0
      %3362 = vmatprep.subr.bf16.mxu0 0
      %3363 = vmatpush1.bf16.msra.mxu0 0
      %3364 = vmatprep.subr.bf16.mxu0 0
      %3365 = vmatpush1.bf16.msra.mxu0 0
      %3366 = vmatprep.subr.bf16.mxu0 0
      %3367 = vmatpush1.bf16.msra.mxu0 0
      %3368 = vmatprep.subr.bf16.mxu0 0
      %3369 = vmatpush1.bf16.msra.mxu0 0
      %3370 = vmatprep.subr.bf16.mxu0 0
      %3371 = vmatpush1.bf16.msra.mxu0 0
      %3372 = vmatprep.subr.bf16.mxu0 0
      %3373 = vmatpush1.bf16.msra.mxu0 0
      %3374 = vmatprep.mubr.bf16.mxu0 0
      %3375 = vmatmul.mubr.bf16.gmra.mrb[0].mxu0 %v3292
      %v3376 = vpop.f32.mrb[0].mxu0
      %v3377 = vadd.f32 0.0, %v3376
      %v3378 = vpop.f32.mrb[0].mxu0
      %v3379 = vpop.f32.mrb[0].mxu0
      %v3380 = vadd.f32 0.0, %v3379
      %v3381 = vpop.f32.mrb[0].mxu0
      %3382 = vmatprep.mubr.bf16.mxu0 0
      %3383 = vmatmul.mubr.bf16.gmra.mrb[0].mxu0 %v3295
      %v3384 = vpop.f32.mrb[0].mxu0
      %v3385 = vadd.f32 0.0, %v3384
      %v3386 = vpop.f32.mrb[0].mxu0
      %v3387 = vpop.f32.mrb[0].mxu0
      %v3388 = vadd.f32 0.0, %v3387
      %v3389 = vpop.f32.mrb[0].mxu0
      %3390 = vmatprep.mubr.bf16.mxu0 0
      %3391 = vmatmul.mubr.bf16.gmra.mrb[0].mxu0 %v3298
      %v3392 = vpop.f32.mrb[0].mxu0
      %v3393 = vadd.f32 0.0, %v3392
      %v3394 = vpop.f32.mrb[0].mxu0
      %v3395 = vpop.f32.mrb[0].mxu0
      %v3396 = vadd.f32 0.0, %v3395
      %v3397 = vpop.f32.mrb[0].mxu0
      %3398 = vmatprep.mubr.bf16.mxu0 0
      %3399 = vmatmul.mubr.bf16.gmra.mrb[0].mxu0 %v3301
      %v3400 = vpop.f32.mrb[0].mxu0
      %v3401 = vadd.f32 0.0, %v3400
      %v3402 = vpop.f32.mrb[0].mxu0
      %v3403 = vpop.f32.mrb[0].mxu0
      %v3404 = vadd.f32 0.0, %v3403
      %v3405 = vpop.f32.mrb[0].mxu0
      %3406 = vmatprep.mubr.bf16.mxu0 0
      %3407 = vmatmul.mubr.bf16.gmra.mrb[0].mxu0 %v3304
      %v3408 = vpop.f32.mrb[0].mxu0
      %v3409 = vadd.f32 0.0, %v3408
      %v3410 = vpop.f32.mrb[0].mxu0
      %v3411 = vpop.f32.mrb[0].mxu0
      %v3412 = vadd.f32 0.0, %v3411
      %v3413 = vpop.f32.mrb[0].mxu0
      %3414 = vmatprep.mubr.bf16.mxu0 0
      %3415 = vmatmul.mubr.bf16.gmra.mrb[0].mxu0 %v3307
      %v3416 = vpop.f32.mrb[0].mxu0
      %v3417 = vadd.f32 0.0, %v3416
      %v3418 = vpop.f32.mrb[0].mxu0
      %v3419 = vpop.f32.mrb[0].mxu0
      %v3420 = vadd.f32 0.0, %v3419
      %v3421 = vpop.f32.mrb[0].mxu0
      %3422 = vmatprep.mubr.bf16.mxu0 0
      %3423 = vmatmul.mubr.bf16.gmra.mrb[0].mxu0 %v3310
      %v3424 = vpop.f32.mrb[0].mxu0
      %v3425 = vadd.f32 0.0, %v3424
      %v3426 = vpop.f32.mrb[0].mxu0
      %v3427 = vpop.f32.mrb[0].mxu0
      %v3428 = vadd.f32 0.0, %v3427
      %v3429 = vpop.f32.mrb[0].mxu0
      %3430 = vmatprep.mubr.bf16.mxu0 0
      %3431 = vmatmul.mubr.bf16.gmra.mrb[0].mxu0 %v3313
      %v3432 = vpop.f32.mrb[0].mxu0
      %v3433 = vadd.f32 0.0, %v3432
      %v3434 = vpop.f32.mrb[0].mxu0
      %v3435 = vpop.f32.mrb[0].mxu0
      %v3436 = vadd.f32 0.0, %v3435
      %v3437 = vpop.f32.mrb[0].mxu0
      %3438 = vmatprep.mubr.bf16.mxu0 0
      %3439 = vmatmul.mubr.bf16.gmra.mrb[0].mxu0 %v3316
      %v3440 = vpop.f32.mrb[0].mxu0
      %v3441 = vadd.f32 0.0, %v3440
      %v3442 = vpop.f32.mrb[0].mxu0
      %v3443 = vpop.f32.mrb[0].mxu0
      %v3444 = vadd.f32 0.0, %v3443
      %v3445 = vpop.f32.mrb[0].mxu0
      %3446 = vmatprep.mubr.bf16.mxu0 0
      %3447 = vmatmul.mubr.bf16.gmra.mrb[0].mxu0 %v3319
      %v3448 = vpop.f32.mrb[0].mxu0
      %v3449 = vadd.f32 0.0, %v3448
      %v3450 = vpop.f32.mrb[0].mxu0
      %v3451 = vpop.f32.mrb[0].mxu0
      %v3452 = vadd.f32 0.0, %v3451
      %v3453 = vpop.f32.mrb[0].mxu0
      %3454 = vmatprep.mubr.bf16.mxu0 0
      %3455 = vmatmul.mubr.bf16.gmra.mrb[0].mxu0 %v3322
      %v3456 = vpop.f32.mrb[0].mxu0
      %v3457 = vadd.f32 0.0, %v3456
      %v3458 = vpop.f32.mrb[0].mxu0
      %v3459 = vpop.f32.mrb[0].mxu0
      %v3460 = vadd.f32 0.0, %v3459
      %v3461 = vpop.f32.mrb[0].mxu0
      %3462 = vmatprep.mubr.bf16.mxu0 0
      %3463 = vmatmul.mubr.bf16.gmra.mrb[0].mxu0 %v3325
      %v3464 = vpop.f32.mrb[0].mxu0
      %v3465 = vadd.f32 0.0, %v3464
      %v3466 = vpop.f32.mrb[0].mxu0
      %v3467 = vpop.f32.mrb[0].mxu0
      %v3468 = vadd.f32 0.0, %v3467
      %v3469 = vpop.f32.mrb[0].mxu0
      %3470 = vmatprep.mubr.bf16.mxu0 0
      %3471 = vmatmul.mubr.bf16.gmra.mrb[0].mxu0 %v3328
      %v3472 = vpop.f32.mrb[0].mxu0
      %v3473 = vadd.f32 0.0, %v3472
      %v3474 = vpop.f32.mrb[0].mxu0
      %v3475 = vpop.f32.mrb[0].mxu0
      %v3476 = vadd.f32 0.0, %v3475
      %v3477 = vpop.f32.mrb[0].mxu0
      %3478 = vmatprep.mubr.bf16.mxu0 0
      %3479 = vmatmul.mubr.bf16.gmra.mrb[0].mxu0 %v3331
      %v3480 = vpop.f32.mrb[0].mxu0
      %v3481 = vadd.f32 0.0, %v3480
      %v3482 = vpop.f32.mrb[0].mxu0
      %v3483 = vpop.f32.mrb[0].mxu0
      %v3484 = vadd.f32 0.0, %v3483
      %v3485 = vpop.f32.mrb[0].mxu0
      %3486 = vmatprep.mubr.bf16.mxu0 0
      %3487 = vmatmul.mubr.bf16.gmra.mrb[0].mxu0 %v3334
      %v3488 = vpop.f32.mrb[0].mxu0
      %v3489 = vadd.f32 0.0, %v3488
      %v3490 = vpop.f32.mrb[0].mxu0
      %v3491 = vpop.f32.mrb[0].mxu0
      %v3492 = vadd.f32 0.0, %v3491
      %v3493 = vpop.f32.mrb[0].mxu0
      %3494 = vmatprep.mubr.bf16.mxu0 0
      %3495 = vmatmul.mubr.bf16.gmra.mrb[0].mxu0 %v3337
      %v3496 = vpop.f32.mrb[0].mxu0
      %v3497 = vadd.f32 0.0, %v3496
      %v3498 = vpop.f32.mrb[0].mxu0
      %v3499 = vpop.f32.mrb[0].mxu0
      %v3500 = vadd.f32 0.0, %v3499
      %v3501 = vpop.f32.mrb[0].mxu0
      %3502 = vdwg.mxu0
      %v3503 = vadd.f32 %v3144, %v3377
      %v3504 = vadd.f32 %v3145, %v3380
      %v3505 = vadd.f32 %v3146, %v3385
      %v3506 = vadd.f32 %v3147, %v3388
      %v3507 = vadd.f32 %v3148, %v3393
      %v3508 = vadd.f32 %v3149, %v3396
      %v3509 = vadd.f32 %v3150, %v3401
      %v3510 = vadd.f32 %v3151, %v3404
      %v3511 = vadd.f32 %v3152, %v3409
      %v3512 = vadd.f32 %v3153, %v3412
      %v3513 = vadd.f32 %v3154, %v3417
      %v3514 = vadd.f32 %v3155, %v3420
      %v3515 = vadd.f32 %v3156, %v3425
      %v3516 = vadd.f32 %v3157, %v3428
      %v3517 = vadd.f32 %v3158, %v3433
      %v3518 = vadd.f32 %v3159, %v3436
      %v3519 = vadd.f32 %v3160, %v3441
      %v3520 = vadd.f32 %v3161, %v3444
      %v3521 = vadd.f32 %v3162, %v3449
      %v3522 = vadd.f32 %v3163, %v3452
      %v3523 = vadd.f32 %v3164, %v3457
      %v3524 = vadd.f32 %v3165, %v3460
      %v3525 = vadd.f32 %v3166, %v3465
      %v3526 = vadd.f32 %v3167, %v3468
      %v3527 = vadd.f32 %v3168, %v3473
      %v3528 = vadd.f32 %v3169, %v3476
      %v3529 = vadd.f32 %v3170, %v3481
      %v3530 = vadd.f32 %v3171, %v3484
      %v3531 = vadd.f32 %v3172, %v3489
      %v3532 = vadd.f32 %v3173, %v3492
      %v3533 = vadd.f32 %v3174, %v3497
      %v3534 = vadd.f32 %v3175, %v3500
      %v3535 = vld [vmem:[%s3176] sm:$0xf]
      %v3536 = vld [vmem:[%s3176 + $0x4] sm:$0xf]
      %v3537 = vld [vmem:[%s3176 + $0x8] sm:$0x1]
      %v3538 = vld [vmem:[%s3176 + $0xc] sm:$0xf]
      %v3539 = vld [vmem:[%s3176 + $0x10] sm:$0xf]
      %v3540 = vld [vmem:[%s3176 + $0x14] sm:$0x1]
      %v3541 = vld [vmem:[%s3176 + $0x18] sm:$0xf]
      %v3542 = vld [vmem:[%s3176 + $0x1c] sm:$0xf]
      %v3543 = vld [vmem:[%s3176 + $0x20] sm:$0x1]
      %v3544 = vld [vmem:[%s3176 + $0x24] sm:$0xf]
      %v3545 = vld [vmem:[%s3176 + $0x28] sm:$0xf]
      %v3546 = vld [vmem:[%s3176 + $0x2c] sm:$0x1]
      %v3547 = vld [vmem:[%s3176 + $0x30] sm:$0xf]
      %v3548 = vld [vmem:[%s3176 + $0x34] sm:$0xf]
      %v3549 = vld [vmem:[%s3176 + $0x38] sm:$0x1]
      %v3550 = vld [vmem:[%s3176 + $0x3c] sm:$0xf]
      %v3551 = vld [vmem:[%s3176 + $0x40] sm:$0xf]
      %v3552 = vld [vmem:[%s3176 + $0x44] sm:$0x1]
      %v3553 = vld [vmem:[%s3176 + $0x48] sm:$0xf]
      %v3554 = vld [vmem:[%s3176 + $0x4c] sm:$0xf]
      %v3555 = vld [vmem:[%s3176 + $0x50] sm:$0x1]
      %v3556 = vld [vmem:[%s3176 + $0x54] sm:$0xf]
      %v3557 = vld [vmem:[%s3176 + $0x58] sm:$0xf]
      %v3558 = vld [vmem:[%s3176 + $0x5c] sm:$0x1]
      %v3559 = vld [vmem:[%s3176 + $0x60] sm:$0xf]
      %v3560 = vld [vmem:[%s3176 + $0x64] sm:$0xf]
      %v3561 = vld [vmem:[%s3176 + $0x68] sm:$0x1]
      %v3562 = vld [vmem:[%s3176 + $0x6c] sm:$0xf]
      %v3563 = vld [vmem:[%s3176 + $0x70] sm:$0xf]
      %v3564 = vld [vmem:[%s3176 + $0x74] sm:$0x1]
      %v3565 = vld [vmem:[%s3176 + $0x78] sm:$0xf]
      %v3566 = vld [vmem:[%s3176 + $0x7c] sm:$0xf]
      %v3567 = vld [vmem:[%s3176 + $0x80] sm:$0x1]
      %v3568 = vld [vmem:[%s3176 + $0x84] sm:$0xf]
      %v3569 = vld [vmem:[%s3176 + $0x88] sm:$0xf]
      %v3570 = vld [vmem:[%s3176 + $0x8c] sm:$0x1]
      %v3571 = vld [vmem:[%s3176 + $0x90] sm:$0xf]
      %v3572 = vld [vmem:[%s3176 + $0x94] sm:$0xf]
      %v3573 = vld [vmem:[%s3176 + $0x98] sm:$0x1]
      %v3574 = vld [vmem:[%s3176 + $0x9c] sm:$0xf]
      %v3575 = vld [vmem:[%s3176 + $0xa0] sm:$0xf]
      %v3576 = vld [vmem:[%s3176 + $0xa4] sm:$0x1]
      %v3577 = vld [vmem:[%s3176 + $0xa8] sm:$0xf]
      %v3578 = vld [vmem:[%s3176 + $0xac] sm:$0xf]
      %v3579 = vld [vmem:[%s3176 + $0xb0] sm:$0x1]
      %v3580 = vld [vmem:[%s3176 + $0xb4] sm:$0xf]
      %v3581 = vld [vmem:[%s3176 + $0xb8] sm:$0xf]
      %v3582 = vld [vmem:[%s3176 + $0xbc] sm:$0x1]
      %v3584 = vshrl.u32 %v3535, 16
      %v3586 = vrot.slane %v3584, 4
      %v3587 = vshll.u32 %v3535, 16
      %v3589 = vrot.slane %v3587, 5
      %v3590 = vor.u32 %v3586, %v3589
      %v3591 = vrot.slane %v3590, 4
      %v3593 = vshll.u32 %v3536, 16
      %v3595 = vrot.slane %v3593, 5
      %v3596 = vsel %vm223, %v3591, %v3595
      %v3597 = vshrl.u32 %v3536, 16
      %v3599 = vrot.slane %v3597, 4
      %v3600 = vor.u32 %v3599, %v3595
      %v3601 = vrot.slane %v3600, 4
      %v3603 = vshll.u32 %v3537, 16
      %v3605 = vrot.slane %v3603, 5
      %v3606 = vsel %vm223, %v3601, %v3605
      %v3608 = vshrl.u32 %v3538, 16
      %v3610 = vrot.slane %v3608, 4
      %v3611 = vshll.u32 %v3538, 16
      %v3613 = vrot.slane %v3611, 5
      %v3614 = vor.u32 %v3610, %v3613
      %v3615 = vrot.slane %v3614, 4
      %v3617 = vshll.u32 %v3539, 16
      %v3619 = vrot.slane %v3617, 5
      %v3620 = vsel %vm223, %v3615, %v3619
      %v3621 = vshrl.u32 %v3539, 16
      %v3623 = vrot.slane %v3621, 4
      %v3624 = vor.u32 %v3623, %v3619
      %v3625 = vrot.slane %v3624, 4
      %v3627 = vshll.u32 %v3540, 16
      %v3629 = vrot.slane %v3627, 5
      %v3630 = vsel %vm223, %v3625, %v3629
      %v3632 = vshrl.u32 %v3541, 16
      %v3634 = vrot.slane %v3632, 4
      %v3635 = vshll.u32 %v3541, 16
      %v3637 = vrot.slane %v3635, 5
      %v3638 = vor.u32 %v3634, %v3637
      %v3639 = vrot.slane %v3638, 4
      %v3641 = vshll.u32 %v3542, 16
      %v3643 = vrot.slane %v3641, 5
      %v3644 = vsel %vm223, %v3639, %v3643
      %v3645 = vshrl.u32 %v3542, 16
      %v3647 = vrot.slane %v3645, 4
      %v3648 = vor.u32 %v3647, %v3643
      %v3649 = vrot.slane %v3648, 4
      %v3651 = vshll.u32 %v3543, 16
      %v3653 = vrot.slane %v3651, 5
      %v3654 = vsel %vm223, %v3649, %v3653
      %v3656 = vshrl.u32 %v3544, 16
      %v3658 = vrot.slane %v3656, 4
      %v3659 = vshll.u32 %v3544, 16
      %v3661 = vrot.slane %v3659, 5
      %v3662 = vor.u32 %v3658, %v3661
      %v3663 = vrot.slane %v3662, 4
      %v3665 = vshll.u32 %v3545, 16
      %v3667 = vrot.slane %v3665, 5
      %v3668 = vsel %vm223, %v3663, %v3667
      %v3669 = vshrl.u32 %v3545, 16
      %v3671 = vrot.slane %v3669, 4
      %v3672 = vor.u32 %v3671, %v3667
      %v3673 = vrot.slane %v3672, 4
      %v3675 = vshll.u32 %v3546, 16
      %v3677 = vrot.slane %v3675, 5
      %v3678 = vsel %vm223, %v3673, %v3677
      %v3680 = vshrl.u32 %v3547, 16
      %v3682 = vrot.slane %v3680, 4
      %v3683 = vshll.u32 %v3547, 16
      %v3685 = vrot.slane %v3683, 5
      %v3686 = vor.u32 %v3682, %v3685
      %v3687 = vrot.slane %v3686, 4
      %v3689 = vshll.u32 %v3548, 16
      %v3691 = vrot.slane %v3689, 5
      %v3692 = vsel %vm223, %v3687, %v3691
      %v3693 = vshrl.u32 %v3548, 16
      %v3695 = vrot.slane %v3693, 4
      %v3696 = vor.u32 %v3695, %v3691
      %v3697 = vrot.slane %v3696, 4
      %v3699 = vshll.u32 %v3549, 16
      %v3701 = vrot.slane %v3699, 5
      %v3702 = vsel %vm223, %v3697, %v3701
      %v3704 = vshrl.u32 %v3550, 16
      %v3706 = vrot.slane %v3704, 4
      %v3707 = vshll.u32 %v3550, 16
      %v3709 = vrot.slane %v3707, 5
      %v3710 = vor.u32 %v3706, %v3709
      %v3711 = vrot.slane %v3710, 4
      %v3713 = vshll.u32 %v3551, 16
      %v3715 = vrot.slane %v3713, 5
      %v3716 = vsel %vm223, %v3711, %v3715
      %v3717 = vshrl.u32 %v3551, 16
      %v3719 = vrot.slane %v3717, 4
      %v3720 = vor.u32 %v3719, %v3715
      %v3721 = vrot.slane %v3720, 4
      %v3723 = vshll.u32 %v3552, 16
      %v3725 = vrot.slane %v3723, 5
      %v3726 = vsel %vm223, %v3721, %v3725
      %v3728 = vshrl.u32 %v3553, 16
      %v3730 = vrot.slane %v3728, 4
      %v3731 = vshll.u32 %v3553, 16
      %v3733 = vrot.slane %v3731, 5
      %v3734 = vor.u32 %v3730, %v3733
      %v3735 = vrot.slane %v3734, 4
      %v3737 = vshll.u32 %v3554, 16
      %v3739 = vrot.slane %v3737, 5
      %v3740 = vsel %vm223, %v3735, %v3739
      %v3741 = vshrl.u32 %v3554, 16
      %v3743 = vrot.slane %v3741, 4
      %v3744 = vor.u32 %v3743, %v3739
      %v3745 = vrot.slane %v3744, 4
      %v3747 = vshll.u32 %v3555, 16
      %v3749 = vrot.slane %v3747, 5
      %v3750 = vsel %vm223, %v3745, %v3749
      %v3752 = vshrl.u32 %v3556, 16
      %v3754 = vrot.slane %v3752, 4
      %v3755 = vshll.u32 %v3556, 16
      %v3757 = vrot.slane %v3755, 5
      %v3758 = vor.u32 %v3754, %v3757
      %v3759 = vrot.slane %v3758, 4
      %v3761 = vshll.u32 %v3557, 16
      %v3763 = vrot.slane %v3761, 5
      %v3764 = vsel %vm223, %v3759, %v3763
      %v3765 = vshrl.u32 %v3557, 16
      %v3767 = vrot.slane %v3765, 4
      %v3768 = vor.u32 %v3767, %v3763
      %v3769 = vrot.slane %v3768, 4
      %v3771 = vshll.u32 %v3558, 16
      %v3773 = vrot.slane %v3771, 5
      %v3774 = vsel %vm223, %v3769, %v3773
      %v3776 = vshrl.u32 %v3559, 16
      %v3778 = vrot.slane %v3776, 4
      %v3779 = vshll.u32 %v3559, 16
      %v3781 = vrot.slane %v3779, 5
      %v3782 = vor.u32 %v3778, %v3781
      %v3783 = vrot.slane %v3782, 4
      %v3785 = vshll.u32 %v3560, 16
      %v3787 = vrot.slane %v3785, 5
      %v3788 = vsel %vm223, %v3783, %v3787
      %v3789 = vshrl.u32 %v3560, 16
      %v3791 = vrot.slane %v3789, 4
      %v3792 = vor.u32 %v3791, %v3787
      %v3793 = vrot.slane %v3792, 4
      %v3795 = vshll.u32 %v3561, 16
      %v3797 = vrot.slane %v3795, 5
      %v3798 = vsel %vm223, %v3793, %v3797
      %v3800 = vshrl.u32 %v3562, 16
      %v3802 = vrot.slane %v3800, 4
      %v3803 = vshll.u32 %v3562, 16
      %v3805 = vrot.slane %v3803, 5
      %v3806 = vor.u32 %v3802, %v3805
      %v3807 = vrot.slane %v3806, 4
      %v3809 = vshll.u32 %v3563, 16
      %v3811 = vrot.slane %v3809, 5
      %v3812 = vsel %vm223, %v3807, %v3811
      %v3813 = vshrl.u32 %v3563, 16
      %v3815 = vrot.slane %v3813, 4
      %v3816 = vor.u32 %v3815, %v3811
      %v3817 = vrot.slane %v3816, 4
      %v3819 = vshll.u32 %v3564, 16
      %v3821 = vrot.slane %v3819, 5
      %v3822 = vsel %vm223, %v3817, %v3821
      %v3824 = vshrl.u32 %v3565, 16
      %v3826 = vrot.slane %v3824, 4
      %v3827 = vshll.u32 %v3565, 16
      %v3829 = vrot.slane %v3827, 5
      %v3830 = vor.u32 %v3826, %v3829
      %v3831 = vrot.slane %v3830, 4
      %v3833 = vshll.u32 %v3566, 16
      %v3835 = vrot.slane %v3833, 5
      %v3836 = vsel %vm223, %v3831, %v3835
      %v3837 = vshrl.u32 %v3566, 16
      %v3839 = vrot.slane %v3837, 4
      %v3840 = vor.u32 %v3839, %v3835
      %v3841 = vrot.slane %v3840, 4
      %v3843 = vshll.u32 %v3567, 16
      %v3845 = vrot.slane %v3843, 5
      %v3846 = vsel %vm223, %v3841, %v3845
      %v3848 = vshrl.u32 %v3568, 16
      %v3850 = vrot.slane %v3848, 4
      %v3851 = vshll.u32 %v3568, 16
      %v3853 = vrot.slane %v3851, 5
      %v3854 = vor.u32 %v3850, %v3853
      %v3855 = vrot.slane %v3854, 4
      %v3857 = vshll.u32 %v3569, 16
      %v3859 = vrot.slane %v3857, 5
      %v3860 = vsel %vm223, %v3855, %v3859
      %v3861 = vshrl.u32 %v3569, 16
      %v3863 = vrot.slane %v3861, 4
      %v3864 = vor.u32 %v3863, %v3859
      %v3865 = vrot.slane %v3864, 4
      %v3867 = vshll.u32 %v3570, 16
      %v3869 = vrot.slane %v3867, 5
      %v3870 = vsel %vm223, %v3865, %v3869
      %v3872 = vshrl.u32 %v3571, 16
      %v3874 = vrot.slane %v3872, 4
      %v3875 = vshll.u32 %v3571, 16
      %v3877 = vrot.slane %v3875, 5
      %v3878 = vor.u32 %v3874, %v3877
      %v3879 = vrot.slane %v3878, 4
      %v3881 = vshll.u32 %v3572, 16
      %v3883 = vrot.slane %v3881, 5
      %v3884 = vsel %vm223, %v3879, %v3883
      %v3885 = vshrl.u32 %v3572, 16
      %v3887 = vrot.slane %v3885, 4
      %v3888 = vor.u32 %v3887, %v3883
      %v3889 = vrot.slane %v3888, 4
      %v3891 = vshll.u32 %v3573, 16
      %v3893 = vrot.slane %v3891, 5
      %v3894 = vsel %vm223, %v3889, %v3893
      %v3896 = vshrl.u32 %v3574, 16
      %v3898 = vrot.slane %v3896, 4
      %v3899 = vshll.u32 %v3574, 16
      %v3901 = vrot.slane %v3899, 5
      %v3902 = vor.u32 %v3898, %v3901
      %v3903 = vrot.slane %v3902, 4
      %v3905 = vshll.u32 %v3575, 16
      %v3907 = vrot.slane %v3905, 5
      %v3908 = vsel %vm223, %v3903, %v3907
      %v3909 = vshrl.u32 %v3575, 16
      %v3911 = vrot.slane %v3909, 4
      %v3912 = vor.u32 %v3911, %v3907
      %v3913 = vrot.slane %v3912, 4
      %v3915 = vshll.u32 %v3576, 16
      %v3917 = vrot.slane %v3915, 5
      %v3918 = vsel %vm223, %v3913, %v3917
      %v3920 = vshrl.u32 %v3577, 16
      %v3922 = vrot.slane %v3920, 4
      %v3923 = vshll.u32 %v3577, 16
      %v3925 = vrot.slane %v3923, 5
      %v3926 = vor.u32 %v3922, %v3925
      %v3927 = vrot.slane %v3926, 4
      %v3929 = vshll.u32 %v3578, 16
      %v3931 = vrot.slane %v3929, 5
      %v3932 = vsel %vm223, %v3927, %v3931
      %v3933 = vshrl.u32 %v3578, 16
      %v3935 = vrot.slane %v3933, 4
      %v3936 = vor.u32 %v3935, %v3931
      %v3937 = vrot.slane %v3936, 4
      %v3939 = vshll.u32 %v3579, 16
      %v3941 = vrot.slane %v3939, 5
      %v3942 = vsel %vm223, %v3937, %v3941
      %v3944 = vshrl.u32 %v3580, 16
      %v3946 = vrot.slane %v3944, 4
      %v3947 = vshll.u32 %v3580, 16
      %v3949 = vrot.slane %v3947, 5
      %v3950 = vor.u32 %v3946, %v3949
      %v3951 = vrot.slane %v3950, 4
      %v3953 = vshll.u32 %v3581, 16
      %v3955 = vrot.slane %v3953, 5
      %v3956 = vsel %vm223, %v3951, %v3955
      %v3957 = vshrl.u32 %v3581, 16
      %v3959 = vrot.slane %v3957, 4
      %v3960 = vor.u32 %v3959, %v3955
      %v3961 = vrot.slane %v3960, 4
      %v3963 = vshll.u32 %v3582, 16
      %v3965 = vrot.slane %v3963, 5
      %v3966 = vsel %vm223, %v3961, %v3965
      %s3967 = scalar_lea.vmem %s1, 28
      %v3968 = vld [vmem:[%s3967] sm:$0xf]
      %v3969 = vunpack.c.l.b16 %v3596
      %v3970 = vunpack.c.l.b16 %v3606
      %v3971 = vunpack.c.l.b16 %v3620
      %v3972 = vunpack.c.l.b16 %v3630
      %v3973 = vunpack.c.l.b16 %v3644
      %v3974 = vunpack.c.l.b16 %v3654
      %v3975 = vunpack.c.l.b16 %v3668
      %v3976 = vunpack.c.l.b16 %v3678
      %v3977 = vunpack.c.l.b16 %v3692
      %v3978 = vunpack.c.l.b16 %v3702
      %v3979 = vunpack.c.l.b16 %v3716
      %v3980 = vunpack.c.l.b16 %v3726
      %v3981 = vunpack.c.l.b16 %v3740
      %v3982 = vunpack.c.l.b16 %v3750
      %v3983 = vunpack.c.l.b16 %v3764
      %v3984 = vunpack.c.l.b16 %v3774
      %v3985 = vunpack.c.l.b16 %v3788
      %v3986 = vunpack.c.l.b16 %v3798
      %v3987 = vunpack.c.l.b16 %v3812
      %v3988 = vunpack.c.l.b16 %v3822
      %v3989 = vunpack.c.l.b16 %v3836
      %v3990 = vunpack.c.l.b16 %v3846
      %v3991 = vunpack.c.l.b16 %v3860
      %v3992 = vunpack.c.l.b16 %v3870
      %v3993 = vunpack.c.l.b16 %v3884
      %v3994 = vunpack.c.l.b16 %v3894
      %v3995 = vunpack.c.l.b16 %v3908
      %v3996 = vunpack.c.l.b16 %v3918
      %v3997 = vunpack.c.l.b16 %v3932
      %v3998 = vunpack.c.l.b16 %v3942
      %v3999 = vunpack.c.l.b16 %v3956
      %v4000 = vunpack.c.l.b16 %v3966
      %v4001 = vpack.c.b16 %v3970, %v3969
      %v4002 = vpack.c.b16 %v3972, %v3971
      %v4003 = vpack.c.b16 %v3974, %v3973
      %v4004 = vpack.c.b16 %v3976, %v3975
      %v4005 = vpack.c.b16 %v3978, %v3977
      %v4006 = vpack.c.b16 %v3980, %v3979
      %v4007 = vpack.c.b16 %v3982, %v3981
      %v4008 = vpack.c.b16 %v3984, %v3983
      %v4009 = vpack.c.b16 %v3986, %v3985
      %v4010 = vpack.c.b16 %v3988, %v3987
      %v4011 = vpack.c.b16 %v3990, %v3989
      %v4012 = vpack.c.b16 %v3992, %v3991
      %v4013 = vpack.c.b16 %v3994, %v3993
      %v4014 = vpack.c.b16 %v3996, %v3995
      %v4015 = vpack.c.b16 %v3998, %v3997
      %v4016 = vpack.c.b16 %v4000, %v3999
      %v4018 = vsel %vm658, %v4001, 0
      %v4021 = vsel %vm658, %v4002, 0
      %v4024 = vsel %vm658, %v4003, 0
      %v4027 = vsel %vm658, %v4004, 0
      %v4030 = vsel %vm658, %v4005, 0
      %v4033 = vsel %vm658, %v4006, 0
      %v4036 = vsel %vm658, %v4007, 0
      %v4039 = vsel %vm658, %v4008, 0
      %v4042 = vsel %vm658, %v4009, 0
      %v4045 = vsel %vm658, %v4010, 0
      %v4048 = vsel %vm658, %v4011, 0
      %v4051 = vsel %vm658, %v4012, 0
      %v4054 = vsel %vm658, %v4013, 0
      %v4057 = vsel %vm658, %v4014, 0
      %v4060 = vsel %vm658, %v4015, 0
      %v4063 = vsel %vm658, %v4016, 0
      %v4066 = vsel %vm707, %v3968, 0
      %4068 = vmatprep.subr.bf16.mxu0 0
      %4069 = vmatpush1.bf16.msra.mxu0 %v4066
      %4070 = vmatprep.subr.bf16.mxu0 0
      %4071 = vmatpush1.bf16.msra.mxu0 0
      %4072 = vmatprep.subr.bf16.mxu0 0
      %4073 = vmatpush1.bf16.msra.mxu0 0
      %4074 = vmatprep.subr.bf16.mxu0 0
      %4075 = vmatpush1.bf16.msra.mxu0 0
      %4076 = vmatprep.subr.bf16.mxu0 0
      %4077 = vmatpush1.bf16.msra.mxu0 0
      %4078 = vmatprep.subr.bf16.mxu0 0
      %4079 = vmatpush1.bf16.msra.mxu0 0
      %4080 = vmatprep.subr.bf16.mxu0 0
      %4081 = vmatpush1.bf16.msra.mxu0 0
      %4082 = vmatprep.subr.bf16.mxu0 0
      %4083 = vmatpush1.bf16.msra.mxu0 0
      %4084 = vmatprep.subr.bf16.mxu0 0
      %4085 = vmatpush1.bf16.msra.mxu0 0
      %4086 = vmatprep.subr.bf16.mxu0 0
      %4087 = vmatpush1.bf16.msra.mxu0 0
      %4088 = vmatprep.subr.bf16.mxu0 0
      %4089 = vmatpush1.bf16.msra.mxu0 0
      %4090 = vmatprep.subr.bf16.mxu0 0
      %4091 = vmatpush1.bf16.msra.mxu0 0
      %4092 = vmatprep.subr.bf16.mxu0 0
      %4093 = vmatpush1.bf16.msra.mxu0 0
      %4094 = vmatprep.subr.bf16.mxu0 0
      %4095 = vmatpush1.bf16.msra.mxu0 0
      %4096 = vmatprep.subr.bf16.mxu0 0
      %4097 = vmatpush1.bf16.msra.mxu0 0
      %4098 = vmatprep.subr.bf16.mxu0 0
      %4099 = vmatpush1.bf16.msra.mxu0 0
      %4100 = vmatprep.mubr.bf16.mxu0 0
      %4101 = vmatmul.mubr.bf16.gmra.mrb[0].mxu0 %v4018
      %v4102 = vpop.f32.mrb[0].mxu0
      %v4103 = vadd.f32 0.0, %v4102
      %v4104 = vpop.f32.mrb[0].mxu0
      %v4105 = vpop.f32.mrb[0].mxu0
      %v4106 = vadd.f32 0.0, %v4105
      %v4107 = vpop.f32.mrb[0].mxu0
      %4108 = vmatprep.mubr.bf16.mxu0 0
      %4109 = vmatmul.mubr.bf16.gmra.mrb[0].mxu0 %v4021
      %v4110 = vpop.f32.mrb[0].mxu0
      %v4111 = vadd.f32 0.0, %v4110
      %v4112 = vpop.f32.mrb[0].mxu0
      %v4113 = vpop.f32.mrb[0].mxu0
      %v4114 = vadd.f32 0.0, %v4113
      %v4115 = vpop.f32.mrb[0].mxu0
      %4116 = vmatprep.mubr.bf16.mxu0 0
      %4117 = vmatmul.mubr.bf16.gmra.mrb[0].mxu0 %v4024
      %v4118 = vpop.f32.mrb[0].mxu0
      %v4119 = vadd.f32 0.0, %v4118
      %v4120 = vpop.f32.mrb[0].mxu0
      %v4121 = vpop.f32.mrb[0].mxu0
      %v4122 = vadd.f32 0.0, %v4121
      %v4123 = vpop.f32.mrb[0].mxu0
      %4124 = vmatprep.mubr.bf16.mxu0 0
      %4125 = vmatmul.mubr.bf16.gmra.mrb[0].mxu0 %v4027
      %v4126 = vpop.f32.mrb[0].mxu0
      %v4127 = vadd.f32 0.0, %v4126
      %v4128 = vpop.f32.mrb[0].mxu0
      %v4129 = vpop.f32.mrb[0].mxu0
      %v4130 = vadd.f32 0.0, %v4129
      %v4131 = vpop.f32.mrb[0].mxu0
      %4132 = vmatprep.mubr.bf16.mxu0 0
      %4133 = vmatmul.mubr.bf16.gmra.mrb[0].mxu0 %v4030
      %v4134 = vpop.f32.mrb[0].mxu0
      %v4135 = vadd.f32 0.0, %v4134
      %v4136 = vpop.f32.mrb[0].mxu0
      %v4137 = vpop.f32.mrb[0].mxu0
      %v4138 = vadd.f32 0.0, %v4137
      %v4139 = vpop.f32.mrb[0].mxu0
      %4140 = vmatprep.mubr.bf16.mxu0 0
      %4141 = vmatmul.mubr.bf16.gmra.mrb[0].mxu0 %v4033
      %v4142 = vpop.f32.mrb[0].mxu0
      %v4143 = vadd.f32 0.0, %v4142
      %v4144 = vpop.f32.mrb[0].mxu0
      %v4145 = vpop.f32.mrb[0].mxu0
      %v4146 = vadd.f32 0.0, %v4145
      %v4147 = vpop.f32.mrb[0].mxu0
      %4148 = vmatprep.mubr.bf16.mxu0 0
      %4149 = vmatmul.mubr.bf16.gmra.mrb[0].mxu0 %v4036
      %v4150 = vpop.f32.mrb[0].mxu0
      %v4151 = vadd.f32 0.0, %v4150
      %v4152 = vpop.f32.mrb[0].mxu0
      %v4153 = vpop.f32.mrb[0].mxu0
      %v4154 = vadd.f32 0.0, %v4153
      %v4155 = vpop.f32.mrb[0].mxu0
      %4156 = vmatprep.mubr.bf16.mxu0 0
      %4157 = vmatmul.mubr.bf16.gmra.mrb[0].mxu0 %v4039
      %v4158 = vpop.f32.mrb[0].mxu0
      %v4159 = vadd.f32 0.0, %v4158
      %v4160 = vpop.f32.mrb[0].mxu0
      %v4161 = vpop.f32.mrb[0].mxu0
      %v4162 = vadd.f32 0.0, %v4161
      %v4163 = vpop.f32.mrb[0].mxu0
      %4164 = vmatprep.mubr.bf16.mxu0 0
      %4165 = vmatmul.mubr.bf16.gmra.mrb[0].mxu0 %v4042
      %v4166 = vpop.f32.mrb[0].mxu0
      %v4167 = vadd.f32 0.0, %v4166
      %v4168 = vpop.f32.mrb[0].mxu0
      %v4169 = vpop.f32.mrb[0].mxu0
      %v4170 = vadd.f32 0.0, %v4169
      %v4171 = vpop.f32.mrb[0].mxu0
      %4172 = vmatprep.mubr.bf16.mxu0 0
      %4173 = vmatmul.mubr.bf16.gmra.mrb[0].mxu0 %v4045
      %v4174 = vpop.f32.mrb[0].mxu0
      %v4175 = vadd.f32 0.0, %v4174
      %v4176 = vpop.f32.mrb[0].mxu0
      %v4177 = vpop.f32.mrb[0].mxu0
      %v4178 = vadd.f32 0.0, %v4177
      %v4179 = vpop.f32.mrb[0].mxu0
      %4180 = vmatprep.mubr.bf16.mxu0 0
      %4181 = vmatmul.mubr.bf16.gmra.mrb[0].mxu0 %v4048
      %v4182 = vpop.f32.mrb[0].mxu0
      %v4183 = vadd.f32 0.0, %v4182
      %v4184 = vpop.f32.mrb[0].mxu0
      %v4185 = vpop.f32.mrb[0].mxu0
      %v4186 = vadd.f32 0.0, %v4185
      %v4187 = vpop.f32.mrb[0].mxu0
      %4188 = vmatprep.mubr.bf16.mxu0 0
      %4189 = vmatmul.mubr.bf16.gmra.mrb[0].mxu0 %v4051
      %v4190 = vpop.f32.mrb[0].mxu0
      %v4191 = vadd.f32 0.0, %v4190
      %v4192 = vpop.f32.mrb[0].mxu0
      %v4193 = vpop.f32.mrb[0].mxu0
      %v4194 = vadd.f32 0.0, %v4193
      %v4195 = vpop.f32.mrb[0].mxu0
      %4196 = vmatprep.mubr.bf16.mxu0 0
      %4197 = vmatmul.mubr.bf16.gmra.mrb[0].mxu0 %v4054
      %v4198 = vpop.f32.mrb[0].mxu0
      %v4199 = vadd.f32 0.0, %v4198
      %v4200 = vpop.f32.mrb[0].mxu0
      %v4201 = vpop.f32.mrb[0].mxu0
      %v4202 = vadd.f32 0.0, %v4201
      %v4203 = vpop.f32.mrb[0].mxu0
      %4204 = vmatprep.mubr.bf16.mxu0 0
      %4205 = vmatmul.mubr.bf16.gmra.mrb[0].mxu0 %v4057
      %v4206 = vpop.f32.mrb[0].mxu0
      %v4207 = vadd.f32 0.0, %v4206
      %v4208 = vpop.f32.mrb[0].mxu0
      %v4209 = vpop.f32.mrb[0].mxu0
      %v4210 = vadd.f32 0.0, %v4209
      %v4211 = vpop.f32.mrb[0].mxu0
      %4212 = vmatprep.mubr.bf16.mxu0 0
      %4213 = vmatmul.mubr.bf16.gmra.mrb[0].mxu0 %v4060
      %v4214 = vpop.f32.mrb[0].mxu0
      %v4215 = vadd.f32 0.0, %v4214
      %v4216 = vpop.f32.mrb[0].mxu0
      %v4217 = vpop.f32.mrb[0].mxu0
      %v4218 = vadd.f32 0.0, %v4217
      %v4219 = vpop.f32.mrb[0].mxu0
      %4220 = vmatprep.mubr.bf16.mxu0 0
      %4221 = vmatmul.mubr.bf16.gmra.mrb[0].mxu0 %v4063
      %v4222 = vpop.f32.mrb[0].mxu0
      %v4223 = vadd.f32 0.0, %v4222
      %v4224 = vpop.f32.mrb[0].mxu0
      %v4225 = vpop.f32.mrb[0].mxu0
      %v4226 = vadd.f32 0.0, %v4225
      %v4227 = vpop.f32.mrb[0].mxu0
      %4228 = vdwg.mxu0
      %v4229 = vadd.f32 %v3503, %v4103
      %v4230 = vadd.f32 %v3504, %v4106
      %v4231 = vadd.f32 %v3505, %v4111
      %v4232 = vadd.f32 %v3506, %v4114
      %v4233 = vadd.f32 %v3507, %v4119
      %v4234 = vadd.f32 %v3508, %v4122
      %v4235 = vadd.f32 %v3509, %v4127
      %v4236 = vadd.f32 %v3510, %v4130
      %v4237 = vadd.f32 %v3511, %v4135
      %v4238 = vadd.f32 %v3512, %v4138
      %v4239 = vadd.f32 %v3513, %v4143
      %v4240 = vadd.f32 %v3514, %v4146
      %v4241 = vadd.f32 %v3515, %v4151
      %v4242 = vadd.f32 %v3516, %v4154
      %v4243 = vadd.f32 %v3517, %v4159
      %v4244 = vadd.f32 %v3518, %v4162
      %v4245 = vadd.f32 %v3519, %v4167
      %v4246 = vadd.f32 %v3520, %v4170
      %v4247 = vadd.f32 %v3521, %v4175
      %v4248 = vadd.f32 %v3522, %v4178
      %v4249 = vadd.f32 %v3523, %v4183
      %v4250 = vadd.f32 %v3524, %v4186
      %v4251 = vadd.f32 %v3525, %v4191
      %v4252 = vadd.f32 %v3526, %v4194
      %v4253 = vadd.f32 %v3527, %v4199
      %v4254 = vadd.f32 %v3528, %v4202
      %v4255 = vadd.f32 %v3529, %v4207
      %v4256 = vadd.f32 %v3530, %v4210
      %v4257 = vadd.f32 %v3531, %v4215
      %v4258 = vadd.f32 %v3532, %v4218
      %v4259 = vadd.f32 %v3533, %v4223
      %v4260 = vadd.f32 %v3534, %v4226
      %v4261 = vld [vmem:[%s3176] sm:$0xe]
      %v4262 = vld [vmem:[%s3176 + $0xc] sm:$0xe]
      %v4263 = vld [vmem:[%s3176 + $0x18] sm:$0xe]
      %v4264 = vld [vmem:[%s3176 + $0x24] sm:$0xe]
      %v4265 = vld [vmem:[%s3176 + $0x30] sm:$0xe]
      %v4266 = vld [vmem:[%s3176 + $0x3c] sm:$0xe]
      %v4267 = vld [vmem:[%s3176 + $0x48] sm:$0xe]
      %v4268 = vld [vmem:[%s3176 + $0x54] sm:$0xe]
      %v4269 = vld [vmem:[%s3176 + $0x60] sm:$0xe]
      %v4270 = vld [vmem:[%s3176 + $0x6c] sm:$0xe]
      %v4271 = vld [vmem:[%s3176 + $0x78] sm:$0xe]
      %v4272 = vld [vmem:[%s3176 + $0x84] sm:$0xe]
      %v4273 = vld [vmem:[%s3176 + $0x90] sm:$0xe]
      %v4274 = vld [vmem:[%s3176 + $0x9c] sm:$0xe]
      %v4275 = vld [vmem:[%s3176 + $0xa8] sm:$0xe]
      %v4276 = vld [vmem:[%s3176 + $0xb4] sm:$0xe]
      %v4325 = vrot.slane %v4261, 5
      %v4326 = vrot.slane %v4325, 4
      %v4327 = vrot.slane %v3536, 5
      %v4328 = vsel %vm1214, %v4326, %v4327
      %v4329 = vrot.slane %v4327, 4
      %v4330 = vrot.slane %v3537, 5
      %v4331 = vsel %vm1214, %v4329, %v4330
      %v4332 = vrot.slane %v4262, 5
      %v4333 = vrot.slane %v4332, 4
      %v4334 = vrot.slane %v3539, 5
      %v4335 = vsel %vm1214, %v4333, %v4334
      %v4336 = vrot.slane %v4334, 4
      %v4337 = vrot.slane %v3540, 5
      %v4338 = vsel %vm1214, %v4336, %v4337
      %v4339 = vrot.slane %v4263, 5
      %v4340 = vrot.slane %v4339, 4
      %v4341 = vrot.slane %v3542, 5
      %v4342 = vsel %vm1214, %v4340, %v4341
      %v4343 = vrot.slane %v4341, 4
      %v4344 = vrot.slane %v3543, 5
      %v4345 = vsel %vm1214, %v4343, %v4344
      %v4346 = vrot.slane %v4264, 5
      %v4347 = vrot.slane %v4346, 4
      %v4348 = vrot.slane %v3545, 5
      %v4349 = vsel %vm1214, %v4347, %v4348
      %v4350 = vrot.slane %v4348, 4
      %v4351 = vrot.slane %v3546, 5
      %v4352 = vsel %vm1214, %v4350, %v4351
      %v4353 = vrot.slane %v4265, 5
      %v4354 = vrot.slane %v4353, 4
      %v4355 = vrot.slane %v3548, 5
      %v4356 = vsel %vm1214, %v4354, %v4355
      %v4357 = vrot.slane %v4355, 4
      %v4358 = vrot.slane %v3549, 5
      %v4359 = vsel %vm1214, %v4357, %v4358
      %v4360 = vrot.slane %v4266, 5
      %v4361 = vrot.slane %v4360, 4
      %v4362 = vrot.slane %v3551, 5
      %v4363 = vsel %vm1214, %v4361, %v4362
      %v4364 = vrot.slane %v4362, 4
      %v4365 = vrot.slane %v3552, 5
      %v4366 = vsel %vm1214, %v4364, %v4365
      %v4367 = vrot.slane %v4267, 5
      %v4368 = vrot.slane %v4367, 4
      %v4369 = vrot.slane %v3554, 5
      %v4370 = vsel %vm1214, %v4368, %v4369
      %v4371 = vrot.slane %v4369, 4
      %v4372 = vrot.slane %v3555, 5
      %v4373 = vsel %vm1214, %v4371, %v4372
      %v4374 = vrot.slane %v4268, 5
      %v4375 = vrot.slane %v4374, 4
      %v4376 = vrot.slane %v3557, 5
      %v4377 = vsel %vm1214, %v4375, %v4376
      %v4378 = vrot.slane %v4376, 4
      %v4379 = vrot.slane %v3558, 5
      %v4380 = vsel %vm1214, %v4378, %v4379
      %v4381 = vrot.slane %v4269, 5
      %v4382 = vrot.slane %v4381, 4
      %v4383 = vrot.slane %v3560, 5
      %v4384 = vsel %vm1214, %v4382, %v4383
      %v4385 = vrot.slane %v4383, 4
      %v4386 = vrot.slane %v3561, 5
      %v4387 = vsel %vm1214, %v4385, %v4386
      %v4388 = vrot.slane %v4270, 5
      %v4389 = vrot.slane %v4388, 4
      %v4390 = vrot.slane %v3563, 5
      %v4391 = vsel %vm1214, %v4389, %v4390
      %v4392 = vrot.slane %v4390, 4
      %v4393 = vrot.slane %v3564, 5
      %v4394 = vsel %vm1214, %v4392, %v4393
      %v4395 = vrot.slane %v4271, 5
      %v4396 = vrot.slane %v4395, 4
      %v4397 = vrot.slane %v3566, 5
      %v4398 = vsel %vm1214, %v4396, %v4397
      %v4399 = vrot.slane %v4397, 4
      %v4400 = vrot.slane %v3567, 5
      %v4401 = vsel %vm1214, %v4399, %v4400
      %v4402 = vrot.slane %v4272, 5
      %v4403 = vrot.slane %v4402, 4
      %v4404 = vrot.slane %v3569, 5
      %v4405 = vsel %vm1214, %v4403, %v4404
      %v4406 = vrot.slane %v4404, 4
      %v4407 = vrot.slane %v3570, 5
      %v4408 = vsel %vm1214, %v4406, %v4407
      %v4409 = vrot.slane %v4273, 5
      %v4410 = vrot.slane %v4409, 4
      %v4411 = vrot.slane %v3572, 5
      %v4412 = vsel %vm1214, %v4410, %v4411
      %v4413 = vrot.slane %v4411, 4
      %v4414 = vrot.slane %v3573, 5
      %v4415 = vsel %vm1214, %v4413, %v4414
      %v4416 = vrot.slane %v4274, 5
      %v4417 = vrot.slane %v4416, 4
      %v4418 = vrot.slane %v3575, 5
      %v4419 = vsel %vm1214, %v4417, %v4418
      %v4420 = vrot.slane %v4418, 4
      %v4421 = vrot.slane %v3576, 5
      %v4422 = vsel %vm1214, %v4420, %v4421
      %v4423 = vrot.slane %v4275, 5
      %v4424 = vrot.slane %v4423, 4
      %v4425 = vrot.slane %v3578, 5
      %v4426 = vsel %vm1214, %v4424, %v4425
      %v4427 = vrot.slane %v4425, 4
      %v4428 = vrot.slane %v3579, 5
      %v4429 = vsel %vm1214, %v4427, %v4428
      %v4430 = vrot.slane %v4276, 5
      %v4431 = vrot.slane %v4430, 4
      %v4432 = vrot.slane %v3581, 5
      %v4433 = vsel %vm1214, %v4431, %v4432
      %v4434 = vrot.slane %v4432, 4
      %v4435 = vrot.slane %v3582, 5
      %v4436 = vsel %vm1214, %v4434, %v4435
      %s4437 = scalar_lea.vmem %s1, 32
      %v4438 = vld [vmem:[%s4437] sm:$0xf]
      %v4439 = vunpack.c.l.b16 %v4328
      %v4440 = vunpack.c.l.b16 %v4331
      %v4441 = vunpack.c.l.b16 %v4335
      %v4442 = vunpack.c.l.b16 %v4338
      %v4443 = vunpack.c.l.b16 %v4342
      %v4444 = vunpack.c.l.b16 %v4345
      %v4445 = vunpack.c.l.b16 %v4349
      %v4446 = vunpack.c.l.b16 %v4352
      %v4447 = vunpack.c.l.b16 %v4356
      %v4448 = vunpack.c.l.b16 %v4359
      %v4449 = vunpack.c.l.b16 %v4363
      %v4450 = vunpack.c.l.b16 %v4366
      %v4451 = vunpack.c.l.b16 %v4370
      %v4452 = vunpack.c.l.b16 %v4373
      %v4453 = vunpack.c.l.b16 %v4377
      %v4454 = vunpack.c.l.b16 %v4380
      %v4455 = vunpack.c.l.b16 %v4384
      %v4456 = vunpack.c.l.b16 %v4387
      %v4457 = vunpack.c.l.b16 %v4391
      %v4458 = vunpack.c.l.b16 %v4394
      %v4459 = vunpack.c.l.b16 %v4398
      %v4460 = vunpack.c.l.b16 %v4401
      %v4461 = vunpack.c.l.b16 %v4405
      %v4462 = vunpack.c.l.b16 %v4408
      %v4463 = vunpack.c.l.b16 %v4412
      %v4464 = vunpack.c.l.b16 %v4415
      %v4465 = vunpack.c.l.b16 %v4419
      %v4466 = vunpack.c.l.b16 %v4422
      %v4467 = vunpack.c.l.b16 %v4426
      %v4468 = vunpack.c.l.b16 %v4429
      %v4469 = vunpack.c.l.b16 %v4433
      %v4470 = vunpack.c.l.b16 %v4436
      %v4471 = vpack.c.b16 %v4440, %v4439
      %v4472 = vpack.c.b16 %v4442, %v4441
      %v4473 = vpack.c.b16 %v4444, %v4443
      %v4474 = vpack.c.b16 %v4446, %v4445
      %v4475 = vpack.c.b16 %v4448, %v4447
      %v4476 = vpack.c.b16 %v4450, %v4449
      %v4477 = vpack.c.b16 %v4452, %v4451
      %v4478 = vpack.c.b16 %v4454, %v4453
      %v4479 = vpack.c.b16 %v4456, %v4455
      %v4480 = vpack.c.b16 %v4458, %v4457
      %v4481 = vpack.c.b16 %v4460, %v4459
      %v4482 = vpack.c.b16 %v4462, %v4461
      %v4483 = vpack.c.b16 %v4464, %v4463
      %v4484 = vpack.c.b16 %v4466, %v4465
      %v4485 = vpack.c.b16 %v4468, %v4467
      %v4486 = vpack.c.b16 %v4470, %v4469
      %v4488 = vsel %vm658, %v4471, 0
      %v4491 = vsel %vm658, %v4472, 0
      %v4494 = vsel %vm658, %v4473, 0
      %v4497 = vsel %vm658, %v4474, 0
      %v4500 = vsel %vm658, %v4475, 0
      %v4503 = vsel %vm658, %v4476, 0
      %v4506 = vsel %vm658, %v4477, 0
      %v4509 = vsel %vm658, %v4478, 0
      %v4512 = vsel %vm658, %v4479, 0
      %v4515 = vsel %vm658, %v4480, 0
      %v4518 = vsel %vm658, %v4481, 0
      %v4521 = vsel %vm658, %v4482, 0
      %v4524 = vsel %vm658, %v4483, 0
      %v4527 = vsel %vm658, %v4484, 0
      %v4530 = vsel %vm658, %v4485, 0
      %v4533 = vsel %vm658, %v4486, 0
      %v4536 = vsel %vm707, %v4438, 0
      %4538 = vmatprep.subr.bf16.mxu0 0
      %4539 = vmatpush1.bf16.msra.mxu0 %v4536
      %4540 = vmatprep.subr.bf16.mxu0 0
      %4541 = vmatpush1.bf16.msra.mxu0 0
      %4542 = vmatprep.subr.bf16.mxu0 0
      %4543 = vmatpush1.bf16.msra.mxu0 0
      %4544 = vmatprep.subr.bf16.mxu0 0
      %4545 = vmatpush1.bf16.msra.mxu0 0
      %4546 = vmatprep.subr.bf16.mxu0 0
      %4547 = vmatpush1.bf16.msra.mxu0 0
      %4548 = vmatprep.subr.bf16.mxu0 0
      %4549 = vmatpush1.bf16.msra.mxu0 0
      %4550 = vmatprep.subr.bf16.mxu0 0
      %4551 = vmatpush1.bf16.msra.mxu0 0
      %4552 = vmatprep.subr.bf16.mxu0 0
      %4553 = vmatpush1.bf16.msra.mxu0 0
      %4554 = vmatprep.subr.bf16.mxu0 0
      %4555 = vmatpush1.bf16.msra.mxu0 0
      %4556 = vmatprep.subr.bf16.mxu0 0
      %4557 = vmatpush1.bf16.msra.mxu0 0
      %4558 = vmatprep.subr.bf16.mxu0 0
      %4559 = vmatpush1.bf16.msra.mxu0 0
      %4560 = vmatprep.subr.bf16.mxu0 0
      %4561 = vmatpush1.bf16.msra.mxu0 0
      %4562 = vmatprep.subr.bf16.mxu0 0
      %4563 = vmatpush1.bf16.msra.mxu0 0
      %4564 = vmatprep.subr.bf16.mxu0 0
      %4565 = vmatpush1.bf16.msra.mxu0 0
      %4566 = vmatprep.subr.bf16.mxu0 0
      %4567 = vmatpush1.bf16.msra.mxu0 0
      %4568 = vmatprep.subr.bf16.mxu0 0
      %4569 = vmatpush1.bf16.msra.mxu0 0
      %4570 = vmatprep.mubr.bf16.mxu0 0
      %4571 = vmatmul.mubr.bf16.gmra.mrb[0].mxu0 %v4488
      %v4572 = vpop.f32.mrb[0].mxu0
      %v4573 = vadd.f32 0.0, %v4572
      %v4574 = vpop.f32.mrb[0].mxu0
      %v4575 = vpop.f32.mrb[0].mxu0
      %v4576 = vadd.f32 0.0, %v4575
      %v4577 = vpop.f32.mrb[0].mxu0
      %4578 = vmatprep.mubr.bf16.mxu0 0
      %4579 = vmatmul.mubr.bf16.gmra.mrb[0].mxu0 %v4491
      %v4580 = vpop.f32.mrb[0].mxu0
      %v4581 = vadd.f32 0.0, %v4580
      %v4582 = vpop.f32.mrb[0].mxu0
      %v4583 = vpop.f32.mrb[0].mxu0
      %v4584 = vadd.f32 0.0, %v4583
      %v4585 = vpop.f32.mrb[0].mxu0
      %4586 = vmatprep.mubr.bf16.mxu0 0
      %4587 = vmatmul.mubr.bf16.gmra.mrb[0].mxu0 %v4494
      %v4588 = vpop.f32.mrb[0].mxu0
      %v4589 = vadd.f32 0.0, %v4588
      %v4590 = vpop.f32.mrb[0].mxu0
      %v4591 = vpop.f32.mrb[0].mxu0
      %v4592 = vadd.f32 0.0, %v4591
      %v4593 = vpop.f32.mrb[0].mxu0
      %4594 = vmatprep.mubr.bf16.mxu0 0
      %4595 = vmatmul.mubr.bf16.gmra.mrb[0].mxu0 %v4497
      %v4596 = vpop.f32.mrb[0].mxu0
      %v4597 = vadd.f32 0.0, %v4596
      %v4598 = vpop.f32.mrb[0].mxu0
      %v4599 = vpop.f32.mrb[0].mxu0
      %v4600 = vadd.f32 0.0, %v4599
      %v4601 = vpop.f32.mrb[0].mxu0
      %4602 = vmatprep.mubr.bf16.mxu0 0
      %4603 = vmatmul.mubr.bf16.gmra.mrb[0].mxu0 %v4500
      %v4604 = vpop.f32.mrb[0].mxu0
      %v4605 = vadd.f32 0.0, %v4604
      %v4606 = vpop.f32.mrb[0].mxu0
      %v4607 = vpop.f32.mrb[0].mxu0
      %v4608 = vadd.f32 0.0, %v4607
      %v4609 = vpop.f32.mrb[0].mxu0
      %4610 = vmatprep.mubr.bf16.mxu0 0
      %4611 = vmatmul.mubr.bf16.gmra.mrb[0].mxu0 %v4503
      %v4612 = vpop.f32.mrb[0].mxu0
      %v4613 = vadd.f32 0.0, %v4612
      %v4614 = vpop.f32.mrb[0].mxu0
      %v4615 = vpop.f32.mrb[0].mxu0
      %v4616 = vadd.f32 0.0, %v4615
      %v4617 = vpop.f32.mrb[0].mxu0
      %4618 = vmatprep.mubr.bf16.mxu0 0
      %4619 = vmatmul.mubr.bf16.gmra.mrb[0].mxu0 %v4506
      %v4620 = vpop.f32.mrb[0].mxu0
      %v4621 = vadd.f32 0.0, %v4620
      %v4622 = vpop.f32.mrb[0].mxu0
      %v4623 = vpop.f32.mrb[0].mxu0
      %v4624 = vadd.f32 0.0, %v4623
      %v4625 = vpop.f32.mrb[0].mxu0
      %4626 = vmatprep.mubr.bf16.mxu0 0
      %4627 = vmatmul.mubr.bf16.gmra.mrb[0].mxu0 %v4509
      %v4628 = vpop.f32.mrb[0].mxu0
      %v4629 = vadd.f32 0.0, %v4628
      %v4630 = vpop.f32.mrb[0].mxu0
      %v4631 = vpop.f32.mrb[0].mxu0
      %v4632 = vadd.f32 0.0, %v4631
      %v4633 = vpop.f32.mrb[0].mxu0
      %4634 = vmatprep.mubr.bf16.mxu0 0
      %4635 = vmatmul.mubr.bf16.gmra.mrb[0].mxu0 %v4512
      %v4636 = vpop.f32.mrb[0].mxu0
      %v4637 = vadd.f32 0.0, %v4636
      %v4638 = vpop.f32.mrb[0].mxu0
      %v4639 = vpop.f32.mrb[0].mxu0
      %v4640 = vadd.f32 0.0, %v4639
      %v4641 = vpop.f32.mrb[0].mxu0
      %4642 = vmatprep.mubr.bf16.mxu0 0
      %4643 = vmatmul.mubr.bf16.gmra.mrb[0].mxu0 %v4515
      %v4644 = vpop.f32.mrb[0].mxu0
      %v4645 = vadd.f32 0.0, %v4644
      %v4646 = vpop.f32.mrb[0].mxu0
      %v4647 = vpop.f32.mrb[0].mxu0
      %v4648 = vadd.f32 0.0, %v4647
      %v4649 = vpop.f32.mrb[0].mxu0
      %4650 = vmatprep.mubr.bf16.mxu0 0
      %4651 = vmatmul.mubr.bf16.gmra.mrb[0].mxu0 %v4518
      %v4652 = vpop.f32.mrb[0].mxu0
      %v4653 = vadd.f32 0.0, %v4652
      %v4654 = vpop.f32.mrb[0].mxu0
      %v4655 = vpop.f32.mrb[0].mxu0
      %v4656 = vadd.f32 0.0, %v4655
      %v4657 = vpop.f32.mrb[0].mxu0
      %4658 = vmatprep.mubr.bf16.mxu0 0
      %4659 = vmatmul.mubr.bf16.gmra.mrb[0].mxu0 %v4521
      %v4660 = vpop.f32.mrb[0].mxu0
      %v4661 = vadd.f32 0.0, %v4660
      %v4662 = vpop.f32.mrb[0].mxu0
      %v4663 = vpop.f32.mrb[0].mxu0
      %v4664 = vadd.f32 0.0, %v4663
      %v4665 = vpop.f32.mrb[0].mxu0
      %4666 = vmatprep.mubr.bf16.mxu0 0
      %4667 = vmatmul.mubr.bf16.gmra.mrb[0].mxu0 %v4524
      %v4668 = vpop.f32.mrb[0].mxu0
      %v4669 = vadd.f32 0.0, %v4668
      %v4670 = vpop.f32.mrb[0].mxu0
      %v4671 = vpop.f32.mrb[0].mxu0
      %v4672 = vadd.f32 0.0, %v4671
      %v4673 = vpop.f32.mrb[0].mxu0
      %4674 = vmatprep.mubr.bf16.mxu0 0
      %4675 = vmatmul.mubr.bf16.gmra.mrb[0].mxu0 %v4527
      %v4676 = vpop.f32.mrb[0].mxu0
      %v4677 = vadd.f32 0.0, %v4676
      %v4678 = vpop.f32.mrb[0].mxu0
      %v4679 = vpop.f32.mrb[0].mxu0
      %v4680 = vadd.f32 0.0, %v4679
      %v4681 = vpop.f32.mrb[0].mxu0
      %4682 = vmatprep.mubr.bf16.mxu0 0
      %4683 = vmatmul.mubr.bf16.gmra.mrb[0].mxu0 %v4530
      %v4684 = vpop.f32.mrb[0].mxu0
      %v4685 = vadd.f32 0.0, %v4684
      %v4686 = vpop.f32.mrb[0].mxu0
      %v4687 = vpop.f32.mrb[0].mxu0
      %v4688 = vadd.f32 0.0, %v4687
      %v4689 = vpop.f32.mrb[0].mxu0
      %4690 = vmatprep.mubr.bf16.mxu0 0
      %4691 = vmatmul.mubr.bf16.gmra.mrb[0].mxu0 %v4533
      %v4692 = vpop.f32.mrb[0].mxu0
      %v4693 = vadd.f32 0.0, %v4692
      %v4694 = vpop.f32.mrb[0].mxu0
      %v4695 = vpop.f32.mrb[0].mxu0
      %v4696 = vadd.f32 0.0, %v4695
      %v4697 = vpop.f32.mrb[0].mxu0
      %4698 = vdwg.mxu0
      %v4699 = vadd.f32 %v4229, %v4573
      %v4700 = vadd.f32 %v4230, %v4576
      %v4701 = vadd.f32 %v4231, %v4581
      %v4702 = vadd.f32 %v4232, %v4584
      %v4703 = vadd.f32 %v4233, %v4589
      %v4704 = vadd.f32 %v4234, %v4592
      %v4705 = vadd.f32 %v4235, %v4597
      %v4706 = vadd.f32 %v4236, %v4600
      %v4707 = vadd.f32 %v4237, %v4605
      %v4708 = vadd.f32 %v4238, %v4608
      %v4709 = vadd.f32 %v4239, %v4613
      %v4710 = vadd.f32 %v4240, %v4616
      %v4711 = vadd.f32 %v4241, %v4621
      %v4712 = vadd.f32 %v4242, %v4624
      %v4713 = vadd.f32 %v4243, %v4629
      %v4714 = vadd.f32 %v4244, %v4632
      %v4715 = vadd.f32 %v4245, %v4637
      %v4716 = vadd.f32 %v4246, %v4640
      %v4717 = vadd.f32 %v4247, %v4645
      %v4718 = vadd.f32 %v4248, %v4648
      %v4719 = vadd.f32 %v4249, %v4653
      %v4720 = vadd.f32 %v4250, %v4656
      %v4721 = vadd.f32 %v4251, %v4661
      %v4722 = vadd.f32 %v4252, %v4664
      %v4723 = vadd.f32 %v4253, %v4669
      %v4724 = vadd.f32 %v4254, %v4672
      %v4725 = vadd.f32 %v4255, %v4677
      %v4726 = vadd.f32 %v4256, %v4680
      %v4727 = vadd.f32 %v4257, %v4685
      %v4728 = vadd.f32 %v4258, %v4688
      %v4729 = vadd.f32 %v4259, %v4693
      %v4730 = vadd.f32 %v4260, %v4696
      %v4731 = vld [vmem:[%s2] sm:$0x1]
      %v4733 = vlaneseq
      %v4734 = vshrl.u32 %v4733, 7
      %v4735 = vsub.s32 0, %v4734
      %v4736 = vrot.slane %v4731, %v4735
      %v4738 = vadd.f32 %v4699, %v4736
      %v4739 = vadd.f32 %v4700, %v4736
      %v4740 = vadd.f32 %v4701, %v4736
      %v4741 = vadd.f32 %v4702, %v4736
      %v4742 = vadd.f32 %v4703, %v4736
      %v4743 = vadd.f32 %v4704, %v4736
      %v4744 = vadd.f32 %v4705, %v4736
      %v4745 = vadd.f32 %v4706, %v4736
      %v4746 = vadd.f32 %v4707, %v4736
      %v4747 = vadd.f32 %v4708, %v4736
      %v4748 = vadd.f32 %v4709, %v4736
      %v4749 = vadd.f32 %v4710, %v4736
      %v4750 = vadd.f32 %v4711, %v4736
      %v4751 = vadd.f32 %v4712, %v4736
      %v4752 = vadd.f32 %v4713, %v4736
      %v4753 = vadd.f32 %v4714, %v4736
      %v4754 = vadd.f32 %v4715, %v4736
      %v4755 = vadd.f32 %v4716, %v4736
      %v4756 = vadd.f32 %v4717, %v4736
      %v4757 = vadd.f32 %v4718, %v4736
      %v4758 = vadd.f32 %v4719, %v4736
      %v4759 = vadd.f32 %v4720, %v4736
      %v4760 = vadd.f32 %v4721, %v4736
      %v4761 = vadd.f32 %v4722, %v4736
      %v4762 = vadd.f32 %v4723, %v4736
      %v4763 = vadd.f32 %v4724, %v4736
      %v4764 = vadd.f32 %v4725, %v4736
      %v4765 = vadd.f32 %v4726, %v4736
      %v4766 = vadd.f32 %v4727, %v4736
      %v4767 = vadd.f32 %v4728, %v4736
      %v4768 = vadd.f32 %v4729, %v4736
      %v4769 = vadd.f32 %v4730, %v4736
      %v4770 = vmax.f32 %v4738, 0.0
      %v4771 = vmax.f32 %v4739, 0.0
      %v4772 = vmax.f32 %v4740, 0.0
      %v4773 = vmax.f32 %v4741, 0.0
      %v4774 = vmax.f32 %v4742, 0.0
      %v4775 = vmax.f32 %v4743, 0.0
      %v4776 = vmax.f32 %v4744, 0.0
      %v4777 = vmax.f32 %v4745, 0.0
      %v4778 = vmax.f32 %v4746, 0.0
      %v4779 = vmax.f32 %v4747, 0.0
      %v4780 = vmax.f32 %v4748, 0.0
      %v4781 = vmax.f32 %v4749, 0.0
      %v4782 = vmax.f32 %v4750, 0.0
      %v4783 = vmax.f32 %v4751, 0.0
      %v4784 = vmax.f32 %v4752, 0.0
      %v4785 = vmax.f32 %v4753, 0.0
      %v4786 = vmax.f32 %v4754, 0.0
      %v4787 = vmax.f32 %v4755, 0.0
      %v4788 = vmax.f32 %v4756, 0.0
      %v4789 = vmax.f32 %v4757, 0.0
      %v4790 = vmax.f32 %v4758, 0.0
      %v4791 = vmax.f32 %v4759, 0.0
      %v4792 = vmax.f32 %v4760, 0.0
      %v4793 = vmax.f32 %v4761, 0.0
      %v4794 = vmax.f32 %v4762, 0.0
      %v4795 = vmax.f32 %v4763, 0.0
      %v4796 = vmax.f32 %v4764, 0.0
      %v4797 = vmax.f32 %v4765, 0.0
      %v4798 = vmax.f32 %v4766, 0.0
      %v4799 = vmax.f32 %v4767, 0.0
      %v4800 = vmax.f32 %v4768, 0.0
      %v4801 = vmax.f32 %v4769, 0.0
      %v4802 = vpack.c.bf16 %v4771, %v4770
      %v4803 = vpack.c.bf16 %v4773, %v4772
      %v4804 = vpack.c.bf16 %v4775, %v4774
      %v4805 = vpack.c.bf16 %v4777, %v4776
      %v4806 = vpack.c.bf16 %v4779, %v4778
      %v4807 = vpack.c.bf16 %v4781, %v4780
      %v4808 = vpack.c.bf16 %v4783, %v4782
      %v4809 = vpack.c.bf16 %v4785, %v4784
      %v4810 = vpack.c.bf16 %v4787, %v4786
      %v4811 = vpack.c.bf16 %v4789, %v4788
      %v4812 = vpack.c.bf16 %v4791, %v4790
      %v4813 = vpack.c.bf16 %v4793, %v4792
      %v4814 = vpack.c.bf16 %v4795, %v4794
      %v4815 = vpack.c.bf16 %v4797, %v4796
      %v4816 = vpack.c.bf16 %v4799, %v4798
      %v4817 = vpack.c.bf16 %v4801, %v4800
      %v4834 = vunpack.c.l.b16 %v4802
      %v4835 = vunpack.c.h.b16 %v4802
      %v4836 = vunpack.c.l.b16 %v4803
      %v4837 = vunpack.c.h.b16 %v4803
      %v4838 = vunpack.c.l.b16 %v4804
      %v4839 = vunpack.c.h.b16 %v4804
      %v4840 = vunpack.c.l.b16 %v4805
      %v4841 = vunpack.c.h.b16 %v4805
      %v4842 = vunpack.c.l.b16 %v4806
      %v4843 = vunpack.c.h.b16 %v4806
      %v4844 = vunpack.c.l.b16 %v4807
      %v4845 = vunpack.c.h.b16 %v4807
      %v4846 = vunpack.c.l.b16 %v4808
      %v4847 = vunpack.c.h.b16 %v4808
      %v4848 = vunpack.c.l.b16 %v4809
      %v4849 = vunpack.c.h.b16 %v4809
      %v4850 = vunpack.c.l.b16 %v4810
      %v4851 = vunpack.c.h.b16 %v4810
      %v4852 = vunpack.c.l.b16 %v4811
      %v4853 = vunpack.c.h.b16 %v4811
      %v4854 = vunpack.c.l.b16 %v4812
      %v4855 = vunpack.c.h.b16 %v4812
      %v4856 = vunpack.c.l.b16 %v4813
      %v4857 = vunpack.c.h.b16 %v4813
      %v4858 = vunpack.c.l.b16 %v4814
      %v4859 = vunpack.c.h.b16 %v4814
      %v4860 = vunpack.c.l.b16 %v4815
      %v4861 = vunpack.c.h.b16 %v4815
      %v4862 = vunpack.c.l.b16 %v4816
      %v4863 = vunpack.c.h.b16 %v4816
      %v4864 = vunpack.c.l.b16 %v4817
      %v4865 = vunpack.c.h.b16 %v4817
      %v4866 = vpack.c.b16 %v4834, %v4834
      %v4867 = vpack.c.b16 %v4835, %v4835
      %v4868 = vpack.c.b16 %v4836, %v4836
      %v4869 = vpack.c.b16 %v4837, %v4837
      %v4870 = vpack.c.b16 %v4838, %v4838
      %v4871 = vpack.c.b16 %v4839, %v4839
      %v4872 = vpack.c.b16 %v4840, %v4840
      %v4873 = vpack.c.b16 %v4841, %v4841
      %v4874 = vpack.c.b16 %v4842, %v4842
      %v4875 = vpack.c.b16 %v4843, %v4843
      %v4876 = vpack.c.b16 %v4844, %v4844
      %v4877 = vpack.c.b16 %v4845, %v4845
      %v4878 = vpack.c.b16 %v4846, %v4846
      %v4879 = vpack.c.b16 %v4847, %v4847
      %v4880 = vpack.c.b16 %v4848, %v4848
      %v4881 = vpack.c.b16 %v4849, %v4849
      %v4882 = vpack.c.b16 %v4850, %v4850
      %v4883 = vpack.c.b16 %v4851, %v4851
      %v4884 = vpack.c.b16 %v4852, %v4852
      %v4885 = vpack.c.b16 %v4853, %v4853
      %v4886 = vpack.c.b16 %v4854, %v4854
      %v4887 = vpack.c.b16 %v4855, %v4855
      %v4888 = vpack.c.b16 %v4856, %v4856
      %v4889 = vpack.c.b16 %v4857, %v4857
      %v4890 = vpack.c.b16 %v4858, %v4858
      %v4891 = vpack.c.b16 %v4859, %v4859
      %v4892 = vpack.c.b16 %v4860, %v4860
      %v4893 = vpack.c.b16 %v4861, %v4861
      %v4894 = vpack.c.b16 %v4862, %v4862
      %v4895 = vpack.c.b16 %v4863, %v4863
      %v4896 = vpack.c.b16 %v4864, %v4864
      %v4897 = vpack.c.b16 %v4865, %v4865
      %4930 = vst [vmem:[%s170] sm:$0xf] %v4866
      %4931 = vst [vmem:[%s170 + $0x4] sm:$0xf] %v4867
      %4932 = vst [vmem:[%s170 + $0x8] sm:$0xf] %v4868
      %4933 = vst [vmem:[%s170 + $0xc] sm:$0xf] %v4869
      %4934 = vst [vmem:[%s170 + $0x10] sm:$0xf] %v4870
      %4935 = vst [vmem:[%s170 + $0x14] sm:$0xf] %v4871
      %4936 = vst [vmem:[%s170 + $0x18] sm:$0xf] %v4872
      %4937 = vst [vmem:[%s170 + $0x1c] sm:$0xf] %v4873
      %4938 = vst [vmem:[%s170 + $0x20] sm:$0xf] %v4874
      %4939 = vst [vmem:[%s170 + $0x24] sm:$0xf] %v4875
      %4940 = vst [vmem:[%s170 + $0x28] sm:$0xf] %v4876
      %4941 = vst [vmem:[%s170 + $0x2c] sm:$0xf] %v4877
      %4942 = vst [vmem:[%s170 + $0x30] sm:$0xf] %v4878
      %4943 = vst [vmem:[%s170 + $0x34] sm:$0xf] %v4879
      %4944 = vst [vmem:[%s170 + $0x38] sm:$0xf] %v4880
      %4945 = vst [vmem:[%s170 + $0x3c] sm:$0xf] %v4881
      %4946 = vst [vmem:[%s170 + $0x40] sm:$0xf] %v4882
      %4947 = vst [vmem:[%s170 + $0x44] sm:$0xf] %v4883
      %4948 = vst [vmem:[%s170 + $0x48] sm:$0xf] %v4884
      %4949 = vst [vmem:[%s170 + $0x4c] sm:$0xf] %v4885
      %4950 = vst [vmem:[%s170 + $0x50] sm:$0xf] %v4886
      %4951 = vst [vmem:[%s170 + $0x54] sm:$0xf] %v4887
      %4952 = vst [vmem:[%s170 + $0x58] sm:$0xf] %v4888
      %4953 = vst [vmem:[%s170 + $0x5c] sm:$0xf] %v4889
      %4954 = vst [vmem:[%s170 + $0x60] sm:$0xf] %v4890
      %4955 = vst [vmem:[%s170 + $0x64] sm:$0xf] %v4891
      %4956 = vst [vmem:[%s170 + $0x68] sm:$0xf] %v4892
      %4957 = vst [vmem:[%s170 + $0x6c] sm:$0xf] %v4893
      %4958 = vst [vmem:[%s170 + $0x70] sm:$0xf] %v4894
      %4959 = vst [vmem:[%s170 + $0x74] sm:$0xf] %v4895
      %4960 = vst [vmem:[%s170 + $0x78] sm:$0xf] %v4896
      %4961 = vst [vmem:[%s170 + $0x7c] sm:$0xf] %v4897
      %p4962 = scmp.lt.s32.totalorder %s14, 1
      %s4963 = scalar_select %p4962, %s14, 1
      %s4964 = smul.addr %s4963, 32
      %s4965 = smul.addr %s4964, 4
      %s4966 = scalar_lea.vmem %s3, %s4965
      // Predicated region
      $region33: #{base_encoder_forward.5} parent=31 // pred_check
        %p4967 = pneg %p100
      $region34: #{base_encoder_forward.5} parent=31 // pred_check_branch
        %4969 = sbr.rel (%p4967) target = $region36
      $region35: #{base_encoder_forward.5} parent=31 // pred_region
        _
      $region36: #{base_encoder_forward.5} parent=31 // pred_fallthru
        _
    $region32: #{base_encoder_forward.5} parent=5 // pred_fallthru
      _
    %p4970 = scmp.le.s32.totalorder 2, %s9
    // Predicated region
    $region37: #{base_encoder_forward.5} parent=5 // pred_check
      %p4971 = pneg %p4970
    $region38: #{base_encoder_forward.5} parent=5 // pred_check_branch
      %4973 = sbr.rel (%p4971) target = $region40
    $region39: #{base_encoder_forward.5} parent=5 // pred_region
      %s4974 = ssub.s32 %s9, 2
      // Predicated region
      $region41: #{base_encoder_forward.5} parent=39 // pred_check
        %p4975 = pneg %p106
      $region42: #{base_encoder_forward.5} parent=39 // pred_check_branch
        %4977 = sbr.rel (%p4975) target = $region44
      $region43: #{base_encoder_forward.5} parent=39 // pred_region
        %p4978 = scmp.lt.s32.totalorder %s15, 1
        %s4979 = scalar_select %p4978, %s15, 1
        %s4980 = smul.addr %s4979, 32
        %s4981 = smul.addr %s4980, 4
        %s4982 = scalar_lea.vmem %s3, %s4981
      $region44: #{base_encoder_forward.5} parent=39 // pred_fallthru
        _
    $region40: #{base_encoder_forward.5} parent=5 // pred_fallthru
      _
  $region6: #{base_encoder_forward.5} parent=0 // loop_footer
    %s13 = sadd.s32 1, %s9
  $region7: #{base_encoder_forward.5} parent=0 // loop_footer_branch
    %8 = sbr.rel target = $region3
  $region8: #{base_encoder_forward.5} parent=0 // loop_exit
    _

// kernel: base_encoder_forward.8
$region0: #{base_encoder_forward.8}
  #allocation0 [shape = 'u32[]', space=smem, size = 0x4, offset = 0x4, fixed_abs, tag = 'smem constant byte address 0x4 - core index']
  #allocation1 [shape = 'u32[144,128]{1,0:T(1,128)}', space=vmem, size = 0x12000, scoped, tag = 'internal scratch']
  %s0 = inlined_call_operand.vmem [shape: bf16[2,3,3,128], index: 0, kind: input, shape index: {}]
  %s1 = inlined_call_operand.vmem [shape: bf16[2,3,3,128], index: 1, kind: input, shape index: {}]
  %s2 = inlined_call_operand.vmem [shape: bf16[2,3,3,128], index: 2, kind: input, shape index: {}]
  %s3 = inlined_call_operand.vmem [shape: bf16[2,3,3,128], index: 3, kind: input, shape index: {}]
  %s4 = inlined_call_operand.vmem [shape: bf16[9,128,256], index: 4, kind: input, shape index: {}]
  %s5 = inlined_call_operand.vmem [shape: f32[1,256], index: 5, kind: input, shape index: {}]
  %s6 = inlined_call_operand.vmem [shape: bf16[2,4,256], index: 6, kind: output, shape index: {}]
  %s7 = sld [smem:[#allocation0]]
  $region57: #{base_encoder_forward.8} parent=0
    _
  %s9 = ssub.s32 1, %s7
  %s10 = scalar_select 0, %s9, %s7
  loop: start=0, step=1, limit=4
  $region2: #{base_encoder_forward.8} parent=0 // loop_pre_header
    _
  $region3: #{base_encoder_forward.8} parent=0 // loop_header
    %s12 = sphi 0, %s16
    %p13 = scmp.ge.s32.totalorder %s12, 4
    %s22 = sphi 0, %s24
    %s25 = sphi 0, %s22
    %s26 = sphi 0, %s25
    %s42 = sphi 0, %s26
    %s48 = sphi 0, %s50
    %s51 = sphi 0, %s48
    %s52 = sphi 0, %s51
    %s68 = sphi 0, %s52
    %s74 = sphi 0, %s76
    %s77 = sphi 0, %s74
    %s78 = sphi 0, %s77
    %s94 = sphi 0, %s78
    %s100 = sphi 0, %s102
    %s103 = sphi 0, %s100
    %s104 = sphi 0, %s103
    %s120 = sphi 0, %s104
    %s124 = sphi 0, %s124
    %s126 = sphi 0, %s124
    %s127 = sphi 0, %s126
    %s141 = sphi 0, %s127
    %s145 = sphi 0, %s145
    %s147 = sphi 0, %s145
    %s148 = sphi 0, %s147
    %s162 = sphi 0, %s148
    %s168 = sphi 0, %s170
    %s171 = sphi 0, %s168
    %s172 = sphi 0, %s171
    %s188 = sphi 0, %s172
  $region4: #{base_encoder_forward.8} parent=0 // loop_header_branch
    %15 = sbr.rel (%p13) target = $region8
  $region5: #{base_encoder_forward.8} parent=0 // loop_body
    %s17 = ssub.s32 %s12, 1
    %s18 = ssub.s32 %s12, 2
    %s19 = sadd.s32 %s12, 1
    %s20 = ssub.s32 %s12, %s19
    %p21 = scmp.eq.s32.totalorder %s20, 0
    %s23 = sadd.s32 %s22, 1
    %s24 = scalar_select %p21, %s22, %s23
    %p27 = pneg %p21
    %p28 = scmp.eq.s32.totalorder %s12, 1
    %p29 = por %p27, %p28
    %p30 = scmp.ne.s32.totalorder %s22, %s25
    %p31 = scmp.eq.s32.totalorder %s12, 0
    %p32 = por %p30, %p31
    %p33 = scmp.ne.s32.totalorder %s22, %s25
    %p34 = scmp.eq.s32.totalorder %s17, 1
    %p35 = por %p33, %p34
    %p36 = scmp.ne.s32.totalorder %s25, %s26
    %p37 = scmp.eq.s32.totalorder %s17, 0
    %p38 = por %p36, %p37
    %p39 = scmp.ne.s32.totalorder %s25, %s26
    %p40 = scmp.eq.s32.totalorder %s18, 1
    %p41 = por %p39, %p40
    %p43 = scmp.ne.s32.totalorder %s26, %s42
    %p44 = scmp.eq.s32.totalorder %s18, 0
    %p45 = por %p43, %p44
    %s46 = ssub.s32 %s12, %s19
    %p47 = scmp.eq.s32.totalorder %s46, 0
    %s49 = sadd.s32 %s48, 1
    %s50 = scalar_select %p47, %s48, %s49
    %p53 = pneg %p47
    %p54 = scmp.eq.s32.totalorder %s12, 1
    %p55 = por %p53, %p54
    %p56 = scmp.ne.s32.totalorder %s48, %s51
    %p57 = scmp.eq.s32.totalorder %s12, 0
    %p58 = por %p56, %p57
    %p59 = scmp.ne.s32.totalorder %s48, %s51
    %p60 = scmp.eq.s32.totalorder %s17, 1
    %p61 = por %p59, %p60
    %p62 = scmp.ne.s32.totalorder %s51, %s52
    %p63 = scmp.eq.s32.totalorder %s17, 0
    %p64 = por %p62, %p63
    %p65 = scmp.ne.s32.totalorder %s51, %s52
    %p66 = scmp.eq.s32.totalorder %s18, 1
    %p67 = por %p65, %p66
    %p69 = scmp.ne.s32.totalorder %s52, %s68
    %p70 = scmp.eq.s32.totalorder %s18, 0
    %p71 = por %p69, %p70
    %s72 = ssub.s32 %s12, %s19
    %p73 = scmp.eq.s32.totalorder %s72, 0
    %s75 = sadd.s32 %s74, 1
    %s76 = scalar_select %p73, %s74, %s75
    %p79 = pneg %p73
    %p80 = scmp.eq.s32.totalorder %s12, 1
    %p81 = por %p79, %p80
    %p82 = scmp.ne.s32.totalorder %s74, %s77
    %p83 = scmp.eq.s32.totalorder %s12, 0
    %p84 = por %p82, %p83
    %p85 = scmp.ne.s32.totalorder %s74, %s77
    %p86 = scmp.eq.s32.totalorder %s17, 1
    %p87 = por %p85, %p86
    %p88 = scmp.ne.s32.totalorder %s77, %s78
    %p89 = scmp.eq.s32.totalorder %s17, 0
    %p90 = por %p88, %p89
    %p91 = scmp.ne.s32.totalorder %s77, %s78
    %p92 = scmp.eq.s32.totalorder %s18, 1
    %p93 = por %p91, %p92
    %p95 = scmp.ne.s32.totalorder %s78, %s94
    %p96 = scmp.eq.s32.totalorder %s18, 0
    %p97 = por %p95, %p96
    %s98 = ssub.s32 %s12, %s19
    %p99 = scmp.eq.s32.totalorder %s98, 0
    %s101 = sadd.s32 %s100, 1
    %s102 = scalar_select %p99, %s100, %s101
    %p105 = pneg %p99
    %p106 = scmp.eq.s32.totalorder %s12, 1
    %p107 = por %p105, %p106
    %p108 = scmp.ne.s32.totalorder %s100, %s103
    %p109 = scmp.eq.s32.totalorder %s12, 0
    %p110 = por %p108, %p109
    %p111 = scmp.ne.s32.totalorder %s100, %s103
    %p112 = scmp.eq.s32.totalorder %s17, 1
    %p113 = por %p111, %p112
    %p114 = scmp.ne.s32.totalorder %s103, %s104
    %p115 = scmp.eq.s32.totalorder %s17, 0
    %p116 = por %p114, %p115
    %p117 = scmp.ne.s32.totalorder %s103, %s104
    %p118 = scmp.eq.s32.totalorder %s18, 1
    %p119 = por %p117, %p118
    %p121 = scmp.ne.s32.totalorder %s104, %s120
    %p122 = scmp.eq.s32.totalorder %s18, 0
    %p123 = por %p121, %p122
    %s125 = sadd.s32 %s124, 1
    %p128 = scmp.eq.s32.totalorder %s12, 1
    %p129 = scmp.ne.s32.totalorder %s124, %s126
    %p130 = scmp.eq.s32.totalorder %s12, 0
    %p131 = por %p129, %p130
    %p132 = scmp.ne.s32.totalorder %s124, %s126
    %p133 = scmp.eq.s32.totalorder %s17, 1
    %p134 = por %p132, %p133
    %p135 = scmp.ne.s32.totalorder %s126, %s127
    %p136 = scmp.eq.s32.totalorder %s17, 0
    %p137 = por %p135, %p136
    %p138 = scmp.ne.s32.totalorder %s126, %s127
    %p139 = scmp.eq.s32.totalorder %s18, 1
    %p140 = por %p138, %p139
    %p142 = scmp.ne.s32.totalorder %s127, %s141
    %p143 = scmp.eq.s32.totalorder %s18, 0
    %p144 = por %p142, %p143
    %s146 = sadd.s32 %s145, 1
    %p149 = scmp.eq.s32.totalorder %s12, 1
    %p150 = scmp.ne.s32.totalorder %s145, %s147
    %p151 = scmp.eq.s32.totalorder %s12, 0
    %p152 = por %p150, %p151
    %p153 = scmp.ne.s32.totalorder %s145, %s147
    %p154 = scmp.eq.s32.totalorder %s17, 1
    %p155 = por %p153, %p154
    %p156 = scmp.ne.s32.totalorder %s147, %s148
    %p157 = scmp.eq.s32.totalorder %s17, 0
    %p158 = por %p156, %p157
    %p159 = scmp.ne.s32.totalorder %s147, %s148
    %p160 = scmp.eq.s32.totalorder %s18, 1
    %p161 = por %p159, %p160
    %p163 = scmp.ne.s32.totalorder %s148, %s162
    %p164 = scmp.eq.s32.totalorder %s18, 0
    %p165 = por %p163, %p164
    %s166 = ssub.s32 %s12, %s19
    %p167 = scmp.eq.s32.totalorder %s166, 0
    %s169 = sadd.s32 %s168, 1
    %s170 = scalar_select %p167, %s168, %s169
    %p173 = pneg %p167
    %p174 = scmp.eq.s32.totalorder %s12, 1
    %p175 = por %p173, %p174
    %p176 = scmp.ne.s32.totalorder %s168, %s171
    %p177 = scmp.eq.s32.totalorder %s12, 0
    %p178 = por %p176, %p177
    %p179 = scmp.ne.s32.totalorder %s168, %s171
    %p180 = scmp.eq.s32.totalorder %s17, 1
    %p181 = por %p179, %p180
    %p182 = scmp.ne.s32.totalorder %s171, %s172
    %p183 = scmp.eq.s32.totalorder %s17, 0
    %p184 = por %p182, %p183
    %p185 = scmp.ne.s32.totalorder %s171, %s172
    %p186 = scmp.eq.s32.totalorder %s18, 1
    %p187 = por %p185, %p186
    %p189 = scmp.ne.s32.totalorder %s172, %s188
    %p190 = scmp.eq.s32.totalorder %s18, 0
    %p191 = por %p189, %p190
    %p192 = scmp.le.s32.totalorder 1, %s12
    %p193 = scmp.lt.s32.totalorder %s12, 3
    %p194 = pnand %p192, %p193
    %p195 = pneg %p194
    // Predicated region
    $region9: #{base_encoder_forward.8} parent=5 // pred_check
      _
    $region10: #{base_encoder_forward.8} parent=5 // pred_check_branch
      %197 = sbr.rel (%p194) target = $region12
    $region11: #{base_encoder_forward.8} parent=5 // pred_region
      %s198 = ssub.s32 %s12, 1
      // Predicated region
      $region13: #{base_encoder_forward.8} parent=11 // pred_check
        %p199 = pneg %p137
      $region14: #{base_encoder_forward.8} parent=11 // pred_check_branch
        %201 = sbr.rel (%p199) target = $region16
      $region15: #{base_encoder_forward.8} parent=11 // pred_region
        _
      $region16: #{base_encoder_forward.8} parent=11 // pred_fallthru
        _
      // Predicated region
      $region17: #{base_encoder_forward.8} parent=11 // pred_check
        %p202 = pneg %p158
      $region18: #{base_encoder_forward.8} parent=11 // pred_check_branch
        %204 = sbr.rel (%p202) target = $region20
      $region19: #{base_encoder_forward.8} parent=11 // pred_region
        _
      $region20: #{base_encoder_forward.8} parent=11 // pred_fallthru
        _
    $region12: #{base_encoder_forward.8} parent=5 // pred_fallthru
      _
    %p205 = scmp.lt.s32.totalorder %s12, 2
    // Predicated region
    $region21: #{base_encoder_forward.8} parent=5 // pred_check
      %p206 = pneg %p205
    $region22: #{base_encoder_forward.8} parent=5 // pred_check_branch
      %208 = sbr.rel (%p206) target = $region24
    $region23: #{base_encoder_forward.8} parent=5 // pred_region
      // Predicated region
      $region25: #{base_encoder_forward.8} parent=23 // pred_check
        %p209 = pneg %p32
      $region26: #{base_encoder_forward.8} parent=23 // pred_check_branch
        %211 = sbr.rel (%p209) target = $region28
      $region27: #{base_encoder_forward.8} parent=23 // pred_region
        %p212 = scmp.lt.s32.totalorder %s12, 1
        %s213 = scalar_select %p212, %s12, 1
        %s214 = smul.addr %s213, 3
        %s215 = smul.addr %s214, 2
        %s216 = scalar_lea.vmem %s0, %s215
      $region28: #{base_encoder_forward.8} parent=23 // pred_fallthru
        _
      // Predicated region
      $region29: #{base_encoder_forward.8} parent=23 // pred_check
        %p217 = pneg %p58
      $region30: #{base_encoder_forward.8} parent=23 // pred_check_branch
        %219 = sbr.rel (%p217) target = $region32
      $region31: #{base_encoder_forward.8} parent=23 // pred_region
        %p220 = scmp.lt.s32.totalorder %s12, 1
        %s221 = scalar_select %p220, %s12, 1
        %s222 = smul.addr %s221, 3
        %s223 = smul.addr %s222, 2
        %s224 = scalar_lea.vmem %s1, %s223
      $region32: #{base_encoder_forward.8} parent=23 // pred_fallthru
        _
      // Predicated region
      $region33: #{base_encoder_forward.8} parent=23 // pred_check
        %p225 = pneg %p84
      $region34: #{base_encoder_forward.8} parent=23 // pred_check_branch
        %227 = sbr.rel (%p225) target = $region36
      $region35: #{base_encoder_forward.8} parent=23 // pred_region
        %p228 = scmp.lt.s32.totalorder %s12, 1
        %s229 = scalar_select %p228, %s12, 1
        %s230 = smul.addr %s229, 3
        %s231 = smul.addr %s230, 2
        %s232 = scalar_lea.vmem %s2, %s231
      $region36: #{base_encoder_forward.8} parent=23 // pred_fallthru
        _
      // Predicated region
      $region37: #{base_encoder_forward.8} parent=23 // pred_check
        %p233 = pneg %p110
      $region38: #{base_encoder_forward.8} parent=23 // pred_check_branch
        %235 = sbr.rel (%p233) target = $region40
      $region39: #{base_encoder_forward.8} parent=23 // pred_region
        %p236 = scmp.lt.s32.totalorder %s12, 1
        %s237 = scalar_select %p236, %s12, 1
        %s238 = smul.addr %s237, 3
        %s239 = smul.addr %s238, 2
        %s240 = scalar_lea.vmem %s3, %s239
      $region40: #{base_encoder_forward.8} parent=23 // pred_fallthru
        _
    $region24: #{base_encoder_forward.8} parent=5 // pred_fallthru
      _
    %p241 = scmp.le.s32.totalorder 1, %s12
    %p242 = scmp.lt.s32.totalorder %s12, 3
    %p243 = pnand %p241, %p242
    %p244 = pneg %p243
    // Predicated region
    $region41: #{base_encoder_forward.8} parent=5 // pred_check
      _
    $region42: #{base_encoder_forward.8} parent=5 // pred_check_branch
      %246 = sbr.rel (%p243) target = $region44
    $region43: #{base_encoder_forward.8} parent=5 // pred_region
      %s247 = ssub.s32 %s12, 1
      %p248 = scmp.lt.s32.totalorder %s17, 1
      %s249 = scalar_select %p248, %s17, 1
      %s250 = smul.addr %s249, 3
      %s251 = smul.addr %s250, 2
      %s252 = scalar_lea.vmem %s0, %s251
      %p253 = pneg %p38
      %p254 = pneg %p35
      %p255 = scmp.lt.s32.totalorder %s17, 1
      %s256 = scalar_select %p255, %s17, 1
      %s257 = smul.addr %s256, 3
      %s258 = smul.addr %s257, 2
      %s259 = scalar_lea.vmem %s1, %s258
      %p260 = pneg %p64
      %p261 = pneg %p61
      %p262 = scmp.lt.s32.totalorder %s17, 1
      %s263 = scalar_select %p262, %s17, 1
      %s264 = smul.addr %s263, 3
      %s265 = smul.addr %s264, 2
      %s266 = scalar_lea.vmem %s2, %s265
      %p267 = pneg %p90
      %p268 = pneg %p87
      %p269 = scmp.lt.s32.totalorder %s17, 1
      %s270 = scalar_select %p269, %s17, 1
      %s271 = smul.addr %s270, 3
      %s272 = smul.addr %s271, 2
      %s273 = scalar_lea.vmem %s3, %s272
      %p274 = pneg %p116
      %p275 = pneg %p113
      %p276 = pneg %p137
      %p277 = pneg %p134
      %p278 = pneg %p158
      %p279 = pneg %p155
      %p280 = pneg %p184
      %p281 = pneg %p181
      %p282 = scmp.lt.s32.totalorder %s17, 1
      %s283 = scalar_select %p282, %s17, 1
      %s284 = smul.addr %s283, 2
      %s285 = smul.addr %s284, 2
      %s286 = scalar_lea.vmem %s6, %s285
      %p287 = scmp.lt.s32.totalorder %s17, 1
      %s288 = scalar_select %p287, %s17, 1
      %s289 = smul.addr %s288, 3
      %s290 = smul.addr %s289, 2
      %s291 = scalar_lea.vmem %s0, %s290
      %p292 = scmp.lt.s32.totalorder %s17, 1
      %s293 = scalar_select %p292, %s17, 1
      %s294 = smul.addr %s293, 3
      %s295 = smul.addr %s294, 2
      %s296 = scalar_lea.vmem %s1, %s295
      %p297 = scmp.lt.s32.totalorder %s17, 1
      %s298 = scalar_select %p297, %s17, 1
      %s299 = smul.addr %s298, 3
      %s300 = smul.addr %s299, 2
      %s301 = scalar_lea.vmem %s2, %s300
      %p302 = scmp.lt.s32.totalorder %s17, 1
      %s303 = scalar_select %p302, %s17, 1
      %s304 = smul.addr %s303, 3
      %s305 = smul.addr %s304, 2
      %s306 = scalar_lea.vmem %s3, %s305
      %p307 = scmp.lt.s32.totalorder %s17, 1
      %s308 = scalar_select %p307, %s17, 1
      %s309 = smul.addr %s308, 2
      %s310 = smul.addr %s309, 2
      %s311 = scalar_lea.vmem %s6, %s310
      %v313 = vld [vmem:[%s291] sm:$0x1]
      %v314 = vld [vmem:[%s291 + $0x2] sm:$0x1]
      %v315 = vld [vmem:[%s4] sm:$0xff]
      %v316 = vld [vmem:[%s4 + $0x8] sm:$0xff]
      %v317 = vld [vmem:[%s4 + $0x10] sm:$0xff]
      %v318 = vld [vmem:[%s4 + $0x18] sm:$0xff]
      %v319 = vld [vmem:[%s4 + $0x20] sm:$0xff]
      %v320 = vld [vmem:[%s4 + $0x28] sm:$0xff]
      %v321 = vld [vmem:[%s4 + $0x30] sm:$0xff]
      %v322 = vld [vmem:[%s4 + $0x38] sm:$0xff]
      %v323 = vld [vmem:[%s4 + $0x40] sm:$0xff]
      %v324 = vld [vmem:[%s4 + $0x48] sm:$0xff]
      %v325 = vld [vmem:[%s4 + $0x50] sm:$0xff]
      %v326 = vld [vmem:[%s4 + $0x58] sm:$0xff]
      %v327 = vld [vmem:[%s4 + $0x60] sm:$0xff]
      %v328 = vld [vmem:[%s4 + $0x68] sm:$0xff]
      %v329 = vld [vmem:[%s4 + $0x70] sm:$0xff]
      %v330 = vld [vmem:[%s4 + $0x78] sm:$0xff]
      %v331 = vld [vmem:[%s296] sm:$0x1]
      %v332 = vld [vmem:[%s296 + $0x2] sm:$0x1]
      %s333 = scalar_lea.vmem %s4, 128
      %v334 = vld [vmem:[%s333] sm:$0xff]
      %v335 = vld [vmem:[%s333 + $0x8] sm:$0xff]
      %v336 = vld [vmem:[%s333 + $0x10] sm:$0xff]
      %v337 = vld [vmem:[%s333 + $0x18] sm:$0xff]
      %v338 = vld [vmem:[%s333 + $0x20] sm:$0xff]
      %v339 = vld [vmem:[%s333 + $0x28] sm:$0xff]
      %v340 = vld [vmem:[%s333 + $0x30] sm:$0xff]
      %v341 = vld [vmem:[%s333 + $0x38] sm:$0xff]
      %v342 = vld [vmem:[%s333 + $0x40] sm:$0xff]
      %v343 = vld [vmem:[%s333 + $0x48] sm:$0xff]
      %v344 = vld [vmem:[%s333 + $0x50] sm:$0xff]
      %v345 = vld [vmem:[%s333 + $0x58] sm:$0xff]
      %v346 = vld [vmem:[%s333 + $0x60] sm:$0xff]
      %v347 = vld [vmem:[%s333 + $0x68] sm:$0xff]
      %v348 = vld [vmem:[%s333 + $0x70] sm:$0xff]
      %v349 = vld [vmem:[%s333 + $0x78] sm:$0xff]
      %v352 = vcombine.low %v331, %v332
      %v354 = vunpack.c.l.s4 1966171168
      %v355 = vunpack.c.0.s8 %v354
      %v356 = vlaneseq
      %v357 = vshrl.u32 %v356, 7
      %v358 = vsub.s32 %v355, %v357
      %v359 = vrot.slane %v352, %v358
      %v361 = vunpack.c.l.s4 1966171168
      %v362 = vunpack.c.0.s8 %v361
      %v363 = vlaneseq
      %v364 = vshrl.u32 %v363, 7
      %v365 = vsub.s32 %v362, %v364
      %v366 = vrot.slane %v359, %v365
      %v384 = vunpack.c.l.b16 %v334
      %v385 = vunpack.c.h.b16 %v334
      %v386 = vunpack.c.l.b16 %v335
      %v387 = vunpack.c.h.b16 %v335
      %v388 = vunpack.c.l.b16 %v336
      %v389 = vunpack.c.h.b16 %v336
      %v390 = vunpack.c.l.b16 %v337
      %v391 = vunpack.c.h.b16 %v337
      %v392 = vunpack.c.l.b16 %v338
      %v393 = vunpack.c.h.b16 %v338
      %v394 = vunpack.c.l.b16 %v339
      %v395 = vunpack.c.h.b16 %v339
      %v396 = vunpack.c.l.b16 %v340
      %v397 = vunpack.c.h.b16 %v340
      %v398 = vunpack.c.l.b16 %v341
      %v399 = vunpack.c.h.b16 %v341
      %v400 = vunpack.c.l.b16 %v342
      %v401 = vunpack.c.h.b16 %v342
      %v402 = vunpack.c.l.b16 %v343
      %v403 = vunpack.c.h.b16 %v343
      %v404 = vunpack.c.l.b16 %v344
      %v405 = vunpack.c.h.b16 %v344
      %v406 = vunpack.c.l.b16 %v345
      %v407 = vunpack.c.h.b16 %v345
      %v408 = vunpack.c.l.b16 %v346
      %v409 = vunpack.c.h.b16 %v346
      %v410 = vunpack.c.l.b16 %v347
      %v411 = vunpack.c.h.b16 %v347
      %v412 = vunpack.c.l.b16 %v348
      %v413 = vunpack.c.h.b16 %v348
      %v414 = vunpack.c.l.b16 %v349
      %v415 = vunpack.c.h.b16 %v349
      %v416 = vpack.c.b16 %v386, %v384
      %v417 = vpack.c.b16 %v387, %v385
      %v418 = vpack.c.b16 %v390, %v388
      %v419 = vpack.c.b16 %v391, %v389
      %v420 = vpack.c.b16 %v394, %v392
      %v421 = vpack.c.b16 %v395, %v393
      %v422 = vpack.c.b16 %v398, %v396
      %v423 = vpack.c.b16 %v399, %v397
      %v424 = vpack.c.b16 %v402, %v400
      %v425 = vpack.c.b16 %v403, %v401
      %v426 = vpack.c.b16 %v406, %v404
      %v427 = vpack.c.b16 %v407, %v405
      %v428 = vpack.c.b16 %v410, %v408
      %v429 = vpack.c.b16 %v411, %v409
      %v430 = vpack.c.b16 %v414, %v412
      %v431 = vpack.c.b16 %v415, %v413
      %448 = vmatprep.subr.bf16.mxu0 %v417
      %449 = vmatpush1.bf16.msra.mxu0 %v416
      %450 = vmatprep.subr.bf16.mxu0 %v419
      %451 = vmatpush1.bf16.msra.mxu0 %v418
      %452 = vmatprep.subr.bf16.mxu0 %v421
      %453 = vmatpush1.bf16.msra.mxu0 %v420
      %454 = vmatprep.subr.bf16.mxu0 %v423
      %455 = vmatpush1.bf16.msra.mxu0 %v422
      %456 = vmatprep.subr.bf16.mxu0 %v425
      %457 = vmatpush1.bf16.msra.mxu0 %v424
      %458 = vmatprep.subr.bf16.mxu0 %v427
      %459 = vmatpush1.bf16.msra.mxu0 %v426
      %460 = vmatprep.subr.bf16.mxu0 %v429
      %461 = vmatpush1.bf16.msra.mxu0 %v428
      %462 = vmatprep.subr.bf16.mxu0 %v431
      %463 = vmatpush1.bf16.msra.mxu0 %v430
      %464 = vmatprep.subr.bf16.mxu0 0
      %465 = vmatpush1.bf16.msra.mxu0 0
      %466 = vmatprep.subr.bf16.mxu0 0
      %467 = vmatpush1.bf16.msra.mxu0 0
      %468 = vmatprep.subr.bf16.mxu0 0
      %469 = vmatpush1.bf16.msra.mxu0 0
      %470 = vmatprep.subr.bf16.mxu0 0
      %471 = vmatpush1.bf16.msra.mxu0 0
      %472 = vmatprep.subr.bf16.mxu0 0
      %473 = vmatpush1.bf16.msra.mxu0 0
      %474 = vmatprep.subr.bf16.mxu0 0
      %475 = vmatpush1.bf16.msra.mxu0 0
      %476 = vmatprep.subr.bf16.mxu0 0
      %477 = vmatpush1.bf16.msra.mxu0 0
      %478 = vmatprep.subr.bf16.mxu0 0
      %479 = vmatpush1.bf16.msra.mxu0 0
      %480 = vmatprep.mubr.bf16.mxu0 0
      %481 = vmatmul.mubr.bf16.gmra.mrb[0].mxu0 %v366
      %v482 = vpop.f32.mrb[0].mxu0
      %v483 = vadd.f32 0.0, %v482
      %v484 = vpop.f32.mrb[0].mxu0
      %v485 = vadd.f32 0.0, %v484
      %v486 = vpop.f32.mrb[0].mxu0
      %v487 = vpop.f32.mrb[0].mxu0
      %488 = vdwg.mxu0
      %v491 = vcombine.low %v313, %v314
      %v493 = vunpack.c.l.s4 1966171168
      %v494 = vunpack.c.0.s8 %v493
      %v495 = vlaneseq
      %v496 = vshrl.u32 %v495, 7
      %v497 = vsub.s32 %v494, %v496
      %v498 = vrot.slane %v491, %v497
      %v500 = vunpack.c.l.s4 1966171168
      %v501 = vunpack.c.0.s8 %v500
      %v502 = vlaneseq
      %v503 = vshrl.u32 %v502, 7
      %v504 = vsub.s32 %v501, %v503
      %v505 = vrot.slane %v498, %v504
      %v523 = vunpack.c.l.b16 %v315
      %v524 = vunpack.c.h.b16 %v315
      %v525 = vunpack.c.l.b16 %v316
      %v526 = vunpack.c.h.b16 %v316
      %v527 = vunpack.c.l.b16 %v317
      %v528 = vunpack.c.h.b16 %v317
      %v529 = vunpack.c.l.b16 %v318
      %v530 = vunpack.c.h.b16 %v318
      %v531 = vunpack.c.l.b16 %v319
      %v532 = vunpack.c.h.b16 %v319
      %v533 = vunpack.c.l.b16 %v320
      %v534 = vunpack.c.h.b16 %v320
      %v535 = vunpack.c.l.b16 %v321
      %v536 = vunpack.c.h.b16 %v321
      %v537 = vunpack.c.l.b16 %v322
      %v538 = vunpack.c.h.b16 %v322
      %v539 = vunpack.c.l.b16 %v323
      %v540 = vunpack.c.h.b16 %v323
      %v541 = vunpack.c.l.b16 %v324
      %v542 = vunpack.c.h.b16 %v324
      %v543 = vunpack.c.l.b16 %v325
      %v544 = vunpack.c.h.b16 %v325
      %v545 = vunpack.c.l.b16 %v326
      %v546 = vunpack.c.h.b16 %v326
      %v547 = vunpack.c.l.b16 %v327
      %v548 = vunpack.c.h.b16 %v327
      %v549 = vunpack.c.l.b16 %v328
      %v550 = vunpack.c.h.b16 %v328
      %v551 = vunpack.c.l.b16 %v329
      %v552 = vunpack.c.h.b16 %v329
      %v553 = vunpack.c.l.b16 %v330
      %v554 = vunpack.c.h.b16 %v330
      %v555 = vpack.c.b16 %v525, %v523
      %v556 = vpack.c.b16 %v526, %v524
      %v557 = vpack.c.b16 %v529, %v527
      %v558 = vpack.c.b16 %v530, %v528
      %v559 = vpack.c.b16 %v533, %v531
      %v560 = vpack.c.b16 %v534, %v532
      %v561 = vpack.c.b16 %v537, %v535
      %v562 = vpack.c.b16 %v538, %v536
      %v563 = vpack.c.b16 %v541, %v539
      %v564 = vpack.c.b16 %v542, %v540
      %v565 = vpack.c.b16 %v545, %v543
      %v566 = vpack.c.b16 %v546, %v544
      %v567 = vpack.c.b16 %v549, %v547
      %v568 = vpack.c.b16 %v550, %v548
      %v569 = vpack.c.b16 %v553, %v551
      %v570 = vpack.c.b16 %v554, %v552
      %587 = vmatprep.subr.bf16.mxu0 %v556
      %588 = vmatpush1.bf16.msra.mxu0 %v555
      %589 = vmatprep.subr.bf16.mxu0 %v558
      %590 = vmatpush1.bf16.msra.mxu0 %v557
      %591 = vmatprep.subr.bf16.mxu0 %v560
      %592 = vmatpush1.bf16.msra.mxu0 %v559
      %593 = vmatprep.subr.bf16.mxu0 %v562
      %594 = vmatpush1.bf16.msra.mxu0 %v561
      %595 = vmatprep.subr.bf16.mxu0 %v564
      %596 = vmatpush1.bf16.msra.mxu0 %v563
      %597 = vmatprep.subr.bf16.mxu0 %v566
      %598 = vmatpush1.bf16.msra.mxu0 %v565
      %599 = vmatprep.subr.bf16.mxu0 %v568
      %600 = vmatpush1.bf16.msra.mxu0 %v567
      %601 = vmatprep.subr.bf16.mxu0 %v570
      %602 = vmatpush1.bf16.msra.mxu0 %v569
      %603 = vmatprep.subr.bf16.mxu0 0
      %604 = vmatpush1.bf16.msra.mxu0 0
      %605 = vmatprep.subr.bf16.mxu0 0
      %606 = vmatpush1.bf16.msra.mxu0 0
      %607 = vmatprep.subr.bf16.mxu0 0
      %608 = vmatpush1.bf16.msra.mxu0 0
      %609 = vmatprep.subr.bf16.mxu0 0
      %610 = vmatpush1.bf16.msra.mxu0 0
      %611 = vmatprep.subr.bf16.mxu0 0
      %612 = vmatpush1.bf16.msra.mxu0 0
      %613 = vmatprep.subr.bf16.mxu0 0
      %614 = vmatpush1.bf16.msra.mxu0 0
      %615 = vmatprep.subr.bf16.mxu0 0
      %616 = vmatpush1.bf16.msra.mxu0 0
      %617 = vmatprep.subr.bf16.mxu0 0
      %618 = vmatpush1.bf16.msra.mxu0 0
      %619 = vmatprep.mubr.bf16.mxu0 0
      %620 = vmatmul.mubr.bf16.gmra.mrb[0].mxu0 %v505
      %v621 = vpop.f32.mrb[0].mxu0
      %v622 = vadd.f32 %v483, %v621
      %v623 = vpop.f32.mrb[0].mxu0
      %v624 = vadd.f32 %v485, %v623
      %v625 = vpop.f32.mrb[0].mxu0
      %v626 = vpop.f32.mrb[0].mxu0
      %627 = vdwg.mxu0
      %v628 = vld [vmem:[%s291] sm:$0x3]
      %v629 = vld [vmem:[%s291 + $0x2] sm:$0x3]
      %v633 = vunpack.c.l.s4 1966171168
      %v634 = vunpack.c.0.s8 %v633
      %v635 = vlaneseq
      %v636 = vshrl.u32 %v635, 7
      %v637 = vsub.s32 %v634, %v636
      %v638 = vrot.slane %v628, %v637
      %v639 = vcombine.high %v638, %v638
      %v641 = vunpack.c.l.s4 1966171168
      %v642 = vunpack.c.0.s8 %v641
      %v643 = vlaneseq
      %v644 = vshrl.u32 %v643, 7
      %v645 = vsub.s32 %v642, %v644
      %v646 = vrot.slane %v629, %v645
      %v647 = vcombine.high %v646, %v646
      %vm648 = vsmask.f32 256
      %vm649 = vsmask.f32 1284
      %vm650 = vmor %vm648, %vm649
      %vm651 = vsmask.f32 2312
      %vm652 = vmor %vm650, %vm651
      %vm653 = vsmask.f32 3340
      %vm654 = vmor %vm652, %vm653
      %vm655 = vsmask.f32 4368
      %vm656 = vmor %vm654, %vm655
      %vm657 = vsmask.f32 5396
      %vm658 = vmor %vm656, %vm657
      %vm659 = vsmask.f32 6424
      %vm660 = vmor %vm658, %vm659
      %vm661 = vsmask.f32 7452
      %vm662 = vmor %vm660, %vm661
      %v664 = vshrl.u32 %v638, 16
      %v666 = vrot.slane %v664, 7
      %v667 = vrot.slane %v666, 1
      %v669 = vshll.u32 %v639, 16
      %v671 = vsel %vm662, %v667, %v669
      %v673 = vshrl.u32 %v646, 16
      %v675 = vrot.slane %v673, 7
      %v676 = vrot.slane %v675, 1
      %v678 = vshll.u32 %v647, 16
      %v680 = vsel %vm662, %v676, %v678
      %s681 = scalar_lea.vmem %s4, 256
      %v682 = vld [vmem:[%s681] sm:$0xff]
      %v683 = vld [vmem:[%s681 + $0x8] sm:$0xff]
      %v684 = vld [vmem:[%s681 + $0x10] sm:$0xff]
      %v685 = vld [vmem:[%s681 + $0x18] sm:$0xff]
      %v686 = vld [vmem:[%s681 + $0x20] sm:$0xff]
      %v687 = vld [vmem:[%s681 + $0x28] sm:$0xff]
      %v688 = vld [vmem:[%s681 + $0x30] sm:$0xff]
      %v689 = vld [vmem:[%s681 + $0x38] sm:$0xff]
      %v690 = vld [vmem:[%s681 + $0x40] sm:$0xff]
      %v691 = vld [vmem:[%s681 + $0x48] sm:$0xff]
      %v692 = vld [vmem:[%s681 + $0x50] sm:$0xff]
      %v693 = vld [vmem:[%s681 + $0x58] sm:$0xff]
      %v694 = vld [vmem:[%s681 + $0x60] sm:$0xff]
      %v695 = vld [vmem:[%s681 + $0x68] sm:$0xff]
      %v696 = vld [vmem:[%s681 + $0x70] sm:$0xff]
      %v697 = vld [vmem:[%s681 + $0x78] sm:$0xff]
      %v698 = vcombine.low %v671, %v680
      %v700 = vunpack.c.l.s4 1966171168
      %v701 = vunpack.c.0.s8 %v700
      %v702 = vlaneseq
      %v703 = vshrl.u32 %v702, 7
      %v704 = vsub.s32 %v701, %v703
      %v705 = vrot.slane %v698, %v704
      %v707 = vunpack.c.l.s4 1966171168
      %v708 = vunpack.c.0.s8 %v707
      %v709 = vlaneseq
      %v710 = vshrl.u32 %v709, 7
      %v711 = vsub.s32 %v708, %v710
      %v712 = vrot.slane %v705, %v711
      %v730 = vunpack.c.l.b16 %v682
      %v731 = vunpack.c.h.b16 %v682
      %v732 = vunpack.c.l.b16 %v683
      %v733 = vunpack.c.h.b16 %v683
      %v734 = vunpack.c.l.b16 %v684
      %v735 = vunpack.c.h.b16 %v684
      %v736 = vunpack.c.l.b16 %v685
      %v737 = vunpack.c.h.b16 %v685
      %v738 = vunpack.c.l.b16 %v686
      %v739 = vunpack.c.h.b16 %v686
      %v740 = vunpack.c.l.b16 %v687
      %v741 = vunpack.c.h.b16 %v687
      %v742 = vunpack.c.l.b16 %v688
      %v743 = vunpack.c.h.b16 %v688
      %v744 = vunpack.c.l.b16 %v689
      %v745 = vunpack.c.h.b16 %v689
      %v746 = vunpack.c.l.b16 %v690
      %v747 = vunpack.c.h.b16 %v690
      %v748 = vunpack.c.l.b16 %v691
      %v749 = vunpack.c.h.b16 %v691
      %v750 = vunpack.c.l.b16 %v692
      %v751 = vunpack.c.h.b16 %v692
      %v752 = vunpack.c.l.b16 %v693
      %v753 = vunpack.c.h.b16 %v693
      %v754 = vunpack.c.l.b16 %v694
      %v755 = vunpack.c.h.b16 %v694
      %v756 = vunpack.c.l.b16 %v695
      %v757 = vunpack.c.h.b16 %v695
      %v758 = vunpack.c.l.b16 %v696
      %v759 = vunpack.c.h.b16 %v696
      %v760 = vunpack.c.l.b16 %v697
      %v761 = vunpack.c.h.b16 %v697
      %v762 = vpack.c.b16 %v732, %v730
      %v763 = vpack.c.b16 %v733, %v731
      %v764 = vpack.c.b16 %v736, %v734
      %v765 = vpack.c.b16 %v737, %v735
      %v766 = vpack.c.b16 %v740, %v738
      %v767 = vpack.c.b16 %v741, %v739
      %v768 = vpack.c.b16 %v744, %v742
      %v769 = vpack.c.b16 %v745, %v743
      %v770 = vpack.c.b16 %v748, %v746
      %v771 = vpack.c.b16 %v749, %v747
      %v772 = vpack.c.b16 %v752, %v750
      %v773 = vpack.c.b16 %v753, %v751
      %v774 = vpack.c.b16 %v756, %v754
      %v775 = vpack.c.b16 %v757, %v755
      %v776 = vpack.c.b16 %v760, %v758
      %v777 = vpack.c.b16 %v761, %v759
      %794 = vmatprep.subr.bf16.mxu0 %v763
      %795 = vmatpush1.bf16.msra.mxu0 %v762
      %796 = vmatprep.subr.bf16.mxu0 %v765
      %797 = vmatpush1.bf16.msra.mxu0 %v764
      %798 = vmatprep.subr.bf16.mxu0 %v767
      %799 = vmatpush1.bf16.msra.mxu0 %v766
      %800 = vmatprep.subr.bf16.mxu0 %v769
      %801 = vmatpush1.bf16.msra.mxu0 %v768
      %802 = vmatprep.subr.bf16.mxu0 %v771
      %803 = vmatpush1.bf16.msra.mxu0 %v770
      %804 = vmatprep.subr.bf16.mxu0 %v773
      %805 = vmatpush1.bf16.msra.mxu0 %v772
      %806 = vmatprep.subr.bf16.mxu0 %v775
      %807 = vmatpush1.bf16.msra.mxu0 %v774
      %808 = vmatprep.subr.bf16.mxu0 %v777
      %809 = vmatpush1.bf16.msra.mxu0 %v776
      %810 = vmatprep.subr.bf16.mxu0 0
      %811 = vmatpush1.bf16.msra.mxu0 0
      %812 = vmatprep.subr.bf16.mxu0 0
      %813 = vmatpush1.bf16.msra.mxu0 0
      %814 = vmatprep.subr.bf16.mxu0 0
      %815 = vmatpush1.bf16.msra.mxu0 0
      %816 = vmatprep.subr.bf16.mxu0 0
      %817 = vmatpush1.bf16.msra.mxu0 0
      %818 = vmatprep.subr.bf16.mxu0 0
      %819 = vmatpush1.bf16.msra.mxu0 0
      %820 = vmatprep.subr.bf16.mxu0 0
      %821 = vmatpush1.bf16.msra.mxu0 0
      %822 = vmatprep.subr.bf16.mxu0 0
      %823 = vmatpush1.bf16.msra.mxu0 0
      %824 = vmatprep.subr.bf16.mxu0 0
      %825 = vmatpush1.bf16.msra.mxu0 0
      %826 = vmatprep.mubr.bf16.mxu0 0
      %827 = vmatmul.mubr.bf16.gmra.mrb[0].mxu0 %v712
      %v828 = vpop.f32.mrb[0].mxu0
      %v829 = vadd.f32 0.0, %v828
      %v830 = vpop.f32.mrb[0].mxu0
      %v831 = vadd.f32 0.0, %v830
      %v832 = vpop.f32.mrb[0].mxu0
      %v833 = vpop.f32.mrb[0].mxu0
      %834 = vdwg.mxu0
      %v835 = vadd.f32 %v622, %v829
      %v836 = vadd.f32 %v624, %v831
      %v837 = vld [vmem:[%s301] sm:$0x1]
      %v838 = vld [vmem:[%s301 + $0x2] sm:$0x1]
      %s839 = scalar_lea.vmem %s4, 384
      %v840 = vld [vmem:[%s839] sm:$0xff]
      %v841 = vld [vmem:[%s839 + $0x8] sm:$0xff]
      %v842 = vld [vmem:[%s839 + $0x10] sm:$0xff]
      %v843 = vld [vmem:[%s839 + $0x18] sm:$0xff]
      %v844 = vld [vmem:[%s839 + $0x20] sm:$0xff]
      %v845 = vld [vmem:[%s839 + $0x28] sm:$0xff]
      %v846 = vld [vmem:[%s839 + $0x30] sm:$0xff]
      %v847 = vld [vmem:[%s839 + $0x38] sm:$0xff]
      %v848 = vld [vmem:[%s839 + $0x40] sm:$0xff]
      %v849 = vld [vmem:[%s839 + $0x48] sm:$0xff]
      %v850 = vld [vmem:[%s839 + $0x50] sm:$0xff]
      %v851 = vld [vmem:[%s839 + $0x58] sm:$0xff]
      %v852 = vld [vmem:[%s839 + $0x60] sm:$0xff]
      %v853 = vld [vmem:[%s839 + $0x68] sm:$0xff]
      %v854 = vld [vmem:[%s839 + $0x70] sm:$0xff]
      %v855 = vld [vmem:[%s839 + $0x78] sm:$0xff]
      %v858 = vcombine.low %v837, %v838
      %v860 = vunpack.c.l.s4 1966171168
      %v861 = vunpack.c.0.s8 %v860
      %v862 = vlaneseq
      %v863 = vshrl.u32 %v862, 7
      %v864 = vsub.s32 %v861, %v863
      %v865 = vrot.slane %v858, %v864
      %v867 = vunpack.c.l.s4 1966171168
      %v868 = vunpack.c.0.s8 %v867
      %v869 = vlaneseq
      %v870 = vshrl.u32 %v869, 7
      %v871 = vsub.s32 %v868, %v870
      %v872 = vrot.slane %v865, %v871
      %v890 = vunpack.c.l.b16 %v840
      %v891 = vunpack.c.h.b16 %v840
      %v892 = vunpack.c.l.b16 %v841
      %v893 = vunpack.c.h.b16 %v841
      %v894 = vunpack.c.l.b16 %v842
      %v895 = vunpack.c.h.b16 %v842
      %v896 = vunpack.c.l.b16 %v843
      %v897 = vunpack.c.h.b16 %v843
      %v898 = vunpack.c.l.b16 %v844
      %v899 = vunpack.c.h.b16 %v844
      %v900 = vunpack.c.l.b16 %v845
      %v901 = vunpack.c.h.b16 %v845
      %v902 = vunpack.c.l.b16 %v846
      %v903 = vunpack.c.h.b16 %v846
      %v904 = vunpack.c.l.b16 %v847
      %v905 = vunpack.c.h.b16 %v847
      %v906 = vunpack.c.l.b16 %v848
      %v907 = vunpack.c.h.b16 %v848
      %v908 = vunpack.c.l.b16 %v849
      %v909 = vunpack.c.h.b16 %v849
      %v910 = vunpack.c.l.b16 %v850
      %v911 = vunpack.c.h.b16 %v850
      %v912 = vunpack.c.l.b16 %v851
      %v913 = vunpack.c.h.b16 %v851
      %v914 = vunpack.c.l.b16 %v852
      %v915 = vunpack.c.h.b16 %v852
      %v916 = vunpack.c.l.b16 %v853
      %v917 = vunpack.c.h.b16 %v853
      %v918 = vunpack.c.l.b16 %v854
      %v919 = vunpack.c.h.b16 %v854
      %v920 = vunpack.c.l.b16 %v855
      %v921 = vunpack.c.h.b16 %v855
      %v922 = vpack.c.b16 %v892, %v890
      %v923 = vpack.c.b16 %v893, %v891
      %v924 = vpack.c.b16 %v896, %v894
      %v925 = vpack.c.b16 %v897, %v895
      %v926 = vpack.c.b16 %v900, %v898
      %v927 = vpack.c.b16 %v901, %v899
      %v928 = vpack.c.b16 %v904, %v902
      %v929 = vpack.c.b16 %v905, %v903
      %v930 = vpack.c.b16 %v908, %v906
      %v931 = vpack.c.b16 %v909, %v907
      %v932 = vpack.c.b16 %v912, %v910
      %v933 = vpack.c.b16 %v913, %v911
      %v934 = vpack.c.b16 %v916, %v914
      %v935 = vpack.c.b16 %v917, %v915
      %v936 = vpack.c.b16 %v920, %v918
      %v937 = vpack.c.b16 %v921, %v919
      %954 = vmatprep.subr.bf16.mxu0 %v923
      %955 = vmatpush1.bf16.msra.mxu0 %v922
      %956 = vmatprep.subr.bf16.mxu0 %v925
      %957 = vmatpush1.bf16.msra.mxu0 %v924
      %958 = vmatprep.subr.bf16.mxu0 %v927
      %959 = vmatpush1.bf16.msra.mxu0 %v926
      %960 = vmatprep.subr.bf16.mxu0 %v929
      %961 = vmatpush1.bf16.msra.mxu0 %v928
      %962 = vmatprep.subr.bf16.mxu0 %v931
      %963 = vmatpush1.bf16.msra.mxu0 %v930
      %964 = vmatprep.subr.bf16.mxu0 %v933
      %965 = vmatpush1.bf16.msra.mxu0 %v932
      %966 = vmatprep.subr.bf16.mxu0 %v935
      %967 = vmatpush1.bf16.msra.mxu0 %v934
      %968 = vmatprep.subr.bf16.mxu0 %v937
      %969 = vmatpush1.bf16.msra.mxu0 %v936
      %970 = vmatprep.subr.bf16.mxu0 0
      %971 = vmatpush1.bf16.msra.mxu0 0
      %972 = vmatprep.subr.bf16.mxu0 0
      %973 = vmatpush1.bf16.msra.mxu0 0
      %974 = vmatprep.subr.bf16.mxu0 0
      %975 = vmatpush1.bf16.msra.mxu0 0
      %976 = vmatprep.subr.bf16.mxu0 0
      %977 = vmatpush1.bf16.msra.mxu0 0
      %978 = vmatprep.subr.bf16.mxu0 0
      %979 = vmatpush1.bf16.msra.mxu0 0
      %980 = vmatprep.subr.bf16.mxu0 0
      %981 = vmatpush1.bf16.msra.mxu0 0
      %982 = vmatprep.subr.bf16.mxu0 0
      %983 = vmatpush1.bf16.msra.mxu0 0
      %984 = vmatprep.subr.bf16.mxu0 0
      %985 = vmatpush1.bf16.msra.mxu0 0
      %986 = vmatprep.mubr.bf16.mxu0 0
      %987 = vmatmul.mubr.bf16.gmra.mrb[0].mxu0 %v872
      %v988 = vpop.f32.mrb[0].mxu0
      %v989 = vadd.f32 0.0, %v988
      %v990 = vpop.f32.mrb[0].mxu0
      %v991 = vadd.f32 0.0, %v990
      %v992 = vpop.f32.mrb[0].mxu0
      %v993 = vpop.f32.mrb[0].mxu0
      %994 = vdwg.mxu0
      %v995 = vadd.f32 %v835, %v989
      %v996 = vadd.f32 %v836, %v991
      %v997 = vld [vmem:[%s306] sm:$0x1]
      %v998 = vld [vmem:[%s306 + $0x2] sm:$0x1]
      %s999 = scalar_lea.vmem %s4, 512
      %v1000 = vld [vmem:[%s999] sm:$0xff]
      %v1001 = vld [vmem:[%s999 + $0x8] sm:$0xff]
      %v1002 = vld [vmem:[%s999 + $0x10] sm:$0xff]
      %v1003 = vld [vmem:[%s999 + $0x18] sm:$0xff]
      %v1004 = vld [vmem:[%s999 + $0x20] sm:$0xff]
      %v1005 = vld [vmem:[%s999 + $0x28] sm:$0xff]
      %v1006 = vld [vmem:[%s999 + $0x30] sm:$0xff]
      %v1007 = vld [vmem:[%s999 + $0x38] sm:$0xff]
      %v1008 = vld [vmem:[%s999 + $0x40] sm:$0xff]
      %v1009 = vld [vmem:[%s999 + $0x48] sm:$0xff]
      %v1010 = vld [vmem:[%s999 + $0x50] sm:$0xff]
      %v1011 = vld [vmem:[%s999 + $0x58] sm:$0xff]
      %v1012 = vld [vmem:[%s999 + $0x60] sm:$0xff]
      %v1013 = vld [vmem:[%s999 + $0x68] sm:$0xff]
      %v1014 = vld [vmem:[%s999 + $0x70] sm:$0xff]
      %v1015 = vld [vmem:[%s999 + $0x78] sm:$0xff]
      %v1018 = vcombine.low %v997, %v998
      %v1020 = vunpack.c.l.s4 1966171168
      %v1021 = vunpack.c.0.s8 %v1020
      %v1022 = vlaneseq
      %v1023 = vshrl.u32 %v1022, 7
      %v1024 = vsub.s32 %v1021, %v1023
      %v1025 = vrot.slane %v1018, %v1024
      %v1027 = vunpack.c.l.s4 1966171168
      %v1028 = vunpack.c.0.s8 %v1027
      %v1029 = vlaneseq
      %v1030 = vshrl.u32 %v1029, 7
      %v1031 = vsub.s32 %v1028, %v1030
      %v1032 = vrot.slane %v1025, %v1031
      %v1050 = vunpack.c.l.b16 %v1000
      %v1051 = vunpack.c.h.b16 %v1000
      %v1052 = vunpack.c.l.b16 %v1001
      %v1053 = vunpack.c.h.b16 %v1001
      %v1054 = vunpack.c.l.b16 %v1002
      %v1055 = vunpack.c.h.b16 %v1002
      %v1056 = vunpack.c.l.b16 %v1003
      %v1057 = vunpack.c.h.b16 %v1003
      %v1058 = vunpack.c.l.b16 %v1004
      %v1059 = vunpack.c.h.b16 %v1004
      %v1060 = vunpack.c.l.b16 %v1005
      %v1061 = vunpack.c.h.b16 %v1005
      %v1062 = vunpack.c.l.b16 %v1006
      %v1063 = vunpack.c.h.b16 %v1006
      %v1064 = vunpack.c.l.b16 %v1007
      %v1065 = vunpack.c.h.b16 %v1007
      %v1066 = vunpack.c.l.b16 %v1008
      %v1067 = vunpack.c.h.b16 %v1008
      %v1068 = vunpack.c.l.b16 %v1009
      %v1069 = vunpack.c.h.b16 %v1009
      %v1070 = vunpack.c.l.b16 %v1010
      %v1071 = vunpack.c.h.b16 %v1010
      %v1072 = vunpack.c.l.b16 %v1011
      %v1073 = vunpack.c.h.b16 %v1011
      %v1074 = vunpack.c.l.b16 %v1012
      %v1075 = vunpack.c.h.b16 %v1012
      %v1076 = vunpack.c.l.b16 %v1013
      %v1077 = vunpack.c.h.b16 %v1013
      %v1078 = vunpack.c.l.b16 %v1014
      %v1079 = vunpack.c.h.b16 %v1014
      %v1080 = vunpack.c.l.b16 %v1015
      %v1081 = vunpack.c.h.b16 %v1015
      %v1082 = vpack.c.b16 %v1052, %v1050
      %v1083 = vpack.c.b16 %v1053, %v1051
      %v1084 = vpack.c.b16 %v1056, %v1054
      %v1085 = vpack.c.b16 %v1057, %v1055
      %v1086 = vpack.c.b16 %v1060, %v1058
      %v1087 = vpack.c.b16 %v1061, %v1059
      %v1088 = vpack.c.b16 %v1064, %v1062
      %v1089 = vpack.c.b16 %v1065, %v1063
      %v1090 = vpack.c.b16 %v1068, %v1066
      %v1091 = vpack.c.b16 %v1069, %v1067
      %v1092 = vpack.c.b16 %v1072, %v1070
      %v1093 = vpack.c.b16 %v1073, %v1071
      %v1094 = vpack.c.b16 %v1076, %v1074
      %v1095 = vpack.c.b16 %v1077, %v1075
      %v1096 = vpack.c.b16 %v1080, %v1078
      %v1097 = vpack.c.b16 %v1081, %v1079
      %1114 = vmatprep.subr.bf16.mxu0 %v1083
      %1115 = vmatpush1.bf16.msra.mxu0 %v1082
      %1116 = vmatprep.subr.bf16.mxu0 %v1085
      %1117 = vmatpush1.bf16.msra.mxu0 %v1084
      %1118 = vmatprep.subr.bf16.mxu0 %v1087
      %1119 = vmatpush1.bf16.msra.mxu0 %v1086
      %1120 = vmatprep.subr.bf16.mxu0 %v1089
      %1121 = vmatpush1.bf16.msra.mxu0 %v1088
      %1122 = vmatprep.subr.bf16.mxu0 %v1091
      %1123 = vmatpush1.bf16.msra.mxu0 %v1090
      %1124 = vmatprep.subr.bf16.mxu0 %v1093
      %1125 = vmatpush1.bf16.msra.mxu0 %v1092
      %1126 = vmatprep.subr.bf16.mxu0 %v1095
      %1127 = vmatpush1.bf16.msra.mxu0 %v1094
      %1128 = vmatprep.subr.bf16.mxu0 %v1097
      %1129 = vmatpush1.bf16.msra.mxu0 %v1096
      %1130 = vmatprep.subr.bf16.mxu0 0
      %1131 = vmatpush1.bf16.msra.mxu0 0
      %1132 = vmatprep.subr.bf16.mxu0 0
      %1133 = vmatpush1.bf16.msra.mxu0 0
      %1134 = vmatprep.subr.bf16.mxu0 0
      %1135 = vmatpush1.bf16.msra.mxu0 0
      %1136 = vmatprep.subr.bf16.mxu0 0
      %1137 = vmatpush1.bf16.msra.mxu0 0
      %1138 = vmatprep.subr.bf16.mxu0 0
      %1139 = vmatpush1.bf16.msra.mxu0 0
      %1140 = vmatprep.subr.bf16.mxu0 0
      %1141 = vmatpush1.bf16.msra.mxu0 0
      %1142 = vmatprep.subr.bf16.mxu0 0
      %1143 = vmatpush1.bf16.msra.mxu0 0
      %1144 = vmatprep.subr.bf16.mxu0 0
      %1145 = vmatpush1.bf16.msra.mxu0 0
      %1146 = vmatprep.mubr.bf16.mxu0 0
      %1147 = vmatmul.mubr.bf16.gmra.mrb[0].mxu0 %v1032
      %v1148 = vpop.f32.mrb[0].mxu0
      %v1149 = vadd.f32 0.0, %v1148
      %v1150 = vpop.f32.mrb[0].mxu0
      %v1151 = vadd.f32 0.0, %v1150
      %v1152 = vpop.f32.mrb[0].mxu0
      %v1153 = vpop.f32.mrb[0].mxu0
      %1154 = vdwg.mxu0
      %v1155 = vadd.f32 %v995, %v1149
      %v1156 = vadd.f32 %v996, %v1151
      %v1157 = vld [vmem:[%s301] sm:$0x3]
      %v1158 = vld [vmem:[%s301 + $0x2] sm:$0x3]
      %v1162 = vunpack.c.l.s4 1966171168
      %v1163 = vunpack.c.0.s8 %v1162
      %v1164 = vlaneseq
      %v1165 = vshrl.u32 %v1164, 7
      %v1166 = vsub.s32 %v1163, %v1165
      %v1167 = vrot.slane %v1157, %v1166
      %v1168 = vcombine.high %v1167, %v1167
      %v1170 = vunpack.c.l.s4 1966171168
      %v1171 = vunpack.c.0.s8 %v1170
      %v1172 = vlaneseq
      %v1173 = vshrl.u32 %v1172, 7
      %v1174 = vsub.s32 %v1171, %v1173
      %v1175 = vrot.slane %v1158, %v1174
      %v1176 = vcombine.high %v1175, %v1175
      %v1178 = vshrl.u32 %v1167, 16
      %v1180 = vrot.slane %v1178, 7
      %v1181 = vrot.slane %v1180, 1
      %v1183 = vshll.u32 %v1168, 16
      %v1185 = vsel %vm662, %v1181, %v1183
      %v1187 = vshrl.u32 %v1175, 16
      %v1189 = vrot.slane %v1187, 7
      %v1190 = vrot.slane %v1189, 1
      %v1192 = vshll.u32 %v1176, 16
      %v1194 = vsel %vm662, %v1190, %v1192
      %s1195 = scalar_lea.vmem %s4, 640
      %v1196 = vld [vmem:[%s1195] sm:$0xff]
      %v1197 = vld [vmem:[%s1195 + $0x8] sm:$0xff]
      %v1198 = vld [vmem:[%s1195 + $0x10] sm:$0xff]
      %v1199 = vld [vmem:[%s1195 + $0x18] sm:$0xff]
      %v1200 = vld [vmem:[%s1195 + $0x20] sm:$0xff]
      %v1201 = vld [vmem:[%s1195 + $0x28] sm:$0xff]
      %v1202 = vld [vmem:[%s1195 + $0x30] sm:$0xff]
      %v1203 = vld [vmem:[%s1195 + $0x38] sm:$0xff]
      %v1204 = vld [vmem:[%s1195 + $0x40] sm:$0xff]
      %v1205 = vld [vmem:[%s1195 + $0x48] sm:$0xff]
      %v1206 = vld [vmem:[%s1195 + $0x50] sm:$0xff]
      %v1207 = vld [vmem:[%s1195 + $0x58] sm:$0xff]
      %v1208 = vld [vmem:[%s1195 + $0x60] sm:$0xff]
      %v1209 = vld [vmem:[%s1195 + $0x68] sm:$0xff]
      %v1210 = vld [vmem:[%s1195 + $0x70] sm:$0xff]
      %v1211 = vld [vmem:[%s1195 + $0x78] sm:$0xff]
      %v1212 = vcombine.low %v1185, %v1194
      %v1214 = vunpack.c.l.s4 1966171168
      %v1215 = vunpack.c.0.s8 %v1214
      %v1216 = vlaneseq
      %v1217 = vshrl.u32 %v1216, 7
      %v1218 = vsub.s32 %v1215, %v1217
      %v1219 = vrot.slane %v1212, %v1218
      %v1221 = vunpack.c.l.s4 1966171168
      %v1222 = vunpack.c.0.s8 %v1221
      %v1223 = vlaneseq
      %v1224 = vshrl.u32 %v1223, 7
      %v1225 = vsub.s32 %v1222, %v1224
      %v1226 = vrot.slane %v1219, %v1225
      %v1244 = vunpack.c.l.b16 %v1196
      %v1245 = vunpack.c.h.b16 %v1196
      %v1246 = vunpack.c.l.b16 %v1197
      %v1247 = vunpack.c.h.b16 %v1197
      %v1248 = vunpack.c.l.b16 %v1198
      %v1249 = vunpack.c.h.b16 %v1198
      %v1250 = vunpack.c.l.b16 %v1199
      %v1251 = vunpack.c.h.b16 %v1199
      %v1252 = vunpack.c.l.b16 %v1200
      %v1253 = vunpack.c.h.b16 %v1200
      %v1254 = vunpack.c.l.b16 %v1201
      %v1255 = vunpack.c.h.b16 %v1201
      %v1256 = vunpack.c.l.b16 %v1202
      %v1257 = vunpack.c.h.b16 %v1202
      %v1258 = vunpack.c.l.b16 %v1203
      %v1259 = vunpack.c.h.b16 %v1203
      %v1260 = vunpack.c.l.b16 %v1204
      %v1261 = vunpack.c.h.b16 %v1204
      %v1262 = vunpack.c.l.b16 %v1205
      %v1263 = vunpack.c.h.b16 %v1205
      %v1264 = vunpack.c.l.b16 %v1206
      %v1265 = vunpack.c.h.b16 %v1206
      %v1266 = vunpack.c.l.b16 %v1207
      %v1267 = vunpack.c.h.b16 %v1207
      %v1268 = vunpack.c.l.b16 %v1208
      %v1269 = vunpack.c.h.b16 %v1208
      %v1270 = vunpack.c.l.b16 %v1209
      %v1271 = vunpack.c.h.b16 %v1209
      %v1272 = vunpack.c.l.b16 %v1210
      %v1273 = vunpack.c.h.b16 %v1210
      %v1274 = vunpack.c.l.b16 %v1211
      %v1275 = vunpack.c.h.b16 %v1211
      %v1276 = vpack.c.b16 %v1246, %v1244
      %v1277 = vpack.c.b16 %v1247, %v1245
      %v1278 = vpack.c.b16 %v1250, %v1248
      %v1279 = vpack.c.b16 %v1251, %v1249
      %v1280 = vpack.c.b16 %v1254, %v1252
      %v1281 = vpack.c.b16 %v1255, %v1253
      %v1282 = vpack.c.b16 %v1258, %v1256
      %v1283 = vpack.c.b16 %v1259, %v1257
      %v1284 = vpack.c.b16 %v1262, %v1260
      %v1285 = vpack.c.b16 %v1263, %v1261
      %v1286 = vpack.c.b16 %v1266, %v1264
      %v1287 = vpack.c.b16 %v1267, %v1265
      %v1288 = vpack.c.b16 %v1270, %v1268
      %v1289 = vpack.c.b16 %v1271, %v1269
      %v1290 = vpack.c.b16 %v1274, %v1272
      %v1291 = vpack.c.b16 %v1275, %v1273
      %1308 = vmatprep.subr.bf16.mxu0 %v1277
      %1309 = vmatpush1.bf16.msra.mxu0 %v1276
      %1310 = vmatprep.subr.bf16.mxu0 %v1279
      %1311 = vmatpush1.bf16.msra.mxu0 %v1278
      %1312 = vmatprep.subr.bf16.mxu0 %v1281
      %1313 = vmatpush1.bf16.msra.mxu0 %v1280
      %1314 = vmatprep.subr.bf16.mxu0 %v1283
      %1315 = vmatpush1.bf16.msra.mxu0 %v1282
      %1316 = vmatprep.subr.bf16.mxu0 %v1285
      %1317 = vmatpush1.bf16.msra.mxu0 %v1284
      %1318 = vmatprep.subr.bf16.mxu0 %v1287
      %1319 = vmatpush1.bf16.msra.mxu0 %v1286
      %1320 = vmatprep.subr.bf16.mxu0 %v1289
      %1321 = vmatpush1.bf16.msra.mxu0 %v1288
      %1322 = vmatprep.subr.bf16.mxu0 %v1291
      %1323 = vmatpush1.bf16.msra.mxu0 %v1290
      %1324 = vmatprep.subr.bf16.mxu0 0
      %1325 = vmatpush1.bf16.msra.mxu0 0
      %1326 = vmatprep.subr.bf16.mxu0 0
      %1327 = vmatpush1.bf16.msra.mxu0 0
      %1328 = vmatprep.subr.bf16.mxu0 0
      %1329 = vmatpush1.bf16.msra.mxu0 0
      %1330 = vmatprep.subr.bf16.mxu0 0
      %1331 = vmatpush1.bf16.msra.mxu0 0
      %1332 = vmatprep.subr.bf16.mxu0 0
      %1333 = vmatpush1.bf16.msra.mxu0 0
      %1334 = vmatprep.subr.bf16.mxu0 0
      %1335 = vmatpush1.bf16.msra.mxu0 0
      %1336 = vmatprep.subr.bf16.mxu0 0
      %1337 = vmatpush1.bf16.msra.mxu0 0
      %1338 = vmatprep.subr.bf16.mxu0 0
      %1339 = vmatpush1.bf16.msra.mxu0 0
      %1340 = vmatprep.mubr.bf16.mxu0 0
      %1341 = vmatmul.mubr.bf16.gmra.mrb[0].mxu0 %v1226
      %v1342 = vpop.f32.mrb[0].mxu0
      %v1343 = vadd.f32 0.0, %v1342
      %v1344 = vpop.f32.mrb[0].mxu0
      %v1345 = vadd.f32 0.0, %v1344
      %v1346 = vpop.f32.mrb[0].mxu0
      %v1347 = vpop.f32.mrb[0].mxu0
      %1348 = vdwg.mxu0
      %v1349 = vadd.f32 %v1155, %v1343
      %v1350 = vadd.f32 %v1156, %v1345
      %s1351 = scalar_lea.vmem %s291, 2
      %v1352 = vld [vmem:[%s1351] sm:$0x1]
      %v1353 = vld [vmem:[%s1351 + $0x2] sm:$0x1]
      %s1354 = scalar_lea.vmem %s4, 768
      %v1355 = vld [vmem:[%s1354] sm:$0xff]
      %v1356 = vld [vmem:[%s1354 + $0x8] sm:$0xff]
      %v1357 = vld [vmem:[%s1354 + $0x10] sm:$0xff]
      %v1358 = vld [vmem:[%s1354 + $0x18] sm:$0xff]
      %v1359 = vld [vmem:[%s1354 + $0x20] sm:$0xff]
      %v1360 = vld [vmem:[%s1354 + $0x28] sm:$0xff]
      %v1361 = vld [vmem:[%s1354 + $0x30] sm:$0xff]
      %v1362 = vld [vmem:[%s1354 + $0x38] sm:$0xff]
      %v1363 = vld [vmem:[%s1354 + $0x40] sm:$0xff]
      %v1364 = vld [vmem:[%s1354 + $0x48] sm:$0xff]
      %v1365 = vld [vmem:[%s1354 + $0x50] sm:$0xff]
      %v1366 = vld [vmem:[%s1354 + $0x58] sm:$0xff]
      %v1367 = vld [vmem:[%s1354 + $0x60] sm:$0xff]
      %v1368 = vld [vmem:[%s1354 + $0x68] sm:$0xff]
      %v1369 = vld [vmem:[%s1354 + $0x70] sm:$0xff]
      %v1370 = vld [vmem:[%s1354 + $0x78] sm:$0xff]
      %v1373 = vcombine.low %v1352, %v1353
      %v1375 = vunpack.c.l.s4 1966171168
      %v1376 = vunpack.c.0.s8 %v1375
      %v1377 = vlaneseq
      %v1378 = vshrl.u32 %v1377, 7
      %v1379 = vsub.s32 %v1376, %v1378
      %v1380 = vrot.slane %v1373, %v1379
      %v1382 = vunpack.c.l.s4 1966171168
      %v1383 = vunpack.c.0.s8 %v1382
      %v1384 = vlaneseq
      %v1385 = vshrl.u32 %v1384, 7
      %v1386 = vsub.s32 %v1383, %v1385
      %v1387 = vrot.slane %v1380, %v1386
      %v1405 = vunpack.c.l.b16 %v1355
      %v1406 = vunpack.c.h.b16 %v1355
      %v1407 = vunpack.c.l.b16 %v1356
      %v1408 = vunpack.c.h.b16 %v1356
      %v1409 = vunpack.c.l.b16 %v1357
      %v1410 = vunpack.c.h.b16 %v1357
      %v1411 = vunpack.c.l.b16 %v1358
      %v1412 = vunpack.c.h.b16 %v1358
      %v1413 = vunpack.c.l.b16 %v1359
      %v1414 = vunpack.c.h.b16 %v1359
      %v1415 = vunpack.c.l.b16 %v1360
      %v1416 = vunpack.c.h.b16 %v1360
      %v1417 = vunpack.c.l.b16 %v1361
      %v1418 = vunpack.c.h.b16 %v1361
      %v1419 = vunpack.c.l.b16 %v1362
      %v1420 = vunpack.c.h.b16 %v1362
      %v1421 = vunpack.c.l.b16 %v1363
      %v1422 = vunpack.c.h.b16 %v1363
      %v1423 = vunpack.c.l.b16 %v1364
      %v1424 = vunpack.c.h.b16 %v1364
      %v1425 = vunpack.c.l.b16 %v1365
      %v1426 = vunpack.c.h.b16 %v1365
      %v1427 = vunpack.c.l.b16 %v1366
      %v1428 = vunpack.c.h.b16 %v1366
      %v1429 = vunpack.c.l.b16 %v1367
      %v1430 = vunpack.c.h.b16 %v1367
      %v1431 = vunpack.c.l.b16 %v1368
      %v1432 = vunpack.c.h.b16 %v1368
      %v1433 = vunpack.c.l.b16 %v1369
      %v1434 = vunpack.c.h.b16 %v1369
      %v1435 = vunpack.c.l.b16 %v1370
      %v1436 = vunpack.c.h.b16 %v1370
      %v1437 = vpack.c.b16 %v1407, %v1405
      %v1438 = vpack.c.b16 %v1408, %v1406
      %v1439 = vpack.c.b16 %v1411, %v1409
      %v1440 = vpack.c.b16 %v1412, %v1410
      %v1441 = vpack.c.b16 %v1415, %v1413
      %v1442 = vpack.c.b16 %v1416, %v1414
      %v1443 = vpack.c.b16 %v1419, %v1417
      %v1444 = vpack.c.b16 %v1420, %v1418
      %v1445 = vpack.c.b16 %v1423, %v1421
      %v1446 = vpack.c.b16 %v1424, %v1422
      %v1447 = vpack.c.b16 %v1427, %v1425
      %v1448 = vpack.c.b16 %v1428, %v1426
      %v1449 = vpack.c.b16 %v1431, %v1429
      %v1450 = vpack.c.b16 %v1432, %v1430
      %v1451 = vpack.c.b16 %v1435, %v1433
      %v1452 = vpack.c.b16 %v1436, %v1434
      %1469 = vmatprep.subr.bf16.mxu0 %v1438
      %1470 = vmatpush1.bf16.msra.mxu0 %v1437
      %1471 = vmatprep.subr.bf16.mxu0 %v1440
      %1472 = vmatpush1.bf16.msra.mxu0 %v1439
      %1473 = vmatprep.subr.bf16.mxu0 %v1442
      %1474 = vmatpush1.bf16.msra.mxu0 %v1441
      %1475 = vmatprep.subr.bf16.mxu0 %v1444
      %1476 = vmatpush1.bf16.msra.mxu0 %v1443
      %1477 = vmatprep.subr.bf16.mxu0 %v1446
      %1478 = vmatpush1.bf16.msra.mxu0 %v1445
      %1479 = vmatprep.subr.bf16.mxu0 %v1448
      %1480 = vmatpush1.bf16.msra.mxu0 %v1447
      %1481 = vmatprep.subr.bf16.mxu0 %v1450
      %1482 = vmatpush1.bf16.msra.mxu0 %v1449
      %1483 = vmatprep.subr.bf16.mxu0 %v1452
      %1484 = vmatpush1.bf16.msra.mxu0 %v1451
      %1485 = vmatprep.subr.bf16.mxu0 0
      %1486 = vmatpush1.bf16.msra.mxu0 0
      %1487 = vmatprep.subr.bf16.mxu0 0
      %1488 = vmatpush1.bf16.msra.mxu0 0
      %1489 = vmatprep.subr.bf16.mxu0 0
      %1490 = vmatpush1.bf16.msra.mxu0 0
      %1491 = vmatprep.subr.bf16.mxu0 0
      %1492 = vmatpush1.bf16.msra.mxu0 0
      %1493 = vmatprep.subr.bf16.mxu0 0
      %1494 = vmatpush1.bf16.msra.mxu0 0
      %1495 = vmatprep.subr.bf16.mxu0 0
      %1496 = vmatpush1.bf16.msra.mxu0 0
      %1497 = vmatprep.subr.bf16.mxu0 0
      %1498 = vmatpush1.bf16.msra.mxu0 0
      %1499 = vmatprep.subr.bf16.mxu0 0
      %1500 = vmatpush1.bf16.msra.mxu0 0
      %1501 = vmatprep.mubr.bf16.mxu0 0
      %1502 = vmatmul.mubr.bf16.gmra.mrb[0].mxu0 %v1387
      %v1503 = vpop.f32.mrb[0].mxu0
      %v1504 = vadd.f32 0.0, %v1503
      %v1505 = vpop.f32.mrb[0].mxu0
      %v1506 = vadd.f32 0.0, %v1505
      %v1507 = vpop.f32.mrb[0].mxu0
      %v1508 = vpop.f32.mrb[0].mxu0
      %1509 = vdwg.mxu0
      %v1510 = vadd.f32 %v1349, %v1504
      %v1511 = vadd.f32 %v1350, %v1506
      %s1512 = scalar_lea.vmem %s296, 2
      %v1513 = vld [vmem:[%s1512] sm:$0x1]
      %v1514 = vld [vmem:[%s1512 + $0x2] sm:$0x1]
      %s1515 = scalar_lea.vmem %s4, 896
      %v1516 = vld [vmem:[%s1515] sm:$0xff]
      %v1517 = vld [vmem:[%s1515 + $0x8] sm:$0xff]
      %v1518 = vld [vmem:[%s1515 + $0x10] sm:$0xff]
      %v1519 = vld [vmem:[%s1515 + $0x18] sm:$0xff]
      %v1520 = vld [vmem:[%s1515 + $0x20] sm:$0xff]
      %v1521 = vld [vmem:[%s1515 + $0x28] sm:$0xff]
      %v1522 = vld [vmem:[%s1515 + $0x30] sm:$0xff]
      %v1523 = vld [vmem:[%s1515 + $0x38] sm:$0xff]
      %v1524 = vld [vmem:[%s1515 + $0x40] sm:$0xff]
      %v1525 = vld [vmem:[%s1515 + $0x48] sm:$0xff]
      %v1526 = vld [vmem:[%s1515 + $0x50] sm:$0xff]
      %v1527 = vld [vmem:[%s1515 + $0x58] sm:$0xff]
      %v1528 = vld [vmem:[%s1515 + $0x60] sm:$0xff]
      %v1529 = vld [vmem:[%s1515 + $0x68] sm:$0xff]
      %v1530 = vld [vmem:[%s1515 + $0x70] sm:$0xff]
      %v1531 = vld [vmem:[%s1515 + $0x78] sm:$0xff]
      %v1534 = vcombine.low %v1513, %v1514
      %v1536 = vunpack.c.l.s4 1966171168
      %v1537 = vunpack.c.0.s8 %v1536
      %v1538 = vlaneseq
      %v1539 = vshrl.u32 %v1538, 7
      %v1540 = vsub.s32 %v1537, %v1539
      %v1541 = vrot.slane %v1534, %v1540
      %v1543 = vunpack.c.l.s4 1966171168
      %v1544 = vunpack.c.0.s8 %v1543
      %v1545 = vlaneseq
      %v1546 = vshrl.u32 %v1545, 7
      %v1547 = vsub.s32 %v1544, %v1546
      %v1548 = vrot.slane %v1541, %v1547
      %v1566 = vunpack.c.l.b16 %v1516
      %v1567 = vunpack.c.h.b16 %v1516
      %v1568 = vunpack.c.l.b16 %v1517
      %v1569 = vunpack.c.h.b16 %v1517
      %v1570 = vunpack.c.l.b16 %v1518
      %v1571 = vunpack.c.h.b16 %v1518
      %v1572 = vunpack.c.l.b16 %v1519
      %v1573 = vunpack.c.h.b16 %v1519
      %v1574 = vunpack.c.l.b16 %v1520
      %v1575 = vunpack.c.h.b16 %v1520
      %v1576 = vunpack.c.l.b16 %v1521
      %v1577 = vunpack.c.h.b16 %v1521
      %v1578 = vunpack.c.l.b16 %v1522
      %v1579 = vunpack.c.h.b16 %v1522
      %v1580 = vunpack.c.l.b16 %v1523
      %v1581 = vunpack.c.h.b16 %v1523
      %v1582 = vunpack.c.l.b16 %v1524
      %v1583 = vunpack.c.h.b16 %v1524
      %v1584 = vunpack.c.l.b16 %v1525
      %v1585 = vunpack.c.h.b16 %v1525
      %v1586 = vunpack.c.l.b16 %v1526
      %v1587 = vunpack.c.h.b16 %v1526
      %v1588 = vunpack.c.l.b16 %v1527
      %v1589 = vunpack.c.h.b16 %v1527
      %v1590 = vunpack.c.l.b16 %v1528
      %v1591 = vunpack.c.h.b16 %v1528
      %v1592 = vunpack.c.l.b16 %v1529
      %v1593 = vunpack.c.h.b16 %v1529
      %v1594 = vunpack.c.l.b16 %v1530
      %v1595 = vunpack.c.h.b16 %v1530
      %v1596 = vunpack.c.l.b16 %v1531
      %v1597 = vunpack.c.h.b16 %v1531
      %v1598 = vpack.c.b16 %v1568, %v1566
      %v1599 = vpack.c.b16 %v1569, %v1567
      %v1600 = vpack.c.b16 %v1572, %v1570
      %v1601 = vpack.c.b16 %v1573, %v1571
      %v1602 = vpack.c.b16 %v1576, %v1574
      %v1603 = vpack.c.b16 %v1577, %v1575
      %v1604 = vpack.c.b16 %v1580, %v1578
      %v1605 = vpack.c.b16 %v1581, %v1579
      %v1606 = vpack.c.b16 %v1584, %v1582
      %v1607 = vpack.c.b16 %v1585, %v1583
      %v1608 = vpack.c.b16 %v1588, %v1586
      %v1609 = vpack.c.b16 %v1589, %v1587
      %v1610 = vpack.c.b16 %v1592, %v1590
      %v1611 = vpack.c.b16 %v1593, %v1591
      %v1612 = vpack.c.b16 %v1596, %v1594
      %v1613 = vpack.c.b16 %v1597, %v1595
      %1630 = vmatprep.subr.bf16.mxu0 %v1599
      %1631 = vmatpush1.bf16.msra.mxu0 %v1598
      %1632 = vmatprep.subr.bf16.mxu0 %v1601
      %1633 = vmatpush1.bf16.msra.mxu0 %v1600
      %1634 = vmatprep.subr.bf16.mxu0 %v1603
      %1635 = vmatpush1.bf16.msra.mxu0 %v1602
      %1636 = vmatprep.subr.bf16.mxu0 %v1605
      %1637 = vmatpush1.bf16.msra.mxu0 %v1604
      %1638 = vmatprep.subr.bf16.mxu0 %v1607
      %1639 = vmatpush1.bf16.msra.mxu0 %v1606
      %1640 = vmatprep.subr.bf16.mxu0 %v1609
      %1641 = vmatpush1.bf16.msra.mxu0 %v1608
      %1642 = vmatprep.subr.bf16.mxu0 %v1611
      %1643 = vmatpush1.bf16.msra.mxu0 %v1610
      %1644 = vmatprep.subr.bf16.mxu0 %v1613
      %1645 = vmatpush1.bf16.msra.mxu0 %v1612
      %1646 = vmatprep.subr.bf16.mxu0 0
      %1647 = vmatpush1.bf16.msra.mxu0 0
      %1648 = vmatprep.subr.bf16.mxu0 0
      %1649 = vmatpush1.bf16.msra.mxu0 0
      %1650 = vmatprep.subr.bf16.mxu0 0
      %1651 = vmatpush1.bf16.msra.mxu0 0
      %1652 = vmatprep.subr.bf16.mxu0 0
      %1653 = vmatpush1.bf16.msra.mxu0 0
      %1654 = vmatprep.subr.bf16.mxu0 0
      %1655 = vmatpush1.bf16.msra.mxu0 0
      %1656 = vmatprep.subr.bf16.mxu0 0
      %1657 = vmatpush1.bf16.msra.mxu0 0
      %1658 = vmatprep.subr.bf16.mxu0 0
      %1659 = vmatpush1.bf16.msra.mxu0 0
      %1660 = vmatprep.subr.bf16.mxu0 0
      %1661 = vmatpush1.bf16.msra.mxu0 0
      %1662 = vmatprep.mubr.bf16.mxu0 0
      %1663 = vmatmul.mubr.bf16.gmra.mrb[0].mxu0 %v1548
      %v1664 = vpop.f32.mrb[0].mxu0
      %v1665 = vadd.f32 0.0, %v1664
      %v1666 = vpop.f32.mrb[0].mxu0
      %v1667 = vadd.f32 0.0, %v1666
      %v1668 = vpop.f32.mrb[0].mxu0
      %v1669 = vpop.f32.mrb[0].mxu0
      %1670 = vdwg.mxu0
      %v1671 = vadd.f32 %v1510, %v1665
      %v1672 = vadd.f32 %v1511, %v1667
      %v1673 = vld [vmem:[%s1351] sm:$0x3]
      %v1674 = vld [vmem:[%s1351 + $0x2] sm:$0x3]
      %v1678 = vunpack.c.l.s4 1966171168
      %v1679 = vunpack.c.0.s8 %v1678
      %v1680 = vlaneseq
      %v1681 = vshrl.u32 %v1680, 7
      %v1682 = vsub.s32 %v1679, %v1681
      %v1683 = vrot.slane %v1673, %v1682
      %v1684 = vcombine.high %v1683, %v1683
      %v1686 = vunpack.c.l.s4 1966171168
      %v1687 = vunpack.c.0.s8 %v1686
      %v1688 = vlaneseq
      %v1689 = vshrl.u32 %v1688, 7
      %v1690 = vsub.s32 %v1687, %v1689
      %v1691 = vrot.slane %v1674, %v1690
      %v1692 = vcombine.high %v1691, %v1691
      %v1694 = vshrl.u32 %v1683, 16
      %v1696 = vrot.slane %v1694, 7
      %v1697 = vrot.slane %v1696, 1
      %v1699 = vshll.u32 %v1684, 16
      %v1701 = vsel %vm662, %v1697, %v1699
      %v1703 = vshrl.u32 %v1691, 16
      %v1705 = vrot.slane %v1703, 7
      %v1706 = vrot.slane %v1705, 1
      %v1708 = vshll.u32 %v1692, 16
      %v1710 = vsel %vm662, %v1706, %v1708
      %s1711 = scalar_lea.vmem %s4, 1024
      %v1712 = vld [vmem:[%s1711] sm:$0xff]
      %v1713 = vld [vmem:[%s1711 + $0x8] sm:$0xff]
      %v1714 = vld [vmem:[%s1711 + $0x10] sm:$0xff]
      %v1715 = vld [vmem:[%s1711 + $0x18] sm:$0xff]
      %v1716 = vld [vmem:[%s1711 + $0x20] sm:$0xff]
      %v1717 = vld [vmem:[%s1711 + $0x28] sm:$0xff]
      %v1718 = vld [vmem:[%s1711 + $0x30] sm:$0xff]
      %v1719 = vld [vmem:[%s1711 + $0x38] sm:$0xff]
      %v1720 = vld [vmem:[%s1711 + $0x40] sm:$0xff]
      %v1721 = vld [vmem:[%s1711 + $0x48] sm:$0xff]
      %v1722 = vld [vmem:[%s1711 + $0x50] sm:$0xff]
      %v1723 = vld [vmem:[%s1711 + $0x58] sm:$0xff]
      %v1724 = vld [vmem:[%s1711 + $0x60] sm:$0xff]
      %v1725 = vld [vmem:[%s1711 + $0x68] sm:$0xff]
      %v1726 = vld [vmem:[%s1711 + $0x70] sm:$0xff]
      %v1727 = vld [vmem:[%s1711 + $0x78] sm:$0xff]
      %v1728 = vcombine.low %v1701, %v1710
      %v1730 = vunpack.c.l.s4 1966171168
      %v1731 = vunpack.c.0.s8 %v1730
      %v1732 = vlaneseq
      %v1733 = vshrl.u32 %v1732, 7
      %v1734 = vsub.s32 %v1731, %v1733
      %v1735 = vrot.slane %v1728, %v1734
      %v1737 = vunpack.c.l.s4 1966171168
      %v1738 = vunpack.c.0.s8 %v1737
      %v1739 = vlaneseq
      %v1740 = vshrl.u32 %v1739, 7
      %v1741 = vsub.s32 %v1738, %v1740
      %v1742 = vrot.slane %v1735, %v1741
      %v1760 = vunpack.c.l.b16 %v1712
      %v1761 = vunpack.c.h.b16 %v1712
      %v1762 = vunpack.c.l.b16 %v1713
      %v1763 = vunpack.c.h.b16 %v1713
      %v1764 = vunpack.c.l.b16 %v1714
      %v1765 = vunpack.c.h.b16 %v1714
      %v1766 = vunpack.c.l.b16 %v1715
      %v1767 = vunpack.c.h.b16 %v1715
      %v1768 = vunpack.c.l.b16 %v1716
      %v1769 = vunpack.c.h.b16 %v1716
      %v1770 = vunpack.c.l.b16 %v1717
      %v1771 = vunpack.c.h.b16 %v1717
      %v1772 = vunpack.c.l.b16 %v1718
      %v1773 = vunpack.c.h.b16 %v1718
      %v1774 = vunpack.c.l.b16 %v1719
      %v1775 = vunpack.c.h.b16 %v1719
      %v1776 = vunpack.c.l.b16 %v1720
      %v1777 = vunpack.c.h.b16 %v1720
      %v1778 = vunpack.c.l.b16 %v1721
      %v1779 = vunpack.c.h.b16 %v1721
      %v1780 = vunpack.c.l.b16 %v1722
      %v1781 = vunpack.c.h.b16 %v1722
      %v1782 = vunpack.c.l.b16 %v1723
      %v1783 = vunpack.c.h.b16 %v1723
      %v1784 = vunpack.c.l.b16 %v1724
      %v1785 = vunpack.c.h.b16 %v1724
      %v1786 = vunpack.c.l.b16 %v1725
      %v1787 = vunpack.c.h.b16 %v1725
      %v1788 = vunpack.c.l.b16 %v1726
      %v1789 = vunpack.c.h.b16 %v1726
      %v1790 = vunpack.c.l.b16 %v1727
      %v1791 = vunpack.c.h.b16 %v1727
      %v1792 = vpack.c.b16 %v1762, %v1760
      %v1793 = vpack.c.b16 %v1763, %v1761
      %v1794 = vpack.c.b16 %v1766, %v1764
      %v1795 = vpack.c.b16 %v1767, %v1765
      %v1796 = vpack.c.b16 %v1770, %v1768
      %v1797 = vpack.c.b16 %v1771, %v1769
      %v1798 = vpack.c.b16 %v1774, %v1772
      %v1799 = vpack.c.b16 %v1775, %v1773
      %v1800 = vpack.c.b16 %v1778, %v1776
      %v1801 = vpack.c.b16 %v1779, %v1777
      %v1802 = vpack.c.b16 %v1782, %v1780
      %v1803 = vpack.c.b16 %v1783, %v1781
      %v1804 = vpack.c.b16 %v1786, %v1784
      %v1805 = vpack.c.b16 %v1787, %v1785
      %v1806 = vpack.c.b16 %v1790, %v1788
      %v1807 = vpack.c.b16 %v1791, %v1789
      %1824 = vmatprep.subr.bf16.mxu0 %v1793
      %1825 = vmatpush1.bf16.msra.mxu0 %v1792
      %1826 = vmatprep.subr.bf16.mxu0 %v1795
      %1827 = vmatpush1.bf16.msra.mxu0 %v1794
      %1828 = vmatprep.subr.bf16.mxu0 %v1797
      %1829 = vmatpush1.bf16.msra.mxu0 %v1796
      %1830 = vmatprep.subr.bf16.mxu0 %v1799
      %1831 = vmatpush1.bf16.msra.mxu0 %v1798
      %1832 = vmatprep.subr.bf16.mxu0 %v1801
      %1833 = vmatpush1.bf16.msra.mxu0 %v1800
      %1834 = vmatprep.subr.bf16.mxu0 %v1803
      %1835 = vmatpush1.bf16.msra.mxu0 %v1802
      %1836 = vmatprep.subr.bf16.mxu0 %v1805
      %1837 = vmatpush1.bf16.msra.mxu0 %v1804
      %1838 = vmatprep.subr.bf16.mxu0 %v1807
      %1839 = vmatpush1.bf16.msra.mxu0 %v1806
      %1840 = vmatprep.subr.bf16.mxu0 0
      %1841 = vmatpush1.bf16.msra.mxu0 0
      %1842 = vmatprep.subr.bf16.mxu0 0
      %1843 = vmatpush1.bf16.msra.mxu0 0
      %1844 = vmatprep.subr.bf16.mxu0 0
      %1845 = vmatpush1.bf16.msra.mxu0 0
      %1846 = vmatprep.subr.bf16.mxu0 0
      %1847 = vmatpush1.bf16.msra.mxu0 0
      %1848 = vmatprep.subr.bf16.mxu0 0
      %1849 = vmatpush1.bf16.msra.mxu0 0
      %1850 = vmatprep.subr.bf16.mxu0 0
      %1851 = vmatpush1.bf16.msra.mxu0 0
      %1852 = vmatprep.subr.bf16.mxu0 0
      %1853 = vmatpush1.bf16.msra.mxu0 0
      %1854 = vmatprep.subr.bf16.mxu0 0
      %1855 = vmatpush1.bf16.msra.mxu0 0
      %1856 = vmatprep.mubr.bf16.mxu0 0
      %1857 = vmatmul.mubr.bf16.gmra.mrb[0].mxu0 %v1742
      %v1858 = vpop.f32.mrb[0].mxu0
      %v1859 = vadd.f32 0.0, %v1858
      %v1860 = vpop.f32.mrb[0].mxu0
      %v1861 = vadd.f32 0.0, %v1860
      %v1862 = vpop.f32.mrb[0].mxu0
      %v1863 = vpop.f32.mrb[0].mxu0
      %1864 = vdwg.mxu0
      %v1865 = vadd.f32 %v1671, %v1859
      %v1866 = vadd.f32 %v1672, %v1861
      %v1867 = vld [vmem:[%s5] sm:$0x3]
      %v1869 = vlaneseq
      %v1870 = vshrl.u32 %v1869, 7
      %v1871 = vsub.s32 0, %v1870
      %v1872 = vrot.slane %v1867, %v1871
      %v1873 = vlaneseq
      %v1874 = vshrl.u32 %v1873, 7
      %v1875 = vsub.s32 1, %v1874
      %v1876 = vrot.slane %v1867, %v1875
      %v1879 = vadd.f32 %v1865, %v1872
      %v1880 = vadd.f32 %v1866, %v1876
      %v1881 = vpack.c.bf16 %v1879, %v1879
      %v1882 = vpack.c.bf16 %v1880, %v1880
      %v1885 = vcombine.low %v1881, %v1882
      %v1887 = vunpack.c.l.s4 1983009808
      %v1888 = vunpack.c.0.s8 %v1887
      %v1889 = vlaneseq
      %v1890 = vshrl.u32 %v1889, 7
      %v1891 = vsub.s32 %v1888, %v1890
      %v1892 = vrot.slane %v1885, %v1891
      %1894 = vst [vmem:[%s311] sm:$0xf] %v1892
      %p1895 = scmp.lt.s32.totalorder %s17, 1
      %s1896 = scalar_select %p1895, %s17, 1
      %s1897 = smul.addr %s1896, 2
      %s1898 = smul.addr %s1897, 2
      %s1899 = scalar_lea.vmem %s6, %s1898
      // Predicated region
      $region45: #{base_encoder_forward.8} parent=43 // pred_check
        %p1900 = pneg %p181
      $region46: #{base_encoder_forward.8} parent=43 // pred_check_branch
        %1902 = sbr.rel (%p1900) target = $region48
      $region47: #{base_encoder_forward.8} parent=43 // pred_region
        _
      $region48: #{base_encoder_forward.8} parent=43 // pred_fallthru
        _
    $region44: #{base_encoder_forward.8} parent=5 // pred_fallthru
      _
    %p1903 = scmp.le.s32.totalorder 2, %s12
    // Predicated region
    $region49: #{base_encoder_forward.8} parent=5 // pred_check
      %p1904 = pneg %p1903
    $region50: #{base_encoder_forward.8} parent=5 // pred_check_branch
      %1906 = sbr.rel (%p1904) target = $region52
    $region51: #{base_encoder_forward.8} parent=5 // pred_region
      %s1907 = ssub.s32 %s12, 2
      // Predicated region
      $region53: #{base_encoder_forward.8} parent=51 // pred_check
        %p1908 = pneg %p187
      $region54: #{base_encoder_forward.8} parent=51 // pred_check_branch
        %1910 = sbr.rel (%p1908) target = $region56
      $region55: #{base_encoder_forward.8} parent=51 // pred_region
        %p1911 = scmp.lt.s32.totalorder %s18, 1
        %s1912 = scalar_select %p1911, %s18, 1
        %s1913 = smul.addr %s1912, 2
        %s1914 = smul.addr %s1913, 2
        %s1915 = scalar_lea.vmem %s6, %s1914
      $region56: #{base_encoder_forward.8} parent=51 // pred_fallthru
        _
    $region52: #{base_encoder_forward.8} parent=5 // pred_fallthru
      _
  $region6: #{base_encoder_forward.8} parent=0 // loop_footer
    %s16 = sadd.s32 1, %s12
  $region7: #{base_encoder_forward.8} parent=0 // loop_footer_branch
    %11 = sbr.rel target = $region3
  $region8: #{base_encoder_forward.8} parent=0 // loop_exit
    _

// kernel: base_encoder_forward.9
$region0: #{base_encoder_forward.9}
  #allocation0 [shape = 'u32[]', space=smem, size = 0x4, offset = 0x4, fixed_abs, tag = 'smem constant byte address 0x4 - core index']
  #allocation1 [shape = 'u32[144,128]{1,0:T(1,128)}', space=vmem, size = 0x12000, scoped, tag = 'internal scratch']
  #allocation2 [shape = 'f32[2,32]{1,0:T(2,128)}', space=vmem, size = 0x400, scoped, tag = 'scratch operand']
  %s0 = inlined_call_operand.vmem [shape: bf16[2,1024], index: 0, kind: input, shape index: {}]
  %s1 = inlined_call_operand.vmem [shape: bf16[1024,32], index: 1, kind: input, shape index: {}]
  %s2 = inlined_call_operand.vmem [shape: f32[1,32], index: 2, kind: input, shape index: {}]
  %s3 = inlined_call_operand.hbm [shape: f32[2,32], index: 3, kind: output, shape index: {}]
  %s4 = sld [smem:[#allocation0]]
  $region53: #{base_encoder_forward.9} parent=0
    _
  %s6 = ssub.s32 1, %s4
  %s7 = scalar_select 0, %s6, %s4
  $region1: #{base_encoder_forward.9} parent=0
    #allocation3 [shape = 'u8[1024]{0}', space=vmem, size = 0x400, scoped, tag = 'output window, operand 0, single buffered']
    #allocation4 [shape = 's32[2]{0}', space=sflag, size = 0x8, scoped, tag = 'scoped memory for base_encoder_forward.9']
    %8 = vsyncpa [#allocation4], 0
    loop: start=0, step=1, limit=4
    $region2: #{base_encoder_forward.9} parent=1 // loop_pre_header
      _
    $region3: #{base_encoder_forward.9} parent=1 // loop_header
      %s10 = sphi 0, %s14
      %p11 = scmp.ge.s32.totalorder %s10, 4
      %s20 = sphi 0, %s22
      %s23 = sphi 0, %s20
      %s24 = sphi 0, %s23
      %s40 = sphi 0, %s24
      %s46 = sphi 0, %s48
      %s49 = sphi 0, %s46
      %s50 = sphi 0, %s49
      %s66 = sphi 0, %s50
      %s70 = sphi 0, %s70
      %s72 = sphi 0, %s70
      %s73 = sphi 0, %s72
      %s87 = sphi 0, %s73
      %s91 = sphi 0, %s91
      %s93 = sphi 0, %s91
      %s94 = sphi 0, %s93
      %s108 = sphi 0, %s94
    $region4: #{base_encoder_forward.9} parent=1 // loop_header_branch
      %13 = sbr.rel (%p11) target = $region8
    $region5: #{base_encoder_forward.9} parent=1 // loop_body
      %s15 = ssub.s32 %s10, 1
      %s16 = ssub.s32 %s10, 2
      %s17 = sadd.s32 %s10, 1
      %s18 = ssub.s32 %s10, %s17
      %p19 = scmp.eq.s32.totalorder %s18, 0
      %s21 = sadd.s32 %s20, 1
      %s22 = scalar_select %p19, %s20, %s21
      %p25 = pneg %p19
      %p26 = scmp.eq.s32.totalorder %s10, 1
      %p27 = por %p25, %p26
      %p28 = scmp.ne.s32.totalorder %s20, %s23
      %p29 = scmp.eq.s32.totalorder %s10, 0
      %p30 = por %p28, %p29
      %p31 = scmp.ne.s32.totalorder %s20, %s23
      %p32 = scmp.eq.s32.totalorder %s15, 1
      %p33 = por %p31, %p32
      %p34 = scmp.ne.s32.totalorder %s23, %s24
      %p35 = scmp.eq.s32.totalorder %s15, 0
      %p36 = por %p34, %p35
      %p37 = scmp.ne.s32.totalorder %s23, %s24
      %p38 = scmp.eq.s32.totalorder %s16, 1
      %p39 = por %p37, %p38
      %p41 = scmp.ne.s32.totalorder %s24, %s40
      %p42 = scmp.eq.s32.totalorder %s16, 0
      %p43 = por %p41, %p42
      %s44 = ssub.s32 %s10, %s17
      %p45 = scmp.eq.s32.totalorder %s44, 0
      %s47 = sadd.s32 %s46, 1
      %s48 = scalar_select %p45, %s46, %s47
      %p51 = pneg %p45
      %p52 = scmp.eq.s32.totalorder %s10, 1
      %p53 = por %p51, %p52
      %p54 = scmp.ne.s32.totalorder %s46, %s49
      %p55 = scmp.eq.s32.totalorder %s10, 0
      %p56 = por %p54, %p55
      %p57 = scmp.ne.s32.totalorder %s46, %s49
      %p58 = scmp.eq.s32.totalorder %s15, 1
      %p59 = por %p57, %p58
      %p60 = scmp.ne.s32.totalorder %s49, %s50
      %p61 = scmp.eq.s32.totalorder %s15, 0
      %p62 = por %p60, %p61
      %p63 = scmp.ne.s32.totalorder %s49, %s50
      %p64 = scmp.eq.s32.totalorder %s16, 1
      %p65 = por %p63, %p64
      %p67 = scmp.ne.s32.totalorder %s50, %s66
      %p68 = scmp.eq.s32.totalorder %s16, 0
      %p69 = por %p67, %p68
      %s71 = sadd.s32 %s70, 1
      %p74 = scmp.eq.s32.totalorder %s10, 1
      %p75 = scmp.ne.s32.totalorder %s70, %s72
      %p76 = scmp.eq.s32.totalorder %s10, 0
      %p77 = por %p75, %p76
      %p78 = scmp.ne.s32.totalorder %s70, %s72
      %p79 = scmp.eq.s32.totalorder %s15, 1
      %p80 = por %p78, %p79
      %p81 = scmp.ne.s32.totalorder %s72, %s73
      %p82 = scmp.eq.s32.totalorder %s15, 0
      %p83 = por %p81, %p82
      %p84 = scmp.ne.s32.totalorder %s72, %s73
      %p85 = scmp.eq.s32.totalorder %s16, 1
      %p86 = por %p84, %p85
      %p88 = scmp.ne.s32.totalorder %s73, %s87
      %p89 = scmp.eq.s32.totalorder %s16, 0
      %p90 = por %p88, %p89
      %s92 = sadd.s32 %s91, 1
      %p95 = scmp.eq.s32.totalorder %s10, 1
      %p96 = scmp.ne.s32.totalorder %s91, %s93
      %p97 = scmp.eq.s32.totalorder %s10, 0
      %p98 = por %p96, %p97
      %p99 = scmp.ne.s32.totalorder %s91, %s93
      %p100 = scmp.eq.s32.totalorder %s15, 1
      %p101 = por %p99, %p100
      %p102 = scmp.ne.s32.totalorder %s93, %s94
      %p103 = scmp.eq.s32.totalorder %s15, 0
      %p104 = por %p102, %p103
      %p105 = scmp.ne.s32.totalorder %s93, %s94
      %p106 = scmp.eq.s32.totalorder %s16, 1
      %p107 = por %p105, %p106
      %p109 = scmp.ne.s32.totalorder %s94, %s108
      %p110 = scmp.eq.s32.totalorder %s16, 0
      %p111 = por %p109, %p110
      %p112 = scmp.le.s32.totalorder 1, %s10
      %p113 = scmp.lt.s32.totalorder %s10, 3
      %p114 = pnand %p112, %p113
      %p115 = pneg %p114
      // Predicated region
      $region9: #{base_encoder_forward.9} parent=5 // pred_check
        _
      $region10: #{base_encoder_forward.9} parent=5 // pred_check_branch
        %117 = sbr.rel (%p114) target = $region12
      $region11: #{base_encoder_forward.9} parent=5 // pred_region
        %s118 = ssub.s32 %s10, 1
        // Predicated region
        $region13: #{base_encoder_forward.9} parent=11 // pred_check
          %p119 = pneg %p83
        $region14: #{base_encoder_forward.9} parent=11 // pred_check_branch
          %121 = sbr.rel (%p119) target = $region16
        $region15: #{base_encoder_forward.9} parent=11 // pred_region
          _
        $region16: #{base_encoder_forward.9} parent=11 // pred_fallthru
          _
      $region12: #{base_encoder_forward.9} parent=5 // pred_fallthru
        _
      %p122 = scmp.lt.s32.totalorder %s10, 2
      // Predicated region
      $region17: #{base_encoder_forward.9} parent=5 // pred_check
        %p123 = pneg %p122
      $region18: #{base_encoder_forward.9} parent=5 // pred_check_branch
        %125 = sbr.rel (%p123) target = $region20
      $region19: #{base_encoder_forward.9} parent=5 // pred_region
        // Predicated region
        $region21: #{base_encoder_forward.9} parent=19 // pred_check
          %p126 = pneg %p30
        $region22: #{base_encoder_forward.9} parent=19 // pred_check_branch
          %128 = sbr.rel (%p126) target = $region24
        $region23: #{base_encoder_forward.9} parent=19 // pred_region
          %s129 = smul.u32 4, %s10
          %p130 = scmp.lt.s32.totalorder %s129, 7
          %s131 = scalar_select %p130, %s129, 7
          %s132 = scalar_lea.vmem %s0, %s131
          %s133 = smul.u32 4, %s10
        $region24: #{base_encoder_forward.9} parent=19 // pred_fallthru
          _
        // Predicated region
        $region25: #{base_encoder_forward.9} parent=19 // pred_check
          %p134 = pneg %p56
        $region26: #{base_encoder_forward.9} parent=19 // pred_check_branch
          %136 = sbr.rel (%p134) target = $region28
        $region27: #{base_encoder_forward.9} parent=19 // pred_region
          %s137 = smul.u32 64, %s10
          %p138 = scmp.lt.s32.totalorder %s137, 127
          %s139 = scalar_select %p138, %s137, 127
          %s140 = smul.addr %s139, 4
          %s141 = scalar_lea.vmem %s1, %s140
          %s142 = smul.u32 64, %s10
        $region28: #{base_encoder_forward.9} parent=19 // pred_fallthru
          _
      $region20: #{base_encoder_forward.9} parent=5 // pred_fallthru
        _
      %p143 = scmp.le.s32.totalorder 1, %s10
      %p144 = scmp.lt.s32.totalorder %s10, 3
      %p145 = pnand %p143, %p144
      %p146 = pneg %p145
      // Predicated region
      $region29: #{base_encoder_forward.9} parent=5 // pred_check
        _
      $region30: #{base_encoder_forward.9} parent=5 // pred_check_branch
        %148 = sbr.rel (%p145) target = $region32
      $region31: #{base_encoder_forward.9} parent=5 // pred_region
        %s149 = ssub.s32 %s10, 1
        %s150 = smul.u32 4, %s15
        %p151 = scmp.lt.s32.totalorder %s150, 7
        %s152 = scalar_select %p151, %s150, 7
        %s153 = scalar_lea.vmem %s0, %s152
        %p154 = pneg %p36
        %p155 = pneg %p33
        %s156 = smul.u32 64, %s15
        %p157 = scmp.lt.s32.totalorder %s156, 127
        %s158 = scalar_select %p157, %s156, 127
        %s159 = smul.addr %s158, 4
        %s160 = scalar_lea.vmem %s1, %s159
        %p161 = pneg %p62
        %p162 = pneg %p59
        %p163 = pneg %p83
        %p164 = pneg %p80
        %p165 = pneg %p104
        %p166 = pneg %p101
        %s167 = smul.u32 4, %s15
        %p168 = scmp.lt.s32.totalorder %s167, 7
        %s169 = scalar_select %p168, %s167, 7
        %s170 = scalar_lea.vmem %s0, %s169
        %s171 = smul.u32 4, %s15
        %s172 = smul.u32 64, %s15
        %p173 = scmp.lt.s32.totalorder %s172, 127
        %s174 = scalar_select %p173, %s172, 127
        %s175 = smul.addr %s174, 4
        %s176 = scalar_lea.vmem %s1, %s175
        %s177 = smul.u32 64, %s15
        %p179 = scmp.eq.s32.totalorder %s15, 0
        // Predicated region
        $region33: #{base_encoder_forward.9} parent=31 // pred_check
          %p180 = pneg %p179
        $region34: #{base_encoder_forward.9} parent=31 // pred_check_branch
          %182 = sbr.rel (%p180) target = $region36
        $region35: #{base_encoder_forward.9} parent=31 // pred_region
          %vm183 = vcmask 254976
          %184 = vst.msk [vmem:[#allocation2] sm:$0x3] %vm183, 0.0
        $region36: #{base_encoder_forward.9} parent=31 // pred_fallthru
          _
        %v185 = vld [vmem:[#allocation2] sm:$0x3]
        %v186 = vld [vmem:[%s170] sm:$0xf]
        %v187 = vld [vmem:[%s176] sm:$0xf]
        %v188 = vld [vmem:[%s176 + $0x4] sm:$0xf]
        %v189 = vld [vmem:[%s176 + $0x8] sm:$0xf]
        %v190 = vld [vmem:[%s176 + $0xc] sm:$0xf]
        %v191 = vld [vmem:[%s176 + $0x10] sm:$0xf]
        %v192 = vld [vmem:[%s176 + $0x14] sm:$0xf]
        %v193 = vld [vmem:[%s176 + $0x18] sm:$0xf]
        %v194 = vld [vmem:[%s176 + $0x1c] sm:$0xf]
        %v195 = vld [vmem:[%s176 + $0x20] sm:$0xf]
        %v196 = vld [vmem:[%s176 + $0x24] sm:$0xf]
        %v197 = vld [vmem:[%s176 + $0x28] sm:$0xf]
        %v198 = vld [vmem:[%s176 + $0x2c] sm:$0xf]
        %v199 = vld [vmem:[%s176 + $0x30] sm:$0xf]
        %v200 = vld [vmem:[%s176 + $0x34] sm:$0xf]
        %v201 = vld [vmem:[%s176 + $0x38] sm:$0xf]
        %v202 = vld [vmem:[%s176 + $0x3c] sm:$0xf]
        %v203 = vld [vmem:[%s176 + $0x40] sm:$0xf]
        %v204 = vld [vmem:[%s176 + $0x44] sm:$0xf]
        %v205 = vld [vmem:[%s176 + $0x48] sm:$0xf]
        %v206 = vld [vmem:[%s176 + $0x4c] sm:$0xf]
        %v207 = vld [vmem:[%s176 + $0x50] sm:$0xf]
        %v208 = vld [vmem:[%s176 + $0x54] sm:$0xf]
        %v209 = vld [vmem:[%s176 + $0x58] sm:$0xf]
        %v210 = vld [vmem:[%s176 + $0x5c] sm:$0xf]
        %v211 = vld [vmem:[%s176 + $0x60] sm:$0xf]
        %v212 = vld [vmem:[%s176 + $0x64] sm:$0xf]
        %v213 = vld [vmem:[%s176 + $0x68] sm:$0xf]
        %v214 = vld [vmem:[%s176 + $0x6c] sm:$0xf]
        %v215 = vld [vmem:[%s176 + $0x70] sm:$0xf]
        %v216 = vld [vmem:[%s176 + $0x74] sm:$0xf]
        %v217 = vld [vmem:[%s176 + $0x78] sm:$0xf]
        %v218 = vld [vmem:[%s176 + $0x7c] sm:$0xf]
        %v219 = vld [vmem:[%s176 + $0x80] sm:$0xf]
        %v220 = vld [vmem:[%s176 + $0x84] sm:$0xf]
        %v221 = vld [vmem:[%s176 + $0x88] sm:$0xf]
        %v222 = vld [vmem:[%s176 + $0x8c] sm:$0xf]
        %v223 = vld [vmem:[%s176 + $0x90] sm:$0xf]
        %v224 = vld [vmem:[%s176 + $0x94] sm:$0xf]
        %v225 = vld [vmem:[%s176 + $0x98] sm:$0xf]
        %v226 = vld [vmem:[%s176 + $0x9c] sm:$0xf]
        %v227 = vld [vmem:[%s176 + $0xa0] sm:$0xf]
        %v228 = vld [vmem:[%s176 + $0xa4] sm:$0xf]
        %v229 = vld [vmem:[%s176 + $0xa8] sm:$0xf]
        %v230 = vld [vmem:[%s176 + $0xac] sm:$0xf]
        %v231 = vld [vmem:[%s176 + $0xb0] sm:$0xf]
        %v232 = vld [vmem:[%s176 + $0xb4] sm:$0xf]
        %v233 = vld [vmem:[%s176 + $0xb8] sm:$0xf]
        %v234 = vld [vmem:[%s176 + $0xbc] sm:$0xf]
        %v235 = vld [vmem:[%s176 + $0xc0] sm:$0xf]
        %v236 = vld [vmem:[%s176 + $0xc4] sm:$0xf]
        %v237 = vld [vmem:[%s176 + $0xc8] sm:$0xf]
        %v238 = vld [vmem:[%s176 + $0xcc] sm:$0xf]
        %v239 = vld [vmem:[%s176 + $0xd0] sm:$0xf]
        %v240 = vld [vmem:[%s176 + $0xd4] sm:$0xf]
        %v241 = vld [vmem:[%s176 + $0xd8] sm:$0xf]
        %v242 = vld [vmem:[%s176 + $0xdc] sm:$0xf]
        %v243 = vld [vmem:[%s176 + $0xe0] sm:$0xf]
        %v244 = vld [vmem:[%s176 + $0xe4] sm:$0xf]
        %v245 = vld [vmem:[%s176 + $0xe8] sm:$0xf]
        %v246 = vld [vmem:[%s176 + $0xec] sm:$0xf]
        %v247 = vld [vmem:[%s176 + $0xf0] sm:$0xf]
        %v248 = vld [vmem:[%s176 + $0xf4] sm:$0xf]
        %v249 = vld [vmem:[%s176 + $0xf8] sm:$0xf]
        %v250 = vld [vmem:[%s176 + $0xfc] sm:$0xf]
        %v253 = vunpack.c.l.s4 1966171168
        %v254 = vunpack.c.0.s8 %v253
        %v255 = vlaneseq
        %v256 = vshrl.u32 %v255, 7
        %v257 = vsub.s32 %v254, %v256
        %v258 = vrot.slane %v186, %v257
        %v259 = vcombine.high %v258, %v258
        %v261 = vunpack.c.l.s4 1966171168
        %v262 = vunpack.c.0.s8 %v261
        %v263 = vlaneseq
        %v264 = vshrl.u32 %v263, 7
        %v265 = vsub.s32 %v262, %v264
        %v266 = vrot.slane %v258, %v265
        %v268 = vunpack.c.l.s4 1966171168
        %v269 = vunpack.c.0.s8 %v268
        %v270 = vlaneseq
        %v271 = vshrl.u32 %v270, 7
        %v272 = vsub.s32 %v269, %v271
        %v273 = vrot.slane %v259, %v272
        %v274 = vcombine.high %v266, %v266
        %v275 = vcombine.high %v273, %v273
        %v344 = vunpack.c.l.b16 %v187
        %v345 = vunpack.c.l.b16 %v188
        %v346 = vunpack.c.l.b16 %v189
        %v347 = vunpack.c.l.b16 %v190
        %v348 = vunpack.c.l.b16 %v191
        %v349 = vunpack.c.l.b16 %v192
        %v350 = vunpack.c.l.b16 %v193
        %v351 = vunpack.c.l.b16 %v194
        %v352 = vunpack.c.l.b16 %v195
        %v353 = vunpack.c.l.b16 %v196
        %v354 = vunpack.c.l.b16 %v197
        %v355 = vunpack.c.l.b16 %v198
        %v356 = vunpack.c.l.b16 %v199
        %v357 = vunpack.c.l.b16 %v200
        %v358 = vunpack.c.l.b16 %v201
        %v359 = vunpack.c.l.b16 %v202
        %v360 = vunpack.c.l.b16 %v203
        %v361 = vunpack.c.l.b16 %v204
        %v362 = vunpack.c.l.b16 %v205
        %v363 = vunpack.c.l.b16 %v206
        %v364 = vunpack.c.l.b16 %v207
        %v365 = vunpack.c.l.b16 %v208
        %v366 = vunpack.c.l.b16 %v209
        %v367 = vunpack.c.l.b16 %v210
        %v368 = vunpack.c.l.b16 %v211
        %v369 = vunpack.c.l.b16 %v212
        %v370 = vunpack.c.l.b16 %v213
        %v371 = vunpack.c.l.b16 %v214
        %v372 = vunpack.c.l.b16 %v215
        %v373 = vunpack.c.l.b16 %v216
        %v374 = vunpack.c.l.b16 %v217
        %v375 = vunpack.c.l.b16 %v218
        %v376 = vunpack.c.l.b16 %v219
        %v377 = vunpack.c.l.b16 %v220
        %v378 = vunpack.c.l.b16 %v221
        %v379 = vunpack.c.l.b16 %v222
        %v380 = vunpack.c.l.b16 %v223
        %v381 = vunpack.c.l.b16 %v224
        %v382 = vunpack.c.l.b16 %v225
        %v383 = vunpack.c.l.b16 %v226
        %v384 = vunpack.c.l.b16 %v227
        %v385 = vunpack.c.l.b16 %v228
        %v386 = vunpack.c.l.b16 %v229
        %v387 = vunpack.c.l.b16 %v230
        %v388 = vunpack.c.l.b16 %v231
        %v389 = vunpack.c.l.b16 %v232
        %v390 = vunpack.c.l.b16 %v233
        %v391 = vunpack.c.l.b16 %v234
        %v392 = vunpack.c.l.b16 %v235
        %v393 = vunpack.c.l.b16 %v236
        %v394 = vunpack.c.l.b16 %v237
        %v395 = vunpack.c.l.b16 %v238
        %v396 = vunpack.c.l.b16 %v239
        %v397 = vunpack.c.l.b16 %v240
        %v398 = vunpack.c.l.b16 %v241
        %v399 = vunpack.c.l.b16 %v242
        %v400 = vunpack.c.l.b16 %v243
        %v401 = vunpack.c.l.b16 %v244
        %v402 = vunpack.c.l.b16 %v245
        %v403 = vunpack.c.l.b16 %v246
        %v404 = vunpack.c.l.b16 %v247
        %v405 = vunpack.c.l.b16 %v248
        %v406 = vunpack.c.l.b16 %v249
        %v407 = vunpack.c.l.b16 %v250
        %v408 = vpack.c.b16 %v345, %v344
        %v409 = vpack.c.b16 %v347, %v346
        %v410 = vpack.c.b16 %v349, %v348
        %v411 = vpack.c.b16 %v351, %v350
        %v412 = vpack.c.b16 %v353, %v352
        %v413 = vpack.c.b16 %v355, %v354
        %v414 = vpack.c.b16 %v357, %v356
        %v415 = vpack.c.b16 %v359, %v358
        %v416 = vpack.c.b16 %v361, %v360
        %v417 = vpack.c.b16 %v363, %v362
        %v418 = vpack.c.b16 %v365, %v364
        %v419 = vpack.c.b16 %v367, %v366
        %v420 = vpack.c.b16 %v369, %v368
        %v421 = vpack.c.b16 %v371, %v370
        %v422 = vpack.c.b16 %v373, %v372
        %v423 = vpack.c.b16 %v375, %v374
        %v424 = vpack.c.b16 %v377, %v376
        %v425 = vpack.c.b16 %v379, %v378
        %v426 = vpack.c.b16 %v381, %v380
        %v427 = vpack.c.b16 %v383, %v382
        %v428 = vpack.c.b16 %v385, %v384
        %v429 = vpack.c.b16 %v387, %v386
        %v430 = vpack.c.b16 %v389, %v388
        %v431 = vpack.c.b16 %v391, %v390
        %v432 = vpack.c.b16 %v393, %v392
        %v433 = vpack.c.b16 %v395, %v394
        %v434 = vpack.c.b16 %v397, %v396
        %v435 = vpack.c.b16 %v399, %v398
        %v436 = vpack.c.b16 %v401, %v400
        %v437 = vpack.c.b16 %v403, %v402
        %v438 = vpack.c.b16 %v405, %v404
        %v439 = vpack.c.b16 %v407, %v406
        %472 = vmatprep.subr.bf16.mxu0 0
        %473 = vmatpush1.bf16.msra.mxu0 %v408
        %474 = vmatprep.subr.bf16.mxu0 0
        %475 = vmatpush1.bf16.msra.mxu0 %v409
        %476 = vmatprep.subr.bf16.mxu0 0
        %477 = vmatpush1.bf16.msra.mxu0 %v410
        %478 = vmatprep.subr.bf16.mxu0 0
        %479 = vmatpush1.bf16.msra.mxu0 %v411
        %480 = vmatprep.subr.bf16.mxu0 0
        %481 = vmatpush1.bf16.msra.mxu0 %v412
        %482 = vmatprep.subr.bf16.mxu0 0
        %483 = vmatpush1.bf16.msra.mxu0 %v413
        %484 = vmatprep.subr.bf16.mxu0 0
        %485 = vmatpush1.bf16.msra.mxu0 %v414
        %486 = vmatprep.subr.bf16.mxu0 0
        %487 = vmatpush1.bf16.msra.mxu0 %v415
        %488 = vmatprep.subr.bf16.mxu0 0
        %489 = vmatpush1.bf16.msra.mxu0 %v416
        %490 = vmatprep.subr.bf16.mxu0 0
        %491 = vmatpush1.bf16.msra.mxu0 %v417
        %492 = vmatprep.subr.bf16.mxu0 0
        %493 = vmatpush1.bf16.msra.mxu0 %v418
        %494 = vmatprep.subr.bf16.mxu0 0
        %495 = vmatpush1.bf16.msra.mxu0 %v419
        %496 = vmatprep.subr.bf16.mxu0 0
        %497 = vmatpush1.bf16.msra.mxu0 %v420
        %498 = vmatprep.subr.bf16.mxu0 0
        %499 = vmatpush1.bf16.msra.mxu0 %v421
        %500 = vmatprep.subr.bf16.mxu0 0
        %501 = vmatpush1.bf16.msra.mxu0 %v422
        %502 = vmatprep.subr.bf16.mxu0 0
        %503 = vmatpush1.bf16.msra.mxu0 %v423
        %504 = vmatprep.mubr.bf16.mxu0 %v273
        %505 = vmatmul.mubr.bf16.gmra.mrb[0].mxu0 %v266
        %v506 = vpop.f32.mrb[0].mxu0
        %v507 = vadd.f32 0.0, %v506
        %v508 = vpop.f32.mrb[0].mxu0
        %v509 = vpop.f32.mrb[0].mxu0
        %v510 = vpop.f32.mrb[0].mxu0
        %511 = vdwg.mxu0
        %512 = vmatprep.subr.bf16.mxu0 0
        %513 = vmatpush1.bf16.msra.mxu0 %v424
        %514 = vmatprep.subr.bf16.mxu0 0
        %515 = vmatpush1.bf16.msra.mxu0 %v425
        %516 = vmatprep.subr.bf16.mxu0 0
        %517 = vmatpush1.bf16.msra.mxu0 %v426
        %518 = vmatprep.subr.bf16.mxu0 0
        %519 = vmatpush1.bf16.msra.mxu0 %v427
        %520 = vmatprep.subr.bf16.mxu0 0
        %521 = vmatpush1.bf16.msra.mxu0 %v428
        %522 = vmatprep.subr.bf16.mxu0 0
        %523 = vmatpush1.bf16.msra.mxu0 %v429
        %524 = vmatprep.subr.bf16.mxu0 0
        %525 = vmatpush1.bf16.msra.mxu0 %v430
        %526 = vmatprep.subr.bf16.mxu0 0
        %527 = vmatpush1.bf16.msra.mxu0 %v431
        %528 = vmatprep.subr.bf16.mxu0 0
        %529 = vmatpush1.bf16.msra.mxu0 %v432
        %530 = vmatprep.subr.bf16.mxu0 0
        %531 = vmatpush1.bf16.msra.mxu0 %v433
        %532 = vmatprep.subr.bf16.mxu0 0
        %533 = vmatpush1.bf16.msra.mxu0 %v434
        %534 = vmatprep.subr.bf16.mxu0 0
        %535 = vmatpush1.bf16.msra.mxu0 %v435
        %536 = vmatprep.subr.bf16.mxu0 0
        %537 = vmatpush1.bf16.msra.mxu0 %v436
        %538 = vmatprep.subr.bf16.mxu0 0
        %539 = vmatpush1.bf16.msra.mxu0 %v437
        %540 = vmatprep.subr.bf16.mxu0 0
        %541 = vmatpush1.bf16.msra.mxu0 %v438
        %542 = vmatprep.subr.bf16.mxu0 0
        %543 = vmatpush1.bf16.msra.mxu0 %v439
        %544 = vmatprep.mubr.bf16.mxu0 %v275
        %545 = vmatmul.mubr.bf16.gmra.mrb[0].mxu0 %v274
        %v546 = vpop.f32.mrb[0].mxu0
        %v547 = vadd.f32 %v507, %v546
        %v548 = vpop.f32.mrb[0].mxu0
        %v549 = vpop.f32.mrb[0].mxu0
        %v550 = vpop.f32.mrb[0].mxu0
        %551 = vdwg.mxu0
        %v552 = vadd.f32 %v185, %v547
        %vm553 = vcmask 254976
        %554 = vst.msk [vmem:[#allocation2] sm:$0x3] %vm553, %v552
        %p555 = scmp.eq.s32.totalorder %s15, 1
        // Predicated region
        $region37: #{base_encoder_forward.9} parent=31 // pred_check
          %p556 = pneg %p555
        $region38: #{base_encoder_forward.9} parent=31 // pred_check_branch
          %558 = sbr.rel (%p556) target = $region40
        $region39: #{base_encoder_forward.9} parent=31 // pred_region
          %v559 = vld [vmem:[#allocation2] sm:$0x3]
          %v560 = vld [vmem:[%s2] sm:$0x1]
          %v562 = vlaneseq
          %v563 = vshrl.u32 %v562, 7
          %v564 = vsub.s32 0, %v563
          %v565 = vrot.slane %v560, %v564
          %v567 = vadd.f32 %v559, %v565
          %568 = vst.msk [vmem:[#allocation3] sm:$0x3] %vm553, %v567
        $region40: #{base_encoder_forward.9} parent=31 // pred_fallthru
          _
        // Predicated region
        $region41: #{base_encoder_forward.9} parent=31 // pred_check
          %p569 = pneg %p101
        $region42: #{base_encoder_forward.9} parent=31 // pred_check_branch
          %571 = sbr.rel (%p569) target = $region44
        $region43: #{base_encoder_forward.9} parent=31 // pred_region
          %s573 = ssub.s32 32, 32
          %574 = vsyncadd [#allocation4], %s573
          %s576 = sshll.u32 [#allocation3], 4
          %s577 = int_to_ptr.vmem [resolvable:$true] %s576
          %579 = dma.vmem_to_hbm [thread:$0]  %s577, 32, %s3, [#allocation4]
        $region44: #{base_encoder_forward.9} parent=31 // pred_fallthru
          _
        // Predicated region
        $region45: #{base_encoder_forward.9} parent=31 // pred_check
          %p580 = pneg %p101
        $region46: #{base_encoder_forward.9} parent=31 // pred_check_branch
          %582 = sbr.rel (%p580) target = $region48
        $region47: #{base_encoder_forward.9} parent=31 // pred_region
          %583 = dma.done [#allocation4], 32
        $region48: #{base_encoder_forward.9} parent=31 // pred_fallthru
          _
      $region32: #{base_encoder_forward.9} parent=5 // pred_fallthru
        _
      %p584 = scmp.le.s32.totalorder 2, %s10
      // Predicated region
      $region49: #{base_encoder_forward.9} parent=5 // pred_check
        %p585 = pneg %p584
      $region50: #{base_encoder_forward.9} parent=5 // pred_check_branch
        %587 = sbr.rel (%p585) target = $region52
      $region51: #{base_encoder_forward.9} parent=5 // pred_region
        %s588 = ssub.s32 %s10, 2
      $region52: #{base_encoder_forward.9} parent=5 // pred_fallthru
        _
    $region6: #{base_encoder_forward.9} parent=1 // loop_footer
      %s14 = sadd.s32 1, %s10
    $region7: #{base_encoder_forward.9} parent=1 // loop_footer_branch
      %9 = sbr.rel target = $region3
    $region8: #{base_encoder_forward.9} parent=1 // loop_exit
      _
    %589 = vsyncpa [#allocation4], 1
    %s590 = scalar_lea.sflag [#allocation4], 1
    %591 = vsyncpa %s590, 1

</llo_original>
